<compile_context>
chip_gen: v7x
topology: tpu7x:2x2x1
jax: 0.10.0
libtpu: 0.0.40
codegen_flags: <defaults>
</compile_context>

<pallas_src>
import jax
import jax.numpy as jnp
from jax.experimental import pallas as pl
from jax.experimental.pallas import tpu as pltpu

# ----------------------------- configuration --------------------------------
DIM = 32                       # transformer_block_dim
PATCH_SIZE = DIM // 8          # 4
PATCH_NUM = DIM // PATCH_SIZE  # 8
N_TOK = PATCH_NUM + 1          # 9 tokens (cls + patches)
Z_DIM = 100
CNT_CLASSES = 2
HEADS = 8
DIM_HEAD = 16
INNER = HEADS * DIM_HEAD       # 128
MLP_DIM = 128
LSTM_HID = DIM // 2            # 16
NUM_MIX_LAYERS = 2             # lookup_table.cnt_layers (synthetic)
NUM_OPS = 3                    # skip / linear / mlp
MIX_HID = 2 * DIM              # 64
LN_EPS = 1e-5
TB_MAX = 64                    # max batch rows per grid step
_HEAD_SHIFT = DIM_HEAD.bit_length() - 1   # 4 (DIM_HEAD is a power of two)

LATENCY_TABLE = jnp.array([[1.0, 2.0, 3.0],
                           [1.5, 2.5, 3.5]], dtype=jnp.float32)


# --------------------------------- kernel ------------------------------------
def _make_kernel(tb):
    """Builds the kernel for a batch tile of `tb` rows (tb must be a multiple of 8)."""
    f32 = jnp.float32
    R = N_TOK * tb                         # rows of the token-major slab
    G = LSTM_HID                           # 16
    G2, G4, G6, G8 = 2 * G, 4 * G, 6 * G, 8 * G

    def ln(x, gb):
        """Row-wise LayerNorm; gb is (2, d) stacked [gamma; beta]."""
        mu = jnp.mean(x, axis=-1, keepdims=True)
        xc = x - mu
        var = jnp.mean(xc * xc, axis=-1, keepdims=True)
        return xc * jax.lax.rsqrt(var + LN_EPS) * gb[0:1, :] + gb[1:2, :]

    def tokens_to_slab(h):
        """(tb, N_TOK*DIM) -> token-major slab (N_TOK*tb, DIM); row = n*tb + b."""
        return jnp.concatenate(
            [h[:, n * DIM:(n + 1) * DIM] for n in range(N_TOK)], axis=0)

    def lstm_layer(xp_f, xp_b, whh):
        """Fused bidirectional recurrence.

        xp_f/xp_b: hoisted input projections (R, 128), gate columns
        [i_f i_b f_f f_b o_f o_b g_f g_b] with the other direction's columns
        zero.  State (tb, 32) = [h_fwd | h_bwd] on lanes; whh is the
        block-diagonal (32, 128) hidden weight.
        """
        hcat = jnp.zeros((tb, G2), f32)
        ccat = jnp.zeros((tb, G2), f32)
        outs_f = [None] * N_TOK
        outs_b = [None] * N_TOK
        for t in range(N_TOK):
            rt = N_TOK - 1 - t
            g = (xp_f[t * tb:(t + 1) * tb, :]
                 + xp_b[rt * tb:(rt + 1) * tb, :]
                 + jnp.dot(hcat, whh, preferred_element_type=f32))   # (tb,128)
            sig = jax.nn.sigmoid(g[:, 0:G6])      # i_f i_b f_f f_b o_f o_b
            gg = jnp.tanh(g[:, G6:G8])            # g_f g_b
            i_ = sig[:, 0:G2]
            f_ = sig[:, G2:G4]
            o_ = sig[:, G4:G6]
            ccat = f_ * ccat + i_ * gg
            hcat = o_ * jnp.tanh(ccat)
            outs_f[t] = hcat[:, 0:G]
            outs_b[rt] = hcat[:, G:G2]
        return outs_f, outs_b

    def kernel(noise_ref, label_ref,
               g1_w, g2_w, ln100, ln2, ln32,
               w32, w128, gb12, misc_b,
               lstm_w, lstm_b, mix_w1f, mix_w2p, mix_b,
               mask_ref, y_ref):
        # ---- gen_first_1: LN -> Linear -> rearrange -> LN ----
        z = ln(noise_ref[...].astype(f32), ln100[...])                    # (tb,100)
        h1 = jnp.dot(z, g1_w[...], preferred_element_type=f32) + gb12[0:1, :]
        x1 = ln(tokens_to_slab(h1), ln32[0])                              # (R,32)

        # ---- gen_first_2 (K=2 matmul -> two broadcast FMAs) ----
        lb = ln(label_ref[...].astype(f32), ln2[...])                     # (tb,2)
        h2 = lb[:, 0:1] * g2_w[0:1, :] + lb[:, 1:2] * g2_w[1:2, :] + gb12[1:2, :]
        x2 = ln(tokens_to_slab(h2), ln32[1])                              # (R,32)

        # ---- cross attention (pre-norm, residual), same-batch keys only ----
        qn = ln(x1, ln32[2])
        kvn = ln(x2, ln32[3])
        q = jnp.dot(qn, w32[:, 0:INNER], preferred_element_type=f32)       # scale folded in
        kv = jnp.dot(kvn, w32[:, INNER:3 * INNER], preferred_element_type=f32)
        k = kv[:, 0:INNER]
        v = kv[:, INNER:2 * INNER]
        q3 = q.reshape(N_TOK, tb, INNER)
        k3 = k.reshape(N_TOK, tb, INNER)
        v3 = v.reshape(N_TOK, tb, INNER)

        # head pooling / spreading indicator matrices (built once per step)
        li = jax.lax.broadcasted_iota(jnp.int32, (INNER, HEADS), 0)
        hi = jax.lax.broadcasted_iota(jnp.int32, (INNER, HEADS), 1)
        head_pool = ((li >> _HEAD_SHIFT) == hi).astype(f32)                # (128,8)
        hs = jax.lax.broadcasted_iota(jnp.int32, (HEADS, INNER), 0)
        ls = jax.lax.broadcasted_iota(jnp.int32, (HEADS, INNER), 1)
        head_spread = ((ls >> _HEAD_SHIFT) == hs).astype(f32)              # (8,128)

        # scores: s[m, r, h] = <q[row r, head h], k[token m of same batch, head h]>
        prods = [(q3 * k3[m][None, :, :]).reshape(R, INNER)
                 for m in range(N_TOK)]
        s = jnp.dot(jnp.concatenate(prods, axis=0), head_pool,
                    preferred_element_type=f32).reshape(N_TOK, R, HEADS)
        s_max = jnp.max(s, axis=0, keepdims=True)
        e = jnp.exp(s - s_max)
        inv = pl.reciprocal(jnp.sum(e, axis=0), approx=True)               # (R,8)
        p = e * inv[None, :, :]                                            # (9,R,8)

        # weighted value sum: spread probs to head lanes, then 9 FMAs
        p_exp = jnp.dot(p.reshape(N_TOK * R, HEADS), head_spread,
                        preferred_element_type=f32).reshape(N_TOK, R, INNER)
        o = jnp.zeros((R, INNER), f32)
        for m in range(N_TOK):
            vt = jnp.broadcast_to(v3[m][None, :, :],
                                  (N_TOK, tb, INNER)).reshape(R, INNER)
            o = o + p_exp[m] * vt
        x = (x1 + jnp.dot(o, w128[:, 0:DIM], preferred_element_type=f32)
             + misc_b[:, 0:DIM])                                           # (R,32)

        # ---- FFN (pre-norm, residual) ----
        fx = ln(x, ln32[4])
        fx = (jnp.dot(fx, w32[:, 3 * INNER:4 * INNER], preferred_element_type=f32)
              + misc_b[:, DIM:DIM + MLP_DIM])
        fx = jax.nn.gelu(fx)   # TODO(synk): tanh-approx GELU vs torch erf GELU
        fx = (jnp.dot(fx, w128[:, DIM:2 * DIM], preferred_element_type=f32)
              + misc_b[:, DIM + MLP_DIM:DIM + MLP_DIM + DIM])
        y = x + fx                                                         # (R,32)

        # ---- 2-layer bidirectional LSTM (batch_first, input=32, hidden=16) ----
        xp0_f = jnp.dot(y, lstm_w[0], preferred_element_type=f32) + lstm_b[0]
        xp0_b = jnp.dot(y, lstm_w[1], preferred_element_type=f32)
        of0, ob0 = lstm_layer(xp0_f, xp0_b, lstm_w[2])
        yf = jnp.concatenate(of0, axis=0)                                  # (R,16)
        yb = jnp.concatenate(ob0, axis=0)                                  # (R,16)
        y1 = jnp.concatenate([yf, yb], axis=1)                             # (R,32)

        xp1_f = jnp.dot(y1, lstm_w[3], preferred_element_type=f32) + lstm_b[1]
        xp1_b = jnp.dot(y1, lstm_w[4], preferred_element_type=f32)
        of1, ob1 = lstm_layer(xp1_f, xp1_b, lstm_w[5])
        # Only token 0 reaches the output (unused tokens are DCE'd).
        y0 = jnp.concatenate([of1[0], ob1[0]], axis=1)                     # (tb,32)

        # ---- mixed-op stages on token 0 only (all candidate ops are row-wise) ----
        for layer in range(NUM_MIX_LAYERS):
            m0 = mask_ref[layer, 0]
            m1 = mask_ref[layer, 1]
            m2 = mask_ref[layer, 2]
            fused = (jnp.dot(y0, mix_w1f[layer], preferred_element_type=f32)
                     + mix_b[layer][:, 0:DIM + MIX_HID])                   # (tb,96)
            lin = fused[:, 0:DIM]
            hid = jax.nn.gelu(fused[:, DIM:DIM + MIX_HID])
            mlp = (jnp.dot(hid, mix_w2p[layer], preferred_element_type=f32)
                   + mix_b[layer][:, DIM + MIX_HID:DIM + MIX_HID + DIM])
            y0 = m0 * y0 + m1 * lin + m2 * mlp

        y_ref[...] = y0.astype(y_ref.dtype)

    return kernel


# ------------------------------ parameter init --------------------------------
def _ln_params(d):
    return jnp.stack([jnp.ones((d,), jnp.float32), jnp.zeros((d,), jnp.float32)])


def init_params(key):
    ks = iter(jax.random.split(key, 48))

    def w(shape, scale=0.02):
        return scale * jax.random.normal(next(ks), shape, dtype=jnp.float32)

    out_dim = N_TOK * DIM
    G4 = 4 * LSTM_HID
    params = dict(
        # gen_first_1 / gen_first_2
        g1_ln_in=_ln_params(Z_DIM), g1_w=w((Z_DIM, out_dim)),
        g1_b=jnp.zeros((1, out_dim), jnp.float32), g1_ln_out=_ln_params(DIM),
        g2_ln_in=_ln_params(CNT_CLASSES), g2_w=w((CNT_CLASSES, out_dim)),
        g2_b=jnp.zeros((1, out_dim), jnp.float32), g2_ln_out=_ln_params(DIM),
        # cross-attention block
        ca_lnq=_ln_params(DIM), ca_lnkv=_ln_params(DIM),
        wq=w((DIM, INNER)), wk=w((DIM, INNER)), wv=w((DIM, INNER)),
        wo=w((INNER, DIM)), bo=jnp.zeros((1, DIM), jnp.float32),
        ffn_ln=_ln_params(DIM),
        wf1=w((DIM, MLP_DIM)), bf1=jnp.zeros((1, MLP_DIM), jnp.float32),
        wf2=w((MLP_DIM, DIM)), bf2=jnp.zeros((1, DIM), jnp.float32),
        # LSTM raw weights: per layer, per direction, (in_dim, 4H) with torch
        # gate-column order [i, f, g, o]; biases are combined b_ih + b_hh.
        lstm_wih=[[w((DIM, G4), 0.05), w((DIM, G4), 0.05)],
                  [w((2 * LSTM_HID, G4), 0.05), w((2 * LSTM_HID, G4), 0.05)]],
        lstm_whh=[[w((LSTM_HID, G4), 0.05), w((LSTM_HID, G4), 0.05)],
                  [w((LSTM_HID, G4), 0.05), w((LSTM_HID, G4), 0.05)]],
        lstm_bias=[[jnp.zeros((G4,), jnp.float32), jnp.zeros((G4,), jnp.float32)],
                   [jnp.zeros((G4,), jnp.float32), jnp.zeros((G4,), jnp.float32)]],
        # mixed-op stages
        mix_linw=w((NUM_MIX_LAYERS, DIM, DIM)),
        mix_linb=jnp.zeros((NUM_MIX_LAYERS, 1, DIM), jnp.float32),
        mix_w1=w((NUM_MIX_LAYERS, DIM, MIX_HID)),
        mix_b1=jnp.zeros((NUM_MIX_LAYERS, 1, MIX_HID), jnp.float32),
        mix_w2=w((NUM_MIX_LAYERS, MIX_HID, DIM)),
        mix_b2=jnp.zeros((NUM_MIX_LAYERS, 1, DIM), jnp.float32),
        # MixedOperationTransformer.thetas (uniform 1/num_ops)
        thetas=jnp.full((NUM_MIX_LAYERS, NUM_OPS), 1.0 / NUM_OPS, jnp.float32),
    )
    return params


# ------------------------------ weight packing --------------------------------
# Kernel LSTM gate-column layout (width 128 = 8 * LSTM_HID), 16 lanes each:
#   [ i_f | i_b | f_f | f_b | o_f | o_b | g_f | g_b ]
# so one sigmoid covers lanes 0:96, one tanh lanes 96:128, and the hidden
# state [h_f | h_b] multiplies a block-diagonal (32, 128) W_hh.
_GATE_ORDER = (0, 1, 3, 2)     # torch [i, f, g, o]  ->  kernel [i, f, o, g]


def _pack_lstm_layer(wih_f, wih_b, whh_f, whh_b, b_f, b_b):
    in_dim = wih_f.shape[0]
    G = LSTM_HID
    wf_wide = jnp.zeros((in_dim, 8 * G), jnp.float32)
    wb_wide = jnp.zeros((in_dim, 8 * G), jnp.float32)
    whh_blk = jnp.zeros((2 * G, 8 * G), jnp.float32)
    bias = jnp.zeros((1, 8 * G), jnp.float32)
    for dst, src in enumerate(_GATE_ORDER):
        s = slice(src * G, (src + 1) * G)
        fcol = slice(2 * dst * G, (2 * dst + 1) * G)
        bcol = slice((2 * dst + 1) * G, (2 * dst + 2) * G)
        wf_wide = wf_wide.at[:, fcol].set(wih_f[:, s])
        wb_wide = wb_wide.at[:, bcol].set(wih_b[:, s])
        whh_blk = whh_blk.at[0:G, fcol].set(whh_f[:, s])
        whh_blk = whh_blk.at[G:2 * G, bcol].set(whh_b[:, s])
        bias = bias.at[:, fcol].set(b_f[s][None, :])
        bias = bias.at[:, bcol].set(b_b[s][None, :])
    return wf_wide, wb_wide, whh_blk, bias


def pack_weights(params):
    """Consolidates the 30+ logical weights into 14 packed kernel buffers."""
    scale = DIM_HEAD ** -0.5
    # [wq*scale | wk | wv | wf1] -> (32, 512); scale folded into Wq.
    w32 = jnp.concatenate([params["wq"] * scale, params["wk"],
                           params["wv"], params["wf1"]], axis=1)
    # [wo | wf2] -> (128, 64)
    w128 = jnp.concatenate([params["wo"], params["wf2"]], axis=1)
    gb12 = jnp.concatenate([params["g1_b"], params["g2_b"]], axis=0)     # (2,288)
    misc_b = jnp.concatenate([params["bo"], params["bf1"], params["bf2"]],
                             axis=1)                                      # (1,192)
    ln32 = jnp.stack([params["g1_ln_out"], params["g2_ln_out"],
                      params["ca_lnq"], params["ca_lnkv"], params["ffn_ln"]])
    lw, lb = [], []
    for layer in range(2):
        wf, wb, whh, bias = _pack_lstm_layer(
            params["lstm_wih"][layer][0], params["lstm_wih"][layer][1],
            params["lstm_whh"][layer][0], params["lstm_whh"][layer][1],
            params["lstm_bias"][layer][0], params["lstm_bias"][layer][1])
        lw += [wf, wb, whh]
        lb.append(bias)
    lstm_w = jnp.stack(lw)                                               # (6,32,128)
    lstm_b = jnp.stack(lb)                                               # (2,1,128)
    mix_w1f = jnp.concatenate([params["mix_linw"], params["mix_w1"]], axis=2)  # (2,32,96)
    mix_b = jnp.concatenate([params["mix_linb"], params["mix_b1"],
                             params["mix_b2"]], axis=2)                  # (2,1,128)
    return [params["g1_w"], params["g2_w"],
            params["g1_ln_in"], params["g2_ln_in"], ln32,
            w32, w128, gb12, misc_b,
            lstm_w, lstm_b,
            mix_w1f, params["mix_w2"], mix_b]


# --------------------------------- wrapper ------------------------------------
def _zero_map(ndim):
    zeros = (0,) * ndim
    return lambda b, _z=zeros: _z


def _round_up(x, m):
    return ((x + m - 1) // m) * m


def supernet_generator_forward(params, noise, label, temperature,
                               latency_to_accumulate, supernet_or_sample, key):
    """noise: (B, 1, Z_DIM), label: (B, 1, CNT_CLASSES)  (PyTorch NCL layout)."""
    B = noise.shape[0]
    noise2d = noise.reshape(B, Z_DIM).astype(jnp.float32)
    label2d = label.reshape(B, CNT_CLASSES).astype(jnp.float32)

    # Batch tile: big enough to amortise per-step overhead, small enough to
    # keep >=2 grid steps at realistic batch sizes (v7x has 2 TensorCores and
    # shards the "parallel" grid axis across them).  Multiple of 8 (sublanes).
    tb = min(TB_MAX, _round_up(max(1, (B + 1) // 2), 8))
    b_pad = _round_up(B, tb)
    if b_pad != B:
        pad = b_pad - B
        noise2d = jnp.pad(noise2d, ((0, pad), (0, 0)))
        label2d = jnp.pad(label2d, ((0, pad), (0, 0)))

    # gumbel_softmax(thetas, temperature) — sampling done host-side in JAX (glue)
    u = jax.random.uniform(key, (NUM_MIX_LAYERS, NUM_OPS),
                           minval=1e-10, maxval=1.0)
    gumbels = -jnp.log(-jnp.log(u))
    masks = jax.nn.softmax((params["thetas"] + gumbels) / temperature,
                           axis=-1).astype(jnp.float32)

    weights = pack_weights(params)
    weight_specs = [pl.BlockSpec(tuple(a.shape), _zero_map(a.ndim))
                    for a in weights]
    in_specs = ([pl.BlockSpec((tb, Z_DIM), lambda b: (b, 0)),
                 pl.BlockSpec((tb, CNT_CLASSES), lambda b: (b, 0))]
                + weight_specs
                + [pl.BlockSpec(memory_space=pltpu.SMEM)])

    y = pl.pallas_call(
        _make_kernel(tb),
        out_shape=jax.ShapeDtypeStruct((b_pad, DIM), jnp.float32),
        grid=(b_pad // tb,),
        in_specs=in_specs,
        out_specs=pl.BlockSpec((tb, DIM), lambda b: (b, 0)),
        compiler_params=pltpu.CompilerParams(
            dimension_semantics=("parallel",),
            vmem_limit_bytes=32 * 1024 * 1024),
    )(noise2d, label2d, *weights, masks)
    y = y[:B]

    # latency accumulation (scalar glue, matches sum(m * lat) per mixed op)
    latency = latency_to_accumulate + jnp.sum(masks * LATENCY_TABLE)

    if supernet_or_sample:
        return y, latency
    # TODO(synk): the reference `mixed_op(y)` single-arg sample path is
    # ill-defined; sample mode reuses the same weighted-sum path, returns y.
    return y


# ----------------------------------- main --------------------------------------
if __name__ == "__main__":
    root = jax.random.PRNGKey(0)
    pkey, nkey, lkey, gkey = jax.random.split(root, 4)

    params = init_params(pkey)

    B = 2
    noise = jax.random.normal(nkey, (B, 1, Z_DIM), dtype=jnp.float32)
    label = jax.random.normal(lkey, (B, 1, CNT_CLASSES), dtype=jnp.float32)
    temperature = 1.0
    latency0 = jnp.float32(0.0)

    y, latency = supernet_generator_forward(
        params, noise, label, temperature, latency0,
        supernet_or_sample=True, key=gkey)
    jax.block_until_ready((y, latency))

    assert y.shape == (B, DIM), y.shape
    assert latency.shape == (), latency.shape
    assert bool(jnp.all(jnp.isfinite(y))), "non-finite output"
    print("KERNEL_OK")
</pallas_src>

<mosaic_0001>
module attributes {stable_mosaic.version = 11 : i64} {
  func.func @kernel(%arg0: i32, %arg1: memref<8x100xf32, #tpu.memory_space<vmem>>, %arg2: memref<8x2xf32, #tpu.memory_space<vmem>>, %arg3: memref<100x288xf32, #tpu.memory_space<vmem>>, %arg4: memref<2x288xf32, #tpu.memory_space<vmem>>, %arg5: memref<2x100xf32, #tpu.memory_space<vmem>>, %arg6: memref<2x2xf32, #tpu.memory_space<vmem>>, %arg7: memref<5x2x32xf32, #tpu.memory_space<vmem>>, %arg8: memref<32x512xf32, #tpu.memory_space<vmem>>, %arg9: memref<128x64xf32, #tpu.memory_space<vmem>>, %arg10: memref<2x288xf32, #tpu.memory_space<vmem>>, %arg11: memref<1x192xf32, #tpu.memory_space<vmem>>, %arg12: memref<6x32x128xf32, #tpu.memory_space<vmem>>, %arg13: memref<2x1x128xf32, #tpu.memory_space<vmem>>, %arg14: memref<2x32x96xf32, #tpu.memory_space<vmem>>, %arg15: memref<2x64x32xf32, #tpu.memory_space<vmem>>, %arg16: memref<2x1x128xf32, #tpu.memory_space<vmem>>, %arg17: memref<2x3xf32, #tpu.memory_space<smem>>, %arg18: memref<8x32xf32, #tpu.memory_space<vmem>>) attributes {dimension_semantics = [#tpu.dimension_semantics<parallel>], iteration_bounds = array<i64: 1>, scalar_prefetch = 0 : i64, scratch_operands = 0 : i64, tpu.core_type = #tpu.core_type<tc>, window_params = [{transform_indices = @transform_0, window_bounds = array<i64: 8, 100>}, {transform_indices = @transform_1, window_bounds = array<i64: 8, 2>}, {pipeline_mode = #tpu.pipeline_mode<synchronous>, transform_indices = @transform_2, window_bounds = array<i64: 100, 288>}, {pipeline_mode = #tpu.pipeline_mode<synchronous>, transform_indices = @transform_3, window_bounds = array<i64: 2, 288>}, {pipeline_mode = #tpu.pipeline_mode<synchronous>, transform_indices = @transform_4, window_bounds = array<i64: 2, 100>}, {pipeline_mode = #tpu.pipeline_mode<synchronous>, transform_indices = @transform_5, window_bounds = array<i64: 2, 2>}, {pipeline_mode = #tpu.pipeline_mode<synchronous>, transform_indices = @transform_6, window_bounds = array<i64: 5, 2, 32>}, {pipeline_mode = #tpu.pipeline_mode<synchronous>, transform_indices = @transform_7, window_bounds = array<i64: 32, 512>}, {pipeline_mode = #tpu.pipeline_mode<synchronous>, transform_indices = @transform_8, window_bounds = array<i64: 128, 64>}, {pipeline_mode = #tpu.pipeline_mode<synchronous>, transform_indices = @transform_9, window_bounds = array<i64: 2, 288>}, {pipeline_mode = #tpu.pipeline_mode<synchronous>, transform_indices = @transform_10, window_bounds = array<i64: 1, 192>}, {pipeline_mode = #tpu.pipeline_mode<synchronous>, transform_indices = @transform_11, window_bounds = array<i64: 6, 32, 128>}, {pipeline_mode = #tpu.pipeline_mode<synchronous>, transform_indices = @transform_12, window_bounds = array<i64: 2, 1, 128>}, {pipeline_mode = #tpu.pipeline_mode<synchronous>, transform_indices = @transform_13, window_bounds = array<i64: 2, 32, 96>}, {pipeline_mode = #tpu.pipeline_mode<synchronous>, transform_indices = @transform_14, window_bounds = array<i64: 2, 64, 32>}, {pipeline_mode = #tpu.pipeline_mode<synchronous>, transform_indices = @transform_15, window_bounds = array<i64: 2, 1, 128>}, {transform_indices = @transform_16, window_bounds = array<i64: 2, 3>}, {transform_indices = @transform_17, window_bounds = array<i64: 8, 32>}]} {
    %c0 = arith.constant 0 : index
    %c0_0 = arith.constant 0 : index
    %0 = vector.load %arg1[%c0, %c0_0] : memref<8x100xf32, #tpu.memory_space<vmem>>, vector<8x100xf32>
    %c0_1 = arith.constant 0 : index
    %c0_2 = arith.constant 0 : index
    %1 = vector.load %arg5[%c0_1, %c0_2] : memref<2x100xf32, #tpu.memory_space<vmem>>, vector<2x100xf32>
    %cst = arith.constant dense<0.000000e+00> : vector<8xf32>
    %2 = vector.multi_reduction <add>, %0, %cst [1] : vector<8x100xf32> to vector<8xf32>
    %3 = vector.shape_cast %2 : vector<8xf32> to vector<8x1xf32>
    %cst_3 = arith.constant 1.000000e+02 : f32
    %4 = vector.broadcast %cst_3 : f32 to vector<8x1xf32>
    %5 = arith.divf %3, %4 : vector<8x1xf32>
    %6 = vector.broadcast %5 : vector<8x1xf32> to vector<8x100xf32>
    %7 = arith.subf %0, %6 : vector<8x100xf32>
    %8 = arith.mulf %7, %7 : vector<8x100xf32>
    %cst_4 = arith.constant dense<0.000000e+00> : vector<8xf32>
    %9 = vector.multi_reduction <add>, %8, %cst_4 [1] : vector<8x100xf32> to vector<8xf32>
    %10 = vector.shape_cast %9 : vector<8xf32> to vector<8x1xf32>
    %cst_5 = arith.constant 1.000000e+02 : f32
    %11 = vector.broadcast %cst_5 : f32 to vector<8x1xf32>
    %12 = arith.divf %10, %11 : vector<8x1xf32>
    %cst_6 = arith.constant 9.99999974E-6 : f32
    %13 = vector.broadcast %cst_6 : f32 to vector<8x1xf32>
    %14 = arith.addf %12, %13 : vector<8x1xf32>
    %15 = math.rsqrt %14 : vector<8x1xf32>
    %16 = vector.broadcast %15 : vector<8x1xf32> to vector<8x100xf32>
    %17 = arith.mulf %7, %16 : vector<8x100xf32>
    %18 = vector.extract_strided_slice %1 {offsets = [0, 0], sizes = [1, 100], strides = [1, 1]} : vector<2x100xf32> to vector<1x100xf32>
    %19 = vector.broadcast %18 : vector<1x100xf32> to vector<8x100xf32>
    %20 = arith.mulf %17, %19 : vector<8x100xf32>
    %21 = vector.extract_strided_slice %1 {offsets = [1, 0], sizes = [1, 100], strides = [1, 1]} : vector<2x100xf32> to vector<1x100xf32>
    %22 = vector.broadcast %21 : vector<1x100xf32> to vector<8x100xf32>
    %23 = arith.addf %20, %22 : vector<8x100xf32>
    %c0_7 = arith.constant 0 : index
    %c0_8 = arith.constant 0 : index
    %24 = vector.load %arg3[%c0_7, %c0_8] : memref<100x288xf32, #tpu.memory_space<vmem>>, vector<100x288xf32>
    %cst_9 = arith.constant dense<0.000000e+00> : vector<8x288xf32>
    %25 = tpu.matmul %23, %24, %cst_9 {dimension_numbers = #tpu.dot_dimension_numbers<[1], [0], [0], [1], [0, 0, 1, 1], [], []>} : vector<8x100xf32>, vector<100x288xf32>, vector<8x288xf32> -> vector<8x288xf32>
    %c0_10 = arith.constant 0 : index
    %c0_11 = arith.constant 0 : index
    %26 = vector.load %arg10[%c0_10, %c0_11] : memref<2x288xf32, #tpu.memory_space<vmem>>, vector<1x288xf32>
    %27 = vector.broadcast %26 : vector<1x288xf32> to vector<8x288xf32>
    %28 = arith.addf %25, %27 : vector<8x288xf32>
    %29 = vector.extract_strided_slice %28 {offsets = [0, 0], sizes = [8, 32], strides = [1, 1]} : vector<8x288xf32> to vector<8x32xf32>
    %30 = vector.extract_strided_slice %28 {offsets = [0, 32], sizes = [8, 32], strides = [1, 1]} : vector<8x288xf32> to vector<8x32xf32>
    %31 = vector.extract_strided_slice %28 {offsets = [0, 64], sizes = [8, 32], strides = [1, 1]} : vector<8x288xf32> to vector<8x32xf32>
    %32 = vector.extract_strided_slice %28 {offsets = [0, 96], sizes = [8, 32], strides = [1, 1]} : vector<8x288xf32> to vector<8x32xf32>
    %33 = vector.extract_strided_slice %28 {offsets = [0, 128], sizes = [8, 32], strides = [1, 1]} : vector<8x288xf32> to vector<8x32xf32>
    %34 = vector.extract_strided_slice %28 {offsets = [0, 160], sizes = [8, 32], strides = [1, 1]} : vector<8x288xf32> to vector<8x32xf32>
    %35 = vector.extract_strided_slice %28 {offsets = [0, 192], sizes = [8, 32], strides = [1, 1]} : vector<8x288xf32> to vector<8x32xf32>
    %36 = vector.extract_strided_slice %28 {offsets = [0, 224], sizes = [8, 32], strides = [1, 1]} : vector<8x288xf32> to vector<8x32xf32>
    %37 = vector.extract_strided_slice %28 {offsets = [0, 256], sizes = [8, 32], strides = [1, 1]} : vector<8x288xf32> to vector<8x32xf32>
    %38 = tpu.concatenate %29, %30, %31, %32, %33, %34, %35, %36, %37 in 0 : vector<8x32xf32>, vector<8x32xf32>, vector<8x32xf32>, vector<8x32xf32>, vector<8x32xf32>, vector<8x32xf32>, vector<8x32xf32>, vector<8x32xf32>, vector<8x32xf32> -> vector<72x32xf32>
    %c0_12 = arith.constant 0 : index
    %c0_13 = arith.constant 0 : index
    %c0_14 = arith.constant 0 : index
    %39 = vector.load %arg7[%c0_12, %c0_13, %c0_14] : memref<5x2x32xf32, #tpu.memory_space<vmem>>, vector<1x2x32xf32>
    %40 = vector.shape_cast %39 : vector<1x2x32xf32> to vector<2x32xf32>
    %cst_15 = arith.constant dense<0.000000e+00> : vector<72xf32>
    %41 = vector.multi_reduction <add>, %38, %cst_15 [1] : vector<72x32xf32> to vector<72xf32>
    %42 = vector.shape_cast %41 : vector<72xf32> to vector<72x1xf32>
    %cst_16 = arith.constant 3.200000e+01 : f32
    %43 = vector.broadcast %cst_16 : f32 to vector<72x1xf32>
    %44 = arith.divf %42, %43 : vector<72x1xf32>
    %45 = vector.broadcast %44 : vector<72x1xf32> to vector<72x32xf32>
    %46 = arith.subf %38, %45 : vector<72x32xf32>
    %47 = arith.mulf %46, %46 : vector<72x32xf32>
    %cst_17 = arith.constant dense<0.000000e+00> : vector<72xf32>
    %48 = vector.multi_reduction <add>, %47, %cst_17 [1] : vector<72x32xf32> to vector<72xf32>
    %49 = vector.shape_cast %48 : vector<72xf32> to vector<72x1xf32>
    %cst_18 = arith.constant 3.200000e+01 : f32
    %50 = vector.broadcast %cst_18 : f32 to vector<72x1xf32>
    %51 = arith.divf %49, %50 : vector<72x1xf32>
    %cst_19 = arith.constant 9.99999974E-6 : f32
    %52 = vector.broadcast %cst_19 : f32 to vector<72x1xf32>
    %53 = arith.addf %51, %52 : vector<72x1xf32>
    %54 = math.rsqrt %53 : vector<72x1xf32>
    %55 = vector.broadcast %54 : vector<72x1xf32> to vector<72x32xf32>
    %56 = arith.mulf %46, %55 : vector<72x32xf32>
    %57 = vector.extract_strided_slice %40 {offsets = [0, 0], sizes = [1, 32], strides = [1, 1]} : vector<2x32xf32> to vector<1x32xf32>
    %58 = vector.broadcast %57 : vector<1x32xf32> to vector<72x32xf32>
    %59 = arith.mulf %56, %58 : vector<72x32xf32>
    %60 = vector.extract_strided_slice %40 {offsets = [1, 0], sizes = [1, 32], strides = [1, 1]} : vector<2x32xf32> to vector<1x32xf32>
    %61 = vector.broadcast %60 : vector<1x32xf32> to vector<72x32xf32>
    %62 = arith.addf %59, %61 : vector<72x32xf32>
    %c0_20 = arith.constant 0 : index
    %c0_21 = arith.constant 0 : index
    %63 = vector.load %arg2[%c0_20, %c0_21] : memref<8x2xf32, #tpu.memory_space<vmem>>, vector<8x2xf32>
    %c0_22 = arith.constant 0 : index
    %c0_23 = arith.constant 0 : index
    %64 = vector.load %arg6[%c0_22, %c0_23] : memref<2x2xf32, #tpu.memory_space<vmem>>, vector<2x2xf32>
    %cst_24 = arith.constant dense<0.000000e+00> : vector<8xf32>
    %65 = vector.multi_reduction <add>, %63, %cst_24 [1] : vector<8x2xf32> to vector<8xf32>
    %66 = vector.shape_cast %65 : vector<8xf32> to vector<8x1xf32>
    %cst_25 = arith.constant 2.000000e+00 : f32
    %67 = vector.broadcast %cst_25 : f32 to vector<8x1xf32>
    %68 = arith.divf %66, %67 : vector<8x1xf32>
    %69 = vector.broadcast %68 : vector<8x1xf32> to vector<8x2xf32>
    %70 = arith.subf %63, %69 : vector<8x2xf32>
    %71 = arith.mulf %70, %70 : vector<8x2xf32>
    %cst_26 = arith.constant dense<0.000000e+00> : vector<8xf32>
    %72 = vector.multi_reduction <add>, %71, %cst_26 [1] : vector<8x2xf32> to vector<8xf32>
    %73 = vector.shape_cast %72 : vector<8xf32> to vector<8x1xf32>
    %cst_27 = arith.constant 2.000000e+00 : f32
    %74 = vector.broadcast %cst_27 : f32 to vector<8x1xf32>
    %75 = arith.divf %73, %74 : vector<8x1xf32>
    %cst_28 = arith.constant 9.99999974E-6 : f32
    %76 = vector.broadcast %cst_28 : f32 to vector<8x1xf32>
    %77 = arith.addf %75, %76 : vector<8x1xf32>
    %78 = math.rsqrt %77 : vector<8x1xf32>
    %79 = vector.broadcast %78 : vector<8x1xf32> to vector<8x2xf32>
    %80 = arith.mulf %70, %79 : vector<8x2xf32>
    %81 = vector.extract_strided_slice %64 {offsets = [0, 0], sizes = [1, 2], strides = [1, 1]} : vector<2x2xf32> to vector<1x2xf32>
    %82 = vector.broadcast %81 : vector<1x2xf32> to vector<8x2xf32>
    %83 = arith.mulf %80, %82 : vector<8x2xf32>
    %84 = vector.extract_strided_slice %64 {offsets = [1, 0], sizes = [1, 2], strides = [1, 1]} : vector<2x2xf32> to vector<1x2xf32>
    %85 = vector.broadcast %84 : vector<1x2xf32> to vector<8x2xf32>
    %86 = arith.addf %83, %85 : vector<8x2xf32>
    %87 = vector.extract_strided_slice %86 {offsets = [0, 0], sizes = [8, 1], strides = [1, 1]} : vector<8x2xf32> to vector<8x1xf32>
    %c0_29 = arith.constant 0 : index
    %c0_30 = arith.constant 0 : index
    %88 = vector.load %arg4[%c0_29, %c0_30] : memref<2x288xf32, #tpu.memory_space<vmem>>, vector<1x288xf32>
    %89 = vector.broadcast %87 : vector<8x1xf32> to vector<8x288xf32>
    %90 = vector.broadcast %88 : vector<1x288xf32> to vector<8x288xf32>
    %91 = arith.mulf %89, %90 : vector<8x288xf32>
    %92 = vector.extract_strided_slice %86 {offsets = [0, 1], sizes = [8, 1], strides = [1, 1]} : vector<8x2xf32> to vector<8x1xf32>
    %c1 = arith.constant 1 : index
    %c0_31 = arith.constant 0 : index
    %93 = vector.load %arg4[%c1, %c0_31] : memref<2x288xf32, #tpu.memory_space<vmem>>, vector<1x288xf32>
    %94 = vector.broadcast %92 : vector<8x1xf32> to vector<8x288xf32>
    %95 = vector.broadcast %93 : vector<1x288xf32> to vector<8x288xf32>
    %96 = arith.mulf %94, %95 : vector<8x288xf32>
    %97 = arith.addf %91, %96 : vector<8x288xf32>
    %c1_32 = arith.constant 1 : index
    %c0_33 = arith.constant 0 : index
    %98 = vector.load %arg10[%c1_32, %c0_33] : memref<2x288xf32, #tpu.memory_space<vmem>>, vector<1x288xf32>
    %99 = vector.broadcast %98 : vector<1x288xf32> to vector<8x288xf32>
    %100 = arith.addf %97, %99 : vector<8x288xf32>
    %101 = vector.extract_strided_slice %100 {offsets = [0, 0], sizes = [8, 32], strides = [1, 1]} : vector<8x288xf32> to vector<8x32xf32>
    %102 = vector.extract_strided_slice %100 {offsets = [0, 32], sizes = [8, 32], strides = [1, 1]} : vector<8x288xf32> to vector<8x32xf32>
    %103 = vector.extract_strided_slice %100 {offsets = [0, 64], sizes = [8, 32], strides = [1, 1]} : vector<8x288xf32> to vector<8x32xf32>
    %104 = vector.extract_strided_slice %100 {offsets = [0, 96], sizes = [8, 32], strides = [1, 1]} : vector<8x288xf32> to vector<8x32xf32>
    %105 = vector.extract_strided_slice %100 {offsets = [0, 128], sizes = [8, 32], strides = [1, 1]} : vector<8x288xf32> to vector<8x32xf32>
    %106 = vector.extract_strided_slice %100 {offsets = [0, 160], sizes = [8, 32], strides = [1, 1]} : vector<8x288xf32> to vector<8x32xf32>
    %107 = vector.extract_strided_slice %100 {offsets = [0, 192], sizes = [8, 32], strides = [1, 1]} : vector<8x288xf32> to vector<8x32xf32>
    %108 = vector.extract_strided_slice %100 {offsets = [0, 224], sizes = [8, 32], strides = [1, 1]} : vector<8x288xf32> to vector<8x32xf32>
    %109 = vector.extract_strided_slice %100 {offsets = [0, 256], sizes = [8, 32], strides = [1, 1]} : vector<8x288xf32> to vector<8x32xf32>
    %110 = tpu.concatenate %101, %102, %103, %104, %105, %106, %107, %108, %109 in 0 : vector<8x32xf32>, vector<8x32xf32>, vector<8x32xf32>, vector<8x32xf32>, vector<8x32xf32>, vector<8x32xf32>, vector<8x32xf32>, vector<8x32xf32>, vector<8x32xf32> -> vector<72x32xf32>
    %c1_34 = arith.constant 1 : index
    %c0_35 = arith.constant 0 : index
    %c0_36 = arith.constant 0 : index
    %111 = vector.load %arg7[%c1_34, %c0_35, %c0_36] : memref<5x2x32xf32, #tpu.memory_space<vmem>>, vector<1x2x32xf32>
    %112 = vector.shape_cast %111 : vector<1x2x32xf32> to vector<2x32xf32>
    %cst_37 = arith.constant dense<0.000000e+00> : vector<72xf32>
    %113 = vector.multi_reduction <add>, %110, %cst_37 [1] : vector<72x32xf32> to vector<72xf32>
    %114 = vector.shape_cast %113 : vector<72xf32> to vector<72x1xf32>
    %cst_38 = arith.constant 3.200000e+01 : f32
    %115 = vector.broadcast %cst_38 : f32 to vector<72x1xf32>
    %116 = arith.divf %114, %115 : vector<72x1xf32>
    %117 = vector.broadcast %116 : vector<72x1xf32> to vector<72x32xf32>
    %118 = arith.subf %110, %117 : vector<72x32xf32>
    %119 = arith.mulf %118, %118 : vector<72x32xf32>
    %cst_39 = arith.constant dense<0.000000e+00> : vector<72xf32>
    %120 = vector.multi_reduction <add>, %119, %cst_39 [1] : vector<72x32xf32> to vector<72xf32>
    %121 = vector.shape_cast %120 : vector<72xf32> to vector<72x1xf32>
    %cst_40 = arith.constant 3.200000e+01 : f32
    %122 = vector.broadcast %cst_40 : f32 to vector<72x1xf32>
    %123 = arith.divf %121, %122 : vector<72x1xf32>
    %cst_41 = arith.constant 9.99999974E-6 : f32
    %124 = vector.broadcast %cst_41 : f32 to vector<72x1xf32>
    %125 = arith.addf %123, %124 : vector<72x1xf32>
    %126 = math.rsqrt %125 : vector<72x1xf32>
    %127 = vector.broadcast %126 : vector<72x1xf32> to vector<72x32xf32>
    %128 = arith.mulf %118, %127 : vector<72x32xf32>
    %129 = vector.extract_strided_slice %112 {offsets = [0, 0], sizes = [1, 32], strides = [1, 1]} : vector<2x32xf32> to vector<1x32xf32>
    %130 = vector.broadcast %129 : vector<1x32xf32> to vector<72x32xf32>
    %131 = arith.mulf %128, %130 : vector<72x32xf32>
    %132 = vector.extract_strided_slice %112 {offsets = [1, 0], sizes = [1, 32], strides = [1, 1]} : vector<2x32xf32> to vector<1x32xf32>
    %133 = vector.broadcast %132 : vector<1x32xf32> to vector<72x32xf32>
    %134 = arith.addf %131, %133 : vector<72x32xf32>
    %c2 = arith.constant 2 : index
    %c0_42 = arith.constant 0 : index
    %c0_43 = arith.constant 0 : index
    %135 = vector.load %arg7[%c2, %c0_42, %c0_43] : memref<5x2x32xf32, #tpu.memory_space<vmem>>, vector<1x2x32xf32>
    %136 = vector.shape_cast %135 : vector<1x2x32xf32> to vector<2x32xf32>
    %cst_44 = arith.constant dense<0.000000e+00> : vector<72xf32>
    %137 = vector.multi_reduction <add>, %62, %cst_44 [1] : vector<72x32xf32> to vector<72xf32>
    %138 = vector.shape_cast %137 : vector<72xf32> to vector<72x1xf32>
    %cst_45 = arith.constant 3.200000e+01 : f32
    %139 = vector.broadcast %cst_45 : f32 to vector<72x1xf32>
    %140 = arith.divf %138, %139 : vector<72x1xf32>
    %141 = vector.broadcast %140 : vector<72x1xf32> to vector<72x32xf32>
    %142 = arith.subf %62, %141 : vector<72x32xf32>
    %143 = arith.mulf %142, %142 : vector<72x32xf32>
    %cst_46 = arith.constant dense<0.000000e+00> : vector<72xf32>
    %144 = vector.multi_reduction <add>, %143, %cst_46 [1] : vector<72x32xf32> to vector<72xf32>
    %145 = vector.shape_cast %144 : vector<72xf32> to vector<72x1xf32>
    %cst_47 = arith.constant 3.200000e+01 : f32
    %146 = vector.broadcast %cst_47 : f32 to vector<72x1xf32>
    %147 = arith.divf %145, %146 : vector<72x1xf32>
    %cst_48 = arith.constant 9.99999974E-6 : f32
    %148 = vector.broadcast %cst_48 : f32 to vector<72x1xf32>
    %149 = arith.addf %147, %148 : vector<72x1xf32>
    %150 = math.rsqrt %149 : vector<72x1xf32>
    %151 = vector.broadcast %150 : vector<72x1xf32> to vector<72x32xf32>
    %152 = arith.mulf %142, %151 : vector<72x32xf32>
    %153 = vector.extract_strided_slice %136 {offsets = [0, 0], sizes = [1, 32], strides = [1, 1]} : vector<2x32xf32> to vector<1x32xf32>
    %154 = vector.broadcast %153 : vector<1x32xf32> to vector<72x32xf32>
    %155 = arith.mulf %152, %154 : vector<72x32xf32>
    %156 = vector.extract_strided_slice %136 {offsets = [1, 0], sizes = [1, 32], strides = [1, 1]} : vector<2x32xf32> to vector<1x32xf32>
    %157 = vector.broadcast %156 : vector<1x32xf32> to vector<72x32xf32>
    %158 = arith.addf %155, %157 : vector<72x32xf32>
    %c3 = arith.constant 3 : index
    %c0_49 = arith.constant 0 : index
    %c0_50 = arith.constant 0 : index
    %159 = vector.load %arg7[%c3, %c0_49, %c0_50] : memref<5x2x32xf32, #tpu.memory_space<vmem>>, vector<1x2x32xf32>
    %160 = vector.shape_cast %159 : vector<1x2x32xf32> to vector<2x32xf32>
    %cst_51 = arith.constant dense<0.000000e+00> : vector<72xf32>
    %161 = vector.multi_reduction <add>, %134, %cst_51 [1] : vector<72x32xf32> to vector<72xf32>
    %162 = vector.shape_cast %161 : vector<72xf32> to vector<72x1xf32>
    %cst_52 = arith.constant 3.200000e+01 : f32
    %163 = vector.broadcast %cst_52 : f32 to vector<72x1xf32>
    %164 = arith.divf %162, %163 : vector<72x1xf32>
    %165 = vector.broadcast %164 : vector<72x1xf32> to vector<72x32xf32>
    %166 = arith.subf %134, %165 : vector<72x32xf32>
    %167 = arith.mulf %166, %166 : vector<72x32xf32>
    %cst_53 = arith.constant dense<0.000000e+00> : vector<72xf32>
    %168 = vector.multi_reduction <add>, %167, %cst_53 [1] : vector<72x32xf32> to vector<72xf32>
    %169 = vector.shape_cast %168 : vector<72xf32> to vector<72x1xf32>
    %cst_54 = arith.constant 3.200000e+01 : f32
    %170 = vector.broadcast %cst_54 : f32 to vector<72x1xf32>
    %171 = arith.divf %169, %170 : vector<72x1xf32>
    %cst_55 = arith.constant 9.99999974E-6 : f32
    %172 = vector.broadcast %cst_55 : f32 to vector<72x1xf32>
    %173 = arith.addf %171, %172 : vector<72x1xf32>
    %174 = math.rsqrt %173 : vector<72x1xf32>
    %175 = vector.broadcast %174 : vector<72x1xf32> to vector<72x32xf32>
    %176 = arith.mulf %166, %175 : vector<72x32xf32>
    %177 = vector.extract_strided_slice %160 {offsets = [0, 0], sizes = [1, 32], strides = [1, 1]} : vector<2x32xf32> to vector<1x32xf32>
    %178 = vector.broadcast %177 : vector<1x32xf32> to vector<72x32xf32>
    %179 = arith.mulf %176, %178 : vector<72x32xf32>
    %180 = vector.extract_strided_slice %160 {offsets = [1, 0], sizes = [1, 32], strides = [1, 1]} : vector<2x32xf32> to vector<1x32xf32>
    %181 = vector.broadcast %180 : vector<1x32xf32> to vector<72x32xf32>
    %182 = arith.addf %179, %181 : vector<72x32xf32>
    %c0_56 = arith.constant 0 : index
    %c0_57 = arith.constant 0 : index
    %183 = vector.load %arg8[%c0_56, %c0_57] : memref<32x512xf32, #tpu.memory_space<vmem>>, vector<32x128xf32>
    %cst_58 = arith.constant dense<0.000000e+00> : vector<72x128xf32>
    %184 = tpu.matmul %158, %183, %cst_58 {dimension_numbers = #tpu.dot_dimension_numbers<[1], [0], [0], [1], [0, 0, 1, 1], [], []>} : vector<72x32xf32>, vector<32x128xf32>, vector<72x128xf32> -> vector<72x128xf32>
    %c0_59 = arith.constant 0 : index
    %c128 = arith.constant 128 : index
    %185 = vector.load %arg8[%c0_59, %c128] : memref<32x512xf32, #tpu.memory_space<vmem>>, vector<32x256xf32>
    %cst_60 = arith.constant dense<0.000000e+00> : vector<72x256xf32>
    %186 = tpu.matmul %182, %185, %cst_60 {dimension_numbers = #tpu.dot_dimension_numbers<[1], [0], [0], [1], [0, 0, 1, 1], [], []>} : vector<72x32xf32>, vector<32x256xf32>, vector<72x256xf32> -> vector<72x256xf32>
    %187 = vector.extract_strided_slice %186 {offsets = [0, 0], sizes = [72, 128], strides = [1, 1]} : vector<72x256xf32> to vector<72x128xf32>
    %188 = vector.extract_strided_slice %186 {offsets = [0, 128], sizes = [72, 128], strides = [1, 1]} : vector<72x256xf32> to vector<72x128xf32>
    %189 = vector.shape_cast %184 : vector<72x128xf32> to vector<9x8x128xf32>
    %190 = vector.shape_cast %187 : vector<72x128xf32> to vector<9x8x128xf32>
    %191 = vector.shape_cast %188 : vector<72x128xf32> to vector<9x8x128xf32>
    %192 = tpu.iota {dimensions = array<i32: 0>} : vector<128x8xi32>
    %193 = tpu.iota {dimensions = array<i32: 1>} : vector<128x8xi32>
    %c4_i32 = arith.constant 4 : i32
    %194 = vector.broadcast %c4_i32 : i32 to vector<128x8xi32>
    %195 = arith.shrsi %192, %194 : vector<128x8xi32>
    %196 = arith.cmpi eq, %195, %193 : vector<128x8xi32>
    %197 = arith.extui %196 : vector<128x8xi1> to vector<128x8xi32>
    %198 = arith.sitofp %197 : vector<128x8xi32> to vector<128x8xf32>
    %199 = tpu.iota {dimensions = array<i32: 0>} : vector<8x128xi32>
    %200 = tpu.iota {dimensions = array<i32: 1>} : vector<8x128xi32>
    %c4_i32_61 = arith.constant 4 : i32
    %201 = vector.broadcast %c4_i32_61 : i32 to vector<8x128xi32>
    %202 = arith.shrsi %200, %201 : vector<8x128xi32>
    %203 = arith.cmpi eq, %202, %199 : vector<8x128xi32>
    %204 = arith.extui %203 : vector<8x128xi1> to vector<8x128xi32>
    %205 = arith.sitofp %204 : vector<8x128xi32> to vector<8x128xf32>
    %206 = vector.extract_strided_slice %190 {offsets = [0, 0, 0], sizes = [1, 8, 128], strides = [1, 1, 1]} : vector<9x8x128xf32> to vector<1x8x128xf32>
    %207 = vector.shape_cast %206 : vector<1x8x128xf32> to vector<8x128xf32>
    %208 = vector.shape_cast %207 : vector<8x128xf32> to vector<1x8x128xf32>
    %209 = vector.broadcast %208 : vector<1x8x128xf32> to vector<9x8x128xf32>
    %210 = arith.mulf %189, %209 : vector<9x8x128xf32>
    %211 = vector.shape_cast %210 : vector<9x8x128xf32> to vector<72x128xf32>
    %212 = vector.extract_strided_slice %190 {offsets = [1, 0, 0], sizes = [1, 8, 128], strides = [1, 1, 1]} : vector<9x8x128xf32> to vector<1x8x128xf32>
    %213 = vector.shape_cast %212 : vector<1x8x128xf32> to vector<8x128xf32>
    %214 = vector.shape_cast %213 : vector<8x128xf32> to vector<1x8x128xf32>
    %215 = vector.broadcast %214 : vector<1x8x128xf32> to vector<9x8x128xf32>
    %216 = arith.mulf %189, %215 : vector<9x8x128xf32>
    %217 = vector.shape_cast %216 : vector<9x8x128xf32> to vector<72x128xf32>
    %218 = vector.extract_strided_slice %190 {offsets = [2, 0, 0], sizes = [1, 8, 128], strides = [1, 1, 1]} : vector<9x8x128xf32> to vector<1x8x128xf32>
    %219 = vector.shape_cast %218 : vector<1x8x128xf32> to vector<8x128xf32>
    %220 = vector.shape_cast %219 : vector<8x128xf32> to vector<1x8x128xf32>
    %221 = vector.broadcast %220 : vector<1x8x128xf32> to vector<9x8x128xf32>
    %222 = arith.mulf %189, %221 : vector<9x8x128xf32>
    %223 = vector.shape_cast %222 : vector<9x8x128xf32> to vector<72x128xf32>
    %224 = vector.extract_strided_slice %190 {offsets = [3, 0, 0], sizes = [1, 8, 128], strides = [1, 1, 1]} : vector<9x8x128xf32> to vector<1x8x128xf32>
    %225 = vector.shape_cast %224 : vector<1x8x128xf32> to vector<8x128xf32>
    %226 = vector.shape_cast %225 : vector<8x128xf32> to vector<1x8x128xf32>
    %227 = vector.broadcast %226 : vector<1x8x128xf32> to vector<9x8x128xf32>
    %228 = arith.mulf %189, %227 : vector<9x8x128xf32>
    %229 = vector.shape_cast %228 : vector<9x8x128xf32> to vector<72x128xf32>
    %230 = vector.extract_strided_slice %190 {offsets = [4, 0, 0], sizes = [1, 8, 128], strides = [1, 1, 1]} : vector<9x8x128xf32> to vector<1x8x128xf32>
    %231 = vector.shape_cast %230 : vector<1x8x128xf32> to vector<8x128xf32>
    %232 = vector.shape_cast %231 : vector<8x128xf32> to vector<1x8x128xf32>
    %233 = vector.broadcast %232 : vector<1x8x128xf32> to vector<9x8x128xf32>
    %234 = arith.mulf %189, %233 : vector<9x8x128xf32>
    %235 = vector.shape_cast %234 : vector<9x8x128xf32> to vector<72x128xf32>
    %236 = vector.extract_strided_slice %190 {offsets = [5, 0, 0], sizes = [1, 8, 128], strides = [1, 1, 1]} : vector<9x8x128xf32> to vector<1x8x128xf32>
    %237 = vector.shape_cast %236 : vector<1x8x128xf32> to vector<8x128xf32>
    %238 = vector.shape_cast %237 : vector<8x128xf32> to vector<1x8x128xf32>
    %239 = vector.broadcast %238 : vector<1x8x128xf32> to vector<9x8x128xf32>
    %240 = arith.mulf %189, %239 : vector<9x8x128xf32>
    %241 = vector.shape_cast %240 : vector<9x8x128xf32> to vector<72x128xf32>
    %242 = vector.extract_strided_slice %190 {offsets = [6, 0, 0], sizes = [1, 8, 128], strides = [1, 1, 1]} : vector<9x8x128xf32> to vector<1x8x128xf32>
    %243 = vector.shape_cast %242 : vector<1x8x128xf32> to vector<8x128xf32>
    %244 = vector.shape_cast %243 : vector<8x128xf32> to vector<1x8x128xf32>
    %245 = vector.broadcast %244 : vector<1x8x128xf32> to vector<9x8x128xf32>
    %246 = arith.mulf %189, %245 : vector<9x8x128xf32>
    %247 = vector.shape_cast %246 : vector<9x8x128xf32> to vector<72x128xf32>
    %248 = vector.extract_strided_slice %190 {offsets = [7, 0, 0], sizes = [1, 8, 128], strides = [1, 1, 1]} : vector<9x8x128xf32> to vector<1x8x128xf32>
    %249 = vector.shape_cast %248 : vector<1x8x128xf32> to vector<8x128xf32>
    %250 = vector.shape_cast %249 : vector<8x128xf32> to vector<1x8x128xf32>
    %251 = vector.broadcast %250 : vector<1x8x128xf32> to vector<9x8x128xf32>
    %252 = arith.mulf %189, %251 : vector<9x8x128xf32>
    %253 = vector.shape_cast %252 : vector<9x8x128xf32> to vector<72x128xf32>
    %254 = vector.extract_strided_slice %190 {offsets = [8, 0, 0], sizes = [1, 8, 128], strides = [1, 1, 1]} : vector<9x8x128xf32> to vector<1x8x128xf32>
    %255 = vector.shape_cast %254 : vector<1x8x128xf32> to vector<8x128xf32>
    %256 = vector.shape_cast %255 : vector<8x128xf32> to vector<1x8x128xf32>
    %257 = vector.broadcast %256 : vector<1x8x128xf32> to vector<9x8x128xf32>
    %258 = arith.mulf %189, %257 : vector<9x8x128xf32>
    %259 = vector.shape_cast %258 : vector<9x8x128xf32> to vector<72x128xf32>
    %260 = tpu.concatenate %211, %217, %223, %229, %235, %241, %247, %253, %259 in 0 : vector<72x128xf32>, vector<72x128xf32>, vector<72x128xf32>, vector<72x128xf32>, vector<72x128xf32>, vector<72x128xf32>, vector<72x128xf32>, vector<72x128xf32>, vector<72x128xf32> -> vector<648x128xf32>
    %cst_62 = arith.constant dense<0.000000e+00> : vector<648x8xf32>
    %261 = tpu.matmul %260, %198, %cst_62 {dimension_numbers = #tpu.dot_dimension_numbers<[1], [0], [0], [1], [0, 0, 1, 1], [], []>} : vector<648x128xf32>, vector<128x8xf32>, vector<648x8xf32> -> vector<648x8xf32>
    %262 = vector.shape_cast %261 : vector<648x8xf32> to vector<9x72x8xf32>
    %cst_63 = arith.constant dense<0xFF800000> : vector<72x8xf32>
    %263 = vector.multi_reduction <maximumf>, %262, %cst_63 [0] : vector<9x72x8xf32> to vector<72x8xf32>
    %264 = vector.shape_cast %263 : vector<72x8xf32> to vector<1x72x8xf32>
    %265 = vector.broadcast %264 : vector<1x72x8xf32> to vector<9x72x8xf32>
    %266 = arith.subf %262, %265 : vector<9x72x8xf32>
    %267 = math.exp %266 : vector<9x72x8xf32>
    %cst_64 = arith.constant dense<0.000000e+00> : vector<72x8xf32>
    %268 = vector.multi_reduction <add>, %267, %cst_64 [0] : vector<9x72x8xf32> to vector<72x8xf32>
    %269 = tpu.reciprocal %268 {approx = true} : vector<72x8xf32> -> vector<72x8xf32>
    %270 = vector.shape_cast %269 : vector<72x8xf32> to vector<1x72x8xf32>
    %271 = vector.broadcast %270 : vector<1x72x8xf32> to vector<9x72x8xf32>
    %272 = arith.mulf %267, %271 : vector<9x72x8xf32>
    %273 = vector.shape_cast %272 : vector<9x72x8xf32> to vector<648x8xf32>
    %cst_65 = arith.constant dense<0.000000e+00> : vector<648x128xf32>
    %274 = tpu.matmul %273, %205, %cst_65 {dimension_numbers = #tpu.dot_dimension_numbers<[1], [0], [0], [1], [0, 0, 1, 1], [], []>} : vector<648x8xf32>, vector<8x128xf32>, vector<648x128xf32> -> vector<648x128xf32>
    %275 = vector.shape_cast %274 : vector<648x128xf32> to vector<9x72x128xf32>
    %cst_66 = arith.constant 0.000000e+00 : f32
    %276 = vector.broadcast %cst_66 : f32 to vector<72x128xf32>
    %277 = vector.extract_strided_slice %191 {offsets = [0, 0, 0], sizes = [1, 8, 128], strides = [1, 1, 1]} : vector<9x8x128xf32> to vector<1x8x128xf32>
    %278 = vector.shape_cast %277 : vector<1x8x128xf32> to vector<8x128xf32>
    %279 = vector.shape_cast %278 : vector<8x128xf32> to vector<1x8x128xf32>
    %280 = vector.shape_cast %279 : vector<1x8x128xf32> to vector<1x8x128xf32>
    %281 = vector.broadcast %280 : vector<1x8x128xf32> to vector<9x8x128xf32>
    %282 = vector.shape_cast %281 : vector<9x8x128xf32> to vector<72x128xf32>
    %283 = vector.extract_strided_slice %275 {offsets = [0, 0, 0], sizes = [1, 72, 128], strides = [1, 1, 1]} : vector<9x72x128xf32> to vector<1x72x128xf32>
    %284 = vector.shape_cast %283 : vector<1x72x128xf32> to vector<72x128xf32>
    %285 = arith.mulf %284, %282 : vector<72x128xf32>
    %286 = arith.addf %276, %285 : vector<72x128xf32>
    %287 = vector.extract_strided_slice %191 {offsets = [1, 0, 0], sizes = [1, 8, 128], strides = [1, 1, 1]} : vector<9x8x128xf32> to vector<1x8x128xf32>
    %288 = vector.shape_cast %287 : vector<1x8x128xf32> to vector<8x128xf32>
    %289 = vector.shape_cast %288 : vector<8x128xf32> to vector<1x8x128xf32>
    %290 = vector.shape_cast %289 : vector<1x8x128xf32> to vector<1x8x128xf32>
    %291 = vector.broadcast %290 : vector<1x8x128xf32> to vector<9x8x128xf32>
    %292 = vector.shape_cast %291 : vector<9x8x128xf32> to vector<72x128xf32>
    %293 = vector.extract_strided_slice %275 {offsets = [1, 0, 0], sizes = [1, 72, 128], strides = [1, 1, 1]} : vector<9x72x128xf32> to vector<1x72x128xf32>
    %294 = vector.shape_cast %293 : vector<1x72x128xf32> to vector<72x128xf32>
    %295 = arith.mulf %294, %292 : vector<72x128xf32>
    %296 = arith.addf %286, %295 : vector<72x128xf32>
    %297 = vector.extract_strided_slice %191 {offsets = [2, 0, 0], sizes = [1, 8, 128], strides = [1, 1, 1]} : vector<9x8x128xf32> to vector<1x8x128xf32>
    %298 = vector.shape_cast %297 : vector<1x8x128xf32> to vector<8x128xf32>
    %299 = vector.shape_cast %298 : vector<8x128xf32> to vector<1x8x128xf32>
    %300 = vector.shape_cast %299 : vector<1x8x128xf32> to vector<1x8x128xf32>
    %301 = vector.broadcast %300 : vector<1x8x128xf32> to vector<9x8x128xf32>
    %302 = vector.shape_cast %301 : vector<9x8x128xf32> to vector<72x128xf32>
    %303 = vector.extract_strided_slice %275 {offsets = [2, 0, 0], sizes = [1, 72, 128], strides = [1, 1, 1]} : vector<9x72x128xf32> to vector<1x72x128xf32>
    %304 = vector.shape_cast %303 : vector<1x72x128xf32> to vector<72x128xf32>
    %305 = arith.mulf %304, %302 : vector<72x128xf32>
    %306 = arith.addf %296, %305 : vector<72x128xf32>
    %307 = vector.extract_strided_slice %191 {offsets = [3, 0, 0], sizes = [1, 8, 128], strides = [1, 1, 1]} : vector<9x8x128xf32> to vector<1x8x128xf32>
    %308 = vector.shape_cast %307 : vector<1x8x128xf32> to vector<8x128xf32>
    %309 = vector.shape_cast %308 : vector<8x128xf32> to vector<1x8x128xf32>
    %310 = vector.shape_cast %309 : vector<1x8x128xf32> to vector<1x8x128xf32>
    %311 = vector.broadcast %310 : vector<1x8x128xf32> to vector<9x8x128xf32>
    %312 = vector.shape_cast %311 : vector<9x8x128xf32> to vector<72x128xf32>
    %313 = vector.extract_strided_slice %275 {offsets = [3, 0, 0], sizes = [1, 72, 128], strides = [1, 1, 1]} : vector<9x72x128xf32> to vector<1x72x128xf32>
    %314 = vector.shape_cast %313 : vector<1x72x128xf32> to vector<72x128xf32>
    %315 = arith.mulf %314, %312 : vector<72x128xf32>
    %316 = arith.addf %306, %315 : vector<72x128xf32>
    %317 = vector.extract_strided_slice %191 {offsets = [4, 0, 0], sizes = [1, 8, 128], strides = [1, 1, 1]} : vector<9x8x128xf32> to vector<1x8x128xf32>
    %318 = vector.shape_cast %317 : vector<1x8x128xf32> to vector<8x128xf32>
    %319 = vector.shape_cast %318 : vector<8x128xf32> to vector<1x8x128xf32>
    %320 = vector.shape_cast %319 : vector<1x8x128xf32> to vector<1x8x128xf32>
    %321 = vector.broadcast %320 : vector<1x8x128xf32> to vector<9x8x128xf32>
    %322 = vector.shape_cast %321 : vector<9x8x128xf32> to vector<72x128xf32>
    %323 = vector.extract_strided_slice %275 {offsets = [4, 0, 0], sizes = [1, 72, 128], strides = [1, 1, 1]} : vector<9x72x128xf32> to vector<1x72x128xf32>
    %324 = vector.shape_cast %323 : vector<1x72x128xf32> to vector<72x128xf32>
    %325 = arith.mulf %324, %322 : vector<72x128xf32>
    %326 = arith.addf %316, %325 : vector<72x128xf32>
    %327 = vector.extract_strided_slice %191 {offsets = [5, 0, 0], sizes = [1, 8, 128], strides = [1, 1, 1]} : vector<9x8x128xf32> to vector<1x8x128xf32>
    %328 = vector.shape_cast %327 : vector<1x8x128xf32> to vector<8x128xf32>
    %329 = vector.shape_cast %328 : vector<8x128xf32> to vector<1x8x128xf32>
    %330 = vector.shape_cast %329 : vector<1x8x128xf32> to vector<1x8x128xf32>
    %331 = vector.broadcast %330 : vector<1x8x128xf32> to vector<9x8x128xf32>
    %332 = vector.shape_cast %331 : vector<9x8x128xf32> to vector<72x128xf32>
    %333 = vector.extract_strided_slice %275 {offsets = [5, 0, 0], sizes = [1, 72, 128], strides = [1, 1, 1]} : vector<9x72x128xf32> to vector<1x72x128xf32>
    %334 = vector.shape_cast %333 : vector<1x72x128xf32> to vector<72x128xf32>
    %335 = arith.mulf %334, %332 : vector<72x128xf32>
    %336 = arith.addf %326, %335 : vector<72x128xf32>
    %337 = vector.extract_strided_slice %191 {offsets = [6, 0, 0], sizes = [1, 8, 128], strides = [1, 1, 1]} : vector<9x8x128xf32> to vector<1x8x128xf32>
    %338 = vector.shape_cast %337 : vector<1x8x128xf32> to vector<8x128xf32>
    %339 = vector.shape_cast %338 : vector<8x128xf32> to vector<1x8x128xf32>
    %340 = vector.shape_cast %339 : vector<1x8x128xf32> to vector<1x8x128xf32>
    %341 = vector.broadcast %340 : vector<1x8x128xf32> to vector<9x8x128xf32>
    %342 = vector.shape_cast %341 : vector<9x8x128xf32> to vector<72x128xf32>
    %343 = vector.extract_strided_slice %275 {offsets = [6, 0, 0], sizes = [1, 72, 128], strides = [1, 1, 1]} : vector<9x72x128xf32> to vector<1x72x128xf32>
    %344 = vector.shape_cast %343 : vector<1x72x128xf32> to vector<72x128xf32>
    %345 = arith.mulf %344, %342 : vector<72x128xf32>
    %346 = arith.addf %336, %345 : vector<72x128xf32>
    %347 = vector.extract_strided_slice %191 {offsets = [7, 0, 0], sizes = [1, 8, 128], strides = [1, 1, 1]} : vector<9x8x128xf32> to vector<1x8x128xf32>
    %348 = vector.shape_cast %347 : vector<1x8x128xf32> to vector<8x128xf32>
    %349 = vector.shape_cast %348 : vector<8x128xf32> to vector<1x8x128xf32>
    %350 = vector.shape_cast %349 : vector<1x8x128xf32> to vector<1x8x128xf32>
    %351 = vector.broadcast %350 : vector<1x8x128xf32> to vector<9x8x128xf32>
    %352 = vector.shape_cast %351 : vector<9x8x128xf32> to vector<72x128xf32>
    %353 = vector.extract_strided_slice %275 {offsets = [7, 0, 0], sizes = [1, 72, 128], strides = [1, 1, 1]} : vector<9x72x128xf32> to vector<1x72x128xf32>
    %354 = vector.shape_cast %353 : vector<1x72x128xf32> to vector<72x128xf32>
    %355 = arith.mulf %354, %352 : vector<72x128xf32>
    %356 = arith.addf %346, %355 : vector<72x128xf32>
    %357 = vector.extract_strided_slice %191 {offsets = [8, 0, 0], sizes = [1, 8, 128], strides = [1, 1, 1]} : vector<9x8x128xf32> to vector<1x8x128xf32>
    %358 = vector.shape_cast %357 : vector<1x8x128xf32> to vector<8x128xf32>
    %359 = vector.shape_cast %358 : vector<8x128xf32> to vector<1x8x128xf32>
    %360 = vector.shape_cast %359 : vector<1x8x128xf32> to vector<1x8x128xf32>
    %361 = vector.broadcast %360 : vector<1x8x128xf32> to vector<9x8x128xf32>
    %362 = vector.shape_cast %361 : vector<9x8x128xf32> to vector<72x128xf32>
    %363 = vector.extract_strided_slice %275 {offsets = [8, 0, 0], sizes = [1, 72, 128], strides = [1, 1, 1]} : vector<9x72x128xf32> to vector<1x72x128xf32>
    %364 = vector.shape_cast %363 : vector<1x72x128xf32> to vector<72x128xf32>
    %365 = arith.mulf %364, %362 : vector<72x128xf32>
    %366 = arith.addf %356, %365 : vector<72x128xf32>
    %c0_67 = arith.constant 0 : index
    %c0_68 = arith.constant 0 : index
    %367 = vector.load %arg9[%c0_67, %c0_68] : memref<128x64xf32, #tpu.memory_space<vmem>>, vector<128x32xf32>
    %cst_69 = arith.constant dense<0.000000e+00> : vector<72x32xf32>
    %368 = tpu.matmul %366, %367, %cst_69 {dimension_numbers = #tpu.dot_dimension_numbers<[1], [0], [0], [1], [0, 0, 1, 1], [], []>} : vector<72x128xf32>, vector<128x32xf32>, vector<72x32xf32> -> vector<72x32xf32>
    %369 = arith.addf %62, %368 : vector<72x32xf32>
    %c0_70 = arith.constant 0 : index
    %c0_71 = arith.constant 0 : index
    %370 = vector.load %arg11[%c0_70, %c0_71] : memref<1x192xf32, #tpu.memory_space<vmem>>, vector<1x32xf32>
    %371 = vector.broadcast %370 : vector<1x32xf32> to vector<72x32xf32>
    %372 = arith.addf %369, %371 : vector<72x32xf32>
    %c4 = arith.constant 4 : index
    %c0_72 = arith.constant 0 : index
    %c0_73 = arith.constant 0 : index
    %373 = vector.load %arg7[%c4, %c0_72, %c0_73] : memref<5x2x32xf32, #tpu.memory_space<vmem>>, vector<1x2x32xf32>
    %374 = vector.shape_cast %373 : vector<1x2x32xf32> to vector<2x32xf32>
    %cst_74 = arith.constant dense<0.000000e+00> : vector<72xf32>
    %375 = vector.multi_reduction <add>, %372, %cst_74 [1] : vector<72x32xf32> to vector<72xf32>
    %376 = vector.shape_cast %375 : vector<72xf32> to vector<72x1xf32>
    %cst_75 = arith.constant 3.200000e+01 : f32
    %377 = vector.broadcast %cst_75 : f32 to vector<72x1xf32>
    %378 = arith.divf %376, %377 : vector<72x1xf32>
    %379 = vector.broadcast %378 : vector<72x1xf32> to vector<72x32xf32>
    %380 = arith.subf %372, %379 : vector<72x32xf32>
    %381 = arith.mulf %380, %380 : vector<72x32xf32>
    %cst_76 = arith.constant dense<0.000000e+00> : vector<72xf32>
    %382 = vector.multi_reduction <add>, %381, %cst_76 [1] : vector<72x32xf32> to vector<72xf32>
    %383 = vector.shape_cast %382 : vector<72xf32> to vector<72x1xf32>
    %cst_77 = arith.constant 3.200000e+01 : f32
    %384 = vector.broadcast %cst_77 : f32 to vector<72x1xf32>
    %385 = arith.divf %383, %384 : vector<72x1xf32>
    %cst_78 = arith.constant 9.99999974E-6 : f32
    %386 = vector.broadcast %cst_78 : f32 to vector<72x1xf32>
    %387 = arith.addf %385, %386 : vector<72x1xf32>
    %388 = math.rsqrt %387 : vector<72x1xf32>
    %389 = vector.broadcast %388 : vector<72x1xf32> to vector<72x32xf32>
    %390 = arith.mulf %380, %389 : vector<72x32xf32>
    %391 = vector.extract_strided_slice %374 {offsets = [0, 0], sizes = [1, 32], strides = [1, 1]} : vector<2x32xf32> to vector<1x32xf32>
    %392 = vector.broadcast %391 : vector<1x32xf32> to vector<72x32xf32>
    %393 = arith.mulf %390, %392 : vector<72x32xf32>
    %394 = vector.extract_strided_slice %374 {offsets = [1, 0], sizes = [1, 32], strides = [1, 1]} : vector<2x32xf32> to vector<1x32xf32>
    %395 = vector.broadcast %394 : vector<1x32xf32> to vector<72x32xf32>
    %396 = arith.addf %393, %395 : vector<72x32xf32>
    %c0_79 = arith.constant 0 : index
    %c384 = arith.constant 384 : index
    %397 = vector.load %arg8[%c0_79, %c384] : memref<32x512xf32, #tpu.memory_space<vmem>>, vector<32x128xf32>
    %cst_80 = arith.constant dense<0.000000e+00> : vector<72x128xf32>
    %398 = tpu.matmul %396, %397, %cst_80 {dimension_numbers = #tpu.dot_dimension_numbers<[1], [0], [0], [1], [0, 0, 1, 1], [], []>} : vector<72x32xf32>, vector<32x128xf32>, vector<72x128xf32> -> vector<72x128xf32>
    %c0_81 = arith.constant 0 : index
    %c32 = arith.constant 32 : index
    %399 = vector.load %arg11[%c0_81, %c32] : memref<1x192xf32, #tpu.memory_space<vmem>>, vector<1x128xf32>
    %400 = vector.broadcast %399 : vector<1x128xf32> to vector<72x128xf32>
    %401 = arith.addf %398, %400 : vector<72x128xf32>
    %402 = arith.mulf %401, %401 : vector<72x128xf32>
    %403 = arith.mulf %401, %402 : vector<72x128xf32>
    %cst_82 = arith.constant 4.471500e-02 : f32
    %404 = vector.broadcast %cst_82 : f32 to vector<72x128xf32>
    %405 = arith.mulf %404, %403 : vector<72x128xf32>
    %406 = arith.addf %401, %405 : vector<72x128xf32>
    %cst_83 = arith.constant 0.797884583 : f32
    %407 = vector.broadcast %cst_83 : f32 to vector<72x128xf32>
    %408 = arith.mulf %407, %406 : vector<72x128xf32>
    %409 = math.tanh %408 : vector<72x128xf32>
    %cst_84 = arith.constant 1.000000e+00 : f32
    %410 = vector.broadcast %cst_84 : f32 to vector<72x128xf32>
    %411 = arith.addf %410, %409 : vector<72x128xf32>
    %cst_85 = arith.constant 5.000000e-01 : f32
    %412 = vector.broadcast %cst_85 : f32 to vector<72x128xf32>
    %413 = arith.mulf %412, %411 : vector<72x128xf32>
    %414 = arith.mulf %401, %413 : vector<72x128xf32>
    %c0_86 = arith.constant 0 : index
    %c32_87 = arith.constant 32 : index
    %415 = vector.load %arg9[%c0_86, %c32_87] : memref<128x64xf32, #tpu.memory_space<vmem>>, vector<128x32xf32>
    %cst_88 = arith.constant dense<0.000000e+00> : vector<72x32xf32>
    %416 = tpu.matmul %414, %415, %cst_88 {dimension_numbers = #tpu.dot_dimension_numbers<[1], [0], [0], [1], [0, 0, 1, 1], [], []>} : vector<72x128xf32>, vector<128x32xf32>, vector<72x32xf32> -> vector<72x32xf32>
    %c0_89 = arith.constant 0 : index
    %c160 = arith.constant 160 : index
    %417 = vector.load %arg11[%c0_89, %c160] : memref<1x192xf32, #tpu.memory_space<vmem>>, vector<1x32xf32>
    %418 = vector.broadcast %417 : vector<1x32xf32> to vector<72x32xf32>
    %419 = arith.addf %416, %418 : vector<72x32xf32>
    %420 = arith.addf %372, %419 : vector<72x32xf32>
    %c0_90 = arith.constant 0 : index
    %c0_91 = arith.constant 0 : index
    %c0_92 = arith.constant 0 : index
    %421 = vector.load %arg12[%c0_90, %c0_91, %c0_92] : memref<6x32x128xf32, #tpu.memory_space<vmem>>, vector<1x32x128xf32>
    %422 = vector.shape_cast %421 : vector<1x32x128xf32> to vector<32x128xf32>
    %cst_93 = arith.constant dense<0.000000e+00> : vector<72x128xf32>
    %423 = tpu.matmul %420, %422, %cst_93 {dimension_numbers = #tpu.dot_dimension_numbers<[1], [0], [0], [1], [0, 0, 1, 1], [], []>} : vector<72x32xf32>, vector<32x128xf32>, vector<72x128xf32> -> vector<72x128xf32>
    %c0_94 = arith.constant 0 : index
    %c0_95 = arith.constant 0 : index
    %c0_96 = arith.constant 0 : index
    %424 = vector.load %arg13[%c0_94, %c0_95, %c0_96] : memref<2x1x128xf32, #tpu.memory_space<vmem>>, vector<1x1x128xf32>
    %425 = vector.shape_cast %424 : vector<1x1x128xf32> to vector<1x128xf32>
    %426 = vector.broadcast %425 : vector<1x128xf32> to vector<72x128xf32>
    %427 = arith.addf %423, %426 : vector<72x128xf32>
    %c1_97 = arith.constant 1 : index
    %c0_98 = arith.constant 0 : index
    %c0_99 = arith.constant 0 : index
    %428 = vector.load %arg12[%c1_97, %c0_98, %c0_99] : memref<6x32x128xf32, #tpu.memory_space<vmem>>, vector<1x32x128xf32>
    %429 = vector.shape_cast %428 : vector<1x32x128xf32> to vector<32x128xf32>
    %cst_100 = arith.constant dense<0.000000e+00> : vector<72x128xf32>
    %430 = tpu.matmul %420, %429, %cst_100 {dimension_numbers = #tpu.dot_dimension_numbers<[1], [0], [0], [1], [0, 0, 1, 1], [], []>} : vector<72x32xf32>, vector<32x128xf32>, vector<72x128xf32> -> vector<72x128xf32>
    %c2_101 = arith.constant 2 : index
    %c0_102 = arith.constant 0 : index
    %c0_103 = arith.constant 0 : index
    %431 = vector.load %arg12[%c2_101, %c0_102, %c0_103] : memref<6x32x128xf32, #tpu.memory_space<vmem>>, vector<1x32x128xf32>
    %432 = vector.shape_cast %431 : vector<1x32x128xf32> to vector<32x128xf32>
    %cst_104 = arith.constant 0.000000e+00 : f32
    %433 = vector.broadcast %cst_104 : f32 to vector<8x32xf32>
    %cst_105 = arith.constant 0.000000e+00 : f32
    %434 = vector.broadcast %cst_105 : f32 to vector<8x32xf32>
    %435 = vector.extract_strided_slice %427 {offsets = [0, 0], sizes = [8, 128], strides = [1, 1]} : vector<72x128xf32> to vector<8x128xf32>
    %436 = vector.extract_strided_slice %430 {offsets = [64, 0], sizes = [8, 128], strides = [1, 1]} : vector<72x128xf32> to vector<8x128xf32>
    %437 = arith.addf %435, %436 : vector<8x128xf32>
    %cst_106 = arith.constant dense<0.000000e+00> : vector<8x128xf32>
    %438 = tpu.matmul %433, %432, %cst_106 {dimension_numbers = #tpu.dot_dimension_numbers<[1], [0], [0], [1], [0, 0, 1, 1], [], []>} : vector<8x32xf32>, vector<32x128xf32>, vector<8x128xf32> -> vector<8x128xf32>
    %439 = arith.addf %437, %438 : vector<8x128xf32>
    %440 = vector.extract_strided_slice %439 {offsets = [0, 0], sizes = [8, 96], strides = [1, 1]} : vector<8x128xf32> to vector<8x96xf32>
    %441 = arith.negf %440 : vector<8x96xf32>
    %442 = math.exp %441 : vector<8x96xf32>
    %cst_107 = arith.constant 1.000000e+00 : f32
    %443 = vector.broadcast %cst_107 : f32 to vector<8x96xf32>
    %444 = arith.addf %443, %442 : vector<8x96xf32>
    %445 = arith.divf %443, %444 : vector<8x96xf32>
    %446 = vector.extract_strided_slice %439 {offsets = [0, 96], sizes = [8, 32], strides = [1, 1]} : vector<8x128xf32> to vector<8x32xf32>
    %447 = math.tanh %446 : vector<8x32xf32>
    %448 = vector.extract_strided_slice %445 {offsets = [0, 0], sizes = [8, 32], strides = [1, 1]} : vector<8x96xf32> to vector<8x32xf32>
    %449 = vector.extract_strided_slice %445 {offsets = [0, 32], sizes = [8, 32], strides = [1, 1]} : vector<8x96xf32> to vector<8x32xf32>
    %450 = vector.extract_strided_slice %445 {offsets = [0, 64], sizes = [8, 32], strides = [1, 1]} : vector<8x96xf32> to vector<8x32xf32>
    %451 = arith.mulf %449, %434 : vector<8x32xf32>
    %452 = arith.mulf %448, %447 : vector<8x32xf32>
    %453 = arith.addf %451, %452 : vector<8x32xf32>
    %454 = math.tanh %453 : vector<8x32xf32>
    %455 = arith.mulf %450, %454 : vector<8x32xf32>
    %456 = vector.extract_strided_slice %455 {offsets = [0, 0], sizes = [8, 16], strides = [1, 1]} : vector<8x32xf32> to vector<8x16xf32>
    %457 = vector.extract_strided_slice %455 {offsets = [0, 16], sizes = [8, 16], strides = [1, 1]} : vector<8x32xf32> to vector<8x16xf32>
    %458 = vector.extract_strided_slice %427 {offsets = [8, 0], sizes = [8, 128], strides = [1, 1]} : vector<72x128xf32> to vector<8x128xf32>
    %459 = vector.extract_strided_slice %430 {offsets = [56, 0], sizes = [8, 128], strides = [1, 1]} : vector<72x128xf32> to vector<8x128xf32>
    %460 = arith.addf %458, %459 : vector<8x128xf32>
    %cst_108 = arith.constant dense<0.000000e+00> : vector<8x128xf32>
    %461 = tpu.matmul %455, %432, %cst_108 {dimension_numbers = #tpu.dot_dimension_numbers<[1], [0], [0], [1], [0, 0, 1, 1], [], []>} : vector<8x32xf32>, vector<32x128xf32>, vector<8x128xf32> -> vector<8x128xf32>
    %462 = arith.addf %460, %461 : vector<8x128xf32>
    %463 = vector.extract_strided_slice %462 {offsets = [0, 0], sizes = [8, 96], strides = [1, 1]} : vector<8x128xf32> to vector<8x96xf32>
    %464 = arith.negf %463 : vector<8x96xf32>
    %465 = math.exp %464 : vector<8x96xf32>
    %cst_109 = arith.constant 1.000000e+00 : f32
    %466 = vector.broadcast %cst_109 : f32 to vector<8x96xf32>
    %467 = arith.addf %466, %465 : vector<8x96xf32>
    %468 = arith.divf %466, %467 : vector<8x96xf32>
    %469 = vector.extract_strided_slice %462 {offsets = [0, 96], sizes = [8, 32], strides = [1, 1]} : vector<8x128xf32> to vector<8x32xf32>
    %470 = math.tanh %469 : vector<8x32xf32>
    %471 = vector.extract_strided_slice %468 {offsets = [0, 0], sizes = [8, 32], strides = [1, 1]} : vector<8x96xf32> to vector<8x32xf32>
    %472 = vector.extract_strided_slice %468 {offsets = [0, 32], sizes = [8, 32], strides = [1, 1]} : vector<8x96xf32> to vector<8x32xf32>
    %473 = vector.extract_strided_slice %468 {offsets = [0, 64], sizes = [8, 32], strides = [1, 1]} : vector<8x96xf32> to vector<8x32xf32>
    %474 = arith.mulf %472, %453 : vector<8x32xf32>
    %475 = arith.mulf %471, %470 : vector<8x32xf32>
    %476 = arith.addf %474, %475 : vector<8x32xf32>
    %477 = math.tanh %476 : vector<8x32xf32>
    %478 = arith.mulf %473, %477 : vector<8x32xf32>
    %479 = vector.extract_strided_slice %478 {offsets = [0, 0], sizes = [8, 16], strides = [1, 1]} : vector<8x32xf32> to vector<8x16xf32>
    %480 = vector.extract_strided_slice %478 {offsets = [0, 16], sizes = [8, 16], strides = [1, 1]} : vector<8x32xf32> to vector<8x16xf32>
    %481 = vector.extract_strided_slice %427 {offsets = [16, 0], sizes = [8, 128], strides = [1, 1]} : vector<72x128xf32> to vector<8x128xf32>
    %482 = vector.extract_strided_slice %430 {offsets = [48, 0], sizes = [8, 128], strides = [1, 1]} : vector<72x128xf32> to vector<8x128xf32>
    %483 = arith.addf %481, %482 : vector<8x128xf32>
    %cst_110 = arith.constant dense<0.000000e+00> : vector<8x128xf32>
    %484 = tpu.matmul %478, %432, %cst_110 {dimension_numbers = #tpu.dot_dimension_numbers<[1], [0], [0], [1], [0, 0, 1, 1], [], []>} : vector<8x32xf32>, vector<32x128xf32>, vector<8x128xf32> -> vector<8x128xf32>
    %485 = arith.addf %483, %484 : vector<8x128xf32>
    %486 = vector.extract_strided_slice %485 {offsets = [0, 0], sizes = [8, 96], strides = [1, 1]} : vector<8x128xf32> to vector<8x96xf32>
    %487 = arith.negf %486 : vector<8x96xf32>
    %488 = math.exp %487 : vector<8x96xf32>
    %cst_111 = arith.constant 1.000000e+00 : f32
    %489 = vector.broadcast %cst_111 : f32 to vector<8x96xf32>
    %490 = arith.addf %489, %488 : vector<8x96xf32>
    %491 = arith.divf %489, %490 : vector<8x96xf32>
    %492 = vector.extract_strided_slice %485 {offsets = [0, 96], sizes = [8, 32], strides = [1, 1]} : vector<8x128xf32> to vector<8x32xf32>
    %493 = math.tanh %492 : vector<8x32xf32>
    %494 = vector.extract_strided_slice %491 {offsets = [0, 0], sizes = [8, 32], strides = [1, 1]} : vector<8x96xf32> to vector<8x32xf32>
    %495 = vector.extract_strided_slice %491 {offsets = [0, 32], sizes = [8, 32], strides = [1, 1]} : vector<8x96xf32> to vector<8x32xf32>
    %496 = vector.extract_strided_slice %491 {offsets = [0, 64], sizes = [8, 32], strides = [1, 1]} : vector<8x96xf32> to vector<8x32xf32>
    %497 = arith.mulf %495, %476 : vector<8x32xf32>
    %498 = arith.mulf %494, %493 : vector<8x32xf32>
    %499 = arith.addf %497, %498 : vector<8x32xf32>
    %500 = math.tanh %499 : vector<8x32xf32>
    %501 = arith.mulf %496, %500 : vector<8x32xf32>
    %502 = vector.extract_strided_slice %501 {offsets = [0, 0], sizes = [8, 16], strides = [1, 1]} : vector<8x32xf32> to vector<8x16xf32>
    %503 = vector.extract_strided_slice %501 {offsets = [0, 16], sizes = [8, 16], strides = [1, 1]} : vector<8x32xf32> to vector<8x16xf32>
    %504 = vector.extract_strided_slice %427 {offsets = [24, 0], sizes = [8, 128], strides = [1, 1]} : vector<72x128xf32> to vector<8x128xf32>
    %505 = vector.extract_strided_slice %430 {offsets = [40, 0], sizes = [8, 128], strides = [1, 1]} : vector<72x128xf32> to vector<8x128xf32>
    %506 = arith.addf %504, %505 : vector<8x128xf32>
    %cst_112 = arith.constant dense<0.000000e+00> : vector<8x128xf32>
    %507 = tpu.matmul %501, %432, %cst_112 {dimension_numbers = #tpu.dot_dimension_numbers<[1], [0], [0], [1], [0, 0, 1, 1], [], []>} : vector<8x32xf32>, vector<32x128xf32>, vector<8x128xf32> -> vector<8x128xf32>
    %508 = arith.addf %506, %507 : vector<8x128xf32>
    %509 = vector.extract_strided_slice %508 {offsets = [0, 0], sizes = [8, 96], strides = [1, 1]} : vector<8x128xf32> to vector<8x96xf32>
    %510 = arith.negf %509 : vector<8x96xf32>
    %511 = math.exp %510 : vector<8x96xf32>
    %cst_113 = arith.constant 1.000000e+00 : f32
    %512 = vector.broadcast %cst_113 : f32 to vector<8x96xf32>
    %513 = arith.addf %512, %511 : vector<8x96xf32>
    %514 = arith.divf %512, %513 : vector<8x96xf32>
    %515 = vector.extract_strided_slice %508 {offsets = [0, 96], sizes = [8, 32], strides = [1, 1]} : vector<8x128xf32> to vector<8x32xf32>
    %516 = math.tanh %515 : vector<8x32xf32>
    %517 = vector.extract_strided_slice %514 {offsets = [0, 0], sizes = [8, 32], strides = [1, 1]} : vector<8x96xf32> to vector<8x32xf32>
    %518 = vector.extract_strided_slice %514 {offsets = [0, 32], sizes = [8, 32], strides = [1, 1]} : vector<8x96xf32> to vector<8x32xf32>
    %519 = vector.extract_strided_slice %514 {offsets = [0, 64], sizes = [8, 32], strides = [1, 1]} : vector<8x96xf32> to vector<8x32xf32>
    %520 = arith.mulf %518, %499 : vector<8x32xf32>
    %521 = arith.mulf %517, %516 : vector<8x32xf32>
    %522 = arith.addf %520, %521 : vector<8x32xf32>
    %523 = math.tanh %522 : vector<8x32xf32>
    %524 = arith.mulf %519, %523 : vector<8x32xf32>
    %525 = vector.extract_strided_slice %524 {offsets = [0, 0], sizes = [8, 16], strides = [1, 1]} : vector<8x32xf32> to vector<8x16xf32>
    %526 = vector.extract_strided_slice %524 {offsets = [0, 16], sizes = [8, 16], strides = [1, 1]} : vector<8x32xf32> to vector<8x16xf32>
    %527 = vector.extract_strided_slice %427 {offsets = [32, 0], sizes = [8, 128], strides = [1, 1]} : vector<72x128xf32> to vector<8x128xf32>
    %528 = vector.extract_strided_slice %430 {offsets = [32, 0], sizes = [8, 128], strides = [1, 1]} : vector<72x128xf32> to vector<8x128xf32>
    %529 = arith.addf %527, %528 : vector<8x128xf32>
    %cst_114 = arith.constant dense<0.000000e+00> : vector<8x128xf32>
    %530 = tpu.matmul %524, %432, %cst_114 {dimension_numbers = #tpu.dot_dimension_numbers<[1], [0], [0], [1], [0, 0, 1, 1], [], []>} : vector<8x32xf32>, vector<32x128xf32>, vector<8x128xf32> -> vector<8x128xf32>
    %531 = arith.addf %529, %530 : vector<8x128xf32>
    %532 = vector.extract_strided_slice %531 {offsets = [0, 0], sizes = [8, 96], strides = [1, 1]} : vector<8x128xf32> to vector<8x96xf32>
    %533 = arith.negf %532 : vector<8x96xf32>
    %534 = math.exp %533 : vector<8x96xf32>
    %cst_115 = arith.constant 1.000000e+00 : f32
    %535 = vector.broadcast %cst_115 : f32 to vector<8x96xf32>
    %536 = arith.addf %535, %534 : vector<8x96xf32>
    %537 = arith.divf %535, %536 : vector<8x96xf32>
    %538 = vector.extract_strided_slice %531 {offsets = [0, 96], sizes = [8, 32], strides = [1, 1]} : vector<8x128xf32> to vector<8x32xf32>
    %539 = math.tanh %538 : vector<8x32xf32>
    %540 = vector.extract_strided_slice %537 {offsets = [0, 0], sizes = [8, 32], strides = [1, 1]} : vector<8x96xf32> to vector<8x32xf32>
    %541 = vector.extract_strided_slice %537 {offsets = [0, 32], sizes = [8, 32], strides = [1, 1]} : vector<8x96xf32> to vector<8x32xf32>
    %542 = vector.extract_strided_slice %537 {offsets = [0, 64], sizes = [8, 32], strides = [1, 1]} : vector<8x96xf32> to vector<8x32xf32>
    %543 = arith.mulf %541, %522 : vector<8x32xf32>
    %544 = arith.mulf %540, %539 : vector<8x32xf32>
    %545 = arith.addf %543, %544 : vector<8x32xf32>
    %546 = math.tanh %545 : vector<8x32xf32>
    %547 = arith.mulf %542, %546 : vector<8x32xf32>
    %548 = vector.extract_strided_slice %547 {offsets = [0, 0], sizes = [8, 16], strides = [1, 1]} : vector<8x32xf32> to vector<8x16xf32>
    %549 = vector.extract_strided_slice %547 {offsets = [0, 16], sizes = [8, 16], strides = [1, 1]} : vector<8x32xf32> to vector<8x16xf32>
    %550 = vector.extract_strided_slice %427 {offsets = [40, 0], sizes = [8, 128], strides = [1, 1]} : vector<72x128xf32> to vector<8x128xf32>
    %551 = vector.extract_strided_slice %430 {offsets = [24, 0], sizes = [8, 128], strides = [1, 1]} : vector<72x128xf32> to vector<8x128xf32>
    %552 = arith.addf %550, %551 : vector<8x128xf32>
    %cst_116 = arith.constant dense<0.000000e+00> : vector<8x128xf32>
    %553 = tpu.matmul %547, %432, %cst_116 {dimension_numbers = #tpu.dot_dimension_numbers<[1], [0], [0], [1], [0, 0, 1, 1], [], []>} : vector<8x32xf32>, vector<32x128xf32>, vector<8x128xf32> -> vector<8x128xf32>
    %554 = arith.addf %552, %553 : vector<8x128xf32>
    %555 = vector.extract_strided_slice %554 {offsets = [0, 0], sizes = [8, 96], strides = [1, 1]} : vector<8x128xf32> to vector<8x96xf32>
    %556 = arith.negf %555 : vector<8x96xf32>
    %557 = math.exp %556 : vector<8x96xf32>
    %cst_117 = arith.constant 1.000000e+00 : f32
    %558 = vector.broadcast %cst_117 : f32 to vector<8x96xf32>
    %559 = arith.addf %558, %557 : vector<8x96xf32>
    %560 = arith.divf %558, %559 : vector<8x96xf32>
    %561 = vector.extract_strided_slice %554 {offsets = [0, 96], sizes = [8, 32], strides = [1, 1]} : vector<8x128xf32> to vector<8x32xf32>
    %562 = math.tanh %561 : vector<8x32xf32>
    %563 = vector.extract_strided_slice %560 {offsets = [0, 0], sizes = [8, 32], strides = [1, 1]} : vector<8x96xf32> to vector<8x32xf32>
    %564 = vector.extract_strided_slice %560 {offsets = [0, 32], sizes = [8, 32], strides = [1, 1]} : vector<8x96xf32> to vector<8x32xf32>
    %565 = vector.extract_strided_slice %560 {offsets = [0, 64], sizes = [8, 32], strides = [1, 1]} : vector<8x96xf32> to vector<8x32xf32>
    %566 = arith.mulf %564, %545 : vector<8x32xf32>
    %567 = arith.mulf %563, %562 : vector<8x32xf32>
    %568 = arith.addf %566, %567 : vector<8x32xf32>
    %569 = math.tanh %568 : vector<8x32xf32>
    %570 = arith.mulf %565, %569 : vector<8x32xf32>
    %571 = vector.extract_strided_slice %570 {offsets = [0, 0], sizes = [8, 16], strides = [1, 1]} : vector<8x32xf32> to vector<8x16xf32>
    %572 = vector.extract_strided_slice %570 {offsets = [0, 16], sizes = [8, 16], strides = [1, 1]} : vector<8x32xf32> to vector<8x16xf32>
    %573 = vector.extract_strided_slice %427 {offsets = [48, 0], sizes = [8, 128], strides = [1, 1]} : vector<72x128xf32> to vector<8x128xf32>
    %574 = vector.extract_strided_slice %430 {offsets = [16, 0], sizes = [8, 128], strides = [1, 1]} : vector<72x128xf32> to vector<8x128xf32>
    %575 = arith.addf %573, %574 : vector<8x128xf32>
    %cst_118 = arith.constant dense<0.000000e+00> : vector<8x128xf32>
    %576 = tpu.matmul %570, %432, %cst_118 {dimension_numbers = #tpu.dot_dimension_numbers<[1], [0], [0], [1], [0, 0, 1, 1], [], []>} : vector<8x32xf32>, vector<32x128xf32>, vector<8x128xf32> -> vector<8x128xf32>
    %577 = arith.addf %575, %576 : vector<8x128xf32>
    %578 = vector.extract_strided_slice %577 {offsets = [0, 0], sizes = [8, 96], strides = [1, 1]} : vector<8x128xf32> to vector<8x96xf32>
    %579 = arith.negf %578 : vector<8x96xf32>
    %580 = math.exp %579 : vector<8x96xf32>
    %cst_119 = arith.constant 1.000000e+00 : f32
    %581 = vector.broadcast %cst_119 : f32 to vector<8x96xf32>
    %582 = arith.addf %581, %580 : vector<8x96xf32>
    %583 = arith.divf %581, %582 : vector<8x96xf32>
    %584 = vector.extract_strided_slice %577 {offsets = [0, 96], sizes = [8, 32], strides = [1, 1]} : vector<8x128xf32> to vector<8x32xf32>
    %585 = math.tanh %584 : vector<8x32xf32>
    %586 = vector.extract_strided_slice %583 {offsets = [0, 0], sizes = [8, 32], strides = [1, 1]} : vector<8x96xf32> to vector<8x32xf32>
    %587 = vector.extract_strided_slice %583 {offsets = [0, 32], sizes = [8, 32], strides = [1, 1]} : vector<8x96xf32> to vector<8x32xf32>
    %588 = vector.extract_strided_slice %583 {offsets = [0, 64], sizes = [8, 32], strides = [1, 1]} : vector<8x96xf32> to vector<8x32xf32>
    %589 = arith.mulf %587, %568 : vector<8x32xf32>
    %590 = arith.mulf %586, %585 : vector<8x32xf32>
    %591 = arith.addf %589, %590 : vector<8x32xf32>
    %592 = math.tanh %591 : vector<8x32xf32>
    %593 = arith.mulf %588, %592 : vector<8x32xf32>
    %594 = vector.extract_strided_slice %593 {offsets = [0, 0], sizes = [8, 16], strides = [1, 1]} : vector<8x32xf32> to vector<8x16xf32>
    %595 = vector.extract_strided_slice %593 {offsets = [0, 16], sizes = [8, 16], strides = [1, 1]} : vector<8x32xf32> to vector<8x16xf32>
    %596 = vector.extract_strided_slice %427 {offsets = [56, 0], sizes = [8, 128], strides = [1, 1]} : vector<72x128xf32> to vector<8x128xf32>
    %597 = vector.extract_strided_slice %430 {offsets = [8, 0], sizes = [8, 128], strides = [1, 1]} : vector<72x128xf32> to vector<8x128xf32>
    %598 = arith.addf %596, %597 : vector<8x128xf32>
    %cst_120 = arith.constant dense<0.000000e+00> : vector<8x128xf32>
    %599 = tpu.matmul %593, %432, %cst_120 {dimension_numbers = #tpu.dot_dimension_numbers<[1], [0], [0], [1], [0, 0, 1, 1], [], []>} : vector<8x32xf32>, vector<32x128xf32>, vector<8x128xf32> -> vector<8x128xf32>
    %600 = arith.addf %598, %599 : vector<8x128xf32>
    %601 = vector.extract_strided_slice %600 {offsets = [0, 0], sizes = [8, 96], strides = [1, 1]} : vector<8x128xf32> to vector<8x96xf32>
    %602 = arith.negf %601 : vector<8x96xf32>
    %603 = math.exp %602 : vector<8x96xf32>
    %cst_121 = arith.constant 1.000000e+00 : f32
    %604 = vector.broadcast %cst_121 : f32 to vector<8x96xf32>
    %605 = arith.addf %604, %603 : vector<8x96xf32>
    %606 = arith.divf %604, %605 : vector<8x96xf32>
    %607 = vector.extract_strided_slice %600 {offsets = [0, 96], sizes = [8, 32], strides = [1, 1]} : vector<8x128xf32> to vector<8x32xf32>
    %608 = math.tanh %607 : vector<8x32xf32>
    %609 = vector.extract_strided_slice %606 {offsets = [0, 0], sizes = [8, 32], strides = [1, 1]} : vector<8x96xf32> to vector<8x32xf32>
    %610 = vector.extract_strided_slice %606 {offsets = [0, 32], sizes = [8, 32], strides = [1, 1]} : vector<8x96xf32> to vector<8x32xf32>
    %611 = vector.extract_strided_slice %606 {offsets = [0, 64], sizes = [8, 32], strides = [1, 1]} : vector<8x96xf32> to vector<8x32xf32>
    %612 = arith.mulf %610, %591 : vector<8x32xf32>
    %613 = arith.mulf %609, %608 : vector<8x32xf32>
    %614 = arith.addf %612, %613 : vector<8x32xf32>
    %615 = math.tanh %614 : vector<8x32xf32>
    %616 = arith.mulf %611, %615 : vector<8x32xf32>
    %617 = vector.extract_strided_slice %616 {offsets = [0, 0], sizes = [8, 16], strides = [1, 1]} : vector<8x32xf32> to vector<8x16xf32>
    %618 = vector.extract_strided_slice %616 {offsets = [0, 16], sizes = [8, 16], strides = [1, 1]} : vector<8x32xf32> to vector<8x16xf32>
    %619 = vector.extract_strided_slice %427 {offsets = [64, 0], sizes = [8, 128], strides = [1, 1]} : vector<72x128xf32> to vector<8x128xf32>
    %620 = vector.extract_strided_slice %430 {offsets = [0, 0], sizes = [8, 128], strides = [1, 1]} : vector<72x128xf32> to vector<8x128xf32>
    %621 = arith.addf %619, %620 : vector<8x128xf32>
    %cst_122 = arith.constant dense<0.000000e+00> : vector<8x128xf32>
    %622 = tpu.matmul %616, %432, %cst_122 {dimension_numbers = #tpu.dot_dimension_numbers<[1], [0], [0], [1], [0, 0, 1, 1], [], []>} : vector<8x32xf32>, vector<32x128xf32>, vector<8x128xf32> -> vector<8x128xf32>
    %623 = arith.addf %621, %622 : vector<8x128xf32>
    %624 = vector.extract_strided_slice %623 {offsets = [0, 0], sizes = [8, 96], strides = [1, 1]} : vector<8x128xf32> to vector<8x96xf32>
    %625 = arith.negf %624 : vector<8x96xf32>
    %626 = math.exp %625 : vector<8x96xf32>
    %cst_123 = arith.constant 1.000000e+00 : f32
    %627 = vector.broadcast %cst_123 : f32 to vector<8x96xf32>
    %628 = arith.addf %627, %626 : vector<8x96xf32>
    %629 = arith.divf %627, %628 : vector<8x96xf32>
    %630 = vector.extract_strided_slice %623 {offsets = [0, 96], sizes = [8, 32], strides = [1, 1]} : vector<8x128xf32> to vector<8x32xf32>
    %631 = math.tanh %630 : vector<8x32xf32>
    %632 = vector.extract_strided_slice %629 {offsets = [0, 0], sizes = [8, 32], strides = [1, 1]} : vector<8x96xf32> to vector<8x32xf32>
    %633 = vector.extract_strided_slice %629 {offsets = [0, 32], sizes = [8, 32], strides = [1, 1]} : vector<8x96xf32> to vector<8x32xf32>
    %634 = vector.extract_strided_slice %629 {offsets = [0, 64], sizes = [8, 32], strides = [1, 1]} : vector<8x96xf32> to vector<8x32xf32>
    %635 = arith.mulf %633, %614 : vector<8x32xf32>
    %636 = arith.mulf %632, %631 : vector<8x32xf32>
    %637 = arith.addf %635, %636 : vector<8x32xf32>
    %638 = math.tanh %637 : vector<8x32xf32>
    %639 = arith.mulf %634, %638 : vector<8x32xf32>
    %640 = vector.extract_strided_slice %639 {offsets = [0, 0], sizes = [8, 16], strides = [1, 1]} : vector<8x32xf32> to vector<8x16xf32>
    %641 = vector.extract_strided_slice %639 {offsets = [0, 16], sizes = [8, 16], strides = [1, 1]} : vector<8x32xf32> to vector<8x16xf32>
    %642 = tpu.concatenate %456, %479, %502, %525, %548, %571, %594, %617, %640 in 0 : vector<8x16xf32>, vector<8x16xf32>, vector<8x16xf32>, vector<8x16xf32>, vector<8x16xf32>, vector<8x16xf32>, vector<8x16xf32>, vector<8x16xf32>, vector<8x16xf32> -> vector<72x16xf32>
    %643 = tpu.concatenate %641, %618, %595, %572, %549, %526, %503, %480, %457 in 0 : vector<8x16xf32>, vector<8x16xf32>, vector<8x16xf32>, vector<8x16xf32>, vector<8x16xf32>, vector<8x16xf32>, vector<8x16xf32>, vector<8x16xf32>, vector<8x16xf32> -> vector<72x16xf32>
    %644 = tpu.concatenate %642, %643 in 1 : vector<72x16xf32>, vector<72x16xf32> -> vector<72x32xf32>
    %c3_124 = arith.constant 3 : index
    %c0_125 = arith.constant 0 : index
    %c0_126 = arith.constant 0 : index
    %645 = vector.load %arg12[%c3_124, %c0_125, %c0_126] : memref<6x32x128xf32, #tpu.memory_space<vmem>>, vector<1x32x128xf32>
    %646 = vector.shape_cast %645 : vector<1x32x128xf32> to vector<32x128xf32>
    %cst_127 = arith.constant dense<0.000000e+00> : vector<72x128xf32>
    %647 = tpu.matmul %644, %646, %cst_127 {dimension_numbers = #tpu.dot_dimension_numbers<[1], [0], [0], [1], [0, 0, 1, 1], [], []>} : vector<72x32xf32>, vector<32x128xf32>, vector<72x128xf32> -> vector<72x128xf32>
    %c1_128 = arith.constant 1 : index
    %c0_129 = arith.constant 0 : index
    %c0_130 = arith.constant 0 : index
    %648 = vector.load %arg13[%c1_128, %c0_129, %c0_130] : memref<2x1x128xf32, #tpu.memory_space<vmem>>, vector<1x1x128xf32>
    %649 = vector.shape_cast %648 : vector<1x1x128xf32> to vector<1x128xf32>
    %650 = vector.broadcast %649 : vector<1x128xf32> to vector<72x128xf32>
    %651 = arith.addf %647, %650 : vector<72x128xf32>
    %c4_131 = arith.constant 4 : index
    %c0_132 = arith.constant 0 : index
    %c0_133 = arith.constant 0 : index
    %652 = vector.load %arg12[%c4_131, %c0_132, %c0_133] : memref<6x32x128xf32, #tpu.memory_space<vmem>>, vector<1x32x128xf32>
    %653 = vector.shape_cast %652 : vector<1x32x128xf32> to vector<32x128xf32>
    %cst_134 = arith.constant dense<0.000000e+00> : vector<72x128xf32>
    %654 = tpu.matmul %644, %653, %cst_134 {dimension_numbers = #tpu.dot_dimension_numbers<[1], [0], [0], [1], [0, 0, 1, 1], [], []>} : vector<72x32xf32>, vector<32x128xf32>, vector<72x128xf32> -> vector<72x128xf32>
    %c5 = arith.constant 5 : index
    %c0_135 = arith.constant 0 : index
    %c0_136 = arith.constant 0 : index
    %655 = vector.load %arg12[%c5, %c0_135, %c0_136] : memref<6x32x128xf32, #tpu.memory_space<vmem>>, vector<1x32x128xf32>
    %656 = vector.shape_cast %655 : vector<1x32x128xf32> to vector<32x128xf32>
    %cst_137 = arith.constant 0.000000e+00 : f32
    %657 = vector.broadcast %cst_137 : f32 to vector<8x32xf32>
    %cst_138 = arith.constant 0.000000e+00 : f32
    %658 = vector.broadcast %cst_138 : f32 to vector<8x32xf32>
    %659 = vector.extract_strided_slice %651 {offsets = [0, 0], sizes = [8, 128], strides = [1, 1]} : vector<72x128xf32> to vector<8x128xf32>
    %660 = vector.extract_strided_slice %654 {offsets = [64, 0], sizes = [8, 128], strides = [1, 1]} : vector<72x128xf32> to vector<8x128xf32>
    %661 = arith.addf %659, %660 : vector<8x128xf32>
    %cst_139 = arith.constant dense<0.000000e+00> : vector<8x128xf32>
    %662 = tpu.matmul %657, %656, %cst_139 {dimension_numbers = #tpu.dot_dimension_numbers<[1], [0], [0], [1], [0, 0, 1, 1], [], []>} : vector<8x32xf32>, vector<32x128xf32>, vector<8x128xf32> -> vector<8x128xf32>
    %663 = arith.addf %661, %662 : vector<8x128xf32>
    %664 = vector.extract_strided_slice %663 {offsets = [0, 0], sizes = [8, 96], strides = [1, 1]} : vector<8x128xf32> to vector<8x96xf32>
    %665 = arith.negf %664 : vector<8x96xf32>
    %666 = math.exp %665 : vector<8x96xf32>
    %cst_140 = arith.constant 1.000000e+00 : f32
    %667 = vector.broadcast %cst_140 : f32 to vector<8x96xf32>
    %668 = arith.addf %667, %666 : vector<8x96xf32>
    %669 = arith.divf %667, %668 : vector<8x96xf32>
    %670 = vector.extract_strided_slice %663 {offsets = [0, 96], sizes = [8, 32], strides = [1, 1]} : vector<8x128xf32> to vector<8x32xf32>
    %671 = math.tanh %670 : vector<8x32xf32>
    %672 = vector.extract_strided_slice %669 {offsets = [0, 0], sizes = [8, 32], strides = [1, 1]} : vector<8x96xf32> to vector<8x32xf32>
    %673 = vector.extract_strided_slice %669 {offsets = [0, 32], sizes = [8, 32], strides = [1, 1]} : vector<8x96xf32> to vector<8x32xf32>
    %674 = vector.extract_strided_slice %669 {offsets = [0, 64], sizes = [8, 32], strides = [1, 1]} : vector<8x96xf32> to vector<8x32xf32>
    %675 = arith.mulf %673, %658 : vector<8x32xf32>
    %676 = arith.mulf %672, %671 : vector<8x32xf32>
    %677 = arith.addf %675, %676 : vector<8x32xf32>
    %678 = math.tanh %677 : vector<8x32xf32>
    %679 = arith.mulf %674, %678 : vector<8x32xf32>
    %680 = vector.extract_strided_slice %679 {offsets = [0, 0], sizes = [8, 16], strides = [1, 1]} : vector<8x32xf32> to vector<8x16xf32>
    %681 = vector.extract_strided_slice %651 {offsets = [8, 0], sizes = [8, 128], strides = [1, 1]} : vector<72x128xf32> to vector<8x128xf32>
    %682 = vector.extract_strided_slice %654 {offsets = [56, 0], sizes = [8, 128], strides = [1, 1]} : vector<72x128xf32> to vector<8x128xf32>
    %683 = arith.addf %681, %682 : vector<8x128xf32>
    %cst_141 = arith.constant dense<0.000000e+00> : vector<8x128xf32>
    %684 = tpu.matmul %679, %656, %cst_141 {dimension_numbers = #tpu.dot_dimension_numbers<[1], [0], [0], [1], [0, 0, 1, 1], [], []>} : vector<8x32xf32>, vector<32x128xf32>, vector<8x128xf32> -> vector<8x128xf32>
    %685 = arith.addf %683, %684 : vector<8x128xf32>
    %686 = vector.extract_strided_slice %685 {offsets = [0, 0], sizes = [8, 96], strides = [1, 1]} : vector<8x128xf32> to vector<8x96xf32>
    %687 = arith.negf %686 : vector<8x96xf32>
    %688 = math.exp %687 : vector<8x96xf32>
    %cst_142 = arith.constant 1.000000e+00 : f32
    %689 = vector.broadcast %cst_142 : f32 to vector<8x96xf32>
    %690 = arith.addf %689, %688 : vector<8x96xf32>
    %691 = arith.divf %689, %690 : vector<8x96xf32>
    %692 = vector.extract_strided_slice %685 {offsets = [0, 96], sizes = [8, 32], strides = [1, 1]} : vector<8x128xf32> to vector<8x32xf32>
    %693 = math.tanh %692 : vector<8x32xf32>
    %694 = vector.extract_strided_slice %691 {offsets = [0, 0], sizes = [8, 32], strides = [1, 1]} : vector<8x96xf32> to vector<8x32xf32>
    %695 = vector.extract_strided_slice %691 {offsets = [0, 32], sizes = [8, 32], strides = [1, 1]} : vector<8x96xf32> to vector<8x32xf32>
    %696 = vector.extract_strided_slice %691 {offsets = [0, 64], sizes = [8, 32], strides = [1, 1]} : vector<8x96xf32> to vector<8x32xf32>
    %697 = arith.mulf %695, %677 : vector<8x32xf32>
    %698 = arith.mulf %694, %693 : vector<8x32xf32>
    %699 = arith.addf %697, %698 : vector<8x32xf32>
    %700 = math.tanh %699 : vector<8x32xf32>
    %701 = arith.mulf %696, %700 : vector<8x32xf32>
    %702 = vector.extract_strided_slice %651 {offsets = [16, 0], sizes = [8, 128], strides = [1, 1]} : vector<72x128xf32> to vector<8x128xf32>
    %703 = vector.extract_strided_slice %654 {offsets = [48, 0], sizes = [8, 128], strides = [1, 1]} : vector<72x128xf32> to vector<8x128xf32>
    %704 = arith.addf %702, %703 : vector<8x128xf32>
    %cst_143 = arith.constant dense<0.000000e+00> : vector<8x128xf32>
    %705 = tpu.matmul %701, %656, %cst_143 {dimension_numbers = #tpu.dot_dimension_numbers<[1], [0], [0], [1], [0, 0, 1, 1], [], []>} : vector<8x32xf32>, vector<32x128xf32>, vector<8x128xf32> -> vector<8x128xf32>
    %706 = arith.addf %704, %705 : vector<8x128xf32>
    %707 = vector.extract_strided_slice %706 {offsets = [0, 0], sizes = [8, 96], strides = [1, 1]} : vector<8x128xf32> to vector<8x96xf32>
    %708 = arith.negf %707 : vector<8x96xf32>
    %709 = math.exp %708 : vector<8x96xf32>
    %cst_144 = arith.constant 1.000000e+00 : f32
    %710 = vector.broadcast %cst_144 : f32 to vector<8x96xf32>
    %711 = arith.addf %710, %709 : vector<8x96xf32>
    %712 = arith.divf %710, %711 : vector<8x96xf32>
    %713 = vector.extract_strided_slice %706 {offsets = [0, 96], sizes = [8, 32], strides = [1, 1]} : vector<8x128xf32> to vector<8x32xf32>
    %714 = math.tanh %713 : vector<8x32xf32>
    %715 = vector.extract_strided_slice %712 {offsets = [0, 0], sizes = [8, 32], strides = [1, 1]} : vector<8x96xf32> to vector<8x32xf32>
    %716 = vector.extract_strided_slice %712 {offsets = [0, 32], sizes = [8, 32], strides = [1, 1]} : vector<8x96xf32> to vector<8x32xf32>
    %717 = vector.extract_strided_slice %712 {offsets = [0, 64], sizes = [8, 32], strides = [1, 1]} : vector<8x96xf32> to vector<8x32xf32>
    %718 = arith.mulf %716, %699 : vector<8x32xf32>
    %719 = arith.mulf %715, %714 : vector<8x32xf32>
    %720 = arith.addf %718, %719 : vector<8x32xf32>
    %721 = math.tanh %720 : vector<8x32xf32>
    %722 = arith.mulf %717, %721 : vector<8x32xf32>
    %723 = vector.extract_strided_slice %651 {offsets = [24, 0], sizes = [8, 128], strides = [1, 1]} : vector<72x128xf32> to vector<8x128xf32>
    %724 = vector.extract_strided_slice %654 {offsets = [40, 0], sizes = [8, 128], strides = [1, 1]} : vector<72x128xf32> to vector<8x128xf32>
    %725 = arith.addf %723, %724 : vector<8x128xf32>
    %cst_145 = arith.constant dense<0.000000e+00> : vector<8x128xf32>
    %726 = tpu.matmul %722, %656, %cst_145 {dimension_numbers = #tpu.dot_dimension_numbers<[1], [0], [0], [1], [0, 0, 1, 1], [], []>} : vector<8x32xf32>, vector<32x128xf32>, vector<8x128xf32> -> vector<8x128xf32>
    %727 = arith.addf %725, %726 : vector<8x128xf32>
    %728 = vector.extract_strided_slice %727 {offsets = [0, 0], sizes = [8, 96], strides = [1, 1]} : vector<8x128xf32> to vector<8x96xf32>
    %729 = arith.negf %728 : vector<8x96xf32>
    %730 = math.exp %729 : vector<8x96xf32>
    %cst_146 = arith.constant 1.000000e+00 : f32
    %731 = vector.broadcast %cst_146 : f32 to vector<8x96xf32>
    %732 = arith.addf %731, %730 : vector<8x96xf32>
    %733 = arith.divf %731, %732 : vector<8x96xf32>
    %734 = vector.extract_strided_slice %727 {offsets = [0, 96], sizes = [8, 32], strides = [1, 1]} : vector<8x128xf32> to vector<8x32xf32>
    %735 = math.tanh %734 : vector<8x32xf32>
    %736 = vector.extract_strided_slice %733 {offsets = [0, 0], sizes = [8, 32], strides = [1, 1]} : vector<8x96xf32> to vector<8x32xf32>
    %737 = vector.extract_strided_slice %733 {offsets = [0, 32], sizes = [8, 32], strides = [1, 1]} : vector<8x96xf32> to vector<8x32xf32>
    %738 = vector.extract_strided_slice %733 {offsets = [0, 64], sizes = [8, 32], strides = [1, 1]} : vector<8x96xf32> to vector<8x32xf32>
    %739 = arith.mulf %737, %720 : vector<8x32xf32>
    %740 = arith.mulf %736, %735 : vector<8x32xf32>
    %741 = arith.addf %739, %740 : vector<8x32xf32>
    %742 = math.tanh %741 : vector<8x32xf32>
    %743 = arith.mulf %738, %742 : vector<8x32xf32>
    %744 = vector.extract_strided_slice %651 {offsets = [32, 0], sizes = [8, 128], strides = [1, 1]} : vector<72x128xf32> to vector<8x128xf32>
    %745 = vector.extract_strided_slice %654 {offsets = [32, 0], sizes = [8, 128], strides = [1, 1]} : vector<72x128xf32> to vector<8x128xf32>
    %746 = arith.addf %744, %745 : vector<8x128xf32>
    %cst_147 = arith.constant dense<0.000000e+00> : vector<8x128xf32>
    %747 = tpu.matmul %743, %656, %cst_147 {dimension_numbers = #tpu.dot_dimension_numbers<[1], [0], [0], [1], [0, 0, 1, 1], [], []>} : vector<8x32xf32>, vector<32x128xf32>, vector<8x128xf32> -> vector<8x128xf32>
    %748 = arith.addf %746, %747 : vector<8x128xf32>
    %749 = vector.extract_strided_slice %748 {offsets = [0, 0], sizes = [8, 96], strides = [1, 1]} : vector<8x128xf32> to vector<8x96xf32>
    %750 = arith.negf %749 : vector<8x96xf32>
    %751 = math.exp %750 : vector<8x96xf32>
    %cst_148 = arith.constant 1.000000e+00 : f32
    %752 = vector.broadcast %cst_148 : f32 to vector<8x96xf32>
    %753 = arith.addf %752, %751 : vector<8x96xf32>
    %754 = arith.divf %752, %753 : vector<8x96xf32>
    %755 = vector.extract_strided_slice %748 {offsets = [0, 96], sizes = [8, 32], strides = [1, 1]} : vector<8x128xf32> to vector<8x32xf32>
    %756 = math.tanh %755 : vector<8x32xf32>
    %757 = vector.extract_strided_slice %754 {offsets = [0, 0], sizes = [8, 32], strides = [1, 1]} : vector<8x96xf32> to vector<8x32xf32>
    %758 = vector.extract_strided_slice %754 {offsets = [0, 32], sizes = [8, 32], strides = [1, 1]} : vector<8x96xf32> to vector<8x32xf32>
    %759 = vector.extract_strided_slice %754 {offsets = [0, 64], sizes = [8, 32], strides = [1, 1]} : vector<8x96xf32> to vector<8x32xf32>
    %760 = arith.mulf %758, %741 : vector<8x32xf32>
    %761 = arith.mulf %757, %756 : vector<8x32xf32>
    %762 = arith.addf %760, %761 : vector<8x32xf32>
    %763 = math.tanh %762 : vector<8x32xf32>
    %764 = arith.mulf %759, %763 : vector<8x32xf32>
    %765 = vector.extract_strided_slice %651 {offsets = [40, 0], sizes = [8, 128], strides = [1, 1]} : vector<72x128xf32> to vector<8x128xf32>
    %766 = vector.extract_strided_slice %654 {offsets = [24, 0], sizes = [8, 128], strides = [1, 1]} : vector<72x128xf32> to vector<8x128xf32>
    %767 = arith.addf %765, %766 : vector<8x128xf32>
    %cst_149 = arith.constant dense<0.000000e+00> : vector<8x128xf32>
    %768 = tpu.matmul %764, %656, %cst_149 {dimension_numbers = #tpu.dot_dimension_numbers<[1], [0], [0], [1], [0, 0, 1, 1], [], []>} : vector<8x32xf32>, vector<32x128xf32>, vector<8x128xf32> -> vector<8x128xf32>
    %769 = arith.addf %767, %768 : vector<8x128xf32>
    %770 = vector.extract_strided_slice %769 {offsets = [0, 0], sizes = [8, 96], strides = [1, 1]} : vector<8x128xf32> to vector<8x96xf32>
    %771 = arith.negf %770 : vector<8x96xf32>
    %772 = math.exp %771 : vector<8x96xf32>
    %cst_150 = arith.constant 1.000000e+00 : f32
    %773 = vector.broadcast %cst_150 : f32 to vector<8x96xf32>
    %774 = arith.addf %773, %772 : vector<8x96xf32>
    %775 = arith.divf %773, %774 : vector<8x96xf32>
    %776 = vector.extract_strided_slice %769 {offsets = [0, 96], sizes = [8, 32], strides = [1, 1]} : vector<8x128xf32> to vector<8x32xf32>
    %777 = math.tanh %776 : vector<8x32xf32>
    %778 = vector.extract_strided_slice %775 {offsets = [0, 0], sizes = [8, 32], strides = [1, 1]} : vector<8x96xf32> to vector<8x32xf32>
    %779 = vector.extract_strided_slice %775 {offsets = [0, 32], sizes = [8, 32], strides = [1, 1]} : vector<8x96xf32> to vector<8x32xf32>
    %780 = vector.extract_strided_slice %775 {offsets = [0, 64], sizes = [8, 32], strides = [1, 1]} : vector<8x96xf32> to vector<8x32xf32>
    %781 = arith.mulf %779, %762 : vector<8x32xf32>
    %782 = arith.mulf %778, %777 : vector<8x32xf32>
    %783 = arith.addf %781, %782 : vector<8x32xf32>
    %784 = math.tanh %783 : vector<8x32xf32>
    %785 = arith.mulf %780, %784 : vector<8x32xf32>
    %786 = vector.extract_strided_slice %651 {offsets = [48, 0], sizes = [8, 128], strides = [1, 1]} : vector<72x128xf32> to vector<8x128xf32>
    %787 = vector.extract_strided_slice %654 {offsets = [16, 0], sizes = [8, 128], strides = [1, 1]} : vector<72x128xf32> to vector<8x128xf32>
    %788 = arith.addf %786, %787 : vector<8x128xf32>
    %cst_151 = arith.constant dense<0.000000e+00> : vector<8x128xf32>
    %789 = tpu.matmul %785, %656, %cst_151 {dimension_numbers = #tpu.dot_dimension_numbers<[1], [0], [0], [1], [0, 0, 1, 1], [], []>} : vector<8x32xf32>, vector<32x128xf32>, vector<8x128xf32> -> vector<8x128xf32>
    %790 = arith.addf %788, %789 : vector<8x128xf32>
    %791 = vector.extract_strided_slice %790 {offsets = [0, 0], sizes = [8, 96], strides = [1, 1]} : vector<8x128xf32> to vector<8x96xf32>
    %792 = arith.negf %791 : vector<8x96xf32>
    %793 = math.exp %792 : vector<8x96xf32>
    %cst_152 = arith.constant 1.000000e+00 : f32
    %794 = vector.broadcast %cst_152 : f32 to vector<8x96xf32>
    %795 = arith.addf %794, %793 : vector<8x96xf32>
    %796 = arith.divf %794, %795 : vector<8x96xf32>
    %797 = vector.extract_strided_slice %790 {offsets = [0, 96], sizes = [8, 32], strides = [1, 1]} : vector<8x128xf32> to vector<8x32xf32>
    %798 = math.tanh %797 : vector<8x32xf32>
    %799 = vector.extract_strided_slice %796 {offsets = [0, 0], sizes = [8, 32], strides = [1, 1]} : vector<8x96xf32> to vector<8x32xf32>
    %800 = vector.extract_strided_slice %796 {offsets = [0, 32], sizes = [8, 32], strides = [1, 1]} : vector<8x96xf32> to vector<8x32xf32>
    %801 = vector.extract_strided_slice %796 {offsets = [0, 64], sizes = [8, 32], strides = [1, 1]} : vector<8x96xf32> to vector<8x32xf32>
    %802 = arith.mulf %800, %783 : vector<8x32xf32>
    %803 = arith.mulf %799, %798 : vector<8x32xf32>
    %804 = arith.addf %802, %803 : vector<8x32xf32>
    %805 = math.tanh %804 : vector<8x32xf32>
    %806 = arith.mulf %801, %805 : vector<8x32xf32>
    %807 = vector.extract_strided_slice %651 {offsets = [56, 0], sizes = [8, 128], strides = [1, 1]} : vector<72x128xf32> to vector<8x128xf32>
    %808 = vector.extract_strided_slice %654 {offsets = [8, 0], sizes = [8, 128], strides = [1, 1]} : vector<72x128xf32> to vector<8x128xf32>
    %809 = arith.addf %807, %808 : vector<8x128xf32>
    %cst_153 = arith.constant dense<0.000000e+00> : vector<8x128xf32>
    %810 = tpu.matmul %806, %656, %cst_153 {dimension_numbers = #tpu.dot_dimension_numbers<[1], [0], [0], [1], [0, 0, 1, 1], [], []>} : vector<8x32xf32>, vector<32x128xf32>, vector<8x128xf32> -> vector<8x128xf32>
    %811 = arith.addf %809, %810 : vector<8x128xf32>
    %812 = vector.extract_strided_slice %811 {offsets = [0, 0], sizes = [8, 96], strides = [1, 1]} : vector<8x128xf32> to vector<8x96xf32>
    %813 = arith.negf %812 : vector<8x96xf32>
    %814 = math.exp %813 : vector<8x96xf32>
    %cst_154 = arith.constant 1.000000e+00 : f32
    %815 = vector.broadcast %cst_154 : f32 to vector<8x96xf32>
    %816 = arith.addf %815, %814 : vector<8x96xf32>
    %817 = arith.divf %815, %816 : vector<8x96xf32>
    %818 = vector.extract_strided_slice %811 {offsets = [0, 96], sizes = [8, 32], strides = [1, 1]} : vector<8x128xf32> to vector<8x32xf32>
    %819 = math.tanh %818 : vector<8x32xf32>
    %820 = vector.extract_strided_slice %817 {offsets = [0, 0], sizes = [8, 32], strides = [1, 1]} : vector<8x96xf32> to vector<8x32xf32>
    %821 = vector.extract_strided_slice %817 {offsets = [0, 32], sizes = [8, 32], strides = [1, 1]} : vector<8x96xf32> to vector<8x32xf32>
    %822 = vector.extract_strided_slice %817 {offsets = [0, 64], sizes = [8, 32], strides = [1, 1]} : vector<8x96xf32> to vector<8x32xf32>
    %823 = arith.mulf %821, %804 : vector<8x32xf32>
    %824 = arith.mulf %820, %819 : vector<8x32xf32>
    %825 = arith.addf %823, %824 : vector<8x32xf32>
    %826 = math.tanh %825 : vector<8x32xf32>
    %827 = arith.mulf %822, %826 : vector<8x32xf32>
    %828 = vector.extract_strided_slice %651 {offsets = [64, 0], sizes = [8, 128], strides = [1, 1]} : vector<72x128xf32> to vector<8x128xf32>
    %829 = vector.extract_strided_slice %654 {offsets = [0, 0], sizes = [8, 128], strides = [1, 1]} : vector<72x128xf32> to vector<8x128xf32>
    %830 = arith.addf %828, %829 : vector<8x128xf32>
    %cst_155 = arith.constant dense<0.000000e+00> : vector<8x128xf32>
    %831 = tpu.matmul %827, %656, %cst_155 {dimension_numbers = #tpu.dot_dimension_numbers<[1], [0], [0], [1], [0, 0, 1, 1], [], []>} : vector<8x32xf32>, vector<32x128xf32>, vector<8x128xf32> -> vector<8x128xf32>
    %832 = arith.addf %830, %831 : vector<8x128xf32>
    %833 = vector.extract_strided_slice %832 {offsets = [0, 0], sizes = [8, 96], strides = [1, 1]} : vector<8x128xf32> to vector<8x96xf32>
    %834 = arith.negf %833 : vector<8x96xf32>
    %835 = math.exp %834 : vector<8x96xf32>
    %cst_156 = arith.constant 1.000000e+00 : f32
    %836 = vector.broadcast %cst_156 : f32 to vector<8x96xf32>
    %837 = arith.addf %836, %835 : vector<8x96xf32>
    %838 = arith.divf %836, %837 : vector<8x96xf32>
    %839 = vector.extract_strided_slice %832 {offsets = [0, 96], sizes = [8, 32], strides = [1, 1]} : vector<8x128xf32> to vector<8x32xf32>
    %840 = math.tanh %839 : vector<8x32xf32>
    %841 = vector.extract_strided_slice %838 {offsets = [0, 0], sizes = [8, 32], strides = [1, 1]} : vector<8x96xf32> to vector<8x32xf32>
    %842 = vector.extract_strided_slice %838 {offsets = [0, 32], sizes = [8, 32], strides = [1, 1]} : vector<8x96xf32> to vector<8x32xf32>
    %843 = vector.extract_strided_slice %838 {offsets = [0, 64], sizes = [8, 32], strides = [1, 1]} : vector<8x96xf32> to vector<8x32xf32>
    %844 = arith.mulf %842, %825 : vector<8x32xf32>
    %845 = arith.mulf %841, %840 : vector<8x32xf32>
    %846 = arith.addf %844, %845 : vector<8x32xf32>
    %847 = math.tanh %846 : vector<8x32xf32>
    %848 = arith.mulf %843, %847 : vector<8x32xf32>
    %849 = vector.extract_strided_slice %848 {offsets = [0, 16], sizes = [8, 16], strides = [1, 1]} : vector<8x32xf32> to vector<8x16xf32>
    %850 = tpu.concatenate %680, %849 in 1 : vector<8x16xf32>, vector<8x16xf32> -> vector<8x32xf32>
    %c0_157 = arith.constant 0 : index
    %c0_158 = arith.constant 0 : index
    %851 = memref.load %arg17[%c0_157, %c0_158] : memref<2x3xf32, #tpu.memory_space<smem>>
    %c0_159 = arith.constant 0 : index
    %c1_160 = arith.constant 1 : index
    %852 = memref.load %arg17[%c0_159, %c1_160] : memref<2x3xf32, #tpu.memory_space<smem>>
    %c0_161 = arith.constant 0 : index
    %c2_162 = arith.constant 2 : index
    %853 = memref.load %arg17[%c0_161, %c2_162] : memref<2x3xf32, #tpu.memory_space<smem>>
    %c0_163 = arith.constant 0 : index
    %c0_164 = arith.constant 0 : index
    %c0_165 = arith.constant 0 : index
    %854 = vector.load %arg14[%c0_163, %c0_164, %c0_165] : memref<2x32x96xf32, #tpu.memory_space<vmem>>, vector<1x32x96xf32>
    %855 = vector.shape_cast %854 : vector<1x32x96xf32> to vector<32x96xf32>
    %cst_166 = arith.constant dense<0.000000e+00> : vector<8x96xf32>
    %856 = tpu.matmul %850, %855, %cst_166 {dimension_numbers = #tpu.dot_dimension_numbers<[1], [0], [0], [1], [0, 0, 1, 1], [], []>} : vector<8x32xf32>, vector<32x96xf32>, vector<8x96xf32> -> vector<8x96xf32>
    %c0_167 = arith.constant 0 : index
    %c0_168 = arith.constant 0 : index
    %c0_169 = arith.constant 0 : index
    %857 = vector.load %arg16[%c0_167, %c0_168, %c0_169] : memref<2x1x128xf32, #tpu.memory_space<vmem>>, vector<1x1x128xf32>
    %858 = vector.shape_cast %857 : vector<1x1x128xf32> to vector<1x128xf32>
    %859 = vector.extract_strided_slice %858 {offsets = [0, 0], sizes = [1, 96], strides = [1, 1]} : vector<1x128xf32> to vector<1x96xf32>
    %860 = vector.broadcast %859 : vector<1x96xf32> to vector<8x96xf32>
    %861 = arith.addf %856, %860 : vector<8x96xf32>
    %862 = vector.extract_strided_slice %861 {offsets = [0, 0], sizes = [8, 32], strides = [1, 1]} : vector<8x96xf32> to vector<8x32xf32>
    %863 = vector.extract_strided_slice %861 {offsets = [0, 32], sizes = [8, 64], strides = [1, 1]} : vector<8x96xf32> to vector<8x64xf32>
    %864 = arith.mulf %863, %863 : vector<8x64xf32>
    %865 = arith.mulf %863, %864 : vector<8x64xf32>
    %cst_170 = arith.constant 4.471500e-02 : f32
    %866 = vector.broadcast %cst_170 : f32 to vector<8x64xf32>
    %867 = arith.mulf %866, %865 : vector<8x64xf32>
    %868 = arith.addf %863, %867 : vector<8x64xf32>
    %cst_171 = arith.constant 0.797884583 : f32
    %869 = vector.broadcast %cst_171 : f32 to vector<8x64xf32>
    %870 = arith.mulf %869, %868 : vector<8x64xf32>
    %871 = math.tanh %870 : vector<8x64xf32>
    %cst_172 = arith.constant 1.000000e+00 : f32
    %872 = vector.broadcast %cst_172 : f32 to vector<8x64xf32>
    %873 = arith.addf %872, %871 : vector<8x64xf32>
    %cst_173 = arith.constant 5.000000e-01 : f32
    %874 = vector.broadcast %cst_173 : f32 to vector<8x64xf32>
    %875 = arith.mulf %874, %873 : vector<8x64xf32>
    %876 = arith.mulf %863, %875 : vector<8x64xf32>
    %c0_174 = arith.constant 0 : index
    %c0_175 = arith.constant 0 : index
    %c0_176 = arith.constant 0 : index
    %877 = vector.load %arg15[%c0_174, %c0_175, %c0_176] : memref<2x64x32xf32, #tpu.memory_space<vmem>>, vector<1x64x32xf32>
    %878 = vector.shape_cast %877 : vector<1x64x32xf32> to vector<64x32xf32>
    %cst_177 = arith.constant dense<0.000000e+00> : vector<8x32xf32>
    %879 = tpu.matmul %876, %878, %cst_177 {dimension_numbers = #tpu.dot_dimension_numbers<[1], [0], [0], [1], [0, 0, 1, 1], [], []>} : vector<8x64xf32>, vector<64x32xf32>, vector<8x32xf32> -> vector<8x32xf32>
    %c0_178 = arith.constant 0 : index
    %c0_179 = arith.constant 0 : index
    %c0_180 = arith.constant 0 : index
    %880 = vector.load %arg16[%c0_178, %c0_179, %c0_180] : memref<2x1x128xf32, #tpu.memory_space<vmem>>, vector<1x1x128xf32>
    %881 = vector.shape_cast %880 : vector<1x1x128xf32> to vector<1x128xf32>
    %882 = vector.extract_strided_slice %881 {offsets = [0, 96], sizes = [1, 32], strides = [1, 1]} : vector<1x128xf32> to vector<1x32xf32>
    %883 = vector.broadcast %882 : vector<1x32xf32> to vector<8x32xf32>
    %884 = arith.addf %879, %883 : vector<8x32xf32>
    %885 = vector.broadcast %851 : f32 to vector<8x32xf32>
    %886 = arith.mulf %885, %850 : vector<8x32xf32>
    %887 = vector.broadcast %852 : f32 to vector<8x32xf32>
    %888 = arith.mulf %887, %862 : vector<8x32xf32>
    %889 = arith.addf %886, %888 : vector<8x32xf32>
    %890 = vector.broadcast %853 : f32 to vector<8x32xf32>
    %891 = arith.mulf %890, %884 : vector<8x32xf32>
    %892 = arith.addf %889, %891 : vector<8x32xf32>
    %c1_181 = arith.constant 1 : index
    %c0_182 = arith.constant 0 : index
    %893 = memref.load %arg17[%c1_181, %c0_182] : memref<2x3xf32, #tpu.memory_space<smem>>
    %c1_183 = arith.constant 1 : index
    %c1_184 = arith.constant 1 : index
    %894 = memref.load %arg17[%c1_183, %c1_184] : memref<2x3xf32, #tpu.memory_space<smem>>
    %c1_185 = arith.constant 1 : index
    %c2_186 = arith.constant 2 : index
    %895 = memref.load %arg17[%c1_185, %c2_186] : memref<2x3xf32, #tpu.memory_space<smem>>
    %c1_187 = arith.constant 1 : index
    %c0_188 = arith.constant 0 : index
    %c0_189 = arith.constant 0 : index
    %896 = vector.load %arg14[%c1_187, %c0_188, %c0_189] : memref<2x32x96xf32, #tpu.memory_space<vmem>>, vector<1x32x96xf32>
    %897 = vector.shape_cast %896 : vector<1x32x96xf32> to vector<32x96xf32>
    %cst_190 = arith.constant dense<0.000000e+00> : vector<8x96xf32>
    %898 = tpu.matmul %892, %897, %cst_190 {dimension_numbers = #tpu.dot_dimension_numbers<[1], [0], [0], [1], [0, 0, 1, 1], [], []>} : vector<8x32xf32>, vector<32x96xf32>, vector<8x96xf32> -> vector<8x96xf32>
    %c1_191 = arith.constant 1 : index
    %c0_192 = arith.constant 0 : index
    %c0_193 = arith.constant 0 : index
    %899 = vector.load %arg16[%c1_191, %c0_192, %c0_193] : memref<2x1x128xf32, #tpu.memory_space<vmem>>, vector<1x1x128xf32>
    %900 = vector.shape_cast %899 : vector<1x1x128xf32> to vector<1x128xf32>
    %901 = vector.extract_strided_slice %900 {offsets = [0, 0], sizes = [1, 96], strides = [1, 1]} : vector<1x128xf32> to vector<1x96xf32>
    %902 = vector.broadcast %901 : vector<1x96xf32> to vector<8x96xf32>
    %903 = arith.addf %898, %902 : vector<8x96xf32>
    %904 = vector.extract_strided_slice %903 {offsets = [0, 0], sizes = [8, 32], strides = [1, 1]} : vector<8x96xf32> to vector<8x32xf32>
    %905 = vector.extract_strided_slice %903 {offsets = [0, 32], sizes = [8, 64], strides = [1, 1]} : vector<8x96xf32> to vector<8x64xf32>
    %906 = arith.mulf %905, %905 : vector<8x64xf32>
    %907 = arith.mulf %905, %906 : vector<8x64xf32>
    %cst_194 = arith.constant 4.471500e-02 : f32
    %908 = vector.broadcast %cst_194 : f32 to vector<8x64xf32>
    %909 = arith.mulf %908, %907 : vector<8x64xf32>
    %910 = arith.addf %905, %909 : vector<8x64xf32>
    %cst_195 = arith.constant 0.797884583 : f32
    %911 = vector.broadcast %cst_195 : f32 to vector<8x64xf32>
    %912 = arith.mulf %911, %910 : vector<8x64xf32>
    %913 = math.tanh %912 : vector<8x64xf32>
    %cst_196 = arith.constant 1.000000e+00 : f32
    %914 = vector.broadcast %cst_196 : f32 to vector<8x64xf32>
    %915 = arith.addf %914, %913 : vector<8x64xf32>
    %cst_197 = arith.constant 5.000000e-01 : f32
    %916 = vector.broadcast %cst_197 : f32 to vector<8x64xf32>
    %917 = arith.mulf %916, %915 : vector<8x64xf32>
    %918 = arith.mulf %905, %917 : vector<8x64xf32>
    %c1_198 = arith.constant 1 : index
    %c0_199 = arith.constant 0 : index
    %c0_200 = arith.constant 0 : index
    %919 = vector.load %arg15[%c1_198, %c0_199, %c0_200] : memref<2x64x32xf32, #tpu.memory_space<vmem>>, vector<1x64x32xf32>
    %920 = vector.shape_cast %919 : vector<1x64x32xf32> to vector<64x32xf32>
    %cst_201 = arith.constant dense<0.000000e+00> : vector<8x32xf32>
    %921 = tpu.matmul %918, %920, %cst_201 {dimension_numbers = #tpu.dot_dimension_numbers<[1], [0], [0], [1], [0, 0, 1, 1], [], []>} : vector<8x64xf32>, vector<64x32xf32>, vector<8x32xf32> -> vector<8x32xf32>
    %c1_202 = arith.constant 1 : index
    %c0_203 = arith.constant 0 : index
    %c0_204 = arith.constant 0 : index
    %922 = vector.load %arg16[%c1_202, %c0_203, %c0_204] : memref<2x1x128xf32, #tpu.memory_space<vmem>>, vector<1x1x128xf32>
    %923 = vector.shape_cast %922 : vector<1x1x128xf32> to vector<1x128xf32>
    %924 = vector.extract_strided_slice %923 {offsets = [0, 96], sizes = [1, 32], strides = [1, 1]} : vector<1x128xf32> to vector<1x32xf32>
    %925 = vector.broadcast %924 : vector<1x32xf32> to vector<8x32xf32>
    %926 = arith.addf %921, %925 : vector<8x32xf32>
    %927 = vector.broadcast %893 : f32 to vector<8x32xf32>
    %928 = arith.mulf %927, %892 : vector<8x32xf32>
    %929 = vector.broadcast %894 : f32 to vector<8x32xf32>
    %930 = arith.mulf %929, %904 : vector<8x32xf32>
    %931 = arith.addf %928, %930 : vector<8x32xf32>
    %932 = vector.broadcast %895 : f32 to vector<8x32xf32>
    %933 = arith.mulf %932, %926 : vector<8x32xf32>
    %934 = arith.addf %931, %933 : vector<8x32xf32>
    %c0_205 = arith.constant 0 : index
    %c0_206 = arith.constant 0 : index
    %935 = vector.load %arg18[%c0_205, %c0_206] : memref<8x32xf32, #tpu.memory_space<vmem>>, vector<8x32xf32>
    tpu.vector_store %arg18[%c0_205, %c0_206], %934 {strides = array<i32>} : memref<8x32xf32, #tpu.memory_space<vmem>>, vector<8x32xf32>,
    return
  }
  func.func @transform_0(%arg0: i32) -> (i32, i32) {
    %c0_i32 = arith.constant 0 : i32
    %c0_i32_0 = arith.constant 0 : i32
    return %arg0, %c0_i32 : i32, i32
  }
  func.func @transform_1(%arg0: i32) -> (i32, i32) {
    %c0_i32 = arith.constant 0 : i32
    %c0_i32_0 = arith.constant 0 : i32
    return %arg0, %c0_i32 : i32, i32
  }
  func.func @transform_2(%arg0: i32) -> (i32, i32) {
    %c0_i32 = arith.constant 0 : i32
    %c0_i32_0 = arith.constant 0 : i32
    %c0_i32_1 = arith.constant 0 : i32
    return %c0_i32, %c0_i32_0 : i32, i32
  }
  func.func @transform_3(%arg0: i32) -> (i32, i32) {
    %c0_i32 = arith.constant 0 : i32
    %c0_i32_0 = arith.constant 0 : i32
    %c0_i32_1 = arith.constant 0 : i32
    return %c0_i32, %c0_i32_0 : i32, i32
  }
  func.func @transform_4(%arg0: i32) -> (i32, i32) {
    %c0_i32 = arith.constant 0 : i32
    %c0_i32_0 = arith.constant 0 : i32
    %c0_i32_1 = arith.constant 0 : i32
    return %c0_i32, %c0_i32_0 : i32, i32
  }
  func.func @transform_5(%arg0: i32) -> (i32, i32) {
    %c0_i32 = arith.constant 0 : i32
    %c0_i32_0 = arith.constant 0 : i32
    %c0_i32_1 = arith.constant 0 : i32
    return %c0_i32, %c0_i32_0 : i32, i32
  }
  func.func @transform_6(%arg0: i32) -> (i32, i32, i32) {
    %c0_i32 = arith.constant 0 : i32
    %c0_i32_0 = arith.constant 0 : i32
    %c0_i32_1 = arith.constant 0 : i32
    %c0_i32_2 = arith.constant 0 : i32
    return %c0_i32, %c0_i32_0, %c0_i32_1 : i32, i32, i32
  }
  func.func @transform_7(%arg0: i32) -> (i32, i32) {
    %c0_i32 = arith.constant 0 : i32
    %c0_i32_0 = arith.constant 0 : i32
    %c0_i32_1 = arith.constant 0 : i32
    return %c0_i32, %c0_i32_0 : i32, i32
  }
  func.func @transform_8(%arg0: i32) -> (i32, i32) {
    %c0_i32 = arith.constant 0 : i32
    %c0_i32_0 = arith.constant 0 : i32
    %c0_i32_1 = arith.constant 0 : i32
    return %c0_i32, %c0_i32_0 : i32, i32
  }
  func.func @transform_9(%arg0: i32) -> (i32, i32) {
    %c0_i32 = arith.constant 0 : i32
    %c0_i32_0 = arith.constant 0 : i32
    %c0_i32_1 = arith.constant 0 : i32
    return %c0_i32, %c0_i32_0 : i32, i32
  }
  func.func @transform_10(%arg0: i32) -> (i32, i32) {
    %c0_i32 = arith.constant 0 : i32
    %c0_i32_0 = arith.constant 0 : i32
    %c0_i32_1 = arith.constant 0 : i32
    return %c0_i32, %c0_i32_0 : i32, i32
  }
  func.func @transform_11(%arg0: i32) -> (i32, i32, i32) {
    %c0_i32 = arith.constant 0 : i32
    %c0_i32_0 = arith.constant 0 : i32
    %c0_i32_1 = arith.constant 0 : i32
    %c0_i32_2 = arith.constant 0 : i32
    return %c0_i32, %c0_i32_0, %c0_i32_1 : i32, i32, i32
  }
  func.func @transform_12(%arg0: i32) -> (i32, i32, i32) {
    %c0_i32 = arith.constant 0 : i32
    %c0_i32_0 = arith.constant 0 : i32
    %c0_i32_1 = arith.constant 0 : i32
    %c0_i32_2 = arith.constant 0 : i32
    return %c0_i32, %c0_i32_0, %c0_i32_1 : i32, i32, i32
  }
  func.func @transform_13(%arg0: i32) -> (i32, i32, i32) {
    %c0_i32 = arith.constant 0 : i32
    %c0_i32_0 = arith.constant 0 : i32
    %c0_i32_1 = arith.constant 0 : i32
    %c0_i32_2 = arith.constant 0 : i32
    return %c0_i32, %c0_i32_0, %c0_i32_1 : i32, i32, i32
  }
  func.func @transform_14(%arg0: i32) -> (i32, i32, i32) {
    %c0_i32 = arith.constant 0 : i32
    %c0_i32_0 = arith.constant 0 : i32
    %c0_i32_1 = arith.constant 0 : i32
    %c0_i32_2 = arith.constant 0 : i32
    return %c0_i32, %c0_i32_0, %c0_i32_1 : i32, i32, i32
  }
  func.func @transform_15(%arg0: i32) -> (i32, i32, i32) {
    %c0_i32 = arith.constant 0 : i32
    %c0_i32_0 = arith.constant 0 : i32
    %c0_i32_1 = arith.constant 0 : i32
    %c0_i32_2 = arith.constant 0 : i32
    return %c0_i32, %c0_i32_0, %c0_i32_1 : i32, i32, i32
  }
  func.func @transform_16(%arg0: i32) -> (i32, i32) {
    %c0_i32 = arith.constant 0 : i32
    %c0_i32_0 = arith.constant 0 : i32
    %c0_i32_1 = arith.constant 0 : i32
    return %c0_i32, %c0_i32_0 : i32, i32
  }
  func.func @transform_17(%arg0: i32) -> (i32, i32) {
    %c0_i32 = arith.constant 0 : i32
    %c0_i32_0 = arith.constant 0 : i32
    return %arg0, %c0_i32 : i32, i32
  }
}

</mosaic_0001>

<llo_original>
// kernel: tpu_custom_call.1
$region0: #{tpu_custom_call.1}
  #allocation0 [shape = 'u32[]', space=smem, size = 0x4, offset = 0x4, fixed_abs, tag = 'smem constant byte address 0x4 - core index']
  #allocation1 [shape = 'u32[144,128]{1,0:T(1,128)}', space=vmem, size = 0x12000, scoped, tag = 'internal scratch']
  %s0 = inlined_call_operand.vmem [shape: f32[8,100], index: 0, kind: input, shape index: {}]
  %s1 = inlined_call_operand.vmem [shape: f32[8,2], index: 1, kind: input, shape index: {}]
  %s2 = inlined_call_operand.vmem [shape: f32[100,288], index: 2, kind: input, shape index: {}]
  %s3 = inlined_call_operand.vmem [shape: f32[2,288], index: 3, kind: input, shape index: {}]
  %s4 = inlined_call_operand.vmem [shape: f32[2,100], index: 4, kind: input, shape index: {}]
  %s5 = inlined_call_operand.vmem [shape: f32[2,2], index: 5, kind: input, shape index: {}]
  %s6 = inlined_call_operand.vmem [shape: f32[5,2,32], index: 6, kind: input, shape index: {}]
  %s7 = inlined_call_operand.vmem [shape: f32[32,512], index: 7, kind: input, shape index: {}]
  %s8 = inlined_call_operand.vmem [shape: f32[128,64], index: 8, kind: input, shape index: {}]
  %s9 = inlined_call_operand.vmem [shape: f32[2,288], index: 9, kind: input, shape index: {}]
  %s10 = inlined_call_operand.vmem [shape: f32[1,192], index: 10, kind: input, shape index: {}]
  %s11 = inlined_call_operand.vmem [shape: f32[6,32,128], index: 11, kind: input, shape index: {}]
  %s12 = inlined_call_operand.vmem [shape: f32[2,1,128], index: 12, kind: input, shape index: {}]
  %s13 = inlined_call_operand.vmem [shape: f32[2,32,96], index: 13, kind: input, shape index: {}]
  %s14 = inlined_call_operand.vmem [shape: f32[2,64,32], index: 14, kind: input, shape index: {}]
  %s15 = inlined_call_operand.vmem [shape: f32[2,1,128], index: 15, kind: input, shape index: {}]
  %s16 = inlined_call_operand.vmem [shape: f32[2,3], index: 16, kind: input, shape index: {}]
  %s17 = inlined_call_operand.hbm [shape: f32[8,32], index: 17, kind: output, shape index: {}]
  %s18 = sld [smem:[#allocation0]]
  $region82: #{tpu_custom_call.1} parent=0
    _
  %s20 = ssub.s32 1, %s18
  %s21 = scalar_select 0, %s20, %s18
  $region1: #{tpu_custom_call.1} parent=0
    #allocation2 [shape = 'u8[1024]{0}', space=smem, size = 0x400, scoped, tag = 'input window, operand 16, single buffered']
    #allocation3 [shape = 's32[1]{0}', space=sflag, size = 0x4, scoped, tag = 'scoped memory for tpu_custom_call.1']
    #allocation4 [shape = 's32[1]{0}', space=sflag, size = 0x4, scoped, tag = 'scoped memory for tpu_custom_call.1']
    #allocation5 [shape = 'u8[4096]{0}', space=vmem, size = 0x1000, scoped, tag = 'output window, operand 0, single buffered']
    %22 = vsyncpa [#allocation4], 0
    %23 = vsyncpa [#allocation3], 0
    // Predicated region
    $region2: #{tpu_custom_call.1} parent=1 // pred_check
      _
    $region3: #{tpu_custom_call.1} parent=1 // pred_check_branch
      %25 = sbr.rel (0) target = $region5
    $region4: #{tpu_custom_call.1} parent=1 // pred_region
      _
    $region5: #{tpu_custom_call.1} parent=1 // pred_fallthru
      _
    // Predicated region
    $region6: #{tpu_custom_call.1} parent=1 // pred_check
      _
    $region7: #{tpu_custom_call.1} parent=1 // pred_check_branch
      %27 = sbr.rel (0) target = $region9
    $region8: #{tpu_custom_call.1} parent=1 // pred_region
      _
    $region9: #{tpu_custom_call.1} parent=1 // pred_fallthru
      _
    // Predicated region
    $region10: #{tpu_custom_call.1} parent=1 // pred_check
      _
    $region11: #{tpu_custom_call.1} parent=1 // pred_check_branch
      %29 = sbr.rel (0) target = $region13
    $region12: #{tpu_custom_call.1} parent=1 // pred_region
      _
    $region13: #{tpu_custom_call.1} parent=1 // pred_fallthru
      _
    // Predicated region
    $region14: #{tpu_custom_call.1} parent=1 // pred_check
      _
    $region15: #{tpu_custom_call.1} parent=1 // pred_check_branch
      %31 = sbr.rel (0) target = $region17
    $region16: #{tpu_custom_call.1} parent=1 // pred_region
      _
    $region17: #{tpu_custom_call.1} parent=1 // pred_fallthru
      _
    // Predicated region
    $region18: #{tpu_custom_call.1} parent=1 // pred_check
      _
    $region19: #{tpu_custom_call.1} parent=1 // pred_check_branch
      %33 = sbr.rel (0) target = $region21
    $region20: #{tpu_custom_call.1} parent=1 // pred_region
      _
    $region21: #{tpu_custom_call.1} parent=1 // pred_fallthru
      _
    // Predicated region
    $region22: #{tpu_custom_call.1} parent=1 // pred_check
      _
    $region23: #{tpu_custom_call.1} parent=1 // pred_check_branch
      %35 = sbr.rel (0) target = $region25
    $region24: #{tpu_custom_call.1} parent=1 // pred_region
      _
    $region25: #{tpu_custom_call.1} parent=1 // pred_fallthru
      _
    // Predicated region
    $region26: #{tpu_custom_call.1} parent=1 // pred_check
      _
    $region27: #{tpu_custom_call.1} parent=1 // pred_check_branch
      %37 = sbr.rel (0) target = $region29
    $region28: #{tpu_custom_call.1} parent=1 // pred_region
      _
    $region29: #{tpu_custom_call.1} parent=1 // pred_fallthru
      _
    // Predicated region
    $region30: #{tpu_custom_call.1} parent=1 // pred_check
      _
    $region31: #{tpu_custom_call.1} parent=1 // pred_check_branch
      %39 = sbr.rel (0) target = $region33
    $region32: #{tpu_custom_call.1} parent=1 // pred_region
      _
    $region33: #{tpu_custom_call.1} parent=1 // pred_fallthru
      _
    // Predicated region
    $region34: #{tpu_custom_call.1} parent=1 // pred_check
      _
    $region35: #{tpu_custom_call.1} parent=1 // pred_check_branch
      %41 = sbr.rel (0) target = $region37
    $region36: #{tpu_custom_call.1} parent=1 // pred_region
      _
    $region37: #{tpu_custom_call.1} parent=1 // pred_fallthru
      _
    // Predicated region
    $region38: #{tpu_custom_call.1} parent=1 // pred_check
      _
    $region39: #{tpu_custom_call.1} parent=1 // pred_check_branch
      %43 = sbr.rel (0) target = $region41
    $region40: #{tpu_custom_call.1} parent=1 // pred_region
      _
    $region41: #{tpu_custom_call.1} parent=1 // pred_fallthru
      _
    // Predicated region
    $region42: #{tpu_custom_call.1} parent=1 // pred_check
      _
    $region43: #{tpu_custom_call.1} parent=1 // pred_check_branch
      %45 = sbr.rel (0) target = $region45
    $region44: #{tpu_custom_call.1} parent=1 // pred_region
      _
    $region45: #{tpu_custom_call.1} parent=1 // pred_fallthru
      _
    // Predicated region
    $region46: #{tpu_custom_call.1} parent=1 // pred_check
      _
    $region47: #{tpu_custom_call.1} parent=1 // pred_check_branch
      %47 = sbr.rel (0) target = $region49
    $region48: #{tpu_custom_call.1} parent=1 // pred_region
      _
    $region49: #{tpu_custom_call.1} parent=1 // pred_fallthru
      _
    // Predicated region
    $region50: #{tpu_custom_call.1} parent=1 // pred_check
      _
    $region51: #{tpu_custom_call.1} parent=1 // pred_check_branch
      %49 = sbr.rel (0) target = $region53
    $region52: #{tpu_custom_call.1} parent=1 // pred_region
      _
    $region53: #{tpu_custom_call.1} parent=1 // pred_fallthru
      _
    // Predicated region
    $region54: #{tpu_custom_call.1} parent=1 // pred_check
      _
    $region55: #{tpu_custom_call.1} parent=1 // pred_check_branch
      %51 = sbr.rel (0) target = $region57
    $region56: #{tpu_custom_call.1} parent=1 // pred_region
      _
    $region57: #{tpu_custom_call.1} parent=1 // pred_fallthru
      _
    // Predicated region
    $region58: #{tpu_custom_call.1} parent=1 // pred_check
      _
    $region59: #{tpu_custom_call.1} parent=1 // pred_check_branch
      %53 = sbr.rel (0) target = $region61
    $region60: #{tpu_custom_call.1} parent=1 // pred_region
      _
    $region61: #{tpu_custom_call.1} parent=1 // pred_fallthru
      _
    // Predicated region
    $region62: #{tpu_custom_call.1} parent=1 // pred_check
      _
    $region63: #{tpu_custom_call.1} parent=1 // pred_check_branch
      %55 = sbr.rel (0) target = $region65
    $region64: #{tpu_custom_call.1} parent=1 // pred_region
      _
    $region65: #{tpu_custom_call.1} parent=1 // pred_fallthru
      _
    // Predicated region
    $region66: #{tpu_custom_call.1} parent=1 // pred_check
      _
    $region67: #{tpu_custom_call.1} parent=1 // pred_check_branch
      %57 = sbr.rel (0) target = $region69
    $region68: #{tpu_custom_call.1} parent=1 // pred_region
      %s59 = ssub.s32 32, 32
      %60 = vsyncadd [#allocation4], %s59
      %s62 = sshll.u32 %s16, 4
      %s63 = int_to_ptr.vmem [resolvable:$true] %s62
      %65 = dma.vmem_to_smem %s63, 32, [#allocation2], [#allocation4]
    $region69: #{tpu_custom_call.1} parent=1 // pred_fallthru
      _
    // Predicated region
    $region70: #{tpu_custom_call.1} parent=1 // pred_check
      _
    $region71: #{tpu_custom_call.1} parent=1 // pred_check_branch
      %67 = sbr.rel (0) target = $region73
    $region72: #{tpu_custom_call.1} parent=1 // pred_region
      %68 = dma.done [#allocation4], 32
    $region73: #{tpu_custom_call.1} parent=1 // pred_fallthru
      _
    %69 = sfence
    %v70 = vld [vmem:[%s0] sm:$0xff]
    %v71 = vld [vmem:[%s4] sm:$0x3]
    %vm72 = vcmask 818176
    %v73 = vsel %vm72, %v70, 0.0
    %74 = vadd.xlane.f32.xlu0 %v73
    %v75 = vpop.xlane.xlu0 %74
    %v76 = vrcp.pop 100.0
    %v77 = vmul.f32 %v75, %v76
    %v78 = vsub.f32 %v70, %v77
    %v79 = vmul.f32 %v78, %v78
    %v80 = vsel %vm72, %v79, 0.0
    %81 = vadd.xlane.f32.xlu0 %v80
    %v82 = vpop.xlane.xlu0 %81
    %v83 = vmul.f32 %v82, %v76
    %v84 = vadd.f32 %v83, 1e-05
    %v85 = vrsqrt.pop %v84
    %v86 = vmul.f32 %v78, %v85
    %v87 = vlaneseq
    %v88 = vshrl.u32 %v87, 7
    %v89 = vsub.s32 0, %v88
    %v90 = vrot.slane %v71, %v89
    %v91 = vmul.f32 %v86, %v90
    %v92 = vlaneseq
    %v93 = vshrl.u32 %v92, 7
    %v94 = vsub.s32 1, %v93
    %v95 = vrot.slane %v71, %v94
    %v96 = vadd.f32 %v91, %v95
    %v97 = vld [vmem:[%s2] sm:$0xff]
    %v98 = vld [vmem:[%s2 + $0x8] sm:$0xff]
    %v99 = vld [vmem:[%s2 + $0x10] sm:$0xff]
    %v100 = vld [vmem:[%s2 + $0x18] sm:$0xff]
    %v101 = vld [vmem:[%s2 + $0x20] sm:$0xff]
    %v102 = vld [vmem:[%s2 + $0x28] sm:$0xff]
    %v103 = vld [vmem:[%s2 + $0x30] sm:$0xff]
    %v104 = vld [vmem:[%s2 + $0x38] sm:$0xff]
    %v105 = vld [vmem:[%s2 + $0x40] sm:$0xff]
    %v106 = vld [vmem:[%s2 + $0x48] sm:$0xff]
    %v107 = vld [vmem:[%s2 + $0x50] sm:$0xff]
    %v108 = vld [vmem:[%s2 + $0x58] sm:$0xff]
    %v109 = vld [vmem:[%s2 + $0x60] sm:$0xff]
    %v110 = vld [vmem:[%s2 + $0x68] sm:$0xff]
    %v111 = vld [vmem:[%s2 + $0x70] sm:$0xff]
    %v112 = vld [vmem:[%s2 + $0x78] sm:$0xff]
    %v113 = vld [vmem:[%s2 + $0x80] sm:$0xff]
    %v114 = vld [vmem:[%s2 + $0x88] sm:$0xff]
    %v115 = vld [vmem:[%s2 + $0x90] sm:$0xff]
    %v116 = vld [vmem:[%s2 + $0x98] sm:$0xff]
    %v117 = vld [vmem:[%s2 + $0xa0] sm:$0xff]
    %v118 = vld [vmem:[%s2 + $0xa8] sm:$0xff]
    %v119 = vld [vmem:[%s2 + $0xb0] sm:$0xff]
    %v120 = vld [vmem:[%s2 + $0xb8] sm:$0xff]
    %v121 = vld [vmem:[%s2 + $0xc0] sm:$0xff]
    %v122 = vld [vmem:[%s2 + $0xc8] sm:$0xff]
    %v123 = vld [vmem:[%s2 + $0xd0] sm:$0xff]
    %v124 = vld [vmem:[%s2 + $0xd8] sm:$0xff]
    %v125 = vld [vmem:[%s2 + $0xe0] sm:$0xff]
    %v126 = vld [vmem:[%s2 + $0xe8] sm:$0xff]
    %v127 = vld [vmem:[%s2 + $0xf0] sm:$0xff]
    %v128 = vld [vmem:[%s2 + $0xf8] sm:$0xff]
    %v129 = vld [vmem:[%s2 + $0x100] sm:$0xff]
    %v130 = vld [vmem:[%s2 + $0x108] sm:$0xff]
    %v131 = vld [vmem:[%s2 + $0x110] sm:$0xff]
    %v132 = vld [vmem:[%s2 + $0x118] sm:$0xff]
    %v133 = vld [vmem:[%s2 + $0x120] sm:$0xf]
    %v134 = vld [vmem:[%s2 + $0x128] sm:$0xf]
    %v135 = vld [vmem:[%s2 + $0x130] sm:$0xf]
    %v136 = vld [vmem:[%s9] ss:$2 sm:$0x7]
    %v138 = vlaneseq
    %v139 = vshrl.u32 %v138, 7
    %v140 = vsub.s32 0, %v139
    %v141 = vrot.slane %v136, %v140
    %v142 = vlaneseq
    %v143 = vshrl.u32 %v142, 7
    %v144 = vsub.s32 1, %v143
    %v145 = vrot.slane %v136, %v144
    %v146 = vlaneseq
    %v147 = vshrl.u32 %v146, 7
    %v148 = vsub.s32 2, %v147
    %v149 = vrot.slane %v136, %v148
    %v154 = vsel %vm72, %v96, 0
    %vm156 = vcmask 1043456
    %v158 = vsel %vm156, %v133, 0
    %v161 = vsel %vm156, %v134, 0
    %v164 = vsel %vm156, %v135, 0
    %166 = vmatprep.subr.mxu0 %v98
    %167 = vmatpush1.msra.mxu0 %v97
    %168 = vmatprep.subr.mxu0 %v101
    %169 = vmatpush1.msra.mxu0 %v100
    %170 = vmatprep.subr.mxu0 %v104
    %171 = vmatpush1.msra.mxu0 %v103
    %172 = vmatprep.subr.mxu0 %v107
    %173 = vmatpush1.msra.mxu0 %v106
    %174 = vmatprep.subr.mxu0 %v110
    %175 = vmatpush1.msra.mxu0 %v109
    %176 = vmatprep.subr.mxu0 %v113
    %177 = vmatpush1.msra.mxu0 %v112
    %178 = vmatprep.subr.mxu0 %v116
    %179 = vmatpush1.msra.mxu0 %v115
    %180 = vmatprep.subr.mxu0 %v119
    %181 = vmatpush1.msra.mxu0 %v118
    %182 = vmatprep.subr.mxu0 %v122
    %183 = vmatpush1.msra.mxu0 %v121
    %184 = vmatprep.subr.mxu0 %v125
    %185 = vmatpush1.msra.mxu0 %v124
    %186 = vmatprep.subr.mxu0 %v128
    %187 = vmatpush1.msra.mxu0 %v127
    %188 = vmatprep.subr.mxu0 %v131
    %189 = vmatpush1.msra.mxu0 %v130
    %190 = vmatprep.subr.mxu0 %v161
    %191 = vmatpush1.msra.mxu0 %v158
    %192 = vmatprep.subr.mxu0 0.0
    %193 = vmatpush1.msra.mxu0 0.0
    %194 = vmatprep.subr.mxu0 0.0
    %195 = vmatpush1.msra.mxu0 0.0
    %196 = vmatprep.subr.mxu0 0.0
    %197 = vmatpush1.msra.mxu0 0.0
    %198 = vmatprep.subr.mxu0 0.0
    %199 = vmatpush1.msra.mxu0 0.0
    %200 = vmatprep.subr.mxu0 0.0
    %201 = vmatpush1.msra.mxu0 0.0
    %202 = vmatprep.subr.mxu0 0.0
    %203 = vmatpush1.msra.mxu0 0.0
    %204 = vmatprep.subr.mxu0 0.0
    %205 = vmatpush1.msra.mxu0 0.0
    %206 = vmatprep.subr.mxu0 0.0
    %207 = vmatpush1.msra.mxu0 0.0
    %208 = vmatprep.subr.mxu0 0.0
    %209 = vmatpush1.msra.mxu0 0.0
    %210 = vmatprep.subr.mxu0 0.0
    %211 = vmatpush1.msra.mxu0 0.0
    %212 = vmatprep.subr.mxu0 0.0
    %213 = vmatpush1.msra.mxu0 0.0
    %214 = vmatprep.subr.mxu0 0.0
    %215 = vmatpush1.msra.mxu0 0.0
    %216 = vmatprep.subr.mxu0 0.0
    %217 = vmatpush1.msra.mxu0 0.0
    %218 = vmatprep.subr.mxu0 0.0
    %219 = vmatpush1.msra.mxu0 0.0
    %220 = vmatprep.subr.mxu0 0.0
    %221 = vmatpush1.msra.mxu0 0.0
    %222 = vmatprep.subr.mxu0 0.0
    %223 = vmatpush1.msra.mxu0 0.0
    %224 = vmatprep.subr.mxu0 0.0
    %225 = vmatpush1.msra.mxu0 0.0
    %226 = vmatprep.subr.mxu0 0.0
    %227 = vmatpush1.msra.mxu0 0.0
    %228 = vmatprep.subr.mxu0 0.0
    %229 = vmatpush1.msra.mxu0 0.0
    %230 = vmatprep.mubr.f32.mxu0 0.0
    %231 = vmatmul.mubr.f32.gmra.mrb[0].mxu0 %v154
    %v232 = vpop.f32.mrb[0].mxu0
    %v233 = vadd.f32 %v141, %v232
    %v234 = vpop.f32.mrb[0].mxu0
    %v235 = vadd.f32 %v145, %v234
    %236 = vdwg.mxu0
    %237 = vmatprep.subr.mxu0 0.0
    %238 = vmatpush1.msra.mxu0 %v99
    %239 = vmatprep.subr.mxu0 0.0
    %240 = vmatpush1.msra.mxu0 %v102
    %241 = vmatprep.subr.mxu0 0.0
    %242 = vmatpush1.msra.mxu0 %v105
    %243 = vmatprep.subr.mxu0 0.0
    %244 = vmatpush1.msra.mxu0 %v108
    %245 = vmatprep.subr.mxu0 0.0
    %246 = vmatpush1.msra.mxu0 %v111
    %247 = vmatprep.subr.mxu0 0.0
    %248 = vmatpush1.msra.mxu0 %v114
    %249 = vmatprep.subr.mxu0 0.0
    %250 = vmatpush1.msra.mxu0 %v117
    %251 = vmatprep.subr.mxu0 0.0
    %252 = vmatpush1.msra.mxu0 %v120
    %253 = vmatprep.subr.mxu0 0.0
    %254 = vmatpush1.msra.mxu0 %v123
    %255 = vmatprep.subr.mxu0 0.0
    %256 = vmatpush1.msra.mxu0 %v126
    %257 = vmatprep.subr.mxu0 0.0
    %258 = vmatpush1.msra.mxu0 %v129
    %259 = vmatprep.subr.mxu0 0.0
    %260 = vmatpush1.msra.mxu0 %v132
    %261 = vmatprep.subr.mxu0 0.0
    %262 = vmatpush1.msra.mxu0 %v164
    %263 = vmatprep.subr.mxu0 0.0
    %264 = vmatpush1.msra.mxu0 0.0
    %265 = vmatprep.subr.mxu0 0.0
    %266 = vmatpush1.msra.mxu0 0.0
    %267 = vmatprep.subr.mxu0 0.0
    %268 = vmatpush1.msra.mxu0 0.0
    %269 = vmatprep.subr.mxu0 0.0
    %270 = vmatpush1.msra.mxu0 0.0
    %271 = vmatprep.subr.mxu0 0.0
    %272 = vmatpush1.msra.mxu0 0.0
    %273 = vmatprep.subr.mxu0 0.0
    %274 = vmatpush1.msra.mxu0 0.0
    %275 = vmatprep.subr.mxu0 0.0
    %276 = vmatpush1.msra.mxu0 0.0
    %277 = vmatprep.subr.mxu0 0.0
    %278 = vmatpush1.msra.mxu0 0.0
    %279 = vmatprep.subr.mxu0 0.0
    %280 = vmatpush1.msra.mxu0 0.0
    %281 = vmatprep.subr.mxu0 0.0
    %282 = vmatpush1.msra.mxu0 0.0
    %283 = vmatprep.subr.mxu0 0.0
    %284 = vmatpush1.msra.mxu0 0.0
    %285 = vmatprep.subr.mxu0 0.0
    %286 = vmatpush1.msra.mxu0 0.0
    %287 = vmatprep.subr.mxu0 0.0
    %288 = vmatpush1.msra.mxu0 0.0
    %289 = vmatprep.subr.mxu0 0.0
    %290 = vmatpush1.msra.mxu0 0.0
    %291 = vmatprep.subr.mxu0 0.0
    %292 = vmatpush1.msra.mxu0 0.0
    %293 = vmatprep.subr.mxu0 0.0
    %294 = vmatpush1.msra.mxu0 0.0
    %295 = vmatprep.subr.mxu0 0.0
    %296 = vmatpush1.msra.mxu0 0.0
    %297 = vmatprep.subr.mxu0 0.0
    %298 = vmatpush1.msra.mxu0 0.0
    %299 = vmatprep.subr.mxu0 0.0
    %300 = vmatpush1.msra.mxu0 0.0
    %301 = vmatprep.mubr.f32.mxu0 0.0
    %302 = vmatmul.mubr.f32.gmra.mrb[0].mxu0 %v154
    %v303 = vpop.f32.mrb[0].mxu0
    %v304 = vadd.f32 %v149, %v303
    %v305 = vpop.f32.mrb[0].mxu0
    %306 = vdwg.mxu0
    %308 = vrot.lane.b32.xlu0 %v233, 96
    %v309 = vpop.permute.xlu0 %308
    %311 = vrot.lane.b32.xlu0 %v233, 64
    %v312 = vpop.permute.xlu0 %311
    %314 = vrot.lane.b32.xlu0 %v233, 32
    %v315 = vpop.permute.xlu0 %314
    %318 = vrot.lane.b32.xlu0 %v235, 96
    %v319 = vpop.permute.xlu0 %318
    %321 = vrot.lane.b32.xlu0 %v235, 64
    %v322 = vpop.permute.xlu0 %321
    %324 = vrot.lane.b32.xlu0 %v235, 32
    %v325 = vpop.permute.xlu0 %324
    %v327 = vld [vmem:[%s6] sm:$0x3]
    %vm328 = vcmask 261120
    %v329 = vsel %vm328, %v233, 0.0
    %330 = vadd.xlane.f32.xlu0 %v329
    %v331 = vpop.xlane.xlu0 %330
    %v332 = vsel %vm328, %v309, 0.0
    %333 = vadd.xlane.f32.xlu0 %v332
    %v334 = vpop.xlane.xlu0 %333
    %v335 = vsel %vm328, %v312, 0.0
    %336 = vadd.xlane.f32.xlu0 %v335
    %v337 = vpop.xlane.xlu0 %336
    %v338 = vsel %vm328, %v315, 0.0
    %339 = vadd.xlane.f32.xlu0 %v338
    %v340 = vpop.xlane.xlu0 %339
    %v341 = vsel %vm328, %v235, 0.0
    %342 = vadd.xlane.f32.xlu0 %v341
    %v343 = vpop.xlane.xlu0 %342
    %v344 = vsel %vm328, %v319, 0.0
    %345 = vadd.xlane.f32.xlu0 %v344
    %v346 = vpop.xlane.xlu0 %345
    %v347 = vsel %vm328, %v322, 0.0
    %348 = vadd.xlane.f32.xlu0 %v347
    %v349 = vpop.xlane.xlu0 %348
    %v350 = vsel %vm328, %v325, 0.0
    %351 = vadd.xlane.f32.xlu0 %v350
    %v352 = vpop.xlane.xlu0 %351
    %v353 = vsel %vm328, %v304, 0.0
    %354 = vadd.xlane.f32.xlu0 %v353
    %v355 = vpop.xlane.xlu0 %354
    %v356 = vrcp.pop 32.0
    %v357 = vmul.f32 %v331, %v356
    %v358 = vmul.f32 %v334, %v356
    %v359 = vmul.f32 %v337, %v356
    %v360 = vmul.f32 %v340, %v356
    %v361 = vmul.f32 %v343, %v356
    %v362 = vmul.f32 %v346, %v356
    %v363 = vmul.f32 %v349, %v356
    %v364 = vmul.f32 %v352, %v356
    %v365 = vmul.f32 %v355, %v356
    %v366 = vsub.f32 %v233, %v357
    %v367 = vsub.f32 %v309, %v358
    %v368 = vsub.f32 %v312, %v359
    %v369 = vsub.f32 %v315, %v360
    %v370 = vsub.f32 %v235, %v361
    %v371 = vsub.f32 %v319, %v362
    %v372 = vsub.f32 %v322, %v363
    %v373 = vsub.f32 %v325, %v364
    %v374 = vsub.f32 %v304, %v365
    %v375 = vmul.f32 %v366, %v366
    %v376 = vmul.f32 %v367, %v367
    %v377 = vmul.f32 %v368, %v368
    %v378 = vmul.f32 %v369, %v369
    %v379 = vmul.f32 %v370, %v370
    %v380 = vmul.f32 %v371, %v371
    %v381 = vmul.f32 %v372, %v372
    %v382 = vmul.f32 %v373, %v373
    %v383 = vmul.f32 %v374, %v374
    %v384 = vsel %vm328, %v375, 0.0
    %385 = vadd.xlane.f32.xlu0 %v384
    %v386 = vpop.xlane.xlu0 %385
    %v387 = vsel %vm328, %v376, 0.0
    %388 = vadd.xlane.f32.xlu0 %v387
    %v389 = vpop.xlane.xlu0 %388
    %v390 = vsel %vm328, %v377, 0.0
    %391 = vadd.xlane.f32.xlu0 %v390
    %v392 = vpop.xlane.xlu0 %391
    %v393 = vsel %vm328, %v378, 0.0
    %394 = vadd.xlane.f32.xlu0 %v393
    %v395 = vpop.xlane.xlu0 %394
    %v396 = vsel %vm328, %v379, 0.0
    %397 = vadd.xlane.f32.xlu0 %v396
    %v398 = vpop.xlane.xlu0 %397
    %v399 = vsel %vm328, %v380, 0.0
    %400 = vadd.xlane.f32.xlu0 %v399
    %v401 = vpop.xlane.xlu0 %400
    %v402 = vsel %vm328, %v381, 0.0
    %403 = vadd.xlane.f32.xlu0 %v402
    %v404 = vpop.xlane.xlu0 %403
    %v405 = vsel %vm328, %v382, 0.0
    %406 = vadd.xlane.f32.xlu0 %v405
    %v407 = vpop.xlane.xlu0 %406
    %v408 = vsel %vm328, %v383, 0.0
    %409 = vadd.xlane.f32.xlu0 %v408
    %v410 = vpop.xlane.xlu0 %409
    %v411 = vmul.f32 %v386, %v356
    %v412 = vmul.f32 %v389, %v356
    %v413 = vmul.f32 %v392, %v356
    %v414 = vmul.f32 %v395, %v356
    %v415 = vmul.f32 %v398, %v356
    %v416 = vmul.f32 %v401, %v356
    %v417 = vmul.f32 %v404, %v356
    %v418 = vmul.f32 %v407, %v356
    %v419 = vmul.f32 %v410, %v356
    %v420 = vadd.f32 %v411, 1e-05
    %v421 = vadd.f32 %v412, 1e-05
    %v422 = vadd.f32 %v413, 1e-05
    %v423 = vadd.f32 %v414, 1e-05
    %v424 = vadd.f32 %v415, 1e-05
    %v425 = vadd.f32 %v416, 1e-05
    %v426 = vadd.f32 %v417, 1e-05
    %v427 = vadd.f32 %v418, 1e-05
    %v428 = vadd.f32 %v419, 1e-05
    %v429 = vrsqrt.pop %v420
    %v430 = vrsqrt.pop %v421
    %v431 = vrsqrt.pop %v422
    %v432 = vrsqrt.pop %v423
    %v433 = vrsqrt.pop %v424
    %v434 = vrsqrt.pop %v425
    %v435 = vrsqrt.pop %v426
    %v436 = vrsqrt.pop %v427
    %v437 = vrsqrt.pop %v428
    %v438 = vmul.f32 %v366, %v429
    %v439 = vmul.f32 %v367, %v430
    %v440 = vmul.f32 %v368, %v431
    %v441 = vmul.f32 %v369, %v432
    %v442 = vmul.f32 %v370, %v433
    %v443 = vmul.f32 %v371, %v434
    %v444 = vmul.f32 %v372, %v435
    %v445 = vmul.f32 %v373, %v436
    %v446 = vmul.f32 %v374, %v437
    %v447 = vlaneseq
    %v448 = vshrl.u32 %v447, 7
    %v449 = vsub.s32 0, %v448
    %v450 = vrot.slane %v327, %v449
    %v451 = vmul.f32 %v438, %v450
    %v452 = vmul.f32 %v439, %v450
    %v453 = vmul.f32 %v440, %v450
    %v454 = vmul.f32 %v441, %v450
    %v455 = vmul.f32 %v442, %v450
    %v456 = vmul.f32 %v443, %v450
    %v457 = vmul.f32 %v444, %v450
    %v458 = vmul.f32 %v445, %v450
    %v459 = vmul.f32 %v446, %v450
    %v460 = vlaneseq
    %v461 = vshrl.u32 %v460, 7
    %v462 = vsub.s32 1, %v461
    %v463 = vrot.slane %v327, %v462
    %v464 = vadd.f32 %v451, %v463
    %v465 = vadd.f32 %v452, %v463
    %v466 = vadd.f32 %v453, %v463
    %v467 = vadd.f32 %v454, %v463
    %v468 = vadd.f32 %v455, %v463
    %v469 = vadd.f32 %v456, %v463
    %v470 = vadd.f32 %v457, %v463
    %v471 = vadd.f32 %v458, %v463
    %v472 = vadd.f32 %v459, %v463
    %v473 = vld [vmem:[%s1] sm:$0xff]
    %v474 = vld [vmem:[%s5] sm:$0x3]
    %vm475 = vcmask 15360
    %v476 = vsel %vm475, %v473, 0.0
    %477 = vadd.xlane.f32.xlu0 %v476
    %v478 = vpop.xlane.xlu0 %477
    %v479 = vrcp.pop 2.0
    %v480 = vmul.f32 %v478, %v479
    %v481 = vsub.f32 %v473, %v480
    %v482 = vmul.f32 %v481, %v481
    %v483 = vsel %vm475, %v482, 0.0
    %484 = vadd.xlane.f32.xlu0 %v483
    %v485 = vpop.xlane.xlu0 %484
    %v486 = vmul.f32 %v485, %v479
    %v487 = vadd.f32 %v486, 1e-05
    %v488 = vrsqrt.pop %v487
    %v489 = vmul.f32 %v481, %v488
    %v490 = vlaneseq
    %v491 = vshrl.u32 %v490, 7
    %v492 = vsub.s32 0, %v491
    %v493 = vrot.slane %v474, %v492
    %v494 = vmul.f32 %v489, %v493
    %v495 = vlaneseq
    %v496 = vshrl.u32 %v495, 7
    %v497 = vsub.s32 1, %v496
    %v498 = vrot.slane %v474, %v497
    %v499 = vadd.f32 %v494, %v498
    %v500 = vld [vmem:[%s3] ss:$2 sm:$0x7]
    %502 = vset.pattern.permute.xlu0 0
    %503 = vperm.xlu0 %502, %v499
    %v504 = vpop.permute.xlu0 %503
    %v507 = vlaneseq
    %v508 = vshrl.u32 %v507, 7
    %v509 = vsub.s32 0, %v508
    %v510 = vrot.slane %v500, %v509
    %v511 = vlaneseq
    %v512 = vshrl.u32 %v511, 7
    %v513 = vsub.s32 1, %v512
    %v514 = vrot.slane %v500, %v513
    %v515 = vlaneseq
    %v516 = vshrl.u32 %v515, 7
    %v517 = vsub.s32 2, %v516
    %v518 = vrot.slane %v500, %v517
    %v522 = vmul.f32 %v504, %v510
    %v523 = vmul.f32 %v504, %v514
    %v524 = vmul.f32 %v504, %v518
    %s525 = scalar_lea.vmem %s3, 1
    %v526 = vld [vmem:[%s525] ss:$2 sm:$0x7]
    %527 = vset.pattern.permute.xlu0 1
    %528 = vperm.xlu0 %527, %v499
    %v529 = vpop.permute.xlu0 %528
    %v532 = vlaneseq
    %v533 = vshrl.u32 %v532, 7
    %v534 = vsub.s32 0, %v533
    %v535 = vrot.slane %v526, %v534
    %v536 = vlaneseq
    %v537 = vshrl.u32 %v536, 7
    %v538 = vsub.s32 1, %v537
    %v539 = vrot.slane %v526, %v538
    %v540 = vlaneseq
    %v541 = vshrl.u32 %v540, 7
    %v542 = vsub.s32 2, %v541
    %v543 = vrot.slane %v526, %v542
    %v547 = vmul.f32 %v529, %v535
    %v548 = vmul.f32 %v529, %v539
    %v549 = vmul.f32 %v529, %v543
    %v550 = vadd.f32 %v522, %v547
    %v551 = vadd.f32 %v523, %v548
    %v552 = vadd.f32 %v524, %v549
    %s553 = scalar_lea.vmem %s9, 1
    %v554 = vld [vmem:[%s553] ss:$2 sm:$0x7]
    %v556 = vlaneseq
    %v557 = vshrl.u32 %v556, 7
    %v558 = vsub.s32 0, %v557
    %v559 = vrot.slane %v554, %v558
    %v560 = vlaneseq
    %v561 = vshrl.u32 %v560, 7
    %v562 = vsub.s32 1, %v561
    %v563 = vrot.slane %v554, %v562
    %v564 = vlaneseq
    %v565 = vshrl.u32 %v564, 7
    %v566 = vsub.s32 2, %v565
    %v567 = vrot.slane %v554, %v566
    %v571 = vadd.f32 %v550, %v559
    %v572 = vadd.f32 %v551, %v563
    %v573 = vadd.f32 %v552, %v567
    %575 = vrot.lane.b32.xlu0 %v571, 96
    %v576 = vpop.permute.xlu0 %575
    %578 = vrot.lane.b32.xlu0 %v571, 64
    %v579 = vpop.permute.xlu0 %578
    %581 = vrot.lane.b32.xlu0 %v571, 32
    %v582 = vpop.permute.xlu0 %581
    %585 = vrot.lane.b32.xlu0 %v572, 96
    %v586 = vpop.permute.xlu0 %585
    %588 = vrot.lane.b32.xlu0 %v572, 64
    %v589 = vpop.permute.xlu0 %588
    %591 = vrot.lane.b32.xlu0 %v572, 32
    %v592 = vpop.permute.xlu0 %591
    %s594 = scalar_lea.vmem %s6, 2
    %v595 = vld [vmem:[%s594] sm:$0x3]
    %v596 = vsel %vm328, %v571, 0.0
    %597 = vadd.xlane.f32.xlu0 %v596
    %v598 = vpop.xlane.xlu0 %597
    %v599 = vsel %vm328, %v576, 0.0
    %600 = vadd.xlane.f32.xlu0 %v599
    %v601 = vpop.xlane.xlu0 %600
    %v602 = vsel %vm328, %v579, 0.0
    %603 = vadd.xlane.f32.xlu0 %v602
    %v604 = vpop.xlane.xlu0 %603
    %v605 = vsel %vm328, %v582, 0.0
    %606 = vadd.xlane.f32.xlu0 %v605
    %v607 = vpop.xlane.xlu0 %606
    %v608 = vsel %vm328, %v572, 0.0
    %609 = vadd.xlane.f32.xlu0 %v608
    %v610 = vpop.xlane.xlu0 %609
    %v611 = vsel %vm328, %v586, 0.0
    %612 = vadd.xlane.f32.xlu0 %v611
    %v613 = vpop.xlane.xlu0 %612
    %v614 = vsel %vm328, %v589, 0.0
    %615 = vadd.xlane.f32.xlu0 %v614
    %v616 = vpop.xlane.xlu0 %615
    %v617 = vsel %vm328, %v592, 0.0
    %618 = vadd.xlane.f32.xlu0 %v617
    %v619 = vpop.xlane.xlu0 %618
    %v620 = vsel %vm328, %v573, 0.0
    %621 = vadd.xlane.f32.xlu0 %v620
    %v622 = vpop.xlane.xlu0 %621
    %v623 = vmul.f32 %v598, %v356
    %v624 = vmul.f32 %v601, %v356
    %v625 = vmul.f32 %v604, %v356
    %v626 = vmul.f32 %v607, %v356
    %v627 = vmul.f32 %v610, %v356
    %v628 = vmul.f32 %v613, %v356
    %v629 = vmul.f32 %v616, %v356
    %v630 = vmul.f32 %v619, %v356
    %v631 = vmul.f32 %v622, %v356
    %v632 = vsub.f32 %v571, %v623
    %v633 = vsub.f32 %v576, %v624
    %v634 = vsub.f32 %v579, %v625
    %v635 = vsub.f32 %v582, %v626
    %v636 = vsub.f32 %v572, %v627
    %v637 = vsub.f32 %v586, %v628
    %v638 = vsub.f32 %v589, %v629
    %v639 = vsub.f32 %v592, %v630
    %v640 = vsub.f32 %v573, %v631
    %v641 = vmul.f32 %v632, %v632
    %v642 = vmul.f32 %v633, %v633
    %v643 = vmul.f32 %v634, %v634
    %v644 = vmul.f32 %v635, %v635
    %v645 = vmul.f32 %v636, %v636
    %v646 = vmul.f32 %v637, %v637
    %v647 = vmul.f32 %v638, %v638
    %v648 = vmul.f32 %v639, %v639
    %v649 = vmul.f32 %v640, %v640
    %v650 = vsel %vm328, %v641, 0.0
    %651 = vadd.xlane.f32.xlu0 %v650
    %v652 = vpop.xlane.xlu0 %651
    %v653 = vsel %vm328, %v642, 0.0
    %654 = vadd.xlane.f32.xlu0 %v653
    %v655 = vpop.xlane.xlu0 %654
    %v656 = vsel %vm328, %v643, 0.0
    %657 = vadd.xlane.f32.xlu0 %v656
    %v658 = vpop.xlane.xlu0 %657
    %v659 = vsel %vm328, %v644, 0.0
    %660 = vadd.xlane.f32.xlu0 %v659
    %v661 = vpop.xlane.xlu0 %660
    %v662 = vsel %vm328, %v645, 0.0
    %663 = vadd.xlane.f32.xlu0 %v662
    %v664 = vpop.xlane.xlu0 %663
    %v665 = vsel %vm328, %v646, 0.0
    %666 = vadd.xlane.f32.xlu0 %v665
    %v667 = vpop.xlane.xlu0 %666
    %v668 = vsel %vm328, %v647, 0.0
    %669 = vadd.xlane.f32.xlu0 %v668
    %v670 = vpop.xlane.xlu0 %669
    %v671 = vsel %vm328, %v648, 0.0
    %672 = vadd.xlane.f32.xlu0 %v671
    %v673 = vpop.xlane.xlu0 %672
    %v674 = vsel %vm328, %v649, 0.0
    %675 = vadd.xlane.f32.xlu0 %v674
    %v676 = vpop.xlane.xlu0 %675
    %v677 = vmul.f32 %v652, %v356
    %v678 = vmul.f32 %v655, %v356
    %v679 = vmul.f32 %v658, %v356
    %v680 = vmul.f32 %v661, %v356
    %v681 = vmul.f32 %v664, %v356
    %v682 = vmul.f32 %v667, %v356
    %v683 = vmul.f32 %v670, %v356
    %v684 = vmul.f32 %v673, %v356
    %v685 = vmul.f32 %v676, %v356
    %v686 = vadd.f32 %v677, 1e-05
    %v687 = vadd.f32 %v678, 1e-05
    %v688 = vadd.f32 %v679, 1e-05
    %v689 = vadd.f32 %v680, 1e-05
    %v690 = vadd.f32 %v681, 1e-05
    %v691 = vadd.f32 %v682, 1e-05
    %v692 = vadd.f32 %v683, 1e-05
    %v693 = vadd.f32 %v684, 1e-05
    %v694 = vadd.f32 %v685, 1e-05
    %v695 = vrsqrt.pop %v686
    %v696 = vrsqrt.pop %v687
    %v697 = vrsqrt.pop %v688
    %v698 = vrsqrt.pop %v689
    %v699 = vrsqrt.pop %v690
    %v700 = vrsqrt.pop %v691
    %v701 = vrsqrt.pop %v692
    %v702 = vrsqrt.pop %v693
    %v703 = vrsqrt.pop %v694
    %v704 = vmul.f32 %v632, %v695
    %v705 = vmul.f32 %v633, %v696
    %v706 = vmul.f32 %v634, %v697
    %v707 = vmul.f32 %v635, %v698
    %v708 = vmul.f32 %v636, %v699
    %v709 = vmul.f32 %v637, %v700
    %v710 = vmul.f32 %v638, %v701
    %v711 = vmul.f32 %v639, %v702
    %v712 = vmul.f32 %v640, %v703
    %v713 = vlaneseq
    %v714 = vshrl.u32 %v713, 7
    %v715 = vsub.s32 0, %v714
    %v716 = vrot.slane %v595, %v715
    %v717 = vmul.f32 %v704, %v716
    %v718 = vmul.f32 %v705, %v716
    %v719 = vmul.f32 %v706, %v716
    %v720 = vmul.f32 %v707, %v716
    %v721 = vmul.f32 %v708, %v716
    %v722 = vmul.f32 %v709, %v716
    %v723 = vmul.f32 %v710, %v716
    %v724 = vmul.f32 %v711, %v716
    %v725 = vmul.f32 %v712, %v716
    %v726 = vlaneseq
    %v727 = vshrl.u32 %v726, 7
    %v728 = vsub.s32 1, %v727
    %v729 = vrot.slane %v595, %v728
    %v730 = vadd.f32 %v717, %v729
    %v731 = vadd.f32 %v718, %v729
    %v732 = vadd.f32 %v719, %v729
    %v733 = vadd.f32 %v720, %v729
    %v734 = vadd.f32 %v721, %v729
    %v735 = vadd.f32 %v722, %v729
    %v736 = vadd.f32 %v723, %v729
    %v737 = vadd.f32 %v724, %v729
    %v738 = vadd.f32 %v725, %v729
    %s739 = scalar_lea.vmem %s6, 4
    %v740 = vld [vmem:[%s739] sm:$0x3]
    %v741 = vsel %vm328, %v464, 0.0
    %742 = vadd.xlane.f32.xlu0 %v741
    %v743 = vpop.xlane.xlu0 %742
    %v744 = vsel %vm328, %v465, 0.0
    %745 = vadd.xlane.f32.xlu0 %v744
    %v746 = vpop.xlane.xlu0 %745
    %v747 = vsel %vm328, %v466, 0.0
    %748 = vadd.xlane.f32.xlu0 %v747
    %v749 = vpop.xlane.xlu0 %748
    %v750 = vsel %vm328, %v467, 0.0
    %751 = vadd.xlane.f32.xlu0 %v750
    %v752 = vpop.xlane.xlu0 %751
    %v753 = vsel %vm328, %v468, 0.0
    %754 = vadd.xlane.f32.xlu0 %v753
    %v755 = vpop.xlane.xlu0 %754
    %v756 = vsel %vm328, %v469, 0.0
    %757 = vadd.xlane.f32.xlu0 %v756
    %v758 = vpop.xlane.xlu0 %757
    %v759 = vsel %vm328, %v470, 0.0
    %760 = vadd.xlane.f32.xlu0 %v759
    %v761 = vpop.xlane.xlu0 %760
    %v762 = vsel %vm328, %v471, 0.0
    %763 = vadd.xlane.f32.xlu0 %v762
    %v764 = vpop.xlane.xlu0 %763
    %v765 = vsel %vm328, %v472, 0.0
    %766 = vadd.xlane.f32.xlu0 %v765
    %v767 = vpop.xlane.xlu0 %766
    %v768 = vmul.f32 %v743, %v356
    %v769 = vmul.f32 %v746, %v356
    %v770 = vmul.f32 %v749, %v356
    %v771 = vmul.f32 %v752, %v356
    %v772 = vmul.f32 %v755, %v356
    %v773 = vmul.f32 %v758, %v356
    %v774 = vmul.f32 %v761, %v356
    %v775 = vmul.f32 %v764, %v356
    %v776 = vmul.f32 %v767, %v356
    %v777 = vsub.f32 %v464, %v768
    %v778 = vsub.f32 %v465, %v769
    %v779 = vsub.f32 %v466, %v770
    %v780 = vsub.f32 %v467, %v771
    %v781 = vsub.f32 %v468, %v772
    %v782 = vsub.f32 %v469, %v773
    %v783 = vsub.f32 %v470, %v774
    %v784 = vsub.f32 %v471, %v775
    %v785 = vsub.f32 %v472, %v776
    %v786 = vmul.f32 %v777, %v777
    %v787 = vmul.f32 %v778, %v778
    %v788 = vmul.f32 %v779, %v779
    %v789 = vmul.f32 %v780, %v780
    %v790 = vmul.f32 %v781, %v781
    %v791 = vmul.f32 %v782, %v782
    %v792 = vmul.f32 %v783, %v783
    %v793 = vmul.f32 %v784, %v784
    %v794 = vmul.f32 %v785, %v785
    %v795 = vsel %vm328, %v786, 0.0
    %796 = vadd.xlane.f32.xlu0 %v795
    %v797 = vpop.xlane.xlu0 %796
    %v798 = vsel %vm328, %v787, 0.0
    %799 = vadd.xlane.f32.xlu0 %v798
    %v800 = vpop.xlane.xlu0 %799
    %v801 = vsel %vm328, %v788, 0.0
    %802 = vadd.xlane.f32.xlu0 %v801
    %v803 = vpop.xlane.xlu0 %802
    %v804 = vsel %vm328, %v789, 0.0
    %805 = vadd.xlane.f32.xlu0 %v804
    %v806 = vpop.xlane.xlu0 %805
    %v807 = vsel %vm328, %v790, 0.0
    %808 = vadd.xlane.f32.xlu0 %v807
    %v809 = vpop.xlane.xlu0 %808
    %v810 = vsel %vm328, %v791, 0.0
    %811 = vadd.xlane.f32.xlu0 %v810
    %v812 = vpop.xlane.xlu0 %811
    %v813 = vsel %vm328, %v792, 0.0
    %814 = vadd.xlane.f32.xlu0 %v813
    %v815 = vpop.xlane.xlu0 %814
    %v816 = vsel %vm328, %v793, 0.0
    %817 = vadd.xlane.f32.xlu0 %v816
    %v818 = vpop.xlane.xlu0 %817
    %v819 = vsel %vm328, %v794, 0.0
    %820 = vadd.xlane.f32.xlu0 %v819
    %v821 = vpop.xlane.xlu0 %820
    %v822 = vmul.f32 %v797, %v356
    %v823 = vmul.f32 %v800, %v356
    %v824 = vmul.f32 %v803, %v356
    %v825 = vmul.f32 %v806, %v356
    %v826 = vmul.f32 %v809, %v356
    %v827 = vmul.f32 %v812, %v356
    %v828 = vmul.f32 %v815, %v356
    %v829 = vmul.f32 %v818, %v356
    %v830 = vmul.f32 %v821, %v356
    %v831 = vadd.f32 %v822, 1e-05
    %v832 = vadd.f32 %v823, 1e-05
    %v833 = vadd.f32 %v824, 1e-05
    %v834 = vadd.f32 %v825, 1e-05
    %v835 = vadd.f32 %v826, 1e-05
    %v836 = vadd.f32 %v827, 1e-05
    %v837 = vadd.f32 %v828, 1e-05
    %v838 = vadd.f32 %v829, 1e-05
    %v839 = vadd.f32 %v830, 1e-05
    %v840 = vrsqrt.pop %v831
    %v841 = vrsqrt.pop %v832
    %v842 = vrsqrt.pop %v833
    %v843 = vrsqrt.pop %v834
    %v844 = vrsqrt.pop %v835
    %v845 = vrsqrt.pop %v836
    %v846 = vrsqrt.pop %v837
    %v847 = vrsqrt.pop %v838
    %v848 = vrsqrt.pop %v839
    %v849 = vmul.f32 %v777, %v840
    %v850 = vmul.f32 %v778, %v841
    %v851 = vmul.f32 %v779, %v842
    %v852 = vmul.f32 %v780, %v843
    %v853 = vmul.f32 %v781, %v844
    %v854 = vmul.f32 %v782, %v845
    %v855 = vmul.f32 %v783, %v846
    %v856 = vmul.f32 %v784, %v847
    %v857 = vmul.f32 %v785, %v848
    %v858 = vlaneseq
    %v859 = vshrl.u32 %v858, 7
    %v860 = vsub.s32 0, %v859
    %v861 = vrot.slane %v740, %v860
    %v862 = vmul.f32 %v849, %v861
    %v863 = vmul.f32 %v850, %v861
    %v864 = vmul.f32 %v851, %v861
    %v865 = vmul.f32 %v852, %v861
    %v866 = vmul.f32 %v853, %v861
    %v867 = vmul.f32 %v854, %v861
    %v868 = vmul.f32 %v855, %v861
    %v869 = vmul.f32 %v856, %v861
    %v870 = vmul.f32 %v857, %v861
    %v871 = vlaneseq
    %v872 = vshrl.u32 %v871, 7
    %v873 = vsub.s32 1, %v872
    %v874 = vrot.slane %v740, %v873
    %v875 = vadd.f32 %v862, %v874
    %v876 = vadd.f32 %v863, %v874
    %v877 = vadd.f32 %v864, %v874
    %v878 = vadd.f32 %v865, %v874
    %v879 = vadd.f32 %v866, %v874
    %v880 = vadd.f32 %v867, %v874
    %v881 = vadd.f32 %v868, %v874
    %v882 = vadd.f32 %v869, %v874
    %v883 = vadd.f32 %v870, %v874
    %s884 = scalar_lea.vmem %s6, 6
    %v885 = vld [vmem:[%s884] sm:$0x3]
    %v886 = vsel %vm328, %v730, 0.0
    %887 = vadd.xlane.f32.xlu0 %v886
    %v888 = vpop.xlane.xlu0 %887
    %v889 = vsel %vm328, %v731, 0.0
    %890 = vadd.xlane.f32.xlu0 %v889
    %v891 = vpop.xlane.xlu0 %890
    %v892 = vsel %vm328, %v732, 0.0
    %893 = vadd.xlane.f32.xlu0 %v892
    %v894 = vpop.xlane.xlu0 %893
    %v895 = vsel %vm328, %v733, 0.0
    %896 = vadd.xlane.f32.xlu0 %v895
    %v897 = vpop.xlane.xlu0 %896
    %v898 = vsel %vm328, %v734, 0.0
    %899 = vadd.xlane.f32.xlu0 %v898
    %v900 = vpop.xlane.xlu0 %899
    %v901 = vsel %vm328, %v735, 0.0
    %902 = vadd.xlane.f32.xlu0 %v901
    %v903 = vpop.xlane.xlu0 %902
    %v904 = vsel %vm328, %v736, 0.0
    %905 = vadd.xlane.f32.xlu0 %v904
    %v906 = vpop.xlane.xlu0 %905
    %v907 = vsel %vm328, %v737, 0.0
    %908 = vadd.xlane.f32.xlu0 %v907
    %v909 = vpop.xlane.xlu0 %908
    %v910 = vsel %vm328, %v738, 0.0
    %911 = vadd.xlane.f32.xlu0 %v910
    %v912 = vpop.xlane.xlu0 %911
    %v913 = vmul.f32 %v888, %v356
    %v914 = vmul.f32 %v891, %v356
    %v915 = vmul.f32 %v894, %v356
    %v916 = vmul.f32 %v897, %v356
    %v917 = vmul.f32 %v900, %v356
    %v918 = vmul.f32 %v903, %v356
    %v919 = vmul.f32 %v906, %v356
    %v920 = vmul.f32 %v909, %v356
    %v921 = vmul.f32 %v912, %v356
    %v922 = vsub.f32 %v730, %v913
    %v923 = vsub.f32 %v731, %v914
    %v924 = vsub.f32 %v732, %v915
    %v925 = vsub.f32 %v733, %v916
    %v926 = vsub.f32 %v734, %v917
    %v927 = vsub.f32 %v735, %v918
    %v928 = vsub.f32 %v736, %v919
    %v929 = vsub.f32 %v737, %v920
    %v930 = vsub.f32 %v738, %v921
    %v931 = vmul.f32 %v922, %v922
    %v932 = vmul.f32 %v923, %v923
    %v933 = vmul.f32 %v924, %v924
    %v934 = vmul.f32 %v925, %v925
    %v935 = vmul.f32 %v926, %v926
    %v936 = vmul.f32 %v927, %v927
    %v937 = vmul.f32 %v928, %v928
    %v938 = vmul.f32 %v929, %v929
    %v939 = vmul.f32 %v930, %v930
    %v940 = vsel %vm328, %v931, 0.0
    %941 = vadd.xlane.f32.xlu0 %v940
    %v942 = vpop.xlane.xlu0 %941
    %v943 = vsel %vm328, %v932, 0.0
    %944 = vadd.xlane.f32.xlu0 %v943
    %v945 = vpop.xlane.xlu0 %944
    %v946 = vsel %vm328, %v933, 0.0
    %947 = vadd.xlane.f32.xlu0 %v946
    %v948 = vpop.xlane.xlu0 %947
    %v949 = vsel %vm328, %v934, 0.0
    %950 = vadd.xlane.f32.xlu0 %v949
    %v951 = vpop.xlane.xlu0 %950
    %v952 = vsel %vm328, %v935, 0.0
    %953 = vadd.xlane.f32.xlu0 %v952
    %v954 = vpop.xlane.xlu0 %953
    %v955 = vsel %vm328, %v936, 0.0
    %956 = vadd.xlane.f32.xlu0 %v955
    %v957 = vpop.xlane.xlu0 %956
    %v958 = vsel %vm328, %v937, 0.0
    %959 = vadd.xlane.f32.xlu0 %v958
    %v960 = vpop.xlane.xlu0 %959
    %v961 = vsel %vm328, %v938, 0.0
    %962 = vadd.xlane.f32.xlu0 %v961
    %v963 = vpop.xlane.xlu0 %962
    %v964 = vsel %vm328, %v939, 0.0
    %965 = vadd.xlane.f32.xlu0 %v964
    %v966 = vpop.xlane.xlu0 %965
    %v967 = vmul.f32 %v942, %v356
    %v968 = vmul.f32 %v945, %v356
    %v969 = vmul.f32 %v948, %v356
    %v970 = vmul.f32 %v951, %v356
    %v971 = vmul.f32 %v954, %v356
    %v972 = vmul.f32 %v957, %v356
    %v973 = vmul.f32 %v960, %v356
    %v974 = vmul.f32 %v963, %v356
    %v975 = vmul.f32 %v966, %v356
    %v976 = vadd.f32 %v967, 1e-05
    %v977 = vadd.f32 %v968, 1e-05
    %v978 = vadd.f32 %v969, 1e-05
    %v979 = vadd.f32 %v970, 1e-05
    %v980 = vadd.f32 %v971, 1e-05
    %v981 = vadd.f32 %v972, 1e-05
    %v982 = vadd.f32 %v973, 1e-05
    %v983 = vadd.f32 %v974, 1e-05
    %v984 = vadd.f32 %v975, 1e-05
    %v985 = vrsqrt.pop %v976
    %v986 = vrsqrt.pop %v977
    %v987 = vrsqrt.pop %v978
    %v988 = vrsqrt.pop %v979
    %v989 = vrsqrt.pop %v980
    %v990 = vrsqrt.pop %v981
    %v991 = vrsqrt.pop %v982
    %v992 = vrsqrt.pop %v983
    %v993 = vrsqrt.pop %v984
    %v994 = vmul.f32 %v922, %v985
    %v995 = vmul.f32 %v923, %v986
    %v996 = vmul.f32 %v924, %v987
    %v997 = vmul.f32 %v925, %v988
    %v998 = vmul.f32 %v926, %v989
    %v999 = vmul.f32 %v927, %v990
    %v1000 = vmul.f32 %v928, %v991
    %v1001 = vmul.f32 %v929, %v992
    %v1002 = vmul.f32 %v930, %v993
    %v1003 = vlaneseq
    %v1004 = vshrl.u32 %v1003, 7
    %v1005 = vsub.s32 0, %v1004
    %v1006 = vrot.slane %v885, %v1005
    %v1007 = vmul.f32 %v994, %v1006
    %v1008 = vmul.f32 %v995, %v1006
    %v1009 = vmul.f32 %v996, %v1006
    %v1010 = vmul.f32 %v997, %v1006
    %v1011 = vmul.f32 %v998, %v1006
    %v1012 = vmul.f32 %v999, %v1006
    %v1013 = vmul.f32 %v1000, %v1006
    %v1014 = vmul.f32 %v1001, %v1006
    %v1015 = vmul.f32 %v1002, %v1006
    %v1016 = vlaneseq
    %v1017 = vshrl.u32 %v1016, 7
    %v1018 = vsub.s32 1, %v1017
    %v1019 = vrot.slane %v885, %v1018
    %v1020 = vadd.f32 %v1007, %v1019
    %v1021 = vadd.f32 %v1008, %v1019
    %v1022 = vadd.f32 %v1009, %v1019
    %v1023 = vadd.f32 %v1010, %v1019
    %v1024 = vadd.f32 %v1011, %v1019
    %v1025 = vadd.f32 %v1012, %v1019
    %v1026 = vadd.f32 %v1013, %v1019
    %v1027 = vadd.f32 %v1014, %v1019
    %v1028 = vadd.f32 %v1015, %v1019
    %v1029 = vld [vmem:[%s7] sm:$0xff]
    %v1030 = vld [vmem:[%s7 + $0x20] sm:$0xff]
    %v1031 = vld [vmem:[%s7 + $0x40] sm:$0xff]
    %v1032 = vld [vmem:[%s7 + $0x60] sm:$0xff]
    %v1034 = vsel %vm328, %v875, 0
    %v1037 = vsel %vm328, %v876, 0
    %v1040 = vsel %vm328, %v877, 0
    %v1043 = vsel %vm328, %v878, 0
    %v1046 = vsel %vm328, %v879, 0
    %v1049 = vsel %vm328, %v880, 0
    %v1052 = vsel %vm328, %v881, 0
    %v1055 = vsel %vm328, %v882, 0
    %v1058 = vsel %vm328, %v883, 0
    %1060 = vmatprep.subr.mxu0 0.0
    %1061 = vmatpush1.msra.mxu0 %v1029
    %1062 = vmatprep.subr.mxu0 0.0
    %1063 = vmatpush1.msra.mxu0 %v1030
    %1064 = vmatprep.subr.mxu0 0.0
    %1065 = vmatpush1.msra.mxu0 %v1031
    %1066 = vmatprep.subr.mxu0 0.0
    %1067 = vmatpush1.msra.mxu0 %v1032
    %1068 = vmatprep.subr.mxu0 0.0
    %1069 = vmatpush1.msra.mxu0 0.0
    %1070 = vmatprep.subr.mxu0 0.0
    %1071 = vmatpush1.msra.mxu0 0.0
    %1072 = vmatprep.subr.mxu0 0.0
    %1073 = vmatpush1.msra.mxu0 0.0
    %1074 = vmatprep.subr.mxu0 0.0
    %1075 = vmatpush1.msra.mxu0 0.0
    %1076 = vmatprep.subr.mxu0 0.0
    %1077 = vmatpush1.msra.mxu0 0.0
    %1078 = vmatprep.subr.mxu0 0.0
    %1079 = vmatpush1.msra.mxu0 0.0
    %1080 = vmatprep.subr.mxu0 0.0
    %1081 = vmatpush1.msra.mxu0 0.0
    %1082 = vmatprep.subr.mxu0 0.0
    %1083 = vmatpush1.msra.mxu0 0.0
    %1084 = vmatprep.subr.mxu0 0.0
    %1085 = vmatpush1.msra.mxu0 0.0
    %1086 = vmatprep.subr.mxu0 0.0
    %1087 = vmatpush1.msra.mxu0 0.0
    %1088 = vmatprep.subr.mxu0 0.0
    %1089 = vmatpush1.msra.mxu0 0.0
    %1090 = vmatprep.subr.mxu0 0.0
    %1091 = vmatpush1.msra.mxu0 0.0
    %1092 = vmatprep.subr.mxu0 0.0
    %1093 = vmatpush1.msra.mxu0 0.0
    %1094 = vmatprep.subr.mxu0 0.0
    %1095 = vmatpush1.msra.mxu0 0.0
    %1096 = vmatprep.subr.mxu0 0.0
    %1097 = vmatpush1.msra.mxu0 0.0
    %1098 = vmatprep.subr.mxu0 0.0
    %1099 = vmatpush1.msra.mxu0 0.0
    %1100 = vmatprep.subr.mxu0 0.0
    %1101 = vmatpush1.msra.mxu0 0.0
    %1102 = vmatprep.subr.mxu0 0.0
    %1103 = vmatpush1.msra.mxu0 0.0
    %1104 = vmatprep.subr.mxu0 0.0
    %1105 = vmatpush1.msra.mxu0 0.0
    %1106 = vmatprep.subr.mxu0 0.0
    %1107 = vmatpush1.msra.mxu0 0.0
    %1108 = vmatprep.subr.mxu0 0.0
    %1109 = vmatpush1.msra.mxu0 0.0
    %1110 = vmatprep.subr.mxu0 0.0
    %1111 = vmatpush1.msra.mxu0 0.0
    %1112 = vmatprep.subr.mxu0 0.0
    %1113 = vmatpush1.msra.mxu0 0.0
    %1114 = vmatprep.subr.mxu0 0.0
    %1115 = vmatpush1.msra.mxu0 0.0
    %1116 = vmatprep.subr.mxu0 0.0
    %1117 = vmatpush1.msra.mxu0 0.0
    %1118 = vmatprep.subr.mxu0 0.0
    %1119 = vmatpush1.msra.mxu0 0.0
    %1120 = vmatprep.subr.mxu0 0.0
    %1121 = vmatpush1.msra.mxu0 0.0
    %1122 = vmatprep.subr.mxu0 0.0
    %1123 = vmatpush1.msra.mxu0 0.0
    %1124 = vmatprep.mubr.f32.mxu0 0.0
    %1125 = vmatmul.mubr.f32.gmra.mrb[0].mxu0 %v1034
    %v1126 = vpop.f32.mrb[0].mxu0
    %v1127 = vadd.f32 0.0, %v1126
    %v1128 = vpop.f32.mrb[0].mxu0
    %1129 = vmatprep.mubr.f32.mxu0 0.0
    %1130 = vmatmul.mubr.f32.gmra.mrb[0].mxu0 %v1037
    %v1131 = vpop.f32.mrb[0].mxu0
    %v1132 = vadd.f32 0.0, %v1131
    %v1133 = vpop.f32.mrb[0].mxu0
    %1134 = vmatprep.mubr.f32.mxu0 0.0
    %1135 = vmatmul.mubr.f32.gmra.mrb[0].mxu0 %v1040
    %v1136 = vpop.f32.mrb[0].mxu0
    %v1137 = vadd.f32 0.0, %v1136
    %v1138 = vpop.f32.mrb[0].mxu0
    %1139 = vmatprep.mubr.f32.mxu0 0.0
    %1140 = vmatmul.mubr.f32.gmra.mrb[0].mxu0 %v1043
    %v1141 = vpop.f32.mrb[0].mxu0
    %v1142 = vadd.f32 0.0, %v1141
    %v1143 = vpop.f32.mrb[0].mxu0
    %1144 = vmatprep.mubr.f32.mxu0 0.0
    %1145 = vmatmul.mubr.f32.gmra.mrb[0].mxu0 %v1046
    %v1146 = vpop.f32.mrb[0].mxu0
    %v1147 = vadd.f32 0.0, %v1146
    %v1148 = vpop.f32.mrb[0].mxu0
    %1149 = vmatprep.mubr.f32.mxu0 0.0
    %1150 = vmatmul.mubr.f32.gmra.mrb[0].mxu0 %v1049
    %v1151 = vpop.f32.mrb[0].mxu0
    %v1152 = vadd.f32 0.0, %v1151
    %v1153 = vpop.f32.mrb[0].mxu0
    %1154 = vmatprep.mubr.f32.mxu0 0.0
    %1155 = vmatmul.mubr.f32.gmra.mrb[0].mxu0 %v1052
    %v1156 = vpop.f32.mrb[0].mxu0
    %v1157 = vadd.f32 0.0, %v1156
    %v1158 = vpop.f32.mrb[0].mxu0
    %1159 = vmatprep.mubr.f32.mxu0 0.0
    %1160 = vmatmul.mubr.f32.gmra.mrb[0].mxu0 %v1055
    %v1161 = vpop.f32.mrb[0].mxu0
    %v1162 = vadd.f32 0.0, %v1161
    %v1163 = vpop.f32.mrb[0].mxu0
    %1164 = vmatprep.mubr.f32.mxu0 0.0
    %1165 = vmatmul.mubr.f32.gmra.mrb[0].mxu0 %v1058
    %v1166 = vpop.f32.mrb[0].mxu0
    %v1167 = vadd.f32 0.0, %v1166
    %v1168 = vpop.f32.mrb[0].mxu0
    %1169 = vdwg.mxu0
    %v1170 = vld [vmem:[%s7 + $0x8] sm:$0xff]
    %v1171 = vld [vmem:[%s7 + $0x10] sm:$0xff]
    %v1172 = vld [vmem:[%s7 + $0x28] sm:$0xff]
    %v1173 = vld [vmem:[%s7 + $0x30] sm:$0xff]
    %v1174 = vld [vmem:[%s7 + $0x48] sm:$0xff]
    %v1175 = vld [vmem:[%s7 + $0x50] sm:$0xff]
    %v1176 = vld [vmem:[%s7 + $0x68] sm:$0xff]
    %v1177 = vld [vmem:[%s7 + $0x70] sm:$0xff]
    %v1179 = vsel %vm328, %v1020, 0
    %v1182 = vsel %vm328, %v1021, 0
    %v1185 = vsel %vm328, %v1022, 0
    %v1188 = vsel %vm328, %v1023, 0
    %v1191 = vsel %vm328, %v1024, 0
    %v1194 = vsel %vm328, %v1025, 0
    %v1197 = vsel %vm328, %v1026, 0
    %v1200 = vsel %vm328, %v1027, 0
    %v1203 = vsel %vm328, %v1028, 0
    %1205 = vmatprep.subr.mxu0 %v1171
    %1206 = vmatpush1.msra.mxu0 %v1170
    %1207 = vmatprep.subr.mxu0 %v1173
    %1208 = vmatpush1.msra.mxu0 %v1172
    %1209 = vmatprep.subr.mxu0 %v1175
    %1210 = vmatpush1.msra.mxu0 %v1174
    %1211 = vmatprep.subr.mxu0 %v1177
    %1212 = vmatpush1.msra.mxu0 %v1176
    %1213 = vmatprep.subr.mxu0 0.0
    %1214 = vmatpush1.msra.mxu0 0.0
    %1215 = vmatprep.subr.mxu0 0.0
    %1216 = vmatpush1.msra.mxu0 0.0
    %1217 = vmatprep.subr.mxu0 0.0
    %1218 = vmatpush1.msra.mxu0 0.0
    %1219 = vmatprep.subr.mxu0 0.0
    %1220 = vmatpush1.msra.mxu0 0.0
    %1221 = vmatprep.subr.mxu0 0.0
    %1222 = vmatpush1.msra.mxu0 0.0
    %1223 = vmatprep.subr.mxu0 0.0
    %1224 = vmatpush1.msra.mxu0 0.0
    %1225 = vmatprep.subr.mxu0 0.0
    %1226 = vmatpush1.msra.mxu0 0.0
    %1227 = vmatprep.subr.mxu0 0.0
    %1228 = vmatpush1.msra.mxu0 0.0
    %1229 = vmatprep.subr.mxu0 0.0
    %1230 = vmatpush1.msra.mxu0 0.0
    %1231 = vmatprep.subr.mxu0 0.0
    %1232 = vmatpush1.msra.mxu0 0.0
    %1233 = vmatprep.subr.mxu0 0.0
    %1234 = vmatpush1.msra.mxu0 0.0
    %1235 = vmatprep.subr.mxu0 0.0
    %1236 = vmatpush1.msra.mxu0 0.0
    %1237 = vmatprep.subr.mxu0 0.0
    %1238 = vmatpush1.msra.mxu0 0.0
    %1239 = vmatprep.subr.mxu0 0.0
    %1240 = vmatpush1.msra.mxu0 0.0
    %1241 = vmatprep.subr.mxu0 0.0
    %1242 = vmatpush1.msra.mxu0 0.0
    %1243 = vmatprep.subr.mxu0 0.0
    %1244 = vmatpush1.msra.mxu0 0.0
    %1245 = vmatprep.subr.mxu0 0.0
    %1246 = vmatpush1.msra.mxu0 0.0
    %1247 = vmatprep.subr.mxu0 0.0
    %1248 = vmatpush1.msra.mxu0 0.0
    %1249 = vmatprep.subr.mxu0 0.0
    %1250 = vmatpush1.msra.mxu0 0.0
    %1251 = vmatprep.subr.mxu0 0.0
    %1252 = vmatpush1.msra.mxu0 0.0
    %1253 = vmatprep.subr.mxu0 0.0
    %1254 = vmatpush1.msra.mxu0 0.0
    %1255 = vmatprep.subr.mxu0 0.0
    %1256 = vmatpush1.msra.mxu0 0.0
    %1257 = vmatprep.subr.mxu0 0.0
    %1258 = vmatpush1.msra.mxu0 0.0
    %1259 = vmatprep.subr.mxu0 0.0
    %1260 = vmatpush1.msra.mxu0 0.0
    %1261 = vmatprep.subr.mxu0 0.0
    %1262 = vmatpush1.msra.mxu0 0.0
    %1263 = vmatprep.subr.mxu0 0.0
    %1264 = vmatpush1.msra.mxu0 0.0
    %1265 = vmatprep.subr.mxu0 0.0
    %1266 = vmatpush1.msra.mxu0 0.0
    %1267 = vmatprep.subr.mxu0 0.0
    %1268 = vmatpush1.msra.mxu0 0.0
    %1269 = vmatprep.mubr.f32.mxu0 0.0
    %1270 = vmatmul.mubr.f32.gmra.mrb[0].mxu0 %v1179
    %v1271 = vpop.f32.mrb[0].mxu0
    %v1272 = vadd.f32 0.0, %v1271
    %v1273 = vpop.f32.mrb[0].mxu0
    %v1274 = vadd.f32 0.0, %v1273
    %1275 = vmatprep.mubr.f32.mxu0 0.0
    %1276 = vmatmul.mubr.f32.gmra.mrb[0].mxu0 %v1182
    %v1277 = vpop.f32.mrb[0].mxu0
    %v1278 = vadd.f32 0.0, %v1277
    %v1279 = vpop.f32.mrb[0].mxu0
    %v1280 = vadd.f32 0.0, %v1279
    %1281 = vmatprep.mubr.f32.mxu0 0.0
    %1282 = vmatmul.mubr.f32.gmra.mrb[0].mxu0 %v1185
    %v1283 = vpop.f32.mrb[0].mxu0
    %v1284 = vadd.f32 0.0, %v1283
    %v1285 = vpop.f32.mrb[0].mxu0
    %v1286 = vadd.f32 0.0, %v1285
    %1287 = vmatprep.mubr.f32.mxu0 0.0
    %1288 = vmatmul.mubr.f32.gmra.mrb[0].mxu0 %v1188
    %v1289 = vpop.f32.mrb[0].mxu0
    %v1290 = vadd.f32 0.0, %v1289
    %v1291 = vpop.f32.mrb[0].mxu0
    %v1292 = vadd.f32 0.0, %v1291
    %1293 = vmatprep.mubr.f32.mxu0 0.0
    %1294 = vmatmul.mubr.f32.gmra.mrb[0].mxu0 %v1191
    %v1295 = vpop.f32.mrb[0].mxu0
    %v1296 = vadd.f32 0.0, %v1295
    %v1297 = vpop.f32.mrb[0].mxu0
    %v1298 = vadd.f32 0.0, %v1297
    %1299 = vmatprep.mubr.f32.mxu0 0.0
    %1300 = vmatmul.mubr.f32.gmra.mrb[0].mxu0 %v1194
    %v1301 = vpop.f32.mrb[0].mxu0
    %v1302 = vadd.f32 0.0, %v1301
    %v1303 = vpop.f32.mrb[0].mxu0
    %v1304 = vadd.f32 0.0, %v1303
    %1305 = vmatprep.mubr.f32.mxu0 0.0
    %1306 = vmatmul.mubr.f32.gmra.mrb[0].mxu0 %v1197
    %v1307 = vpop.f32.mrb[0].mxu0
    %v1308 = vadd.f32 0.0, %v1307
    %v1309 = vpop.f32.mrb[0].mxu0
    %v1310 = vadd.f32 0.0, %v1309
    %1311 = vmatprep.mubr.f32.mxu0 0.0
    %1312 = vmatmul.mubr.f32.gmra.mrb[0].mxu0 %v1200
    %v1313 = vpop.f32.mrb[0].mxu0
    %v1314 = vadd.f32 0.0, %v1313
    %v1315 = vpop.f32.mrb[0].mxu0
    %v1316 = vadd.f32 0.0, %v1315
    %1317 = vmatprep.mubr.f32.mxu0 0.0
    %1318 = vmatmul.mubr.f32.gmra.mrb[0].mxu0 %v1203
    %v1319 = vpop.f32.mrb[0].mxu0
    %v1320 = vadd.f32 0.0, %v1319
    %v1321 = vpop.f32.mrb[0].mxu0
    %v1322 = vadd.f32 0.0, %v1321
    %1323 = vdwg.mxu0
    %v1324 = vlaneseq
    %v1325 = vshrl.u32 %v1324, 7
    %v1326 = vadd.s32 %v1325, 8
    %v1327 = vadd.s32 %v1325, 16
    %v1328 = vadd.s32 %v1325, 24
    %v1329 = vadd.s32 %v1325, 32
    %v1330 = vadd.s32 %v1325, 40
    %v1331 = vadd.s32 %v1325, 48
    %v1332 = vadd.s32 %v1325, 56
    %v1333 = vadd.s32 %v1325, 64
    %v1334 = vadd.s32 %v1325, 72
    %v1335 = vadd.s32 %v1325, 80
    %v1336 = vadd.s32 %v1325, 88
    %v1337 = vadd.s32 %v1325, 96
    %v1338 = vadd.s32 %v1325, 104
    %v1339 = vadd.s32 %v1325, 112
    %v1340 = vadd.s32 %v1325, 120
    %v1341 = vlaneseq
    %v1342 = vand.u32 %v1341, 127
    %v1343 = vshra.s32 %v1325, 4
    %v1344 = vshra.s32 %v1326, 4
    %v1345 = vshra.s32 %v1327, 4
    %v1346 = vshra.s32 %v1328, 4
    %v1347 = vshra.s32 %v1329, 4
    %v1348 = vshra.s32 %v1330, 4
    %v1349 = vshra.s32 %v1331, 4
    %v1350 = vshra.s32 %v1332, 4
    %v1351 = vshra.s32 %v1333, 4
    %v1352 = vshra.s32 %v1334, 4
    %v1353 = vshra.s32 %v1335, 4
    %v1354 = vshra.s32 %v1336, 4
    %v1355 = vshra.s32 %v1337, 4
    %v1356 = vshra.s32 %v1338, 4
    %v1357 = vshra.s32 %v1339, 4
    %v1358 = vshra.s32 %v1340, 4
    %vm1359 = vcmp.eq.s32.totalorder %v1343, %v1342
    %vm1360 = vcmp.eq.s32.totalorder %v1344, %v1342
    %vm1361 = vcmp.eq.s32.totalorder %v1345, %v1342
    %vm1362 = vcmp.eq.s32.totalorder %v1346, %v1342
    %vm1363 = vcmp.eq.s32.totalorder %v1347, %v1342
    %vm1364 = vcmp.eq.s32.totalorder %v1348, %v1342
    %vm1365 = vcmp.eq.s32.totalorder %v1349, %v1342
    %vm1366 = vcmp.eq.s32.totalorder %v1350, %v1342
    %vm1367 = vcmp.eq.s32.totalorder %v1351, %v1342
    %vm1368 = vcmp.eq.s32.totalorder %v1352, %v1342
    %vm1369 = vcmp.eq.s32.totalorder %v1353, %v1342
    %vm1370 = vcmp.eq.s32.totalorder %v1354, %v1342
    %vm1371 = vcmp.eq.s32.totalorder %v1355, %v1342
    %vm1372 = vcmp.eq.s32.totalorder %v1356, %v1342
    %vm1373 = vcmp.eq.s32.totalorder %v1357, %v1342
    %vm1374 = vcmp.eq.s32.totalorder %v1358, %v1342
    %v1375 = vsel %vm1359, 1, 0
    %v1376 = vsel %vm1360, 1, 0
    %v1377 = vsel %vm1361, 1, 0
    %v1378 = vsel %vm1362, 1, 0
    %v1379 = vsel %vm1363, 1, 0
    %v1380 = vsel %vm1364, 1, 0
    %v1381 = vsel %vm1365, 1, 0
    %v1382 = vsel %vm1366, 1, 0
    %v1383 = vsel %vm1367, 1, 0
    %v1384 = vsel %vm1368, 1, 0
    %v1385 = vsel %vm1369, 1, 0
    %v1386 = vsel %vm1370, 1, 0
    %v1387 = vsel %vm1371, 1, 0
    %v1388 = vsel %vm1372, 1, 0
    %v1389 = vsel %vm1373, 1, 0
    %v1390 = vsel %vm1374, 1, 0
    %v1391 = vcvt.s32.f32 %v1375
    %v1392 = vcvt.s32.f32 %v1376
    %v1393 = vcvt.s32.f32 %v1377
    %v1394 = vcvt.s32.f32 %v1378
    %v1395 = vcvt.s32.f32 %v1379
    %v1396 = vcvt.s32.f32 %v1380
    %v1397 = vcvt.s32.f32 %v1381
    %v1398 = vcvt.s32.f32 %v1382
    %v1399 = vcvt.s32.f32 %v1383
    %v1400 = vcvt.s32.f32 %v1384
    %v1401 = vcvt.s32.f32 %v1385
    %v1402 = vcvt.s32.f32 %v1386
    %v1403 = vcvt.s32.f32 %v1387
    %v1404 = vcvt.s32.f32 %v1388
    %v1405 = vcvt.s32.f32 %v1389
    %v1406 = vcvt.s32.f32 %v1390
    %v1407 = vshra.s32 %v1342, 4
    %vm1408 = vcmp.eq.s32.totalorder %v1407, %v1325
    %v1409 = vsel %vm1408, 1, 0
    %v1410 = vcvt.s32.f32 %v1409
    %v1411 = vmul.f32 %v1127, %v1272
    %v1412 = vmul.f32 %v1132, %v1272
    %v1413 = vmul.f32 %v1137, %v1272
    %v1414 = vmul.f32 %v1142, %v1272
    %v1415 = vmul.f32 %v1147, %v1272
    %v1416 = vmul.f32 %v1152, %v1272
    %v1417 = vmul.f32 %v1157, %v1272
    %v1418 = vmul.f32 %v1162, %v1272
    %v1419 = vmul.f32 %v1167, %v1272
    %v1420 = vmul.f32 %v1127, %v1278
    %v1421 = vmul.f32 %v1132, %v1278
    %v1422 = vmul.f32 %v1137, %v1278
    %v1423 = vmul.f32 %v1142, %v1278
    %v1424 = vmul.f32 %v1147, %v1278
    %v1425 = vmul.f32 %v1152, %v1278
    %v1426 = vmul.f32 %v1157, %v1278
    %v1427 = vmul.f32 %v1162, %v1278
    %v1428 = vmul.f32 %v1167, %v1278
    %v1429 = vmul.f32 %v1127, %v1284
    %v1430 = vmul.f32 %v1132, %v1284
    %v1431 = vmul.f32 %v1137, %v1284
    %v1432 = vmul.f32 %v1142, %v1284
    %v1433 = vmul.f32 %v1147, %v1284
    %v1434 = vmul.f32 %v1152, %v1284
    %v1435 = vmul.f32 %v1157, %v1284
    %v1436 = vmul.f32 %v1162, %v1284
    %v1437 = vmul.f32 %v1167, %v1284
    %v1438 = vmul.f32 %v1127, %v1290
    %v1439 = vmul.f32 %v1132, %v1290
    %v1440 = vmul.f32 %v1137, %v1290
    %v1441 = vmul.f32 %v1142, %v1290
    %v1442 = vmul.f32 %v1147, %v1290
    %v1443 = vmul.f32 %v1152, %v1290
    %v1444 = vmul.f32 %v1157, %v1290
    %v1445 = vmul.f32 %v1162, %v1290
    %v1446 = vmul.f32 %v1167, %v1290
    %v1447 = vmul.f32 %v1127, %v1296
    %v1448 = vmul.f32 %v1132, %v1296
    %v1449 = vmul.f32 %v1137, %v1296
    %v1450 = vmul.f32 %v1142, %v1296
    %v1451 = vmul.f32 %v1147, %v1296
    %v1452 = vmul.f32 %v1152, %v1296
    %v1453 = vmul.f32 %v1157, %v1296
    %v1454 = vmul.f32 %v1162, %v1296
    %v1455 = vmul.f32 %v1167, %v1296
    %v1456 = vmul.f32 %v1127, %v1302
    %v1457 = vmul.f32 %v1132, %v1302
    %v1458 = vmul.f32 %v1137, %v1302
    %v1459 = vmul.f32 %v1142, %v1302
    %v1460 = vmul.f32 %v1147, %v1302
    %v1461 = vmul.f32 %v1152, %v1302
    %v1462 = vmul.f32 %v1157, %v1302
    %v1463 = vmul.f32 %v1162, %v1302
    %v1464 = vmul.f32 %v1167, %v1302
    %v1465 = vmul.f32 %v1127, %v1308
    %v1466 = vmul.f32 %v1132, %v1308
    %v1467 = vmul.f32 %v1137, %v1308
    %v1468 = vmul.f32 %v1142, %v1308
    %v1469 = vmul.f32 %v1147, %v1308
    %v1470 = vmul.f32 %v1152, %v1308
    %v1471 = vmul.f32 %v1157, %v1308
    %v1472 = vmul.f32 %v1162, %v1308
    %v1473 = vmul.f32 %v1167, %v1308
    %v1474 = vmul.f32 %v1127, %v1314
    %v1475 = vmul.f32 %v1132, %v1314
    %v1476 = vmul.f32 %v1137, %v1314
    %v1477 = vmul.f32 %v1142, %v1314
    %v1478 = vmul.f32 %v1147, %v1314
    %v1479 = vmul.f32 %v1152, %v1314
    %v1480 = vmul.f32 %v1157, %v1314
    %v1481 = vmul.f32 %v1162, %v1314
    %v1482 = vmul.f32 %v1167, %v1314
    %v1483 = vmul.f32 %v1127, %v1320
    %v1484 = vmul.f32 %v1132, %v1320
    %v1485 = vmul.f32 %v1137, %v1320
    %v1486 = vmul.f32 %v1142, %v1320
    %v1487 = vmul.f32 %v1147, %v1320
    %v1488 = vmul.f32 %v1152, %v1320
    %v1489 = vmul.f32 %v1157, %v1320
    %v1490 = vmul.f32 %v1162, %v1320
    %v1491 = vmul.f32 %v1167, %v1320
    %1492 = vmatprep.subr.mxu0 0.0
    %1493 = vmatpush1.msra.mxu0 %v1391
    %1494 = vmatprep.subr.mxu0 0.0
    %1495 = vmatpush1.msra.mxu0 %v1392
    %1496 = vmatprep.subr.mxu0 0.0
    %1497 = vmatpush1.msra.mxu0 %v1393
    %1498 = vmatprep.subr.mxu0 0.0
    %1499 = vmatpush1.msra.mxu0 %v1394
    %1500 = vmatprep.subr.mxu0 0.0
    %1501 = vmatpush1.msra.mxu0 %v1395
    %1502 = vmatprep.subr.mxu0 0.0
    %1503 = vmatpush1.msra.mxu0 %v1396
    %1504 = vmatprep.subr.mxu0 0.0
    %1505 = vmatpush1.msra.mxu0 %v1397
    %1506 = vmatprep.subr.mxu0 0.0
    %1507 = vmatpush1.msra.mxu0 %v1398
    %1508 = vmatprep.subr.mxu0 0.0
    %1509 = vmatpush1.msra.mxu0 %v1399
    %1510 = vmatprep.subr.mxu0 0.0
    %1511 = vmatpush1.msra.mxu0 %v1400
    %1512 = vmatprep.subr.mxu0 0.0
    %1513 = vmatpush1.msra.mxu0 %v1401
    %1514 = vmatprep.subr.mxu0 0.0
    %1515 = vmatpush1.msra.mxu0 %v1402
    %1516 = vmatprep.subr.mxu0 0.0
    %1517 = vmatpush1.msra.mxu0 %v1403
    %1518 = vmatprep.subr.mxu0 0.0
    %1519 = vmatpush1.msra.mxu0 %v1404
    %1520 = vmatprep.subr.mxu0 0.0
    %1521 = vmatpush1.msra.mxu0 %v1405
    %1522 = vmatprep.subr.mxu0 0.0
    %1523 = vmatpush1.msra.mxu0 %v1406
    %1524 = vmatprep.subr.mxu0 0.0
    %1525 = vmatpush1.msra.mxu0 0.0
    %1526 = vmatprep.subr.mxu0 0.0
    %1527 = vmatpush1.msra.mxu0 0.0
    %1528 = vmatprep.subr.mxu0 0.0
    %1529 = vmatpush1.msra.mxu0 0.0
    %1530 = vmatprep.subr.mxu0 0.0
    %1531 = vmatpush1.msra.mxu0 0.0
    %1532 = vmatprep.subr.mxu0 0.0
    %1533 = vmatpush1.msra.mxu0 0.0
    %1534 = vmatprep.subr.mxu0 0.0
    %1535 = vmatpush1.msra.mxu0 0.0
    %1536 = vmatprep.subr.mxu0 0.0
    %1537 = vmatpush1.msra.mxu0 0.0
    %1538 = vmatprep.subr.mxu0 0.0
    %1539 = vmatpush1.msra.mxu0 0.0
    %1540 = vmatprep.subr.mxu0 0.0
    %1541 = vmatpush1.msra.mxu0 0.0
    %1542 = vmatprep.subr.mxu0 0.0
    %1543 = vmatpush1.msra.mxu0 0.0
    %1544 = vmatprep.subr.mxu0 0.0
    %1545 = vmatpush1.msra.mxu0 0.0
    %1546 = vmatprep.subr.mxu0 0.0
    %1547 = vmatpush1.msra.mxu0 0.0
    %1548 = vmatprep.subr.mxu0 0.0
    %1549 = vmatpush1.msra.mxu0 0.0
    %1550 = vmatprep.subr.mxu0 0.0
    %1551 = vmatpush1.msra.mxu0 0.0
    %1552 = vmatprep.subr.mxu0 0.0
    %1553 = vmatpush1.msra.mxu0 0.0
    %1554 = vmatprep.subr.mxu0 0.0
    %1555 = vmatpush1.msra.mxu0 0.0
    %1556 = vmatprep.mubr.f32.mxu0 0.0
    %1557 = vmatmul.mubr.f32.gmra.mrb[0].mxu0 %v1411
    %v1558 = vpop.f32.mrb[0].mxu0
    %v1559 = vadd.f32 0.0, %v1558
    %v1560 = vpop.f32.mrb[0].mxu0
    %1561 = vmatprep.mubr.f32.mxu0 0.0
    %1562 = vmatmul.mubr.f32.gmra.mrb[0].mxu0 %v1412
    %v1563 = vpop.f32.mrb[0].mxu0
    %v1564 = vadd.f32 0.0, %v1563
    %v1565 = vpop.f32.mrb[0].mxu0
    %1566 = vmatprep.mubr.f32.mxu0 0.0
    %1567 = vmatmul.mubr.f32.gmra.mrb[0].mxu0 %v1413
    %v1568 = vpop.f32.mrb[0].mxu0
    %v1569 = vadd.f32 0.0, %v1568
    %v1570 = vpop.f32.mrb[0].mxu0
    %1571 = vmatprep.mubr.f32.mxu0 0.0
    %1572 = vmatmul.mubr.f32.gmra.mrb[0].mxu0 %v1414
    %v1573 = vpop.f32.mrb[0].mxu0
    %v1574 = vadd.f32 0.0, %v1573
    %v1575 = vpop.f32.mrb[0].mxu0
    %1576 = vmatprep.mubr.f32.mxu0 0.0
    %1577 = vmatmul.mubr.f32.gmra.mrb[0].mxu0 %v1415
    %v1578 = vpop.f32.mrb[0].mxu0
    %v1579 = vadd.f32 0.0, %v1578
    %v1580 = vpop.f32.mrb[0].mxu0
    %1581 = vmatprep.mubr.f32.mxu0 0.0
    %1582 = vmatmul.mubr.f32.gmra.mrb[0].mxu0 %v1416
    %v1583 = vpop.f32.mrb[0].mxu0
    %v1584 = vadd.f32 0.0, %v1583
    %v1585 = vpop.f32.mrb[0].mxu0
    %1586 = vmatprep.mubr.f32.mxu0 0.0
    %1587 = vmatmul.mubr.f32.gmra.mrb[0].mxu0 %v1417
    %v1588 = vpop.f32.mrb[0].mxu0
    %v1589 = vadd.f32 0.0, %v1588
    %v1590 = vpop.f32.mrb[0].mxu0
    %1591 = vmatprep.mubr.f32.mxu0 0.0
    %1592 = vmatmul.mubr.f32.gmra.mrb[0].mxu0 %v1418
    %v1593 = vpop.f32.mrb[0].mxu0
    %v1594 = vadd.f32 0.0, %v1593
    %v1595 = vpop.f32.mrb[0].mxu0
    %1596 = vmatprep.mubr.f32.mxu0 0.0
    %1597 = vmatmul.mubr.f32.gmra.mrb[0].mxu0 %v1419
    %v1598 = vpop.f32.mrb[0].mxu0
    %v1599 = vadd.f32 0.0, %v1598
    %v1600 = vpop.f32.mrb[0].mxu0
    %1601 = vmatprep.mubr.f32.mxu0 0.0
    %1602 = vmatmul.mubr.f32.gmra.mrb[0].mxu0 %v1420
    %v1603 = vpop.f32.mrb[0].mxu0
    %v1604 = vadd.f32 0.0, %v1603
    %v1605 = vpop.f32.mrb[0].mxu0
    %1606 = vmatprep.mubr.f32.mxu0 0.0
    %1607 = vmatmul.mubr.f32.gmra.mrb[0].mxu0 %v1421
    %v1608 = vpop.f32.mrb[0].mxu0
    %v1609 = vadd.f32 0.0, %v1608
    %v1610 = vpop.f32.mrb[0].mxu0
    %1611 = vmatprep.mubr.f32.mxu0 0.0
    %1612 = vmatmul.mubr.f32.gmra.mrb[0].mxu0 %v1422
    %v1613 = vpop.f32.mrb[0].mxu0
    %v1614 = vadd.f32 0.0, %v1613
    %v1615 = vpop.f32.mrb[0].mxu0
    %1616 = vmatprep.mubr.f32.mxu0 0.0
    %1617 = vmatmul.mubr.f32.gmra.mrb[0].mxu0 %v1423
    %v1618 = vpop.f32.mrb[0].mxu0
    %v1619 = vadd.f32 0.0, %v1618
    %v1620 = vpop.f32.mrb[0].mxu0
    %1621 = vmatprep.mubr.f32.mxu0 0.0
    %1622 = vmatmul.mubr.f32.gmra.mrb[0].mxu0 %v1424
    %v1623 = vpop.f32.mrb[0].mxu0
    %v1624 = vadd.f32 0.0, %v1623
    %v1625 = vpop.f32.mrb[0].mxu0
    %1626 = vmatprep.mubr.f32.mxu0 0.0
    %1627 = vmatmul.mubr.f32.gmra.mrb[0].mxu0 %v1425
    %v1628 = vpop.f32.mrb[0].mxu0
    %v1629 = vadd.f32 0.0, %v1628
    %v1630 = vpop.f32.mrb[0].mxu0
    %1631 = vmatprep.mubr.f32.mxu0 0.0
    %1632 = vmatmul.mubr.f32.gmra.mrb[0].mxu0 %v1426
    %v1633 = vpop.f32.mrb[0].mxu0
    %v1634 = vadd.f32 0.0, %v1633
    %v1635 = vpop.f32.mrb[0].mxu0
    %1636 = vmatprep.mubr.f32.mxu0 0.0
    %1637 = vmatmul.mubr.f32.gmra.mrb[0].mxu0 %v1427
    %v1638 = vpop.f32.mrb[0].mxu0
    %v1639 = vadd.f32 0.0, %v1638
    %v1640 = vpop.f32.mrb[0].mxu0
    %1641 = vmatprep.mubr.f32.mxu0 0.0
    %1642 = vmatmul.mubr.f32.gmra.mrb[0].mxu0 %v1428
    %v1643 = vpop.f32.mrb[0].mxu0
    %v1644 = vadd.f32 0.0, %v1643
    %v1645 = vpop.f32.mrb[0].mxu0
    %1646 = vmatprep.mubr.f32.mxu0 0.0
    %1647 = vmatmul.mubr.f32.gmra.mrb[0].mxu0 %v1429
    %v1648 = vpop.f32.mrb[0].mxu0
    %v1649 = vadd.f32 0.0, %v1648
    %v1650 = vpop.f32.mrb[0].mxu0
    %1651 = vmatprep.mubr.f32.mxu0 0.0
    %1652 = vmatmul.mubr.f32.gmra.mrb[0].mxu0 %v1430
    %v1653 = vpop.f32.mrb[0].mxu0
    %v1654 = vadd.f32 0.0, %v1653
    %v1655 = vpop.f32.mrb[0].mxu0
    %1656 = vmatprep.mubr.f32.mxu0 0.0
    %1657 = vmatmul.mubr.f32.gmra.mrb[0].mxu0 %v1431
    %v1658 = vpop.f32.mrb[0].mxu0
    %v1659 = vadd.f32 0.0, %v1658
    %v1660 = vpop.f32.mrb[0].mxu0
    %1661 = vmatprep.mubr.f32.mxu0 0.0
    %1662 = vmatmul.mubr.f32.gmra.mrb[0].mxu0 %v1432
    %v1663 = vpop.f32.mrb[0].mxu0
    %v1664 = vadd.f32 0.0, %v1663
    %v1665 = vpop.f32.mrb[0].mxu0
    %1666 = vmatprep.mubr.f32.mxu0 0.0
    %1667 = vmatmul.mubr.f32.gmra.mrb[0].mxu0 %v1433
    %v1668 = vpop.f32.mrb[0].mxu0
    %v1669 = vadd.f32 0.0, %v1668
    %v1670 = vpop.f32.mrb[0].mxu0
    %1671 = vmatprep.mubr.f32.mxu0 0.0
    %1672 = vmatmul.mubr.f32.gmra.mrb[0].mxu0 %v1434
    %v1673 = vpop.f32.mrb[0].mxu0
    %v1674 = vadd.f32 0.0, %v1673
    %v1675 = vpop.f32.mrb[0].mxu0
    %1676 = vmatprep.mubr.f32.mxu0 0.0
    %1677 = vmatmul.mubr.f32.gmra.mrb[0].mxu0 %v1435
    %v1678 = vpop.f32.mrb[0].mxu0
    %v1679 = vadd.f32 0.0, %v1678
    %v1680 = vpop.f32.mrb[0].mxu0
    %1681 = vmatprep.mubr.f32.mxu0 0.0
    %1682 = vmatmul.mubr.f32.gmra.mrb[0].mxu0 %v1436
    %v1683 = vpop.f32.mrb[0].mxu0
    %v1684 = vadd.f32 0.0, %v1683
    %v1685 = vpop.f32.mrb[0].mxu0
    %1686 = vmatprep.mubr.f32.mxu0 0.0
    %1687 = vmatmul.mubr.f32.gmra.mrb[0].mxu0 %v1437
    %v1688 = vpop.f32.mrb[0].mxu0
    %v1689 = vadd.f32 0.0, %v1688
    %v1690 = vpop.f32.mrb[0].mxu0
    %1691 = vmatprep.mubr.f32.mxu0 0.0
    %1692 = vmatmul.mubr.f32.gmra.mrb[0].mxu0 %v1438
    %v1693 = vpop.f32.mrb[0].mxu0
    %v1694 = vadd.f32 0.0, %v1693
    %v1695 = vpop.f32.mrb[0].mxu0
    %1696 = vmatprep.mubr.f32.mxu0 0.0
    %1697 = vmatmul.mubr.f32.gmra.mrb[0].mxu0 %v1439
    %v1698 = vpop.f32.mrb[0].mxu0
    %v1699 = vadd.f32 0.0, %v1698
    %v1700 = vpop.f32.mrb[0].mxu0
    %1701 = vmatprep.mubr.f32.mxu0 0.0
    %1702 = vmatmul.mubr.f32.gmra.mrb[0].mxu0 %v1440
    %v1703 = vpop.f32.mrb[0].mxu0
    %v1704 = vadd.f32 0.0, %v1703
    %v1705 = vpop.f32.mrb[0].mxu0
    %1706 = vmatprep.mubr.f32.mxu0 0.0
    %1707 = vmatmul.mubr.f32.gmra.mrb[0].mxu0 %v1441
    %v1708 = vpop.f32.mrb[0].mxu0
    %v1709 = vadd.f32 0.0, %v1708
    %v1710 = vpop.f32.mrb[0].mxu0
    %1711 = vmatprep.mubr.f32.mxu0 0.0
    %1712 = vmatmul.mubr.f32.gmra.mrb[0].mxu0 %v1442
    %v1713 = vpop.f32.mrb[0].mxu0
    %v1714 = vadd.f32 0.0, %v1713
    %v1715 = vpop.f32.mrb[0].mxu0
    %1716 = vmatprep.mubr.f32.mxu0 0.0
    %1717 = vmatmul.mubr.f32.gmra.mrb[0].mxu0 %v1443
    %v1718 = vpop.f32.mrb[0].mxu0
    %v1719 = vadd.f32 0.0, %v1718
    %v1720 = vpop.f32.mrb[0].mxu0
    %1721 = vmatprep.mubr.f32.mxu0 0.0
    %1722 = vmatmul.mubr.f32.gmra.mrb[0].mxu0 %v1444
    %v1723 = vpop.f32.mrb[0].mxu0
    %v1724 = vadd.f32 0.0, %v1723
    %v1725 = vpop.f32.mrb[0].mxu0
    %1726 = vmatprep.mubr.f32.mxu0 0.0
    %1727 = vmatmul.mubr.f32.gmra.mrb[0].mxu0 %v1445
    %v1728 = vpop.f32.mrb[0].mxu0
    %v1729 = vadd.f32 0.0, %v1728
    %v1730 = vpop.f32.mrb[0].mxu0
    %1731 = vmatprep.mubr.f32.mxu0 0.0
    %1732 = vmatmul.mubr.f32.gmra.mrb[0].mxu0 %v1446
    %v1733 = vpop.f32.mrb[0].mxu0
    %v1734 = vadd.f32 0.0, %v1733
    %v1735 = vpop.f32.mrb[0].mxu0
    %1736 = vmatprep.mubr.f32.mxu0 0.0
    %1737 = vmatmul.mubr.f32.gmra.mrb[0].mxu0 %v1447
    %v1738 = vpop.f32.mrb[0].mxu0
    %v1739 = vadd.f32 0.0, %v1738
    %v1740 = vpop.f32.mrb[0].mxu0
    %1741 = vmatprep.mubr.f32.mxu0 0.0
    %1742 = vmatmul.mubr.f32.gmra.mrb[0].mxu0 %v1448
    %v1743 = vpop.f32.mrb[0].mxu0
    %v1744 = vadd.f32 0.0, %v1743
    %v1745 = vpop.f32.mrb[0].mxu0
    %1746 = vmatprep.mubr.f32.mxu0 0.0
    %1747 = vmatmul.mubr.f32.gmra.mrb[0].mxu0 %v1449
    %v1748 = vpop.f32.mrb[0].mxu0
    %v1749 = vadd.f32 0.0, %v1748
    %v1750 = vpop.f32.mrb[0].mxu0
    %1751 = vmatprep.mubr.f32.mxu0 0.0
    %1752 = vmatmul.mubr.f32.gmra.mrb[0].mxu0 %v1450
    %v1753 = vpop.f32.mrb[0].mxu0
    %v1754 = vadd.f32 0.0, %v1753
    %v1755 = vpop.f32.mrb[0].mxu0
    %1756 = vmatprep.mubr.f32.mxu0 0.0
    %1757 = vmatmul.mubr.f32.gmra.mrb[0].mxu0 %v1451
    %v1758 = vpop.f32.mrb[0].mxu0
    %v1759 = vadd.f32 0.0, %v1758
    %v1760 = vpop.f32.mrb[0].mxu0
    %1761 = vmatprep.mubr.f32.mxu0 0.0
    %1762 = vmatmul.mubr.f32.gmra.mrb[0].mxu0 %v1452
    %v1763 = vpop.f32.mrb[0].mxu0
    %v1764 = vadd.f32 0.0, %v1763
    %v1765 = vpop.f32.mrb[0].mxu0
    %1766 = vmatprep.mubr.f32.mxu0 0.0
    %1767 = vmatmul.mubr.f32.gmra.mrb[0].mxu0 %v1453
    %v1768 = vpop.f32.mrb[0].mxu0
    %v1769 = vadd.f32 0.0, %v1768
    %v1770 = vpop.f32.mrb[0].mxu0
    %1771 = vmatprep.mubr.f32.mxu0 0.0
    %1772 = vmatmul.mubr.f32.gmra.mrb[0].mxu0 %v1454
    %v1773 = vpop.f32.mrb[0].mxu0
    %v1774 = vadd.f32 0.0, %v1773
    %v1775 = vpop.f32.mrb[0].mxu0
    %1776 = vmatprep.mubr.f32.mxu0 0.0
    %1777 = vmatmul.mubr.f32.gmra.mrb[0].mxu0 %v1455
    %v1778 = vpop.f32.mrb[0].mxu0
    %v1779 = vadd.f32 0.0, %v1778
    %v1780 = vpop.f32.mrb[0].mxu0
    %1781 = vmatprep.mubr.f32.mxu0 0.0
    %1782 = vmatmul.mubr.f32.gmra.mrb[0].mxu0 %v1456
    %v1783 = vpop.f32.mrb[0].mxu0
    %v1784 = vadd.f32 0.0, %v1783
    %v1785 = vpop.f32.mrb[0].mxu0
    %1786 = vmatprep.mubr.f32.mxu0 0.0
    %1787 = vmatmul.mubr.f32.gmra.mrb[0].mxu0 %v1457
    %v1788 = vpop.f32.mrb[0].mxu0
    %v1789 = vadd.f32 0.0, %v1788
    %v1790 = vpop.f32.mrb[0].mxu0
    %1791 = vmatprep.mubr.f32.mxu0 0.0
    %1792 = vmatmul.mubr.f32.gmra.mrb[0].mxu0 %v1458
    %v1793 = vpop.f32.mrb[0].mxu0
    %v1794 = vadd.f32 0.0, %v1793
    %v1795 = vpop.f32.mrb[0].mxu0
    %1796 = vmatprep.mubr.f32.mxu0 0.0
    %1797 = vmatmul.mubr.f32.gmra.mrb[0].mxu0 %v1459
    %v1798 = vpop.f32.mrb[0].mxu0
    %v1799 = vadd.f32 0.0, %v1798
    %v1800 = vpop.f32.mrb[0].mxu0
    %1801 = vmatprep.mubr.f32.mxu0 0.0
    %1802 = vmatmul.mubr.f32.gmra.mrb[0].mxu0 %v1460
    %v1803 = vpop.f32.mrb[0].mxu0
    %v1804 = vadd.f32 0.0, %v1803
    %v1805 = vpop.f32.mrb[0].mxu0
    %1806 = vmatprep.mubr.f32.mxu0 0.0
    %1807 = vmatmul.mubr.f32.gmra.mrb[0].mxu0 %v1461
    %v1808 = vpop.f32.mrb[0].mxu0
    %v1809 = vadd.f32 0.0, %v1808
    %v1810 = vpop.f32.mrb[0].mxu0
    %1811 = vmatprep.mubr.f32.mxu0 0.0
    %1812 = vmatmul.mubr.f32.gmra.mrb[0].mxu0 %v1462
    %v1813 = vpop.f32.mrb[0].mxu0
    %v1814 = vadd.f32 0.0, %v1813
    %v1815 = vpop.f32.mrb[0].mxu0
    %1816 = vmatprep.mubr.f32.mxu0 0.0
    %1817 = vmatmul.mubr.f32.gmra.mrb[0].mxu0 %v1463
    %v1818 = vpop.f32.mrb[0].mxu0
    %v1819 = vadd.f32 0.0, %v1818
    %v1820 = vpop.f32.mrb[0].mxu0
    %1821 = vmatprep.mubr.f32.mxu0 0.0
    %1822 = vmatmul.mubr.f32.gmra.mrb[0].mxu0 %v1464
    %v1823 = vpop.f32.mrb[0].mxu0
    %v1824 = vadd.f32 0.0, %v1823
    %v1825 = vpop.f32.mrb[0].mxu0
    %1826 = vmatprep.mubr.f32.mxu0 0.0
    %1827 = vmatmul.mubr.f32.gmra.mrb[0].mxu0 %v1465
    %v1828 = vpop.f32.mrb[0].mxu0
    %v1829 = vadd.f32 0.0, %v1828
    %v1830 = vpop.f32.mrb[0].mxu0
    %1831 = vmatprep.mubr.f32.mxu0 0.0
    %1832 = vmatmul.mubr.f32.gmra.mrb[0].mxu0 %v1466
    %v1833 = vpop.f32.mrb[0].mxu0
    %v1834 = vadd.f32 0.0, %v1833
    %v1835 = vpop.f32.mrb[0].mxu0
    %1836 = vmatprep.mubr.f32.mxu0 0.0
    %1837 = vmatmul.mubr.f32.gmra.mrb[0].mxu0 %v1467
    %v1838 = vpop.f32.mrb[0].mxu0
    %v1839 = vadd.f32 0.0, %v1838
    %v1840 = vpop.f32.mrb[0].mxu0
    %1841 = vmatprep.mubr.f32.mxu0 0.0
    %1842 = vmatmul.mubr.f32.gmra.mrb[0].mxu0 %v1468
    %v1843 = vpop.f32.mrb[0].mxu0
    %v1844 = vadd.f32 0.0, %v1843
    %v1845 = vpop.f32.mrb[0].mxu0
    %1846 = vmatprep.mubr.f32.mxu0 0.0
    %1847 = vmatmul.mubr.f32.gmra.mrb[0].mxu0 %v1469
    %v1848 = vpop.f32.mrb[0].mxu0
    %v1849 = vadd.f32 0.0, %v1848
    %v1850 = vpop.f32.mrb[0].mxu0
    %1851 = vmatprep.mubr.f32.mxu0 0.0
    %1852 = vmatmul.mubr.f32.gmra.mrb[0].mxu0 %v1470
    %v1853 = vpop.f32.mrb[0].mxu0
    %v1854 = vadd.f32 0.0, %v1853
    %v1855 = vpop.f32.mrb[0].mxu0
    %1856 = vmatprep.mubr.f32.mxu0 0.0
    %1857 = vmatmul.mubr.f32.gmra.mrb[0].mxu0 %v1471
    %v1858 = vpop.f32.mrb[0].mxu0
    %v1859 = vadd.f32 0.0, %v1858
    %v1860 = vpop.f32.mrb[0].mxu0
    %1861 = vmatprep.mubr.f32.mxu0 0.0
    %1862 = vmatmul.mubr.f32.gmra.mrb[0].mxu0 %v1472
    %v1863 = vpop.f32.mrb[0].mxu0
    %v1864 = vadd.f32 0.0, %v1863
    %v1865 = vpop.f32.mrb[0].mxu0
    %1866 = vmatprep.mubr.f32.mxu0 0.0
    %1867 = vmatmul.mubr.f32.gmra.mrb[0].mxu0 %v1473
    %v1868 = vpop.f32.mrb[0].mxu0
    %v1869 = vadd.f32 0.0, %v1868
    %v1870 = vpop.f32.mrb[0].mxu0
    %1871 = vmatprep.mubr.f32.mxu0 0.0
    %1872 = vmatmul.mubr.f32.gmra.mrb[0].mxu0 %v1474
    %v1873 = vpop.f32.mrb[0].mxu0
    %v1874 = vadd.f32 0.0, %v1873
    %v1875 = vpop.f32.mrb[0].mxu0
    %1876 = vmatprep.mubr.f32.mxu0 0.0
    %1877 = vmatmul.mubr.f32.gmra.mrb[0].mxu0 %v1475
    %v1878 = vpop.f32.mrb[0].mxu0
    %v1879 = vadd.f32 0.0, %v1878
    %v1880 = vpop.f32.mrb[0].mxu0
    %1881 = vmatprep.mubr.f32.mxu0 0.0
    %1882 = vmatmul.mubr.f32.gmra.mrb[0].mxu0 %v1476
    %v1883 = vpop.f32.mrb[0].mxu0
    %v1884 = vadd.f32 0.0, %v1883
    %v1885 = vpop.f32.mrb[0].mxu0
    %1886 = vmatprep.mubr.f32.mxu0 0.0
    %1887 = vmatmul.mubr.f32.gmra.mrb[0].mxu0 %v1477
    %v1888 = vpop.f32.mrb[0].mxu0
    %v1889 = vadd.f32 0.0, %v1888
    %v1890 = vpop.f32.mrb[0].mxu0
    %1891 = vmatprep.mubr.f32.mxu0 0.0
    %1892 = vmatmul.mubr.f32.gmra.mrb[0].mxu0 %v1478
    %v1893 = vpop.f32.mrb[0].mxu0
    %v1894 = vadd.f32 0.0, %v1893
    %v1895 = vpop.f32.mrb[0].mxu0
    %1896 = vmatprep.mubr.f32.mxu0 0.0
    %1897 = vmatmul.mubr.f32.gmra.mrb[0].mxu0 %v1479
    %v1898 = vpop.f32.mrb[0].mxu0
    %v1899 = vadd.f32 0.0, %v1898
    %v1900 = vpop.f32.mrb[0].mxu0
    %1901 = vmatprep.mubr.f32.mxu0 0.0
    %1902 = vmatmul.mubr.f32.gmra.mrb[0].mxu0 %v1480
    %v1903 = vpop.f32.mrb[0].mxu0
    %v1904 = vadd.f32 0.0, %v1903
    %v1905 = vpop.f32.mrb[0].mxu0
    %1906 = vmatprep.mubr.f32.mxu0 0.0
    %1907 = vmatmul.mubr.f32.gmra.mrb[0].mxu0 %v1481
    %v1908 = vpop.f32.mrb[0].mxu0
    %v1909 = vadd.f32 0.0, %v1908
    %v1910 = vpop.f32.mrb[0].mxu0
    %1911 = vmatprep.mubr.f32.mxu0 0.0
    %1912 = vmatmul.mubr.f32.gmra.mrb[0].mxu0 %v1482
    %v1913 = vpop.f32.mrb[0].mxu0
    %v1914 = vadd.f32 0.0, %v1913
    %v1915 = vpop.f32.mrb[0].mxu0
    %1916 = vmatprep.mubr.f32.mxu0 0.0
    %1917 = vmatmul.mubr.f32.gmra.mrb[0].mxu0 %v1483
    %v1918 = vpop.f32.mrb[0].mxu0
    %v1919 = vadd.f32 0.0, %v1918
    %v1920 = vpop.f32.mrb[0].mxu0
    %1921 = vmatprep.mubr.f32.mxu0 0.0
    %1922 = vmatmul.mubr.f32.gmra.mrb[0].mxu0 %v1484
    %v1923 = vpop.f32.mrb[0].mxu0
    %v1924 = vadd.f32 0.0, %v1923
    %v1925 = vpop.f32.mrb[0].mxu0
    %1926 = vmatprep.mubr.f32.mxu0 0.0
    %1927 = vmatmul.mubr.f32.gmra.mrb[0].mxu0 %v1485
    %v1928 = vpop.f32.mrb[0].mxu0
    %v1929 = vadd.f32 0.0, %v1928
    %v1930 = vpop.f32.mrb[0].mxu0
    %1931 = vmatprep.mubr.f32.mxu0 0.0
    %1932 = vmatmul.mubr.f32.gmra.mrb[0].mxu0 %v1486
    %v1933 = vpop.f32.mrb[0].mxu0
    %v1934 = vadd.f32 0.0, %v1933
    %v1935 = vpop.f32.mrb[0].mxu0
    %1936 = vmatprep.mubr.f32.mxu0 0.0
    %1937 = vmatmul.mubr.f32.gmra.mrb[0].mxu0 %v1487
    %v1938 = vpop.f32.mrb[0].mxu0
    %v1939 = vadd.f32 0.0, %v1938
    %v1940 = vpop.f32.mrb[0].mxu0
    %1941 = vmatprep.mubr.f32.mxu0 0.0
    %1942 = vmatmul.mubr.f32.gmra.mrb[0].mxu0 %v1488
    %v1943 = vpop.f32.mrb[0].mxu0
    %v1944 = vadd.f32 0.0, %v1943
    %v1945 = vpop.f32.mrb[0].mxu0
    %1946 = vmatprep.mubr.f32.mxu0 0.0
    %1947 = vmatmul.mubr.f32.gmra.mrb[0].mxu0 %v1489
    %v1948 = vpop.f32.mrb[0].mxu0
    %v1949 = vadd.f32 0.0, %v1948
    %v1950 = vpop.f32.mrb[0].mxu0
    %1951 = vmatprep.mubr.f32.mxu0 0.0
    %1952 = vmatmul.mubr.f32.gmra.mrb[0].mxu0 %v1490
    %v1953 = vpop.f32.mrb[0].mxu0
    %v1954 = vadd.f32 0.0, %v1953
    %v1955 = vpop.f32.mrb[0].mxu0
    %1956 = vmatprep.mubr.f32.mxu0 0.0
    %1957 = vmatmul.mubr.f32.gmra.mrb[0].mxu0 %v1491
    %v1958 = vpop.f32.mrb[0].mxu0
    %v1959 = vadd.f32 0.0, %v1958
    %v1960 = vpop.f32.mrb[0].mxu0
    %1961 = vdwg.mxu0
    %vm1962 = vcmask 64512
    %v1963 = vsel %vm1962, %v1559, -inf
    %v1964 = vsel %vm1962, %v1604, -inf
    %v1965 = vmax.f32 %v1963, %v1964
    %v1966 = vsel %vm1962, %v1649, -inf
    %v1967 = vmax.f32 %v1965, %v1966
    %v1968 = vsel %vm1962, %v1694, -inf
    %v1969 = vmax.f32 %v1967, %v1968
    %v1970 = vsel %vm1962, %v1739, -inf
    %v1971 = vmax.f32 %v1969, %v1970
    %v1972 = vsel %vm1962, %v1784, -inf
    %v1973 = vmax.f32 %v1971, %v1972
    %v1974 = vsel %vm1962, %v1829, -inf
    %v1975 = vmax.f32 %v1973, %v1974
    %v1976 = vsel %vm1962, %v1874, -inf
    %v1977 = vmax.f32 %v1975, %v1976
    %v1978 = vsel %vm1962, %v1919, -inf
    %v1979 = vmax.f32 %v1977, %v1978
    %v1980 = vsel %vm1962, %v1564, -inf
    %v1981 = vsel %vm1962, %v1609, -inf
    %v1982 = vmax.f32 %v1980, %v1981
    %v1983 = vsel %vm1962, %v1654, -inf
    %v1984 = vmax.f32 %v1982, %v1983
    %v1985 = vsel %vm1962, %v1699, -inf
    %v1986 = vmax.f32 %v1984, %v1985
    %v1987 = vsel %vm1962, %v1744, -inf
    %v1988 = vmax.f32 %v1986, %v1987
    %v1989 = vsel %vm1962, %v1789, -inf
    %v1990 = vmax.f32 %v1988, %v1989
    %v1991 = vsel %vm1962, %v1834, -inf
    %v1992 = vmax.f32 %v1990, %v1991
    %v1993 = vsel %vm1962, %v1879, -inf
    %v1994 = vmax.f32 %v1992, %v1993
    %v1995 = vsel %vm1962, %v1924, -inf
    %v1996 = vmax.f32 %v1994, %v1995
    %v1997 = vsel %vm1962, %v1569, -inf
    %v1998 = vsel %vm1962, %v1614, -inf
    %v1999 = vmax.f32 %v1997, %v1998
    %v2000 = vsel %vm1962, %v1659, -inf
    %v2001 = vmax.f32 %v1999, %v2000
    %v2002 = vsel %vm1962, %v1704, -inf
    %v2003 = vmax.f32 %v2001, %v2002
    %v2004 = vsel %vm1962, %v1749, -inf
    %v2005 = vmax.f32 %v2003, %v2004
    %v2006 = vsel %vm1962, %v1794, -inf
    %v2007 = vmax.f32 %v2005, %v2006
    %v2008 = vsel %vm1962, %v1839, -inf
    %v2009 = vmax.f32 %v2007, %v2008
    %v2010 = vsel %vm1962, %v1884, -inf
    %v2011 = vmax.f32 %v2009, %v2010
    %v2012 = vsel %vm1962, %v1929, -inf
    %v2013 = vmax.f32 %v2011, %v2012
    %v2014 = vsel %vm1962, %v1574, -inf
    %v2015 = vsel %vm1962, %v1619, -inf
    %v2016 = vmax.f32 %v2014, %v2015
    %v2017 = vsel %vm1962, %v1664, -inf
    %v2018 = vmax.f32 %v2016, %v2017
    %v2019 = vsel %vm1962, %v1709, -inf
    %v2020 = vmax.f32 %v2018, %v2019
    %v2021 = vsel %vm1962, %v1754, -inf
    %v2022 = vmax.f32 %v2020, %v2021
    %v2023 = vsel %vm1962, %v1799, -inf
    %v2024 = vmax.f32 %v2022, %v2023
    %v2025 = vsel %vm1962, %v1844, -inf
    %v2026 = vmax.f32 %v2024, %v2025
    %v2027 = vsel %vm1962, %v1889, -inf
    %v2028 = vmax.f32 %v2026, %v2027
    %v2029 = vsel %vm1962, %v1934, -inf
    %v2030 = vmax.f32 %v2028, %v2029
    %v2031 = vsel %vm1962, %v1579, -inf
    %v2032 = vsel %vm1962, %v1624, -inf
    %v2033 = vmax.f32 %v2031, %v2032
    %v2034 = vsel %vm1962, %v1669, -inf
    %v2035 = vmax.f32 %v2033, %v2034
    %v2036 = vsel %vm1962, %v1714, -inf
    %v2037 = vmax.f32 %v2035, %v2036
    %v2038 = vsel %vm1962, %v1759, -inf
    %v2039 = vmax.f32 %v2037, %v2038
    %v2040 = vsel %vm1962, %v1804, -inf
    %v2041 = vmax.f32 %v2039, %v2040
    %v2042 = vsel %vm1962, %v1849, -inf
    %v2043 = vmax.f32 %v2041, %v2042
    %v2044 = vsel %vm1962, %v1894, -inf
    %v2045 = vmax.f32 %v2043, %v2044
    %v2046 = vsel %vm1962, %v1939, -inf
    %v2047 = vmax.f32 %v2045, %v2046
    %v2048 = vsel %vm1962, %v1584, -inf
    %v2049 = vsel %vm1962, %v1629, -inf
    %v2050 = vmax.f32 %v2048, %v2049
    %v2051 = vsel %vm1962, %v1674, -inf
    %v2052 = vmax.f32 %v2050, %v2051
    %v2053 = vsel %vm1962, %v1719, -inf
    %v2054 = vmax.f32 %v2052, %v2053
    %v2055 = vsel %vm1962, %v1764, -inf
    %v2056 = vmax.f32 %v2054, %v2055
    %v2057 = vsel %vm1962, %v1809, -inf
    %v2058 = vmax.f32 %v2056, %v2057
    %v2059 = vsel %vm1962, %v1854, -inf
    %v2060 = vmax.f32 %v2058, %v2059
    %v2061 = vsel %vm1962, %v1899, -inf
    %v2062 = vmax.f32 %v2060, %v2061
    %v2063 = vsel %vm1962, %v1944, -inf
    %v2064 = vmax.f32 %v2062, %v2063
    %v2065 = vsel %vm1962, %v1589, -inf
    %v2066 = vsel %vm1962, %v1634, -inf
    %v2067 = vmax.f32 %v2065, %v2066
    %v2068 = vsel %vm1962, %v1679, -inf
    %v2069 = vmax.f32 %v2067, %v2068
    %v2070 = vsel %vm1962, %v1724, -inf
    %v2071 = vmax.f32 %v2069, %v2070
    %v2072 = vsel %vm1962, %v1769, -inf
    %v2073 = vmax.f32 %v2071, %v2072
    %v2074 = vsel %vm1962, %v1814, -inf
    %v2075 = vmax.f32 %v2073, %v2074
    %v2076 = vsel %vm1962, %v1859, -inf
    %v2077 = vmax.f32 %v2075, %v2076
    %v2078 = vsel %vm1962, %v1904, -inf
    %v2079 = vmax.f32 %v2077, %v2078
    %v2080 = vsel %vm1962, %v1949, -inf
    %v2081 = vmax.f32 %v2079, %v2080
    %v2082 = vsel %vm1962, %v1594, -inf
    %v2083 = vsel %vm1962, %v1639, -inf
    %v2084 = vmax.f32 %v2082, %v2083
    %v2085 = vsel %vm1962, %v1684, -inf
    %v2086 = vmax.f32 %v2084, %v2085
    %v2087 = vsel %vm1962, %v1729, -inf
    %v2088 = vmax.f32 %v2086, %v2087
    %v2089 = vsel %vm1962, %v1774, -inf
    %v2090 = vmax.f32 %v2088, %v2089
    %v2091 = vsel %vm1962, %v1819, -inf
    %v2092 = vmax.f32 %v2090, %v2091
    %v2093 = vsel %vm1962, %v1864, -inf
    %v2094 = vmax.f32 %v2092, %v2093
    %v2095 = vsel %vm1962, %v1909, -inf
    %v2096 = vmax.f32 %v2094, %v2095
    %v2097 = vsel %vm1962, %v1954, -inf
    %v2098 = vmax.f32 %v2096, %v2097
    %v2099 = vsel %vm1962, %v1599, -inf
    %v2100 = vsel %vm1962, %v1644, -inf
    %v2101 = vmax.f32 %v2099, %v2100
    %v2102 = vsel %vm1962, %v1689, -inf
    %v2103 = vmax.f32 %v2101, %v2102
    %v2104 = vsel %vm1962, %v1734, -inf
    %v2105 = vmax.f32 %v2103, %v2104
    %v2106 = vsel %vm1962, %v1779, -inf
    %v2107 = vmax.f32 %v2105, %v2106
    %v2108 = vsel %vm1962, %v1824, -inf
    %v2109 = vmax.f32 %v2107, %v2108
    %v2110 = vsel %vm1962, %v1869, -inf
    %v2111 = vmax.f32 %v2109, %v2110
    %v2112 = vsel %vm1962, %v1914, -inf
    %v2113 = vmax.f32 %v2111, %v2112
    %v2114 = vsel %vm1962, %v1959, -inf
    %v2115 = vmax.f32 %v2113, %v2114
    %v2116 = vsub.f32 %v1559, %v1979
    %v2117 = vsub.f32 %v1564, %v1996
    %v2118 = vsub.f32 %v1569, %v2013
    %v2119 = vsub.f32 %v1574, %v2030
    %v2120 = vsub.f32 %v1579, %v2047
    %v2121 = vsub.f32 %v1584, %v2064
    %v2122 = vsub.f32 %v1589, %v2081
    %v2123 = vsub.f32 %v1594, %v2098
    %v2124 = vsub.f32 %v1599, %v2115
    %v2125 = vsub.f32 %v1604, %v1979
    %v2126 = vsub.f32 %v1609, %v1996
    %v2127 = vsub.f32 %v1614, %v2013
    %v2128 = vsub.f32 %v1619, %v2030
    %v2129 = vsub.f32 %v1624, %v2047
    %v2130 = vsub.f32 %v1629, %v2064
    %v2131 = vsub.f32 %v1634, %v2081
    %v2132 = vsub.f32 %v1639, %v2098
    %v2133 = vsub.f32 %v1644, %v2115
    %v2134 = vsub.f32 %v1649, %v1979
    %v2135 = vsub.f32 %v1654, %v1996
    %v2136 = vsub.f32 %v1659, %v2013
    %v2137 = vsub.f32 %v1664, %v2030
    %v2138 = vsub.f32 %v1669, %v2047
    %v2139 = vsub.f32 %v1674, %v2064
    %v2140 = vsub.f32 %v1679, %v2081
    %v2141 = vsub.f32 %v1684, %v2098
    %v2142 = vsub.f32 %v1689, %v2115
    %v2143 = vsub.f32 %v1694, %v1979
    %v2144 = vsub.f32 %v1699, %v1996
    %v2145 = vsub.f32 %v1704, %v2013
    %v2146 = vsub.f32 %v1709, %v2030
    %v2147 = vsub.f32 %v1714, %v2047
    %v2148 = vsub.f32 %v1719, %v2064
    %v2149 = vsub.f32 %v1724, %v2081
    %v2150 = vsub.f32 %v1729, %v2098
    %v2151 = vsub.f32 %v1734, %v2115
    %v2152 = vsub.f32 %v1739, %v1979
    %v2153 = vsub.f32 %v1744, %v1996
    %v2154 = vsub.f32 %v1749, %v2013
    %v2155 = vsub.f32 %v1754, %v2030
    %v2156 = vsub.f32 %v1759, %v2047
    %v2157 = vsub.f32 %v1764, %v2064
    %v2158 = vsub.f32 %v1769, %v2081
    %v2159 = vsub.f32 %v1774, %v2098
    %v2160 = vsub.f32 %v1779, %v2115
    %v2161 = vsub.f32 %v1784, %v1979
    %v2162 = vsub.f32 %v1789, %v1996
    %v2163 = vsub.f32 %v1794, %v2013
    %v2164 = vsub.f32 %v1799, %v2030
    %v2165 = vsub.f32 %v1804, %v2047
    %v2166 = vsub.f32 %v1809, %v2064
    %v2167 = vsub.f32 %v1814, %v2081
    %v2168 = vsub.f32 %v1819, %v2098
    %v2169 = vsub.f32 %v1824, %v2115
    %v2170 = vsub.f32 %v1829, %v1979
    %v2171 = vsub.f32 %v1834, %v1996
    %v2172 = vsub.f32 %v1839, %v2013
    %v2173 = vsub.f32 %v1844, %v2030
    %v2174 = vsub.f32 %v1849, %v2047
    %v2175 = vsub.f32 %v1854, %v2064
    %v2176 = vsub.f32 %v1859, %v2081
    %v2177 = vsub.f32 %v1864, %v2098
    %v2178 = vsub.f32 %v1869, %v2115
    %v2179 = vsub.f32 %v1874, %v1979
    %v2180 = vsub.f32 %v1879, %v1996
    %v2181 = vsub.f32 %v1884, %v2013
    %v2182 = vsub.f32 %v1889, %v2030
    %v2183 = vsub.f32 %v1894, %v2047
    %v2184 = vsub.f32 %v1899, %v2064
    %v2185 = vsub.f32 %v1904, %v2081
    %v2186 = vsub.f32 %v1909, %v2098
    %v2187 = vsub.f32 %v1914, %v2115
    %v2188 = vsub.f32 %v1919, %v1979
    %v2189 = vsub.f32 %v1924, %v1996
    %v2190 = vsub.f32 %v1929, %v2013
    %v2191 = vsub.f32 %v1934, %v2030
    %v2192 = vsub.f32 %v1939, %v2047
    %v2193 = vsub.f32 %v1944, %v2064
    %v2194 = vsub.f32 %v1949, %v2081
    %v2195 = vsub.f32 %v1954, %v2098
    %v2196 = vsub.f32 %v1959, %v2115
    %v2197 = vmul.f32 %v2116, 1.442695
    %v2198 = vpow.pop %v2197
    %v2199 = vmul.f32 %v2117, 1.442695
    %v2200 = vpow.pop %v2199
    %v2201 = vmul.f32 %v2118, 1.442695
    %v2202 = vpow.pop %v2201
    %v2203 = vmul.f32 %v2119, 1.442695
    %v2204 = vpow.pop %v2203
    %v2205 = vmul.f32 %v2120, 1.442695
    %v2206 = vpow.pop %v2205
    %v2207 = vmul.f32 %v2121, 1.442695
    %v2208 = vpow.pop %v2207
    %v2209 = vmul.f32 %v2122, 1.442695
    %v2210 = vpow.pop %v2209
    %v2211 = vmul.f32 %v2123, 1.442695
    %v2212 = vpow.pop %v2211
    %v2213 = vmul.f32 %v2124, 1.442695
    %v2214 = vpow.pop %v2213
    %v2215 = vmul.f32 %v2125, 1.442695
    %v2216 = vpow.pop %v2215
    %v2217 = vmul.f32 %v2126, 1.442695
    %v2218 = vpow.pop %v2217
    %v2219 = vmul.f32 %v2127, 1.442695
    %v2220 = vpow.pop %v2219
    %v2221 = vmul.f32 %v2128, 1.442695
    %v2222 = vpow.pop %v2221
    %v2223 = vmul.f32 %v2129, 1.442695
    %v2224 = vpow.pop %v2223
    %v2225 = vmul.f32 %v2130, 1.442695
    %v2226 = vpow.pop %v2225
    %v2227 = vmul.f32 %v2131, 1.442695
    %v2228 = vpow.pop %v2227
    %v2229 = vmul.f32 %v2132, 1.442695
    %v2230 = vpow.pop %v2229
    %v2231 = vmul.f32 %v2133, 1.442695
    %v2232 = vpow.pop %v2231
    %v2233 = vmul.f32 %v2134, 1.442695
    %v2234 = vpow.pop %v2233
    %v2235 = vmul.f32 %v2135, 1.442695
    %v2236 = vpow.pop %v2235
    %v2237 = vmul.f32 %v2136, 1.442695
    %v2238 = vpow.pop %v2237
    %v2239 = vmul.f32 %v2137, 1.442695
    %v2240 = vpow.pop %v2239
    %v2241 = vmul.f32 %v2138, 1.442695
    %v2242 = vpow.pop %v2241
    %v2243 = vmul.f32 %v2139, 1.442695
    %v2244 = vpow.pop %v2243
    %v2245 = vmul.f32 %v2140, 1.442695
    %v2246 = vpow.pop %v2245
    %v2247 = vmul.f32 %v2141, 1.442695
    %v2248 = vpow.pop %v2247
    %v2249 = vmul.f32 %v2142, 1.442695
    %v2250 = vpow.pop %v2249
    %v2251 = vmul.f32 %v2143, 1.442695
    %v2252 = vpow.pop %v2251
    %v2253 = vmul.f32 %v2144, 1.442695
    %v2254 = vpow.pop %v2253
    %v2255 = vmul.f32 %v2145, 1.442695
    %v2256 = vpow.pop %v2255
    %v2257 = vmul.f32 %v2146, 1.442695
    %v2258 = vpow.pop %v2257
    %v2259 = vmul.f32 %v2147, 1.442695
    %v2260 = vpow.pop %v2259
    %v2261 = vmul.f32 %v2148, 1.442695
    %v2262 = vpow.pop %v2261
    %v2263 = vmul.f32 %v2149, 1.442695
    %v2264 = vpow.pop %v2263
    %v2265 = vmul.f32 %v2150, 1.442695
    %v2266 = vpow.pop %v2265
    %v2267 = vmul.f32 %v2151, 1.442695
    %v2268 = vpow.pop %v2267
    %v2269 = vmul.f32 %v2152, 1.442695
    %v2270 = vpow.pop %v2269
    %v2271 = vmul.f32 %v2153, 1.442695
    %v2272 = vpow.pop %v2271
    %v2273 = vmul.f32 %v2154, 1.442695
    %v2274 = vpow.pop %v2273
    %v2275 = vmul.f32 %v2155, 1.442695
    %v2276 = vpow.pop %v2275
    %v2277 = vmul.f32 %v2156, 1.442695
    %v2278 = vpow.pop %v2277
    %v2279 = vmul.f32 %v2157, 1.442695
    %v2280 = vpow.pop %v2279
    %v2281 = vmul.f32 %v2158, 1.442695
    %v2282 = vpow.pop %v2281
    %v2283 = vmul.f32 %v2159, 1.442695
    %v2284 = vpow.pop %v2283
    %v2285 = vmul.f32 %v2160, 1.442695
    %v2286 = vpow.pop %v2285
    %v2287 = vmul.f32 %v2161, 1.442695
    %v2288 = vpow.pop %v2287
    %v2289 = vmul.f32 %v2162, 1.442695
    %v2290 = vpow.pop %v2289
    %v2291 = vmul.f32 %v2163, 1.442695
    %v2292 = vpow.pop %v2291
    %v2293 = vmul.f32 %v2164, 1.442695
    %v2294 = vpow.pop %v2293
    %v2295 = vmul.f32 %v2165, 1.442695
    %v2296 = vpow.pop %v2295
    %v2297 = vmul.f32 %v2166, 1.442695
    %v2298 = vpow.pop %v2297
    %v2299 = vmul.f32 %v2167, 1.442695
    %v2300 = vpow.pop %v2299
    %v2301 = vmul.f32 %v2168, 1.442695
    %v2302 = vpow.pop %v2301
    %v2303 = vmul.f32 %v2169, 1.442695
    %v2304 = vpow.pop %v2303
    %v2305 = vmul.f32 %v2170, 1.442695
    %v2306 = vpow.pop %v2305
    %v2307 = vmul.f32 %v2171, 1.442695
    %v2308 = vpow.pop %v2307
    %v2309 = vmul.f32 %v2172, 1.442695
    %v2310 = vpow.pop %v2309
    %v2311 = vmul.f32 %v2173, 1.442695
    %v2312 = vpow.pop %v2311
    %v2313 = vmul.f32 %v2174, 1.442695
    %v2314 = vpow.pop %v2313
    %v2315 = vmul.f32 %v2175, 1.442695
    %v2316 = vpow.pop %v2315
    %v2317 = vmul.f32 %v2176, 1.442695
    %v2318 = vpow.pop %v2317
    %v2319 = vmul.f32 %v2177, 1.442695
    %v2320 = vpow.pop %v2319
    %v2321 = vmul.f32 %v2178, 1.442695
    %v2322 = vpow.pop %v2321
    %v2323 = vmul.f32 %v2179, 1.442695
    %v2324 = vpow.pop %v2323
    %v2325 = vmul.f32 %v2180, 1.442695
    %v2326 = vpow.pop %v2325
    %v2327 = vmul.f32 %v2181, 1.442695
    %v2328 = vpow.pop %v2327
    %v2329 = vmul.f32 %v2182, 1.442695
    %v2330 = vpow.pop %v2329
    %v2331 = vmul.f32 %v2183, 1.442695
    %v2332 = vpow.pop %v2331
    %v2333 = vmul.f32 %v2184, 1.442695
    %v2334 = vpow.pop %v2333
    %v2335 = vmul.f32 %v2185, 1.442695
    %v2336 = vpow.pop %v2335
    %v2337 = vmul.f32 %v2186, 1.442695
    %v2338 = vpow.pop %v2337
    %v2339 = vmul.f32 %v2187, 1.442695
    %v2340 = vpow.pop %v2339
    %v2341 = vmul.f32 %v2188, 1.442695
    %v2342 = vpow.pop %v2341
    %v2343 = vmul.f32 %v2189, 1.442695
    %v2344 = vpow.pop %v2343
    %v2345 = vmul.f32 %v2190, 1.442695
    %v2346 = vpow.pop %v2345
    %v2347 = vmul.f32 %v2191, 1.442695
    %v2348 = vpow.pop %v2347
    %v2349 = vmul.f32 %v2192, 1.442695
    %v2350 = vpow.pop %v2349
    %v2351 = vmul.f32 %v2193, 1.442695
    %v2352 = vpow.pop %v2351
    %v2353 = vmul.f32 %v2194, 1.442695
    %v2354 = vpow.pop %v2353
    %v2355 = vmul.f32 %v2195, 1.442695
    %v2356 = vpow.pop %v2355
    %v2357 = vmul.f32 %v2196, 1.442695
    %v2358 = vpow.pop %v2357
    %v2359 = vsel %vm1962, %v2198, 0.0
    %v2360 = vsel %vm1962, %v2216, 0.0
    %v2361 = vadd.f32 %v2359, %v2360
    %v2362 = vsel %vm1962, %v2234, 0.0
    %v2363 = vadd.f32 %v2361, %v2362
    %v2364 = vsel %vm1962, %v2252, 0.0
    %v2365 = vadd.f32 %v2363, %v2364
    %v2366 = vsel %vm1962, %v2270, 0.0
    %v2367 = vadd.f32 %v2365, %v2366
    %v2368 = vsel %vm1962, %v2288, 0.0
    %v2369 = vadd.f32 %v2367, %v2368
    %v2370 = vsel %vm1962, %v2306, 0.0
    %v2371 = vadd.f32 %v2369, %v2370
    %v2372 = vsel %vm1962, %v2324, 0.0
    %v2373 = vadd.f32 %v2371, %v2372
    %v2374 = vsel %vm1962, %v2342, 0.0
    %v2375 = vadd.f32 %v2373, %v2374
    %v2376 = vsel %vm1962, %v2200, 0.0
    %v2377 = vsel %vm1962, %v2218, 0.0
    %v2378 = vadd.f32 %v2376, %v2377
    %v2379 = vsel %vm1962, %v2236, 0.0
    %v2380 = vadd.f32 %v2378, %v2379
    %v2381 = vsel %vm1962, %v2254, 0.0
    %v2382 = vadd.f32 %v2380, %v2381
    %v2383 = vsel %vm1962, %v2272, 0.0
    %v2384 = vadd.f32 %v2382, %v2383
    %v2385 = vsel %vm1962, %v2290, 0.0
    %v2386 = vadd.f32 %v2384, %v2385
    %v2387 = vsel %vm1962, %v2308, 0.0
    %v2388 = vadd.f32 %v2386, %v2387
    %v2389 = vsel %vm1962, %v2326, 0.0
    %v2390 = vadd.f32 %v2388, %v2389
    %v2391 = vsel %vm1962, %v2344, 0.0
    %v2392 = vadd.f32 %v2390, %v2391
    %v2393 = vsel %vm1962, %v2202, 0.0
    %v2394 = vsel %vm1962, %v2220, 0.0
    %v2395 = vadd.f32 %v2393, %v2394
    %v2396 = vsel %vm1962, %v2238, 0.0
    %v2397 = vadd.f32 %v2395, %v2396
    %v2398 = vsel %vm1962, %v2256, 0.0
    %v2399 = vadd.f32 %v2397, %v2398
    %v2400 = vsel %vm1962, %v2274, 0.0
    %v2401 = vadd.f32 %v2399, %v2400
    %v2402 = vsel %vm1962, %v2292, 0.0
    %v2403 = vadd.f32 %v2401, %v2402
    %v2404 = vsel %vm1962, %v2310, 0.0
    %v2405 = vadd.f32 %v2403, %v2404
    %v2406 = vsel %vm1962, %v2328, 0.0
    %v2407 = vadd.f32 %v2405, %v2406
    %v2408 = vsel %vm1962, %v2346, 0.0
    %v2409 = vadd.f32 %v2407, %v2408
    %v2410 = vsel %vm1962, %v2204, 0.0
    %v2411 = vsel %vm1962, %v2222, 0.0
    %v2412 = vadd.f32 %v2410, %v2411
    %v2413 = vsel %vm1962, %v2240, 0.0
    %v2414 = vadd.f32 %v2412, %v2413
    %v2415 = vsel %vm1962, %v2258, 0.0
    %v2416 = vadd.f32 %v2414, %v2415
    %v2417 = vsel %vm1962, %v2276, 0.0
    %v2418 = vadd.f32 %v2416, %v2417
    %v2419 = vsel %vm1962, %v2294, 0.0
    %v2420 = vadd.f32 %v2418, %v2419
    %v2421 = vsel %vm1962, %v2312, 0.0
    %v2422 = vadd.f32 %v2420, %v2421
    %v2423 = vsel %vm1962, %v2330, 0.0
    %v2424 = vadd.f32 %v2422, %v2423
    %v2425 = vsel %vm1962, %v2348, 0.0
    %v2426 = vadd.f32 %v2424, %v2425
    %v2427 = vsel %vm1962, %v2206, 0.0
    %v2428 = vsel %vm1962, %v2224, 0.0
    %v2429 = vadd.f32 %v2427, %v2428
    %v2430 = vsel %vm1962, %v2242, 0.0
    %v2431 = vadd.f32 %v2429, %v2430
    %v2432 = vsel %vm1962, %v2260, 0.0
    %v2433 = vadd.f32 %v2431, %v2432
    %v2434 = vsel %vm1962, %v2278, 0.0
    %v2435 = vadd.f32 %v2433, %v2434
    %v2436 = vsel %vm1962, %v2296, 0.0
    %v2437 = vadd.f32 %v2435, %v2436
    %v2438 = vsel %vm1962, %v2314, 0.0
    %v2439 = vadd.f32 %v2437, %v2438
    %v2440 = vsel %vm1962, %v2332, 0.0
    %v2441 = vadd.f32 %v2439, %v2440
    %v2442 = vsel %vm1962, %v2350, 0.0
    %v2443 = vadd.f32 %v2441, %v2442
    %v2444 = vsel %vm1962, %v2208, 0.0
    %v2445 = vsel %vm1962, %v2226, 0.0
    %v2446 = vadd.f32 %v2444, %v2445
    %v2447 = vsel %vm1962, %v2244, 0.0
    %v2448 = vadd.f32 %v2446, %v2447
    %v2449 = vsel %vm1962, %v2262, 0.0
    %v2450 = vadd.f32 %v2448, %v2449
    %v2451 = vsel %vm1962, %v2280, 0.0
    %v2452 = vadd.f32 %v2450, %v2451
    %v2453 = vsel %vm1962, %v2298, 0.0
    %v2454 = vadd.f32 %v2452, %v2453
    %v2455 = vsel %vm1962, %v2316, 0.0
    %v2456 = vadd.f32 %v2454, %v2455
    %v2457 = vsel %vm1962, %v2334, 0.0
    %v2458 = vadd.f32 %v2456, %v2457
    %v2459 = vsel %vm1962, %v2352, 0.0
    %v2460 = vadd.f32 %v2458, %v2459
    %v2461 = vsel %vm1962, %v2210, 0.0
    %v2462 = vsel %vm1962, %v2228, 0.0
    %v2463 = vadd.f32 %v2461, %v2462
    %v2464 = vsel %vm1962, %v2246, 0.0
    %v2465 = vadd.f32 %v2463, %v2464
    %v2466 = vsel %vm1962, %v2264, 0.0
    %v2467 = vadd.f32 %v2465, %v2466
    %v2468 = vsel %vm1962, %v2282, 0.0
    %v2469 = vadd.f32 %v2467, %v2468
    %v2470 = vsel %vm1962, %v2300, 0.0
    %v2471 = vadd.f32 %v2469, %v2470
    %v2472 = vsel %vm1962, %v2318, 0.0
    %v2473 = vadd.f32 %v2471, %v2472
    %v2474 = vsel %vm1962, %v2336, 0.0
    %v2475 = vadd.f32 %v2473, %v2474
    %v2476 = vsel %vm1962, %v2354, 0.0
    %v2477 = vadd.f32 %v2475, %v2476
    %v2478 = vsel %vm1962, %v2212, 0.0
    %v2479 = vsel %vm1962, %v2230, 0.0
    %v2480 = vadd.f32 %v2478, %v2479
    %v2481 = vsel %vm1962, %v2248, 0.0
    %v2482 = vadd.f32 %v2480, %v2481
    %v2483 = vsel %vm1962, %v2266, 0.0
    %v2484 = vadd.f32 %v2482, %v2483
    %v2485 = vsel %vm1962, %v2284, 0.0
    %v2486 = vadd.f32 %v2484, %v2485
    %v2487 = vsel %vm1962, %v2302, 0.0
    %v2488 = vadd.f32 %v2486, %v2487
    %v2489 = vsel %vm1962, %v2320, 0.0
    %v2490 = vadd.f32 %v2488, %v2489
    %v2491 = vsel %vm1962, %v2338, 0.0
    %v2492 = vadd.f32 %v2490, %v2491
    %v2493 = vsel %vm1962, %v2356, 0.0
    %v2494 = vadd.f32 %v2492, %v2493
    %v2495 = vsel %vm1962, %v2214, 0.0
    %v2496 = vsel %vm1962, %v2232, 0.0
    %v2497 = vadd.f32 %v2495, %v2496
    %v2498 = vsel %vm1962, %v2250, 0.0
    %v2499 = vadd.f32 %v2497, %v2498
    %v2500 = vsel %vm1962, %v2268, 0.0
    %v2501 = vadd.f32 %v2499, %v2500
    %v2502 = vsel %vm1962, %v2286, 0.0
    %v2503 = vadd.f32 %v2501, %v2502
    %v2504 = vsel %vm1962, %v2304, 0.0
    %v2505 = vadd.f32 %v2503, %v2504
    %v2506 = vsel %vm1962, %v2322, 0.0
    %v2507 = vadd.f32 %v2505, %v2506
    %v2508 = vsel %vm1962, %v2340, 0.0
    %v2509 = vadd.f32 %v2507, %v2508
    %v2510 = vsel %vm1962, %v2358, 0.0
    %v2511 = vadd.f32 %v2509, %v2510
    %v2512 = vrcp.pop %v2375
    %v2513 = vrcp.pop %v2392
    %v2514 = vrcp.pop %v2409
    %v2515 = vrcp.pop %v2426
    %v2516 = vrcp.pop %v2443
    %v2517 = vrcp.pop %v2460
    %v2518 = vrcp.pop %v2477
    %v2519 = vrcp.pop %v2494
    %v2520 = vrcp.pop %v2511
    %v2521 = vmul.f32 %v2198, %v2512
    %v2522 = vmul.f32 %v2200, %v2513
    %v2523 = vmul.f32 %v2202, %v2514
    %v2524 = vmul.f32 %v2204, %v2515
    %v2525 = vmul.f32 %v2206, %v2516
    %v2526 = vmul.f32 %v2208, %v2517
    %v2527 = vmul.f32 %v2210, %v2518
    %v2528 = vmul.f32 %v2212, %v2519
    %v2529 = vmul.f32 %v2214, %v2520
    %v2530 = vmul.f32 %v2216, %v2512
    %v2531 = vmul.f32 %v2218, %v2513
    %v2532 = vmul.f32 %v2220, %v2514
    %v2533 = vmul.f32 %v2222, %v2515
    %v2534 = vmul.f32 %v2224, %v2516
    %v2535 = vmul.f32 %v2226, %v2517
    %v2536 = vmul.f32 %v2228, %v2518
    %v2537 = vmul.f32 %v2230, %v2519
    %v2538 = vmul.f32 %v2232, %v2520
    %v2539 = vmul.f32 %v2234, %v2512
    %v2540 = vmul.f32 %v2236, %v2513
    %v2541 = vmul.f32 %v2238, %v2514
    %v2542 = vmul.f32 %v2240, %v2515
    %v2543 = vmul.f32 %v2242, %v2516
    %v2544 = vmul.f32 %v2244, %v2517
    %v2545 = vmul.f32 %v2246, %v2518
    %v2546 = vmul.f32 %v2248, %v2519
    %v2547 = vmul.f32 %v2250, %v2520
    %v2548 = vmul.f32 %v2252, %v2512
    %v2549 = vmul.f32 %v2254, %v2513
    %v2550 = vmul.f32 %v2256, %v2514
    %v2551 = vmul.f32 %v2258, %v2515
    %v2552 = vmul.f32 %v2260, %v2516
    %v2553 = vmul.f32 %v2262, %v2517
    %v2554 = vmul.f32 %v2264, %v2518
    %v2555 = vmul.f32 %v2266, %v2519
    %v2556 = vmul.f32 %v2268, %v2520
    %v2557 = vmul.f32 %v2270, %v2512
    %v2558 = vmul.f32 %v2272, %v2513
    %v2559 = vmul.f32 %v2274, %v2514
    %v2560 = vmul.f32 %v2276, %v2515
    %v2561 = vmul.f32 %v2278, %v2516
    %v2562 = vmul.f32 %v2280, %v2517
    %v2563 = vmul.f32 %v2282, %v2518
    %v2564 = vmul.f32 %v2284, %v2519
    %v2565 = vmul.f32 %v2286, %v2520
    %v2566 = vmul.f32 %v2288, %v2512
    %v2567 = vmul.f32 %v2290, %v2513
    %v2568 = vmul.f32 %v2292, %v2514
    %v2569 = vmul.f32 %v2294, %v2515
    %v2570 = vmul.f32 %v2296, %v2516
    %v2571 = vmul.f32 %v2298, %v2517
    %v2572 = vmul.f32 %v2300, %v2518
    %v2573 = vmul.f32 %v2302, %v2519
    %v2574 = vmul.f32 %v2304, %v2520
    %v2575 = vmul.f32 %v2306, %v2512
    %v2576 = vmul.f32 %v2308, %v2513
    %v2577 = vmul.f32 %v2310, %v2514
    %v2578 = vmul.f32 %v2312, %v2515
    %v2579 = vmul.f32 %v2314, %v2516
    %v2580 = vmul.f32 %v2316, %v2517
    %v2581 = vmul.f32 %v2318, %v2518
    %v2582 = vmul.f32 %v2320, %v2519
    %v2583 = vmul.f32 %v2322, %v2520
    %v2584 = vmul.f32 %v2324, %v2512
    %v2585 = vmul.f32 %v2326, %v2513
    %v2586 = vmul.f32 %v2328, %v2514
    %v2587 = vmul.f32 %v2330, %v2515
    %v2588 = vmul.f32 %v2332, %v2516
    %v2589 = vmul.f32 %v2334, %v2517
    %v2590 = vmul.f32 %v2336, %v2518
    %v2591 = vmul.f32 %v2338, %v2519
    %v2592 = vmul.f32 %v2340, %v2520
    %v2593 = vmul.f32 %v2342, %v2512
    %v2594 = vmul.f32 %v2344, %v2513
    %v2595 = vmul.f32 %v2346, %v2514
    %v2596 = vmul.f32 %v2348, %v2515
    %v2597 = vmul.f32 %v2350, %v2516
    %v2598 = vmul.f32 %v2352, %v2517
    %v2599 = vmul.f32 %v2354, %v2518
    %v2600 = vmul.f32 %v2356, %v2519
    %v2601 = vmul.f32 %v2358, %v2520
    %v2603 = vsel %vm1962, %v2521, 0
    %v2606 = vsel %vm1962, %v2522, 0
    %v2609 = vsel %vm1962, %v2523, 0
    %v2612 = vsel %vm1962, %v2524, 0
    %v2615 = vsel %vm1962, %v2525, 0
    %v2618 = vsel %vm1962, %v2526, 0
    %v2621 = vsel %vm1962, %v2527, 0
    %v2624 = vsel %vm1962, %v2528, 0
    %v2627 = vsel %vm1962, %v2529, 0
    %v2630 = vsel %vm1962, %v2530, 0
    %v2633 = vsel %vm1962, %v2531, 0
    %v2636 = vsel %vm1962, %v2532, 0
    %v2639 = vsel %vm1962, %v2533, 0
    %v2642 = vsel %vm1962, %v2534, 0
    %v2645 = vsel %vm1962, %v2535, 0
    %v2648 = vsel %vm1962, %v2536, 0
    %v2651 = vsel %vm1962, %v2537, 0
    %v2654 = vsel %vm1962, %v2538, 0
    %v2657 = vsel %vm1962, %v2539, 0
    %v2660 = vsel %vm1962, %v2540, 0
    %v2663 = vsel %vm1962, %v2541, 0
    %v2666 = vsel %vm1962, %v2542, 0
    %v2669 = vsel %vm1962, %v2543, 0
    %v2672 = vsel %vm1962, %v2544, 0
    %v2675 = vsel %vm1962, %v2545, 0
    %v2678 = vsel %vm1962, %v2546, 0
    %v2681 = vsel %vm1962, %v2547, 0
    %v2684 = vsel %vm1962, %v2548, 0
    %v2687 = vsel %vm1962, %v2549, 0
    %v2690 = vsel %vm1962, %v2550, 0
    %v2693 = vsel %vm1962, %v2551, 0
    %v2696 = vsel %vm1962, %v2552, 0
    %v2699 = vsel %vm1962, %v2553, 0
    %v2702 = vsel %vm1962, %v2554, 0
    %v2705 = vsel %vm1962, %v2555, 0
    %v2708 = vsel %vm1962, %v2556, 0
    %v2711 = vsel %vm1962, %v2557, 0
    %v2714 = vsel %vm1962, %v2558, 0
    %v2717 = vsel %vm1962, %v2559, 0
    %v2720 = vsel %vm1962, %v2560, 0
    %v2723 = vsel %vm1962, %v2561, 0
    %v2726 = vsel %vm1962, %v2562, 0
    %v2729 = vsel %vm1962, %v2563, 0
    %v2732 = vsel %vm1962, %v2564, 0
    %v2735 = vsel %vm1962, %v2565, 0
    %v2738 = vsel %vm1962, %v2566, 0
    %v2741 = vsel %vm1962, %v2567, 0
    %v2744 = vsel %vm1962, %v2568, 0
    %v2747 = vsel %vm1962, %v2569, 0
    %v2750 = vsel %vm1962, %v2570, 0
    %v2753 = vsel %vm1962, %v2571, 0
    %v2756 = vsel %vm1962, %v2572, 0
    %v2759 = vsel %vm1962, %v2573, 0
    %v2762 = vsel %vm1962, %v2574, 0
    %v2765 = vsel %vm1962, %v2575, 0
    %v2768 = vsel %vm1962, %v2576, 0
    %v2771 = vsel %vm1962, %v2577, 0
    %v2774 = vsel %vm1962, %v2578, 0
    %v2777 = vsel %vm1962, %v2579, 0
    %v2780 = vsel %vm1962, %v2580, 0
    %v2783 = vsel %vm1962, %v2581, 0
    %v2786 = vsel %vm1962, %v2582, 0
    %v2789 = vsel %vm1962, %v2583, 0
    %v2792 = vsel %vm1962, %v2584, 0
    %v2795 = vsel %vm1962, %v2585, 0
    %v2798 = vsel %vm1962, %v2586, 0
    %v2801 = vsel %vm1962, %v2587, 0
    %v2804 = vsel %vm1962, %v2588, 0
    %v2807 = vsel %vm1962, %v2589, 0
    %v2810 = vsel %vm1962, %v2590, 0
    %v2813 = vsel %vm1962, %v2591, 0
    %v2816 = vsel %vm1962, %v2592, 0
    %v2819 = vsel %vm1962, %v2593, 0
    %v2822 = vsel %vm1962, %v2594, 0
    %v2825 = vsel %vm1962, %v2595, 0
    %v2828 = vsel %vm1962, %v2596, 0
    %v2831 = vsel %vm1962, %v2597, 0
    %v2834 = vsel %vm1962, %v2598, 0
    %v2837 = vsel %vm1962, %v2599, 0
    %v2840 = vsel %vm1962, %v2600, 0
    %v2843 = vsel %vm1962, %v2601, 0
    %2845 = vmatprep.subr.mxu0 0.0
    %2846 = vmatpush1.msra.mxu0 %v1410
    %2847 = vmatprep.subr.mxu0 0.0
    %2848 = vmatpush1.msra.mxu0 0.0
    %2849 = vmatprep.subr.mxu0 0.0
    %2850 = vmatpush1.msra.mxu0 0.0
    %2851 = vmatprep.subr.mxu0 0.0
    %2852 = vmatpush1.msra.mxu0 0.0
    %2853 = vmatprep.subr.mxu0 0.0
    %2854 = vmatpush1.msra.mxu0 0.0
    %2855 = vmatprep.subr.mxu0 0.0
    %2856 = vmatpush1.msra.mxu0 0.0
    %2857 = vmatprep.subr.mxu0 0.0
    %2858 = vmatpush1.msra.mxu0 0.0
    %2859 = vmatprep.subr.mxu0 0.0
    %2860 = vmatpush1.msra.mxu0 0.0
    %2861 = vmatprep.subr.mxu0 0.0
    %2862 = vmatpush1.msra.mxu0 0.0
    %2863 = vmatprep.subr.mxu0 0.0
    %2864 = vmatpush1.msra.mxu0 0.0
    %2865 = vmatprep.subr.mxu0 0.0
    %2866 = vmatpush1.msra.mxu0 0.0
    %2867 = vmatprep.subr.mxu0 0.0
    %2868 = vmatpush1.msra.mxu0 0.0
    %2869 = vmatprep.subr.mxu0 0.0
    %2870 = vmatpush1.msra.mxu0 0.0
    %2871 = vmatprep.subr.mxu0 0.0
    %2872 = vmatpush1.msra.mxu0 0.0
    %2873 = vmatprep.subr.mxu0 0.0
    %2874 = vmatpush1.msra.mxu0 0.0
    %2875 = vmatprep.subr.mxu0 0.0
    %2876 = vmatpush1.msra.mxu0 0.0
    %2877 = vmatprep.subr.mxu0 0.0
    %2878 = vmatpush1.msra.mxu0 0.0
    %2879 = vmatprep.subr.mxu0 0.0
    %2880 = vmatpush1.msra.mxu0 0.0
    %2881 = vmatprep.subr.mxu0 0.0
    %2882 = vmatpush1.msra.mxu0 0.0
    %2883 = vmatprep.subr.mxu0 0.0
    %2884 = vmatpush1.msra.mxu0 0.0
    %2885 = vmatprep.subr.mxu0 0.0
    %2886 = vmatpush1.msra.mxu0 0.0
    %2887 = vmatprep.subr.mxu0 0.0
    %2888 = vmatpush1.msra.mxu0 0.0
    %2889 = vmatprep.subr.mxu0 0.0
    %2890 = vmatpush1.msra.mxu0 0.0
    %2891 = vmatprep.subr.mxu0 0.0
    %2892 = vmatpush1.msra.mxu0 0.0
    %2893 = vmatprep.subr.mxu0 0.0
    %2894 = vmatpush1.msra.mxu0 0.0
    %2895 = vmatprep.subr.mxu0 0.0
    %2896 = vmatpush1.msra.mxu0 0.0
    %2897 = vmatprep.subr.mxu0 0.0
    %2898 = vmatpush1.msra.mxu0 0.0
    %2899 = vmatprep.subr.mxu0 0.0
    %2900 = vmatpush1.msra.mxu0 0.0
    %2901 = vmatprep.subr.mxu0 0.0
    %2902 = vmatpush1.msra.mxu0 0.0
    %2903 = vmatprep.subr.mxu0 0.0
    %2904 = vmatpush1.msra.mxu0 0.0
    %2905 = vmatprep.subr.mxu0 0.0
    %2906 = vmatpush1.msra.mxu0 0.0
    %2907 = vmatprep.subr.mxu0 0.0
    %2908 = vmatpush1.msra.mxu0 0.0
    %2909 = vmatprep.mubr.f32.mxu0 0.0
    %2910 = vmatmul.mubr.f32.gmra.mrb[0].mxu0 %v2603
    %v2911 = vpop.f32.mrb[0].mxu0
    %v2912 = vadd.f32 0.0, %v2911
    %v2913 = vpop.f32.mrb[0].mxu0
    %2914 = vmatprep.mubr.f32.mxu0 0.0
    %2915 = vmatmul.mubr.f32.gmra.mrb[0].mxu0 %v2606
    %v2916 = vpop.f32.mrb[0].mxu0
    %v2917 = vadd.f32 0.0, %v2916
    %v2918 = vpop.f32.mrb[0].mxu0
    %2919 = vmatprep.mubr.f32.mxu0 0.0
    %2920 = vmatmul.mubr.f32.gmra.mrb[0].mxu0 %v2609
    %v2921 = vpop.f32.mrb[0].mxu0
    %v2922 = vadd.f32 0.0, %v2921
    %v2923 = vpop.f32.mrb[0].mxu0
    %2924 = vmatprep.mubr.f32.mxu0 0.0
    %2925 = vmatmul.mubr.f32.gmra.mrb[0].mxu0 %v2612
    %v2926 = vpop.f32.mrb[0].mxu0
    %v2927 = vadd.f32 0.0, %v2926
    %v2928 = vpop.f32.mrb[0].mxu0
    %2929 = vmatprep.mubr.f32.mxu0 0.0
    %2930 = vmatmul.mubr.f32.gmra.mrb[0].mxu0 %v2615
    %v2931 = vpop.f32.mrb[0].mxu0
    %v2932 = vadd.f32 0.0, %v2931
    %v2933 = vpop.f32.mrb[0].mxu0
    %2934 = vmatprep.mubr.f32.mxu0 0.0
    %2935 = vmatmul.mubr.f32.gmra.mrb[0].mxu0 %v2618
    %v2936 = vpop.f32.mrb[0].mxu0
    %v2937 = vadd.f32 0.0, %v2936
    %v2938 = vpop.f32.mrb[0].mxu0
    %2939 = vmatprep.mubr.f32.mxu0 0.0
    %2940 = vmatmul.mubr.f32.gmra.mrb[0].mxu0 %v2621
    %v2941 = vpop.f32.mrb[0].mxu0
    %v2942 = vadd.f32 0.0, %v2941
    %v2943 = vpop.f32.mrb[0].mxu0
    %2944 = vmatprep.mubr.f32.mxu0 0.0
    %2945 = vmatmul.mubr.f32.gmra.mrb[0].mxu0 %v2624
    %v2946 = vpop.f32.mrb[0].mxu0
    %v2947 = vadd.f32 0.0, %v2946
    %v2948 = vpop.f32.mrb[0].mxu0
    %2949 = vmatprep.mubr.f32.mxu0 0.0
    %2950 = vmatmul.mubr.f32.gmra.mrb[0].mxu0 %v2627
    %v2951 = vpop.f32.mrb[0].mxu0
    %v2952 = vadd.f32 0.0, %v2951
    %v2953 = vpop.f32.mrb[0].mxu0
    %2954 = vmatprep.mubr.f32.mxu0 0.0
    %2955 = vmatmul.mubr.f32.gmra.mrb[0].mxu0 %v2630
    %v2956 = vpop.f32.mrb[0].mxu0
    %v2957 = vadd.f32 0.0, %v2956
    %v2958 = vpop.f32.mrb[0].mxu0
    %2959 = vmatprep.mubr.f32.mxu0 0.0
    %2960 = vmatmul.mubr.f32.gmra.mrb[0].mxu0 %v2633
    %v2961 = vpop.f32.mrb[0].mxu0
    %v2962 = vadd.f32 0.0, %v2961
    %v2963 = vpop.f32.mrb[0].mxu0
    %2964 = vmatprep.mubr.f32.mxu0 0.0
    %2965 = vmatmul.mubr.f32.gmra.mrb[0].mxu0 %v2636
    %v2966 = vpop.f32.mrb[0].mxu0
    %v2967 = vadd.f32 0.0, %v2966
    %v2968 = vpop.f32.mrb[0].mxu0
    %2969 = vmatprep.mubr.f32.mxu0 0.0
    %2970 = vmatmul.mubr.f32.gmra.mrb[0].mxu0 %v2639
    %v2971 = vpop.f32.mrb[0].mxu0
    %v2972 = vadd.f32 0.0, %v2971
    %v2973 = vpop.f32.mrb[0].mxu0
    %2974 = vmatprep.mubr.f32.mxu0 0.0
    %2975 = vmatmul.mubr.f32.gmra.mrb[0].mxu0 %v2642
    %v2976 = vpop.f32.mrb[0].mxu0
    %v2977 = vadd.f32 0.0, %v2976
    %v2978 = vpop.f32.mrb[0].mxu0
    %2979 = vmatprep.mubr.f32.mxu0 0.0
    %2980 = vmatmul.mubr.f32.gmra.mrb[0].mxu0 %v2645
    %v2981 = vpop.f32.mrb[0].mxu0
    %v2982 = vadd.f32 0.0, %v2981
    %v2983 = vpop.f32.mrb[0].mxu0
    %2984 = vmatprep.mubr.f32.mxu0 0.0
    %2985 = vmatmul.mubr.f32.gmra.mrb[0].mxu0 %v2648
    %v2986 = vpop.f32.mrb[0].mxu0
    %v2987 = vadd.f32 0.0, %v2986
    %v2988 = vpop.f32.mrb[0].mxu0
    %2989 = vmatprep.mubr.f32.mxu0 0.0
    %2990 = vmatmul.mubr.f32.gmra.mrb[0].mxu0 %v2651
    %v2991 = vpop.f32.mrb[0].mxu0
    %v2992 = vadd.f32 0.0, %v2991
    %v2993 = vpop.f32.mrb[0].mxu0
    %2994 = vmatprep.mubr.f32.mxu0 0.0
    %2995 = vmatmul.mubr.f32.gmra.mrb[0].mxu0 %v2654
    %v2996 = vpop.f32.mrb[0].mxu0
    %v2997 = vadd.f32 0.0, %v2996
    %v2998 = vpop.f32.mrb[0].mxu0
    %2999 = vmatprep.mubr.f32.mxu0 0.0
    %3000 = vmatmul.mubr.f32.gmra.mrb[0].mxu0 %v2657
    %v3001 = vpop.f32.mrb[0].mxu0
    %v3002 = vadd.f32 0.0, %v3001
    %v3003 = vpop.f32.mrb[0].mxu0
    %3004 = vmatprep.mubr.f32.mxu0 0.0
    %3005 = vmatmul.mubr.f32.gmra.mrb[0].mxu0 %v2660
    %v3006 = vpop.f32.mrb[0].mxu0
    %v3007 = vadd.f32 0.0, %v3006
    %v3008 = vpop.f32.mrb[0].mxu0
    %3009 = vmatprep.mubr.f32.mxu0 0.0
    %3010 = vmatmul.mubr.f32.gmra.mrb[0].mxu0 %v2663
    %v3011 = vpop.f32.mrb[0].mxu0
    %v3012 = vadd.f32 0.0, %v3011
    %v3013 = vpop.f32.mrb[0].mxu0
    %3014 = vmatprep.mubr.f32.mxu0 0.0
    %3015 = vmatmul.mubr.f32.gmra.mrb[0].mxu0 %v2666
    %v3016 = vpop.f32.mrb[0].mxu0
    %v3017 = vadd.f32 0.0, %v3016
    %v3018 = vpop.f32.mrb[0].mxu0
    %3019 = vmatprep.mubr.f32.mxu0 0.0
    %3020 = vmatmul.mubr.f32.gmra.mrb[0].mxu0 %v2669
    %v3021 = vpop.f32.mrb[0].mxu0
    %v3022 = vadd.f32 0.0, %v3021
    %v3023 = vpop.f32.mrb[0].mxu0
    %3024 = vmatprep.mubr.f32.mxu0 0.0
    %3025 = vmatmul.mubr.f32.gmra.mrb[0].mxu0 %v2672
    %v3026 = vpop.f32.mrb[0].mxu0
    %v3027 = vadd.f32 0.0, %v3026
    %v3028 = vpop.f32.mrb[0].mxu0
    %3029 = vmatprep.mubr.f32.mxu0 0.0
    %3030 = vmatmul.mubr.f32.gmra.mrb[0].mxu0 %v2675
    %v3031 = vpop.f32.mrb[0].mxu0
    %v3032 = vadd.f32 0.0, %v3031
    %v3033 = vpop.f32.mrb[0].mxu0
    %3034 = vmatprep.mubr.f32.mxu0 0.0
    %3035 = vmatmul.mubr.f32.gmra.mrb[0].mxu0 %v2678
    %v3036 = vpop.f32.mrb[0].mxu0
    %v3037 = vadd.f32 0.0, %v3036
    %v3038 = vpop.f32.mrb[0].mxu0
    %3039 = vmatprep.mubr.f32.mxu0 0.0
    %3040 = vmatmul.mubr.f32.gmra.mrb[0].mxu0 %v2681
    %v3041 = vpop.f32.mrb[0].mxu0
    %v3042 = vadd.f32 0.0, %v3041
    %v3043 = vpop.f32.mrb[0].mxu0
    %3044 = vmatprep.mubr.f32.mxu0 0.0
    %3045 = vmatmul.mubr.f32.gmra.mrb[0].mxu0 %v2684
    %v3046 = vpop.f32.mrb[0].mxu0
    %v3047 = vadd.f32 0.0, %v3046
    %v3048 = vpop.f32.mrb[0].mxu0
    %3049 = vmatprep.mubr.f32.mxu0 0.0
    %3050 = vmatmul.mubr.f32.gmra.mrb[0].mxu0 %v2687
    %v3051 = vpop.f32.mrb[0].mxu0
    %v3052 = vadd.f32 0.0, %v3051
    %v3053 = vpop.f32.mrb[0].mxu0
    %3054 = vmatprep.mubr.f32.mxu0 0.0
    %3055 = vmatmul.mubr.f32.gmra.mrb[0].mxu0 %v2690
    %v3056 = vpop.f32.mrb[0].mxu0
    %v3057 = vadd.f32 0.0, %v3056
    %v3058 = vpop.f32.mrb[0].mxu0
    %3059 = vmatprep.mubr.f32.mxu0 0.0
    %3060 = vmatmul.mubr.f32.gmra.mrb[0].mxu0 %v2693
    %v3061 = vpop.f32.mrb[0].mxu0
    %v3062 = vadd.f32 0.0, %v3061
    %v3063 = vpop.f32.mrb[0].mxu0
    %3064 = vmatprep.mubr.f32.mxu0 0.0
    %3065 = vmatmul.mubr.f32.gmra.mrb[0].mxu0 %v2696
    %v3066 = vpop.f32.mrb[0].mxu0
    %v3067 = vadd.f32 0.0, %v3066
    %v3068 = vpop.f32.mrb[0].mxu0
    %3069 = vmatprep.mubr.f32.mxu0 0.0
    %3070 = vmatmul.mubr.f32.gmra.mrb[0].mxu0 %v2699
    %v3071 = vpop.f32.mrb[0].mxu0
    %v3072 = vadd.f32 0.0, %v3071
    %v3073 = vpop.f32.mrb[0].mxu0
    %3074 = vmatprep.mubr.f32.mxu0 0.0
    %3075 = vmatmul.mubr.f32.gmra.mrb[0].mxu0 %v2702
    %v3076 = vpop.f32.mrb[0].mxu0
    %v3077 = vadd.f32 0.0, %v3076
    %v3078 = vpop.f32.mrb[0].mxu0
    %3079 = vmatprep.mubr.f32.mxu0 0.0
    %3080 = vmatmul.mubr.f32.gmra.mrb[0].mxu0 %v2705
    %v3081 = vpop.f32.mrb[0].mxu0
    %v3082 = vadd.f32 0.0, %v3081
    %v3083 = vpop.f32.mrb[0].mxu0
    %3084 = vmatprep.mubr.f32.mxu0 0.0
    %3085 = vmatmul.mubr.f32.gmra.mrb[0].mxu0 %v2708
    %v3086 = vpop.f32.mrb[0].mxu0
    %v3087 = vadd.f32 0.0, %v3086
    %v3088 = vpop.f32.mrb[0].mxu0
    %3089 = vmatprep.mubr.f32.mxu0 0.0
    %3090 = vmatmul.mubr.f32.gmra.mrb[0].mxu0 %v2711
    %v3091 = vpop.f32.mrb[0].mxu0
    %v3092 = vadd.f32 0.0, %v3091
    %v3093 = vpop.f32.mrb[0].mxu0
    %3094 = vmatprep.mubr.f32.mxu0 0.0
    %3095 = vmatmul.mubr.f32.gmra.mrb[0].mxu0 %v2714
    %v3096 = vpop.f32.mrb[0].mxu0
    %v3097 = vadd.f32 0.0, %v3096
    %v3098 = vpop.f32.mrb[0].mxu0
    %3099 = vmatprep.mubr.f32.mxu0 0.0
    %3100 = vmatmul.mubr.f32.gmra.mrb[0].mxu0 %v2717
    %v3101 = vpop.f32.mrb[0].mxu0
    %v3102 = vadd.f32 0.0, %v3101
    %v3103 = vpop.f32.mrb[0].mxu0
    %3104 = vmatprep.mubr.f32.mxu0 0.0
    %3105 = vmatmul.mubr.f32.gmra.mrb[0].mxu0 %v2720
    %v3106 = vpop.f32.mrb[0].mxu0
    %v3107 = vadd.f32 0.0, %v3106
    %v3108 = vpop.f32.mrb[0].mxu0
    %3109 = vmatprep.mubr.f32.mxu0 0.0
    %3110 = vmatmul.mubr.f32.gmra.mrb[0].mxu0 %v2723
    %v3111 = vpop.f32.mrb[0].mxu0
    %v3112 = vadd.f32 0.0, %v3111
    %v3113 = vpop.f32.mrb[0].mxu0
    %3114 = vmatprep.mubr.f32.mxu0 0.0
    %3115 = vmatmul.mubr.f32.gmra.mrb[0].mxu0 %v2726
    %v3116 = vpop.f32.mrb[0].mxu0
    %v3117 = vadd.f32 0.0, %v3116
    %v3118 = vpop.f32.mrb[0].mxu0
    %3119 = vmatprep.mubr.f32.mxu0 0.0
    %3120 = vmatmul.mubr.f32.gmra.mrb[0].mxu0 %v2729
    %v3121 = vpop.f32.mrb[0].mxu0
    %v3122 = vadd.f32 0.0, %v3121
    %v3123 = vpop.f32.mrb[0].mxu0
    %3124 = vmatprep.mubr.f32.mxu0 0.0
    %3125 = vmatmul.mubr.f32.gmra.mrb[0].mxu0 %v2732
    %v3126 = vpop.f32.mrb[0].mxu0
    %v3127 = vadd.f32 0.0, %v3126
    %v3128 = vpop.f32.mrb[0].mxu0
    %3129 = vmatprep.mubr.f32.mxu0 0.0
    %3130 = vmatmul.mubr.f32.gmra.mrb[0].mxu0 %v2735
    %v3131 = vpop.f32.mrb[0].mxu0
    %v3132 = vadd.f32 0.0, %v3131
    %v3133 = vpop.f32.mrb[0].mxu0
    %3134 = vmatprep.mubr.f32.mxu0 0.0
    %3135 = vmatmul.mubr.f32.gmra.mrb[0].mxu0 %v2738
    %v3136 = vpop.f32.mrb[0].mxu0
    %v3137 = vadd.f32 0.0, %v3136
    %v3138 = vpop.f32.mrb[0].mxu0
    %3139 = vmatprep.mubr.f32.mxu0 0.0
    %3140 = vmatmul.mubr.f32.gmra.mrb[0].mxu0 %v2741
    %v3141 = vpop.f32.mrb[0].mxu0
    %v3142 = vadd.f32 0.0, %v3141
    %v3143 = vpop.f32.mrb[0].mxu0
    %3144 = vmatprep.mubr.f32.mxu0 0.0
    %3145 = vmatmul.mubr.f32.gmra.mrb[0].mxu0 %v2744
    %v3146 = vpop.f32.mrb[0].mxu0
    %v3147 = vadd.f32 0.0, %v3146
    %v3148 = vpop.f32.mrb[0].mxu0
    %3149 = vmatprep.mubr.f32.mxu0 0.0
    %3150 = vmatmul.mubr.f32.gmra.mrb[0].mxu0 %v2747
    %v3151 = vpop.f32.mrb[0].mxu0
    %v3152 = vadd.f32 0.0, %v3151
    %v3153 = vpop.f32.mrb[0].mxu0
    %3154 = vmatprep.mubr.f32.mxu0 0.0
    %3155 = vmatmul.mubr.f32.gmra.mrb[0].mxu0 %v2750
    %v3156 = vpop.f32.mrb[0].mxu0
    %v3157 = vadd.f32 0.0, %v3156
    %v3158 = vpop.f32.mrb[0].mxu0
    %3159 = vmatprep.mubr.f32.mxu0 0.0
    %3160 = vmatmul.mubr.f32.gmra.mrb[0].mxu0 %v2753
    %v3161 = vpop.f32.mrb[0].mxu0
    %v3162 = vadd.f32 0.0, %v3161
    %v3163 = vpop.f32.mrb[0].mxu0
    %3164 = vmatprep.mubr.f32.mxu0 0.0
    %3165 = vmatmul.mubr.f32.gmra.mrb[0].mxu0 %v2756
    %v3166 = vpop.f32.mrb[0].mxu0
    %v3167 = vadd.f32 0.0, %v3166
    %v3168 = vpop.f32.mrb[0].mxu0
    %3169 = vmatprep.mubr.f32.mxu0 0.0
    %3170 = vmatmul.mubr.f32.gmra.mrb[0].mxu0 %v2759
    %v3171 = vpop.f32.mrb[0].mxu0
    %v3172 = vadd.f32 0.0, %v3171
    %v3173 = vpop.f32.mrb[0].mxu0
    %3174 = vmatprep.mubr.f32.mxu0 0.0
    %3175 = vmatmul.mubr.f32.gmra.mrb[0].mxu0 %v2762
    %v3176 = vpop.f32.mrb[0].mxu0
    %v3177 = vadd.f32 0.0, %v3176
    %v3178 = vpop.f32.mrb[0].mxu0
    %3179 = vmatprep.mubr.f32.mxu0 0.0
    %3180 = vmatmul.mubr.f32.gmra.mrb[0].mxu0 %v2765
    %v3181 = vpop.f32.mrb[0].mxu0
    %v3182 = vadd.f32 0.0, %v3181
    %v3183 = vpop.f32.mrb[0].mxu0
    %3184 = vmatprep.mubr.f32.mxu0 0.0
    %3185 = vmatmul.mubr.f32.gmra.mrb[0].mxu0 %v2768
    %v3186 = vpop.f32.mrb[0].mxu0
    %v3187 = vadd.f32 0.0, %v3186
    %v3188 = vpop.f32.mrb[0].mxu0
    %3189 = vmatprep.mubr.f32.mxu0 0.0
    %3190 = vmatmul.mubr.f32.gmra.mrb[0].mxu0 %v2771
    %v3191 = vpop.f32.mrb[0].mxu0
    %v3192 = vadd.f32 0.0, %v3191
    %v3193 = vpop.f32.mrb[0].mxu0
    %3194 = vmatprep.mubr.f32.mxu0 0.0
    %3195 = vmatmul.mubr.f32.gmra.mrb[0].mxu0 %v2774
    %v3196 = vpop.f32.mrb[0].mxu0
    %v3197 = vadd.f32 0.0, %v3196
    %v3198 = vpop.f32.mrb[0].mxu0
    %3199 = vmatprep.mubr.f32.mxu0 0.0
    %3200 = vmatmul.mubr.f32.gmra.mrb[0].mxu0 %v2777
    %v3201 = vpop.f32.mrb[0].mxu0
    %v3202 = vadd.f32 0.0, %v3201
    %v3203 = vpop.f32.mrb[0].mxu0
    %3204 = vmatprep.mubr.f32.mxu0 0.0
    %3205 = vmatmul.mubr.f32.gmra.mrb[0].mxu0 %v2780
    %v3206 = vpop.f32.mrb[0].mxu0
    %v3207 = vadd.f32 0.0, %v3206
    %v3208 = vpop.f32.mrb[0].mxu0
    %3209 = vmatprep.mubr.f32.mxu0 0.0
    %3210 = vmatmul.mubr.f32.gmra.mrb[0].mxu0 %v2783
    %v3211 = vpop.f32.mrb[0].mxu0
    %v3212 = vadd.f32 0.0, %v3211
    %v3213 = vpop.f32.mrb[0].mxu0
    %3214 = vmatprep.mubr.f32.mxu0 0.0
    %3215 = vmatmul.mubr.f32.gmra.mrb[0].mxu0 %v2786
    %v3216 = vpop.f32.mrb[0].mxu0
    %v3217 = vadd.f32 0.0, %v3216
    %v3218 = vpop.f32.mrb[0].mxu0
    %3219 = vmatprep.mubr.f32.mxu0 0.0
    %3220 = vmatmul.mubr.f32.gmra.mrb[0].mxu0 %v2789
    %v3221 = vpop.f32.mrb[0].mxu0
    %v3222 = vadd.f32 0.0, %v3221
    %v3223 = vpop.f32.mrb[0].mxu0
    %3224 = vmatprep.mubr.f32.mxu0 0.0
    %3225 = vmatmul.mubr.f32.gmra.mrb[0].mxu0 %v2792
    %v3226 = vpop.f32.mrb[0].mxu0
    %v3227 = vadd.f32 0.0, %v3226
    %v3228 = vpop.f32.mrb[0].mxu0
    %3229 = vmatprep.mubr.f32.mxu0 0.0
    %3230 = vmatmul.mubr.f32.gmra.mrb[0].mxu0 %v2795
    %v3231 = vpop.f32.mrb[0].mxu0
    %v3232 = vadd.f32 0.0, %v3231
    %v3233 = vpop.f32.mrb[0].mxu0
    %3234 = vmatprep.mubr.f32.mxu0 0.0
    %3235 = vmatmul.mubr.f32.gmra.mrb[0].mxu0 %v2798
    %v3236 = vpop.f32.mrb[0].mxu0
    %v3237 = vadd.f32 0.0, %v3236
    %v3238 = vpop.f32.mrb[0].mxu0
    %3239 = vmatprep.mubr.f32.mxu0 0.0
    %3240 = vmatmul.mubr.f32.gmra.mrb[0].mxu0 %v2801
    %v3241 = vpop.f32.mrb[0].mxu0
    %v3242 = vadd.f32 0.0, %v3241
    %v3243 = vpop.f32.mrb[0].mxu0
    %3244 = vmatprep.mubr.f32.mxu0 0.0
    %3245 = vmatmul.mubr.f32.gmra.mrb[0].mxu0 %v2804
    %v3246 = vpop.f32.mrb[0].mxu0
    %v3247 = vadd.f32 0.0, %v3246
    %v3248 = vpop.f32.mrb[0].mxu0
    %3249 = vmatprep.mubr.f32.mxu0 0.0
    %3250 = vmatmul.mubr.f32.gmra.mrb[0].mxu0 %v2807
    %v3251 = vpop.f32.mrb[0].mxu0
    %v3252 = vadd.f32 0.0, %v3251
    %v3253 = vpop.f32.mrb[0].mxu0
    %3254 = vmatprep.mubr.f32.mxu0 0.0
    %3255 = vmatmul.mubr.f32.gmra.mrb[0].mxu0 %v2810
    %v3256 = vpop.f32.mrb[0].mxu0
    %v3257 = vadd.f32 0.0, %v3256
    %v3258 = vpop.f32.mrb[0].mxu0
    %3259 = vmatprep.mubr.f32.mxu0 0.0
    %3260 = vmatmul.mubr.f32.gmra.mrb[0].mxu0 %v2813
    %v3261 = vpop.f32.mrb[0].mxu0
    %v3262 = vadd.f32 0.0, %v3261
    %v3263 = vpop.f32.mrb[0].mxu0
    %3264 = vmatprep.mubr.f32.mxu0 0.0
    %3265 = vmatmul.mubr.f32.gmra.mrb[0].mxu0 %v2816
    %v3266 = vpop.f32.mrb[0].mxu0
    %v3267 = vadd.f32 0.0, %v3266
    %v3268 = vpop.f32.mrb[0].mxu0
    %3269 = vmatprep.mubr.f32.mxu0 0.0
    %3270 = vmatmul.mubr.f32.gmra.mrb[0].mxu0 %v2819
    %v3271 = vpop.f32.mrb[0].mxu0
    %v3272 = vadd.f32 0.0, %v3271
    %v3273 = vpop.f32.mrb[0].mxu0
    %3274 = vmatprep.mubr.f32.mxu0 0.0
    %3275 = vmatmul.mubr.f32.gmra.mrb[0].mxu0 %v2822
    %v3276 = vpop.f32.mrb[0].mxu0
    %v3277 = vadd.f32 0.0, %v3276
    %v3278 = vpop.f32.mrb[0].mxu0
    %3279 = vmatprep.mubr.f32.mxu0 0.0
    %3280 = vmatmul.mubr.f32.gmra.mrb[0].mxu0 %v2825
    %v3281 = vpop.f32.mrb[0].mxu0
    %v3282 = vadd.f32 0.0, %v3281
    %v3283 = vpop.f32.mrb[0].mxu0
    %3284 = vmatprep.mubr.f32.mxu0 0.0
    %3285 = vmatmul.mubr.f32.gmra.mrb[0].mxu0 %v2828
    %v3286 = vpop.f32.mrb[0].mxu0
    %v3287 = vadd.f32 0.0, %v3286
    %v3288 = vpop.f32.mrb[0].mxu0
    %3289 = vmatprep.mubr.f32.mxu0 0.0
    %3290 = vmatmul.mubr.f32.gmra.mrb[0].mxu0 %v2831
    %v3291 = vpop.f32.mrb[0].mxu0
    %v3292 = vadd.f32 0.0, %v3291
    %v3293 = vpop.f32.mrb[0].mxu0
    %3294 = vmatprep.mubr.f32.mxu0 0.0
    %3295 = vmatmul.mubr.f32.gmra.mrb[0].mxu0 %v2834
    %v3296 = vpop.f32.mrb[0].mxu0
    %v3297 = vadd.f32 0.0, %v3296
    %v3298 = vpop.f32.mrb[0].mxu0
    %3299 = vmatprep.mubr.f32.mxu0 0.0
    %3300 = vmatmul.mubr.f32.gmra.mrb[0].mxu0 %v2837
    %v3301 = vpop.f32.mrb[0].mxu0
    %v3302 = vadd.f32 0.0, %v3301
    %v3303 = vpop.f32.mrb[0].mxu0
    %3304 = vmatprep.mubr.f32.mxu0 0.0
    %3305 = vmatmul.mubr.f32.gmra.mrb[0].mxu0 %v2840
    %v3306 = vpop.f32.mrb[0].mxu0
    %v3307 = vadd.f32 0.0, %v3306
    %v3308 = vpop.f32.mrb[0].mxu0
    %3309 = vmatprep.mubr.f32.mxu0 0.0
    %3310 = vmatmul.mubr.f32.gmra.mrb[0].mxu0 %v2843
    %v3311 = vpop.f32.mrb[0].mxu0
    %v3312 = vadd.f32 0.0, %v3311
    %v3313 = vpop.f32.mrb[0].mxu0
    %3314 = vdwg.mxu0
    %v3315 = vmul.f32 %v2912, %v1274
    %v3316 = vmul.f32 %v2917, %v1274
    %v3317 = vmul.f32 %v2922, %v1274
    %v3318 = vmul.f32 %v2927, %v1274
    %v3319 = vmul.f32 %v2932, %v1274
    %v3320 = vmul.f32 %v2937, %v1274
    %v3321 = vmul.f32 %v2942, %v1274
    %v3322 = vmul.f32 %v2947, %v1274
    %v3323 = vmul.f32 %v2952, %v1274
    %v3324 = vadd.f32 %v3315, 0.0
    %v3325 = vadd.f32 %v3316, 0.0
    %v3326 = vadd.f32 %v3317, 0.0
    %v3327 = vadd.f32 %v3318, 0.0
    %v3328 = vadd.f32 %v3319, 0.0
    %v3329 = vadd.f32 %v3320, 0.0
    %v3330 = vadd.f32 %v3321, 0.0
    %v3331 = vadd.f32 %v3322, 0.0
    %v3332 = vadd.f32 %v3323, 0.0
    %v3333 = vmul.f32 %v2957, %v1280
    %v3334 = vmul.f32 %v2962, %v1280
    %v3335 = vmul.f32 %v2967, %v1280
    %v3336 = vmul.f32 %v2972, %v1280
    %v3337 = vmul.f32 %v2977, %v1280
    %v3338 = vmul.f32 %v2982, %v1280
    %v3339 = vmul.f32 %v2987, %v1280
    %v3340 = vmul.f32 %v2992, %v1280
    %v3341 = vmul.f32 %v2997, %v1280
    %v3342 = vadd.f32 %v3324, %v3333
    %v3343 = vadd.f32 %v3325, %v3334
    %v3344 = vadd.f32 %v3326, %v3335
    %v3345 = vadd.f32 %v3327, %v3336
    %v3346 = vadd.f32 %v3328, %v3337
    %v3347 = vadd.f32 %v3329, %v3338
    %v3348 = vadd.f32 %v3330, %v3339
    %v3349 = vadd.f32 %v3331, %v3340
    %v3350 = vadd.f32 %v3332, %v3341
    %v3351 = vmul.f32 %v3002, %v1286
    %v3352 = vmul.f32 %v3007, %v1286
    %v3353 = vmul.f32 %v3012, %v1286
    %v3354 = vmul.f32 %v3017, %v1286
    %v3355 = vmul.f32 %v3022, %v1286
    %v3356 = vmul.f32 %v3027, %v1286
    %v3357 = vmul.f32 %v3032, %v1286
    %v3358 = vmul.f32 %v3037, %v1286
    %v3359 = vmul.f32 %v3042, %v1286
    %v3360 = vadd.f32 %v3342, %v3351
    %v3361 = vadd.f32 %v3343, %v3352
    %v3362 = vadd.f32 %v3344, %v3353
    %v3363 = vadd.f32 %v3345, %v3354
    %v3364 = vadd.f32 %v3346, %v3355
    %v3365 = vadd.f32 %v3347, %v3356
    %v3366 = vadd.f32 %v3348, %v3357
    %v3367 = vadd.f32 %v3349, %v3358
    %v3368 = vadd.f32 %v3350, %v3359
    %v3369 = vmul.f32 %v3047, %v1292
    %v3370 = vmul.f32 %v3052, %v1292
    %v3371 = vmul.f32 %v3057, %v1292
    %v3372 = vmul.f32 %v3062, %v1292
    %v3373 = vmul.f32 %v3067, %v1292
    %v3374 = vmul.f32 %v3072, %v1292
    %v3375 = vmul.f32 %v3077, %v1292
    %v3376 = vmul.f32 %v3082, %v1292
    %v3377 = vmul.f32 %v3087, %v1292
    %v3378 = vadd.f32 %v3360, %v3369
    %v3379 = vadd.f32 %v3361, %v3370
    %v3380 = vadd.f32 %v3362, %v3371
    %v3381 = vadd.f32 %v3363, %v3372
    %v3382 = vadd.f32 %v3364, %v3373
    %v3383 = vadd.f32 %v3365, %v3374
    %v3384 = vadd.f32 %v3366, %v3375
    %v3385 = vadd.f32 %v3367, %v3376
    %v3386 = vadd.f32 %v3368, %v3377
    %v3387 = vmul.f32 %v3092, %v1298
    %v3388 = vmul.f32 %v3097, %v1298
    %v3389 = vmul.f32 %v3102, %v1298
    %v3390 = vmul.f32 %v3107, %v1298
    %v3391 = vmul.f32 %v3112, %v1298
    %v3392 = vmul.f32 %v3117, %v1298
    %v3393 = vmul.f32 %v3122, %v1298
    %v3394 = vmul.f32 %v3127, %v1298
    %v3395 = vmul.f32 %v3132, %v1298
    %v3396 = vadd.f32 %v3378, %v3387
    %v3397 = vadd.f32 %v3379, %v3388
    %v3398 = vadd.f32 %v3380, %v3389
    %v3399 = vadd.f32 %v3381, %v3390
    %v3400 = vadd.f32 %v3382, %v3391
    %v3401 = vadd.f32 %v3383, %v3392
    %v3402 = vadd.f32 %v3384, %v3393
    %v3403 = vadd.f32 %v3385, %v3394
    %v3404 = vadd.f32 %v3386, %v3395
    %v3405 = vmul.f32 %v3137, %v1304
    %v3406 = vmul.f32 %v3142, %v1304
    %v3407 = vmul.f32 %v3147, %v1304
    %v3408 = vmul.f32 %v3152, %v1304
    %v3409 = vmul.f32 %v3157, %v1304
    %v3410 = vmul.f32 %v3162, %v1304
    %v3411 = vmul.f32 %v3167, %v1304
    %v3412 = vmul.f32 %v3172, %v1304
    %v3413 = vmul.f32 %v3177, %v1304
    %v3414 = vadd.f32 %v3396, %v3405
    %v3415 = vadd.f32 %v3397, %v3406
    %v3416 = vadd.f32 %v3398, %v3407
    %v3417 = vadd.f32 %v3399, %v3408
    %v3418 = vadd.f32 %v3400, %v3409
    %v3419 = vadd.f32 %v3401, %v3410
    %v3420 = vadd.f32 %v3402, %v3411
    %v3421 = vadd.f32 %v3403, %v3412
    %v3422 = vadd.f32 %v3404, %v3413
    %v3423 = vmul.f32 %v3182, %v1310
    %v3424 = vmul.f32 %v3187, %v1310
    %v3425 = vmul.f32 %v3192, %v1310
    %v3426 = vmul.f32 %v3197, %v1310
    %v3427 = vmul.f32 %v3202, %v1310
    %v3428 = vmul.f32 %v3207, %v1310
    %v3429 = vmul.f32 %v3212, %v1310
    %v3430 = vmul.f32 %v3217, %v1310
    %v3431 = vmul.f32 %v3222, %v1310
    %v3432 = vadd.f32 %v3414, %v3423
    %v3433 = vadd.f32 %v3415, %v3424
    %v3434 = vadd.f32 %v3416, %v3425
    %v3435 = vadd.f32 %v3417, %v3426
    %v3436 = vadd.f32 %v3418, %v3427
    %v3437 = vadd.f32 %v3419, %v3428
    %v3438 = vadd.f32 %v3420, %v3429
    %v3439 = vadd.f32 %v3421, %v3430
    %v3440 = vadd.f32 %v3422, %v3431
    %v3441 = vmul.f32 %v3227, %v1316
    %v3442 = vmul.f32 %v3232, %v1316
    %v3443 = vmul.f32 %v3237, %v1316
    %v3444 = vmul.f32 %v3242, %v1316
    %v3445 = vmul.f32 %v3247, %v1316
    %v3446 = vmul.f32 %v3252, %v1316
    %v3447 = vmul.f32 %v3257, %v1316
    %v3448 = vmul.f32 %v3262, %v1316
    %v3449 = vmul.f32 %v3267, %v1316
    %v3450 = vadd.f32 %v3432, %v3441
    %v3451 = vadd.f32 %v3433, %v3442
    %v3452 = vadd.f32 %v3434, %v3443
    %v3453 = vadd.f32 %v3435, %v3444
    %v3454 = vadd.f32 %v3436, %v3445
    %v3455 = vadd.f32 %v3437, %v3446
    %v3456 = vadd.f32 %v3438, %v3447
    %v3457 = vadd.f32 %v3439, %v3448
    %v3458 = vadd.f32 %v3440, %v3449
    %v3459 = vmul.f32 %v3272, %v1322
    %v3460 = vmul.f32 %v3277, %v1322
    %v3461 = vmul.f32 %v3282, %v1322
    %v3462 = vmul.f32 %v3287, %v1322
    %v3463 = vmul.f32 %v3292, %v1322
    %v3464 = vmul.f32 %v3297, %v1322
    %v3465 = vmul.f32 %v3302, %v1322
    %v3466 = vmul.f32 %v3307, %v1322
    %v3467 = vmul.f32 %v3312, %v1322
    %v3468 = vadd.f32 %v3450, %v3459
    %v3469 = vadd.f32 %v3451, %v3460
    %v3470 = vadd.f32 %v3452, %v3461
    %v3471 = vadd.f32 %v3453, %v3462
    %v3472 = vadd.f32 %v3454, %v3463
    %v3473 = vadd.f32 %v3455, %v3464
    %v3474 = vadd.f32 %v3456, %v3465
    %v3475 = vadd.f32 %v3457, %v3466
    %v3476 = vadd.f32 %v3458, %v3467
    %v3477 = vld [vmem:[%s8] sm:$0xff]
    %v3478 = vld [vmem:[%s8 + $0x8] sm:$0xff]
    %v3479 = vld [vmem:[%s8 + $0x10] sm:$0xff]
    %v3480 = vld [vmem:[%s8 + $0x18] sm:$0xff]
    %v3481 = vld [vmem:[%s8 + $0x20] sm:$0xff]
    %v3482 = vld [vmem:[%s8 + $0x28] sm:$0xff]
    %v3483 = vld [vmem:[%s8 + $0x30] sm:$0xff]
    %v3484 = vld [vmem:[%s8 + $0x38] sm:$0xff]
    %v3485 = vld [vmem:[%s8 + $0x40] sm:$0xff]
    %v3486 = vld [vmem:[%s8 + $0x48] sm:$0xff]
    %v3487 = vld [vmem:[%s8 + $0x50] sm:$0xff]
    %v3488 = vld [vmem:[%s8 + $0x58] sm:$0xff]
    %v3489 = vld [vmem:[%s8 + $0x60] sm:$0xff]
    %v3490 = vld [vmem:[%s8 + $0x68] sm:$0xff]
    %v3491 = vld [vmem:[%s8 + $0x70] sm:$0xff]
    %v3492 = vld [vmem:[%s8 + $0x78] sm:$0xff]
    %3493 = vmatprep.subr.mxu0 0.0
    %3494 = vmatpush1.msra.mxu0 %v3477
    %3495 = vmatprep.subr.mxu0 0.0
    %3496 = vmatpush1.msra.mxu0 %v3478
    %3497 = vmatprep.subr.mxu0 0.0
    %3498 = vmatpush1.msra.mxu0 %v3479
    %3499 = vmatprep.subr.mxu0 0.0
    %3500 = vmatpush1.msra.mxu0 %v3480
    %3501 = vmatprep.subr.mxu0 0.0
    %3502 = vmatpush1.msra.mxu0 %v3481
    %3503 = vmatprep.subr.mxu0 0.0
    %3504 = vmatpush1.msra.mxu0 %v3482
    %3505 = vmatprep.subr.mxu0 0.0
    %3506 = vmatpush1.msra.mxu0 %v3483
    %3507 = vmatprep.subr.mxu0 0.0
    %3508 = vmatpush1.msra.mxu0 %v3484
    %3509 = vmatprep.subr.mxu0 0.0
    %3510 = vmatpush1.msra.mxu0 %v3485
    %3511 = vmatprep.subr.mxu0 0.0
    %3512 = vmatpush1.msra.mxu0 %v3486
    %3513 = vmatprep.subr.mxu0 0.0
    %3514 = vmatpush1.msra.mxu0 %v3487
    %3515 = vmatprep.subr.mxu0 0.0
    %3516 = vmatpush1.msra.mxu0 %v3488
    %3517 = vmatprep.subr.mxu0 0.0
    %3518 = vmatpush1.msra.mxu0 %v3489
    %3519 = vmatprep.subr.mxu0 0.0
    %3520 = vmatpush1.msra.mxu0 %v3490
    %3521 = vmatprep.subr.mxu0 0.0
    %3522 = vmatpush1.msra.mxu0 %v3491
    %3523 = vmatprep.subr.mxu0 0.0
    %3524 = vmatpush1.msra.mxu0 %v3492
    %3525 = vmatprep.subr.mxu0 0.0
    %3526 = vmatpush1.msra.mxu0 0.0
    %3527 = vmatprep.subr.mxu0 0.0
    %3528 = vmatpush1.msra.mxu0 0.0
    %3529 = vmatprep.subr.mxu0 0.0
    %3530 = vmatpush1.msra.mxu0 0.0
    %3531 = vmatprep.subr.mxu0 0.0
    %3532 = vmatpush1.msra.mxu0 0.0
    %3533 = vmatprep.subr.mxu0 0.0
    %3534 = vmatpush1.msra.mxu0 0.0
    %3535 = vmatprep.subr.mxu0 0.0
    %3536 = vmatpush1.msra.mxu0 0.0
    %3537 = vmatprep.subr.mxu0 0.0
    %3538 = vmatpush1.msra.mxu0 0.0
    %3539 = vmatprep.subr.mxu0 0.0
    %3540 = vmatpush1.msra.mxu0 0.0
    %3541 = vmatprep.subr.mxu0 0.0
    %3542 = vmatpush1.msra.mxu0 0.0
    %3543 = vmatprep.subr.mxu0 0.0
    %3544 = vmatpush1.msra.mxu0 0.0
    %3545 = vmatprep.subr.mxu0 0.0
    %3546 = vmatpush1.msra.mxu0 0.0
    %3547 = vmatprep.subr.mxu0 0.0
    %3548 = vmatpush1.msra.mxu0 0.0
    %3549 = vmatprep.subr.mxu0 0.0
    %3550 = vmatpush1.msra.mxu0 0.0
    %3551 = vmatprep.subr.mxu0 0.0
    %3552 = vmatpush1.msra.mxu0 0.0
    %3553 = vmatprep.subr.mxu0 0.0
    %3554 = vmatpush1.msra.mxu0 0.0
    %3555 = vmatprep.subr.mxu0 0.0
    %3556 = vmatpush1.msra.mxu0 0.0
    %3557 = vmatprep.mubr.f32.mxu0 0.0
    %3558 = vmatmul.mubr.f32.gmra.mrb[0].mxu0 %v3468
    %v3559 = vpop.f32.mrb[0].mxu0
    %v3560 = vadd.f32 0.0, %v3559
    %v3561 = vpop.f32.mrb[0].mxu0
    %3562 = vmatprep.mubr.f32.mxu0 0.0
    %3563 = vmatmul.mubr.f32.gmra.mrb[0].mxu0 %v3469
    %v3564 = vpop.f32.mrb[0].mxu0
    %v3565 = vadd.f32 0.0, %v3564
    %v3566 = vpop.f32.mrb[0].mxu0
    %3567 = vmatprep.mubr.f32.mxu0 0.0
    %3568 = vmatmul.mubr.f32.gmra.mrb[0].mxu0 %v3470
    %v3569 = vpop.f32.mrb[0].mxu0
    %v3570 = vadd.f32 0.0, %v3569
    %v3571 = vpop.f32.mrb[0].mxu0
    %3572 = vmatprep.mubr.f32.mxu0 0.0
    %3573 = vmatmul.mubr.f32.gmra.mrb[0].mxu0 %v3471
    %v3574 = vpop.f32.mrb[0].mxu0
    %v3575 = vadd.f32 0.0, %v3574
    %v3576 = vpop.f32.mrb[0].mxu0
    %3577 = vmatprep.mubr.f32.mxu0 0.0
    %3578 = vmatmul.mubr.f32.gmra.mrb[0].mxu0 %v3472
    %v3579 = vpop.f32.mrb[0].mxu0
    %v3580 = vadd.f32 0.0, %v3579
    %v3581 = vpop.f32.mrb[0].mxu0
    %3582 = vmatprep.mubr.f32.mxu0 0.0
    %3583 = vmatmul.mubr.f32.gmra.mrb[0].mxu0 %v3473
    %v3584 = vpop.f32.mrb[0].mxu0
    %v3585 = vadd.f32 0.0, %v3584
    %v3586 = vpop.f32.mrb[0].mxu0
    %3587 = vmatprep.mubr.f32.mxu0 0.0
    %3588 = vmatmul.mubr.f32.gmra.mrb[0].mxu0 %v3474
    %v3589 = vpop.f32.mrb[0].mxu0
    %v3590 = vadd.f32 0.0, %v3589
    %v3591 = vpop.f32.mrb[0].mxu0
    %3592 = vmatprep.mubr.f32.mxu0 0.0
    %3593 = vmatmul.mubr.f32.gmra.mrb[0].mxu0 %v3475
    %v3594 = vpop.f32.mrb[0].mxu0
    %v3595 = vadd.f32 0.0, %v3594
    %v3596 = vpop.f32.mrb[0].mxu0
    %3597 = vmatprep.mubr.f32.mxu0 0.0
    %3598 = vmatmul.mubr.f32.gmra.mrb[0].mxu0 %v3476
    %v3599 = vpop.f32.mrb[0].mxu0
    %v3600 = vadd.f32 0.0, %v3599
    %v3601 = vpop.f32.mrb[0].mxu0
    %3602 = vdwg.mxu0
    %v3603 = vadd.f32 %v464, %v3560
    %v3604 = vadd.f32 %v465, %v3565
    %v3605 = vadd.f32 %v466, %v3570
    %v3606 = vadd.f32 %v467, %v3575
    %v3607 = vadd.f32 %v468, %v3580
    %v3608 = vadd.f32 %v469, %v3585
    %v3609 = vadd.f32 %v470, %v3590
    %v3610 = vadd.f32 %v471, %v3595
    %v3611 = vadd.f32 %v472, %v3600
    %v3612 = vld [vmem:[%s10] sm:$0x1]
    %v3614 = vlaneseq
    %v3615 = vshrl.u32 %v3614, 7
    %v3616 = vsub.s32 0, %v3615
    %v3617 = vrot.slane %v3612, %v3616
    %v3619 = vadd.f32 %v3603, %v3617
    %v3620 = vadd.f32 %v3604, %v3617
    %v3621 = vadd.f32 %v3605, %v3617
    %v3622 = vadd.f32 %v3606, %v3617
    %v3623 = vadd.f32 %v3607, %v3617
    %v3624 = vadd.f32 %v3608, %v3617
    %v3625 = vadd.f32 %v3609, %v3617
    %v3626 = vadd.f32 %v3610, %v3617
    %v3627 = vadd.f32 %v3611, %v3617
    %s3628 = scalar_lea.vmem %s6, 8
    %v3629 = vld [vmem:[%s3628] sm:$0x3]
    %v3630 = vsel %vm328, %v3619, 0.0
    %3631 = vadd.xlane.f32.xlu0 %v3630
    %v3632 = vpop.xlane.xlu0 %3631
    %v3633 = vsel %vm328, %v3620, 0.0
    %3634 = vadd.xlane.f32.xlu0 %v3633
    %v3635 = vpop.xlane.xlu0 %3634
    %v3636 = vsel %vm328, %v3621, 0.0
    %3637 = vadd.xlane.f32.xlu0 %v3636
    %v3638 = vpop.xlane.xlu0 %3637
    %v3639 = vsel %vm328, %v3622, 0.0
    %3640 = vadd.xlane.f32.xlu0 %v3639
    %v3641 = vpop.xlane.xlu0 %3640
    %v3642 = vsel %vm328, %v3623, 0.0
    %3643 = vadd.xlane.f32.xlu0 %v3642
    %v3644 = vpop.xlane.xlu0 %3643
    %v3645 = vsel %vm328, %v3624, 0.0
    %3646 = vadd.xlane.f32.xlu0 %v3645
    %v3647 = vpop.xlane.xlu0 %3646
    %v3648 = vsel %vm328, %v3625, 0.0
    %3649 = vadd.xlane.f32.xlu0 %v3648
    %v3650 = vpop.xlane.xlu0 %3649
    %v3651 = vsel %vm328, %v3626, 0.0
    %3652 = vadd.xlane.f32.xlu0 %v3651
    %v3653 = vpop.xlane.xlu0 %3652
    %v3654 = vsel %vm328, %v3627, 0.0
    %3655 = vadd.xlane.f32.xlu0 %v3654
    %v3656 = vpop.xlane.xlu0 %3655
    %v3657 = vmul.f32 %v3632, %v356
    %v3658 = vmul.f32 %v3635, %v356
    %v3659 = vmul.f32 %v3638, %v356
    %v3660 = vmul.f32 %v3641, %v356
    %v3661 = vmul.f32 %v3644, %v356
    %v3662 = vmul.f32 %v3647, %v356
    %v3663 = vmul.f32 %v3650, %v356
    %v3664 = vmul.f32 %v3653, %v356
    %v3665 = vmul.f32 %v3656, %v356
    %v3666 = vsub.f32 %v3619, %v3657
    %v3667 = vsub.f32 %v3620, %v3658
    %v3668 = vsub.f32 %v3621, %v3659
    %v3669 = vsub.f32 %v3622, %v3660
    %v3670 = vsub.f32 %v3623, %v3661
    %v3671 = vsub.f32 %v3624, %v3662
    %v3672 = vsub.f32 %v3625, %v3663
    %v3673 = vsub.f32 %v3626, %v3664
    %v3674 = vsub.f32 %v3627, %v3665
    %v3675 = vmul.f32 %v3666, %v3666
    %v3676 = vmul.f32 %v3667, %v3667
    %v3677 = vmul.f32 %v3668, %v3668
    %v3678 = vmul.f32 %v3669, %v3669
    %v3679 = vmul.f32 %v3670, %v3670
    %v3680 = vmul.f32 %v3671, %v3671
    %v3681 = vmul.f32 %v3672, %v3672
    %v3682 = vmul.f32 %v3673, %v3673
    %v3683 = vmul.f32 %v3674, %v3674
    %v3684 = vsel %vm328, %v3675, 0.0
    %3685 = vadd.xlane.f32.xlu0 %v3684
    %v3686 = vpop.xlane.xlu0 %3685
    %v3687 = vsel %vm328, %v3676, 0.0
    %3688 = vadd.xlane.f32.xlu0 %v3687
    %v3689 = vpop.xlane.xlu0 %3688
    %v3690 = vsel %vm328, %v3677, 0.0
    %3691 = vadd.xlane.f32.xlu0 %v3690
    %v3692 = vpop.xlane.xlu0 %3691
    %v3693 = vsel %vm328, %v3678, 0.0
    %3694 = vadd.xlane.f32.xlu0 %v3693
    %v3695 = vpop.xlane.xlu0 %3694
    %v3696 = vsel %vm328, %v3679, 0.0
    %3697 = vadd.xlane.f32.xlu0 %v3696
    %v3698 = vpop.xlane.xlu0 %3697
    %v3699 = vsel %vm328, %v3680, 0.0
    %3700 = vadd.xlane.f32.xlu0 %v3699
    %v3701 = vpop.xlane.xlu0 %3700
    %v3702 = vsel %vm328, %v3681, 0.0
    %3703 = vadd.xlane.f32.xlu0 %v3702
    %v3704 = vpop.xlane.xlu0 %3703
    %v3705 = vsel %vm328, %v3682, 0.0
    %3706 = vadd.xlane.f32.xlu0 %v3705
    %v3707 = vpop.xlane.xlu0 %3706
    %v3708 = vsel %vm328, %v3683, 0.0
    %3709 = vadd.xlane.f32.xlu0 %v3708
    %v3710 = vpop.xlane.xlu0 %3709
    %v3711 = vmul.f32 %v3686, %v356
    %v3712 = vmul.f32 %v3689, %v356
    %v3713 = vmul.f32 %v3692, %v356
    %v3714 = vmul.f32 %v3695, %v356
    %v3715 = vmul.f32 %v3698, %v356
    %v3716 = vmul.f32 %v3701, %v356
    %v3717 = vmul.f32 %v3704, %v356
    %v3718 = vmul.f32 %v3707, %v356
    %v3719 = vmul.f32 %v3710, %v356
    %v3720 = vadd.f32 %v3711, 1e-05
    %v3721 = vadd.f32 %v3712, 1e-05
    %v3722 = vadd.f32 %v3713, 1e-05
    %v3723 = vadd.f32 %v3714, 1e-05
    %v3724 = vadd.f32 %v3715, 1e-05
    %v3725 = vadd.f32 %v3716, 1e-05
    %v3726 = vadd.f32 %v3717, 1e-05
    %v3727 = vadd.f32 %v3718, 1e-05
    %v3728 = vadd.f32 %v3719, 1e-05
    %v3729 = vrsqrt.pop %v3720
    %v3730 = vrsqrt.pop %v3721
    %v3731 = vrsqrt.pop %v3722
    %v3732 = vrsqrt.pop %v3723
    %v3733 = vrsqrt.pop %v3724
    %v3734 = vrsqrt.pop %v3725
    %v3735 = vrsqrt.pop %v3726
    %v3736 = vrsqrt.pop %v3727
    %v3737 = vrsqrt.pop %v3728
    %v3738 = vmul.f32 %v3666, %v3729
    %v3739 = vmul.f32 %v3667, %v3730
    %v3740 = vmul.f32 %v3668, %v3731
    %v3741 = vmul.f32 %v3669, %v3732
    %v3742 = vmul.f32 %v3670, %v3733
    %v3743 = vmul.f32 %v3671, %v3734
    %v3744 = vmul.f32 %v3672, %v3735
    %v3745 = vmul.f32 %v3673, %v3736
    %v3746 = vmul.f32 %v3674, %v3737
    %v3747 = vlaneseq
    %v3748 = vshrl.u32 %v3747, 7
    %v3749 = vsub.s32 0, %v3748
    %v3750 = vrot.slane %v3629, %v3749
    %v3751 = vmul.f32 %v3738, %v3750
    %v3752 = vmul.f32 %v3739, %v3750
    %v3753 = vmul.f32 %v3740, %v3750
    %v3754 = vmul.f32 %v3741, %v3750
    %v3755 = vmul.f32 %v3742, %v3750
    %v3756 = vmul.f32 %v3743, %v3750
    %v3757 = vmul.f32 %v3744, %v3750
    %v3758 = vmul.f32 %v3745, %v3750
    %v3759 = vmul.f32 %v3746, %v3750
    %v3760 = vlaneseq
    %v3761 = vshrl.u32 %v3760, 7
    %v3762 = vsub.s32 1, %v3761
    %v3763 = vrot.slane %v3629, %v3762
    %v3764 = vadd.f32 %v3751, %v3763
    %v3765 = vadd.f32 %v3752, %v3763
    %v3766 = vadd.f32 %v3753, %v3763
    %v3767 = vadd.f32 %v3754, %v3763
    %v3768 = vadd.f32 %v3755, %v3763
    %v3769 = vadd.f32 %v3756, %v3763
    %v3770 = vadd.f32 %v3757, %v3763
    %v3771 = vadd.f32 %v3758, %v3763
    %v3772 = vadd.f32 %v3759, %v3763
    %v3773 = vld [vmem:[%s7 + $0x18] sm:$0xff]
    %v3774 = vld [vmem:[%s7 + $0x38] sm:$0xff]
    %v3775 = vld [vmem:[%s7 + $0x58] sm:$0xff]
    %v3776 = vld [vmem:[%s7 + $0x78] sm:$0xff]
    %v3777 = vld [vmem:[%s10] sm:$0x3]
    %v3779 = vlaneseq
    %v3780 = vshrl.u32 %v3779, 7
    %v3781 = vsub.s32 0, %v3780
    %v3782 = vrot.slane %v3777, %v3781
    %v3783 = vlaneseq
    %v3784 = vshrl.u32 %v3783, 7
    %v3785 = vsub.s32 1, %v3784
    %v3786 = vrot.slane %v3777, %v3785
    %3787 = vrot.lane.b32.xlu0 %v3782, 96
    %v3788 = vpop.permute.xlu0 %3787
    %3789 = vrot.lane.b32.xlu0 %v3786, 96
    %v3790 = vpop.permute.xlu0 %3789
    %vm3791 = vcmask 785408
    %v3792 = vsel %vm3791, %v3788, %v3790
    %v3795 = vsel %vm328, %v3764, 0
    %v3798 = vsel %vm328, %v3765, 0
    %v3801 = vsel %vm328, %v3766, 0
    %v3804 = vsel %vm328, %v3767, 0
    %v3807 = vsel %vm328, %v3768, 0
    %v3810 = vsel %vm328, %v3769, 0
    %v3813 = vsel %vm328, %v3770, 0
    %v3816 = vsel %vm328, %v3771, 0
    %v3819 = vsel %vm328, %v3772, 0
    %3821 = vmatprep.subr.mxu0 0.0
    %3822 = vmatpush1.msra.mxu0 %v3773
    %3823 = vmatprep.subr.mxu0 0.0
    %3824 = vmatpush1.msra.mxu0 %v3774
    %3825 = vmatprep.subr.mxu0 0.0
    %3826 = vmatpush1.msra.mxu0 %v3775
    %3827 = vmatprep.subr.mxu0 0.0
    %3828 = vmatpush1.msra.mxu0 %v3776
    %3829 = vmatprep.subr.mxu0 0.0
    %3830 = vmatpush1.msra.mxu0 0.0
    %3831 = vmatprep.subr.mxu0 0.0
    %3832 = vmatpush1.msra.mxu0 0.0
    %3833 = vmatprep.subr.mxu0 0.0
    %3834 = vmatpush1.msra.mxu0 0.0
    %3835 = vmatprep.subr.mxu0 0.0
    %3836 = vmatpush1.msra.mxu0 0.0
    %3837 = vmatprep.subr.mxu0 0.0
    %3838 = vmatpush1.msra.mxu0 0.0
    %3839 = vmatprep.subr.mxu0 0.0
    %3840 = vmatpush1.msra.mxu0 0.0
    %3841 = vmatprep.subr.mxu0 0.0
    %3842 = vmatpush1.msra.mxu0 0.0
    %3843 = vmatprep.subr.mxu0 0.0
    %3844 = vmatpush1.msra.mxu0 0.0
    %3845 = vmatprep.subr.mxu0 0.0
    %3846 = vmatpush1.msra.mxu0 0.0
    %3847 = vmatprep.subr.mxu0 0.0
    %3848 = vmatpush1.msra.mxu0 0.0
    %3849 = vmatprep.subr.mxu0 0.0
    %3850 = vmatpush1.msra.mxu0 0.0
    %3851 = vmatprep.subr.mxu0 0.0
    %3852 = vmatpush1.msra.mxu0 0.0
    %3853 = vmatprep.subr.mxu0 0.0
    %3854 = vmatpush1.msra.mxu0 0.0
    %3855 = vmatprep.subr.mxu0 0.0
    %3856 = vmatpush1.msra.mxu0 0.0
    %3857 = vmatprep.subr.mxu0 0.0
    %3858 = vmatpush1.msra.mxu0 0.0
    %3859 = vmatprep.subr.mxu0 0.0
    %3860 = vmatpush1.msra.mxu0 0.0
    %3861 = vmatprep.subr.mxu0 0.0
    %3862 = vmatpush1.msra.mxu0 0.0
    %3863 = vmatprep.subr.mxu0 0.0
    %3864 = vmatpush1.msra.mxu0 0.0
    %3865 = vmatprep.subr.mxu0 0.0
    %3866 = vmatpush1.msra.mxu0 0.0
    %3867 = vmatprep.subr.mxu0 0.0
    %3868 = vmatpush1.msra.mxu0 0.0
    %3869 = vmatprep.subr.mxu0 0.0
    %3870 = vmatpush1.msra.mxu0 0.0
    %3871 = vmatprep.subr.mxu0 0.0
    %3872 = vmatpush1.msra.mxu0 0.0
    %3873 = vmatprep.subr.mxu0 0.0
    %3874 = vmatpush1.msra.mxu0 0.0
    %3875 = vmatprep.subr.mxu0 0.0
    %3876 = vmatpush1.msra.mxu0 0.0
    %3877 = vmatprep.subr.mxu0 0.0
    %3878 = vmatpush1.msra.mxu0 0.0
    %3879 = vmatprep.subr.mxu0 0.0
    %3880 = vmatpush1.msra.mxu0 0.0
    %3881 = vmatprep.subr.mxu0 0.0
    %3882 = vmatpush1.msra.mxu0 0.0
    %3883 = vmatprep.subr.mxu0 0.0
    %3884 = vmatpush1.msra.mxu0 0.0
    %3885 = vmatprep.mubr.f32.mxu0 0.0
    %3886 = vmatmul.mubr.f32.gmra.mrb[0].mxu0 %v3795
    %v3887 = vpop.f32.mrb[0].mxu0
    %v3888 = vadd.f32 %v3792, %v3887
    %v3889 = vpop.f32.mrb[0].mxu0
    %3890 = vmatprep.mubr.f32.mxu0 0.0
    %3891 = vmatmul.mubr.f32.gmra.mrb[0].mxu0 %v3798
    %v3892 = vpop.f32.mrb[0].mxu0
    %v3893 = vadd.f32 %v3792, %v3892
    %v3894 = vpop.f32.mrb[0].mxu0
    %3895 = vmatprep.mubr.f32.mxu0 0.0
    %3896 = vmatmul.mubr.f32.gmra.mrb[0].mxu0 %v3801
    %v3897 = vpop.f32.mrb[0].mxu0
    %v3898 = vadd.f32 %v3792, %v3897
    %v3899 = vpop.f32.mrb[0].mxu0
    %3900 = vmatprep.mubr.f32.mxu0 0.0
    %3901 = vmatmul.mubr.f32.gmra.mrb[0].mxu0 %v3804
    %v3902 = vpop.f32.mrb[0].mxu0
    %v3903 = vadd.f32 %v3792, %v3902
    %v3904 = vpop.f32.mrb[0].mxu0
    %3905 = vmatprep.mubr.f32.mxu0 0.0
    %3906 = vmatmul.mubr.f32.gmra.mrb[0].mxu0 %v3807
    %v3907 = vpop.f32.mrb[0].mxu0
    %v3908 = vadd.f32 %v3792, %v3907
    %v3909 = vpop.f32.mrb[0].mxu0
    %3910 = vmatprep.mubr.f32.mxu0 0.0
    %3911 = vmatmul.mubr.f32.gmra.mrb[0].mxu0 %v3810
    %v3912 = vpop.f32.mrb[0].mxu0
    %v3913 = vadd.f32 %v3792, %v3912
    %v3914 = vpop.f32.mrb[0].mxu0
    %3915 = vmatprep.mubr.f32.mxu0 0.0
    %3916 = vmatmul.mubr.f32.gmra.mrb[0].mxu0 %v3813
    %v3917 = vpop.f32.mrb[0].mxu0
    %v3918 = vadd.f32 %v3792, %v3917
    %v3919 = vpop.f32.mrb[0].mxu0
    %3920 = vmatprep.mubr.f32.mxu0 0.0
    %3921 = vmatmul.mubr.f32.gmra.mrb[0].mxu0 %v3816
    %v3922 = vpop.f32.mrb[0].mxu0
    %v3923 = vadd.f32 %v3792, %v3922
    %v3924 = vpop.f32.mrb[0].mxu0
    %3925 = vmatprep.mubr.f32.mxu0 0.0
    %3926 = vmatmul.mubr.f32.gmra.mrb[0].mxu0 %v3819
    %v3927 = vpop.f32.mrb[0].mxu0
    %v3928 = vadd.f32 %v3792, %v3927
    %v3929 = vpop.f32.mrb[0].mxu0
    %3930 = vdwg.mxu0
    %v3931 = vmul.f32 %v3888, %v3888
    %v3932 = vmul.f32 %v3893, %v3893
    %v3933 = vmul.f32 %v3898, %v3898
    %v3934 = vmul.f32 %v3903, %v3903
    %v3935 = vmul.f32 %v3908, %v3908
    %v3936 = vmul.f32 %v3913, %v3913
    %v3937 = vmul.f32 %v3918, %v3918
    %v3938 = vmul.f32 %v3923, %v3923
    %v3939 = vmul.f32 %v3928, %v3928
    %v3940 = vmul.f32 %v3888, %v3931
    %v3941 = vmul.f32 %v3893, %v3932
    %v3942 = vmul.f32 %v3898, %v3933
    %v3943 = vmul.f32 %v3903, %v3934
    %v3944 = vmul.f32 %v3908, %v3935
    %v3945 = vmul.f32 %v3913, %v3936
    %v3946 = vmul.f32 %v3918, %v3937
    %v3947 = vmul.f32 %v3923, %v3938
    %v3948 = vmul.f32 %v3928, %v3939
    %v3949 = vmul.f32 %v3940, 0.044715
    %v3950 = vmul.f32 %v3941, 0.044715
    %v3951 = vmul.f32 %v3942, 0.044715
    %v3952 = vmul.f32 %v3943, 0.044715
    %v3953 = vmul.f32 %v3944, 0.044715
    %v3954 = vmul.f32 %v3945, 0.044715
    %v3955 = vmul.f32 %v3946, 0.044715
    %v3956 = vmul.f32 %v3947, 0.044715
    %v3957 = vmul.f32 %v3948, 0.044715
    %v3958 = vadd.f32 %v3888, %v3949
    %v3959 = vadd.f32 %v3893, %v3950
    %v3960 = vadd.f32 %v3898, %v3951
    %v3961 = vadd.f32 %v3903, %v3952
    %v3962 = vadd.f32 %v3908, %v3953
    %v3963 = vadd.f32 %v3913, %v3954
    %v3964 = vadd.f32 %v3918, %v3955
    %v3965 = vadd.f32 %v3923, %v3956
    %v3966 = vadd.f32 %v3928, %v3957
    %v3967 = vmul.f32 %v3958, 0.7978846
    %v3968 = vmul.f32 %v3959, 0.7978846
    %v3969 = vmul.f32 %v3960, 0.7978846
    %v3970 = vmul.f32 %v3961, 0.7978846
    %v3971 = vmul.f32 %v3962, 0.7978846
    %v3972 = vmul.f32 %v3963, 0.7978846
    %v3973 = vmul.f32 %v3964, 0.7978846
    %v3974 = vmul.f32 %v3965, 0.7978846
    %v3975 = vmul.f32 %v3966, 0.7978846
    %v3976 = vtanh.pop %v3967
    %v3977 = vtanh.pop %v3968
    %v3978 = vtanh.pop %v3969
    %v3979 = vtanh.pop %v3970
    %v3980 = vtanh.pop %v3971
    %v3981 = vtanh.pop %v3972
    %v3982 = vtanh.pop %v3973
    %v3983 = vtanh.pop %v3974
    %v3984 = vtanh.pop %v3975
    %v3985 = vadd.f32 %v3976, 1.0
    %v3986 = vadd.f32 %v3977, 1.0
    %v3987 = vadd.f32 %v3978, 1.0
    %v3988 = vadd.f32 %v3979, 1.0
    %v3989 = vadd.f32 %v3980, 1.0
    %v3990 = vadd.f32 %v3981, 1.0
    %v3991 = vadd.f32 %v3982, 1.0
    %v3992 = vadd.f32 %v3983, 1.0
    %v3993 = vadd.f32 %v3984, 1.0
    %v3994 = vmul.f32 %v3985, 0.5
    %v3995 = vmul.f32 %v3986, 0.5
    %v3996 = vmul.f32 %v3987, 0.5
    %v3997 = vmul.f32 %v3988, 0.5
    %v3998 = vmul.f32 %v3989, 0.5
    %v3999 = vmul.f32 %v3990, 0.5
    %v4000 = vmul.f32 %v3991, 0.5
    %v4001 = vmul.f32 %v3992, 0.5
    %v4002 = vmul.f32 %v3993, 0.5
    %v4003 = vmul.f32 %v3888, %v3994
    %v4004 = vmul.f32 %v3893, %v3995
    %v4005 = vmul.f32 %v3898, %v3996
    %v4006 = vmul.f32 %v3903, %v3997
    %v4007 = vmul.f32 %v3908, %v3998
    %v4008 = vmul.f32 %v3913, %v3999
    %v4009 = vmul.f32 %v3918, %v4000
    %v4010 = vmul.f32 %v3923, %v4001
    %v4011 = vmul.f32 %v3928, %v4002
    %v4012 = vld [vmem:[%s10 + $0x1] sm:$0x1]
    %v4014 = vlaneseq
    %v4015 = vshrl.u32 %v4014, 7
    %v4016 = vsub.s32 0, %v4015
    %v4017 = vrot.slane %v4012, %v4016
    %4034 = vrot.lane.b32.xlu0 %v3477, 96
    %v4035 = vpop.permute.xlu0 %4034
    %4036 = vrot.lane.b32.xlu0 %v3478, 96
    %v4037 = vpop.permute.xlu0 %4036
    %4038 = vrot.lane.b32.xlu0 %v3479, 96
    %v4039 = vpop.permute.xlu0 %4038
    %4040 = vrot.lane.b32.xlu0 %v3480, 96
    %v4041 = vpop.permute.xlu0 %4040
    %4042 = vrot.lane.b32.xlu0 %v3481, 96
    %v4043 = vpop.permute.xlu0 %4042
    %4044 = vrot.lane.b32.xlu0 %v3482, 96
    %v4045 = vpop.permute.xlu0 %4044
    %4046 = vrot.lane.b32.xlu0 %v3483, 96
    %v4047 = vpop.permute.xlu0 %4046
    %4048 = vrot.lane.b32.xlu0 %v3484, 96
    %v4049 = vpop.permute.xlu0 %4048
    %4050 = vrot.lane.b32.xlu0 %v3485, 96
    %v4051 = vpop.permute.xlu0 %4050
    %4052 = vrot.lane.b32.xlu0 %v3486, 96
    %v4053 = vpop.permute.xlu0 %4052
    %4054 = vrot.lane.b32.xlu0 %v3487, 96
    %v4055 = vpop.permute.xlu0 %4054
    %4056 = vrot.lane.b32.xlu0 %v3488, 96
    %v4057 = vpop.permute.xlu0 %4056
    %4058 = vrot.lane.b32.xlu0 %v3489, 96
    %v4059 = vpop.permute.xlu0 %4058
    %4060 = vrot.lane.b32.xlu0 %v3490, 96
    %v4061 = vpop.permute.xlu0 %4060
    %4062 = vrot.lane.b32.xlu0 %v3491, 96
    %v4063 = vpop.permute.xlu0 %4062
    %4064 = vrot.lane.b32.xlu0 %v3492, 96
    %v4065 = vpop.permute.xlu0 %4064
    %4082 = vrot.lane.b32.xlu0 %v4017, 96
    %v4083 = vpop.permute.xlu0 %4082
    %4085 = vmatprep.subr.mxu0 0.0
    %4086 = vmatpush1.msra.mxu0 %v4035
    %4087 = vmatprep.subr.mxu0 0.0
    %4088 = vmatpush1.msra.mxu0 %v4037
    %4089 = vmatprep.subr.mxu0 0.0
    %4090 = vmatpush1.msra.mxu0 %v4039
    %4091 = vmatprep.subr.mxu0 0.0
    %4092 = vmatpush1.msra.mxu0 %v4041
    %4093 = vmatprep.subr.mxu0 0.0
    %4094 = vmatpush1.msra.mxu0 %v4043
    %4095 = vmatprep.subr.mxu0 0.0
    %4096 = vmatpush1.msra.mxu0 %v4045
    %4097 = vmatprep.subr.mxu0 0.0
    %4098 = vmatpush1.msra.mxu0 %v4047
    %4099 = vmatprep.subr.mxu0 0.0
    %4100 = vmatpush1.msra.mxu0 %v4049
    %4101 = vmatprep.subr.mxu0 0.0
    %4102 = vmatpush1.msra.mxu0 %v4051
    %4103 = vmatprep.subr.mxu0 0.0
    %4104 = vmatpush1.msra.mxu0 %v4053
    %4105 = vmatprep.subr.mxu0 0.0
    %4106 = vmatpush1.msra.mxu0 %v4055
    %4107 = vmatprep.subr.mxu0 0.0
    %4108 = vmatpush1.msra.mxu0 %v4057
    %4109 = vmatprep.subr.mxu0 0.0
    %4110 = vmatpush1.msra.mxu0 %v4059
    %4111 = vmatprep.subr.mxu0 0.0
    %4112 = vmatpush1.msra.mxu0 %v4061
    %4113 = vmatprep.subr.mxu0 0.0
    %4114 = vmatpush1.msra.mxu0 %v4063
    %4115 = vmatprep.subr.mxu0 0.0
    %4116 = vmatpush1.msra.mxu0 %v4065
    %4117 = vmatprep.subr.mxu0 0.0
    %4118 = vmatpush1.msra.mxu0 0.0
    %4119 = vmatprep.subr.mxu0 0.0
    %4120 = vmatpush1.msra.mxu0 0.0
    %4121 = vmatprep.subr.mxu0 0.0
    %4122 = vmatpush1.msra.mxu0 0.0
    %4123 = vmatprep.subr.mxu0 0.0
    %4124 = vmatpush1.msra.mxu0 0.0
    %4125 = vmatprep.subr.mxu0 0.0
    %4126 = vmatpush1.msra.mxu0 0.0
    %4127 = vmatprep.subr.mxu0 0.0
    %4128 = vmatpush1.msra.mxu0 0.0
    %4129 = vmatprep.subr.mxu0 0.0
    %4130 = vmatpush1.msra.mxu0 0.0
    %4131 = vmatprep.subr.mxu0 0.0
    %4132 = vmatpush1.msra.mxu0 0.0
    %4133 = vmatprep.subr.mxu0 0.0
    %4134 = vmatpush1.msra.mxu0 0.0
    %4135 = vmatprep.subr.mxu0 0.0
    %4136 = vmatpush1.msra.mxu0 0.0
    %4137 = vmatprep.subr.mxu0 0.0
    %4138 = vmatpush1.msra.mxu0 0.0
    %4139 = vmatprep.subr.mxu0 0.0
    %4140 = vmatpush1.msra.mxu0 0.0
    %4141 = vmatprep.subr.mxu0 0.0
    %4142 = vmatpush1.msra.mxu0 0.0
    %4143 = vmatprep.subr.mxu0 0.0
    %4144 = vmatpush1.msra.mxu0 0.0
    %4145 = vmatprep.subr.mxu0 0.0
    %4146 = vmatpush1.msra.mxu0 0.0
    %4147 = vmatprep.subr.mxu0 0.0
    %4148 = vmatpush1.msra.mxu0 0.0
    %4149 = vmatprep.mubr.f32.mxu0 0.0
    %4150 = vmatmul.mubr.f32.gmra.mrb[0].mxu0 %v4003
    %v4151 = vpop.f32.mrb[0].mxu0
    %v4152 = vadd.f32 %v4083, %v4151
    %v4153 = vpop.f32.mrb[0].mxu0
    %4154 = vmatprep.mubr.f32.mxu0 0.0
    %4155 = vmatmul.mubr.f32.gmra.mrb[0].mxu0 %v4004
    %v4156 = vpop.f32.mrb[0].mxu0
    %v4157 = vadd.f32 %v4083, %v4156
    %v4158 = vpop.f32.mrb[0].mxu0
    %4159 = vmatprep.mubr.f32.mxu0 0.0
    %4160 = vmatmul.mubr.f32.gmra.mrb[0].mxu0 %v4005
    %v4161 = vpop.f32.mrb[0].mxu0
    %v4162 = vadd.f32 %v4083, %v4161
    %v4163 = vpop.f32.mrb[0].mxu0
    %4164 = vmatprep.mubr.f32.mxu0 0.0
    %4165 = vmatmul.mubr.f32.gmra.mrb[0].mxu0 %v4006
    %v4166 = vpop.f32.mrb[0].mxu0
    %v4167 = vadd.f32 %v4083, %v4166
    %v4168 = vpop.f32.mrb[0].mxu0
    %4169 = vmatprep.mubr.f32.mxu0 0.0
    %4170 = vmatmul.mubr.f32.gmra.mrb[0].mxu0 %v4007
    %v4171 = vpop.f32.mrb[0].mxu0
    %v4172 = vadd.f32 %v4083, %v4171
    %v4173 = vpop.f32.mrb[0].mxu0
    %4174 = vmatprep.mubr.f32.mxu0 0.0
    %4175 = vmatmul.mubr.f32.gmra.mrb[0].mxu0 %v4008
    %v4176 = vpop.f32.mrb[0].mxu0
    %v4177 = vadd.f32 %v4083, %v4176
    %v4178 = vpop.f32.mrb[0].mxu0
    %4179 = vmatprep.mubr.f32.mxu0 0.0
    %4180 = vmatmul.mubr.f32.gmra.mrb[0].mxu0 %v4009
    %v4181 = vpop.f32.mrb[0].mxu0
    %v4182 = vadd.f32 %v4083, %v4181
    %v4183 = vpop.f32.mrb[0].mxu0
    %4184 = vmatprep.mubr.f32.mxu0 0.0
    %4185 = vmatmul.mubr.f32.gmra.mrb[0].mxu0 %v4010
    %v4186 = vpop.f32.mrb[0].mxu0
    %v4187 = vadd.f32 %v4083, %v4186
    %v4188 = vpop.f32.mrb[0].mxu0
    %4189 = vmatprep.mubr.f32.mxu0 0.0
    %4190 = vmatmul.mubr.f32.gmra.mrb[0].mxu0 %v4011
    %v4191 = vpop.f32.mrb[0].mxu0
    %v4192 = vadd.f32 %v4083, %v4191
    %v4193 = vpop.f32.mrb[0].mxu0
    %4194 = vdwg.mxu0
    %v4195 = vadd.f32 %v3619, %v4152
    %v4196 = vadd.f32 %v3620, %v4157
    %v4197 = vadd.f32 %v3621, %v4162
    %v4198 = vadd.f32 %v3622, %v4167
    %v4199 = vadd.f32 %v3623, %v4172
    %v4200 = vadd.f32 %v3624, %v4177
    %v4201 = vadd.f32 %v3625, %v4182
    %v4202 = vadd.f32 %v3626, %v4187
    %v4203 = vadd.f32 %v3627, %v4192
    %v4204 = vld [vmem:[%s11] sm:$0xff]
    %v4205 = vld [vmem:[%s11 + $0x8] sm:$0xff]
    %v4206 = vld [vmem:[%s11 + $0x10] sm:$0xff]
    %v4207 = vld [vmem:[%s11 + $0x18] sm:$0xff]
    %v4208 = vld [vmem:[%s12] sm:$0x1]
    %v4210 = vlaneseq
    %v4211 = vshrl.u32 %v4210, 7
    %v4212 = vsub.s32 0, %v4211
    %v4213 = vrot.slane %v4208, %v4212
    %v4216 = vsel %vm328, %v4195, 0
    %v4219 = vsel %vm328, %v4196, 0
    %v4222 = vsel %vm328, %v4197, 0
    %v4225 = vsel %vm328, %v4198, 0
    %v4228 = vsel %vm328, %v4199, 0
    %v4231 = vsel %vm328, %v4200, 0
    %v4234 = vsel %vm328, %v4201, 0
    %v4237 = vsel %vm328, %v4202, 0
    %v4240 = vsel %vm328, %v4203, 0
    %4242 = vmatprep.subr.mxu0 0.0
    %4243 = vmatpush1.msra.mxu0 %v4204
    %4244 = vmatprep.subr.mxu0 0.0
    %4245 = vmatpush1.msra.mxu0 %v4205
    %4246 = vmatprep.subr.mxu0 0.0
    %4247 = vmatpush1.msra.mxu0 %v4206
    %4248 = vmatprep.subr.mxu0 0.0
    %4249 = vmatpush1.msra.mxu0 %v4207
    %4250 = vmatprep.subr.mxu0 0.0
    %4251 = vmatpush1.msra.mxu0 0.0
    %4252 = vmatprep.subr.mxu0 0.0
    %4253 = vmatpush1.msra.mxu0 0.0
    %4254 = vmatprep.subr.mxu0 0.0
    %4255 = vmatpush1.msra.mxu0 0.0
    %4256 = vmatprep.subr.mxu0 0.0
    %4257 = vmatpush1.msra.mxu0 0.0
    %4258 = vmatprep.subr.mxu0 0.0
    %4259 = vmatpush1.msra.mxu0 0.0
    %4260 = vmatprep.subr.mxu0 0.0
    %4261 = vmatpush1.msra.mxu0 0.0
    %4262 = vmatprep.subr.mxu0 0.0
    %4263 = vmatpush1.msra.mxu0 0.0
    %4264 = vmatprep.subr.mxu0 0.0
    %4265 = vmatpush1.msra.mxu0 0.0
    %4266 = vmatprep.subr.mxu0 0.0
    %4267 = vmatpush1.msra.mxu0 0.0
    %4268 = vmatprep.subr.mxu0 0.0
    %4269 = vmatpush1.msra.mxu0 0.0
    %4270 = vmatprep.subr.mxu0 0.0
    %4271 = vmatpush1.msra.mxu0 0.0
    %4272 = vmatprep.subr.mxu0 0.0
    %4273 = vmatpush1.msra.mxu0 0.0
    %4274 = vmatprep.subr.mxu0 0.0
    %4275 = vmatpush1.msra.mxu0 0.0
    %4276 = vmatprep.subr.mxu0 0.0
    %4277 = vmatpush1.msra.mxu0 0.0
    %4278 = vmatprep.subr.mxu0 0.0
    %4279 = vmatpush1.msra.mxu0 0.0
    %4280 = vmatprep.subr.mxu0 0.0
    %4281 = vmatpush1.msra.mxu0 0.0
    %4282 = vmatprep.subr.mxu0 0.0
    %4283 = vmatpush1.msra.mxu0 0.0
    %4284 = vmatprep.subr.mxu0 0.0
    %4285 = vmatpush1.msra.mxu0 0.0
    %4286 = vmatprep.subr.mxu0 0.0
    %4287 = vmatpush1.msra.mxu0 0.0
    %4288 = vmatprep.subr.mxu0 0.0
    %4289 = vmatpush1.msra.mxu0 0.0
    %4290 = vmatprep.subr.mxu0 0.0
    %4291 = vmatpush1.msra.mxu0 0.0
    %4292 = vmatprep.subr.mxu0 0.0
    %4293 = vmatpush1.msra.mxu0 0.0
    %4294 = vmatprep.subr.mxu0 0.0
    %4295 = vmatpush1.msra.mxu0 0.0
    %4296 = vmatprep.subr.mxu0 0.0
    %4297 = vmatpush1.msra.mxu0 0.0
    %4298 = vmatprep.subr.mxu0 0.0
    %4299 = vmatpush1.msra.mxu0 0.0
    %4300 = vmatprep.subr.mxu0 0.0
    %4301 = vmatpush1.msra.mxu0 0.0
    %4302 = vmatprep.subr.mxu0 0.0
    %4303 = vmatpush1.msra.mxu0 0.0
    %4304 = vmatprep.subr.mxu0 0.0
    %4305 = vmatpush1.msra.mxu0 0.0
    %4306 = vmatprep.mubr.f32.mxu0 0.0
    %4307 = vmatmul.mubr.f32.gmra.mrb[0].mxu0 %v4216
    %v4308 = vpop.f32.mrb[0].mxu0
    %v4309 = vadd.f32 %v4213, %v4308
    %v4310 = vpop.f32.mrb[0].mxu0
    %4311 = vmatprep.mubr.f32.mxu0 0.0
    %4312 = vmatmul.mubr.f32.gmra.mrb[0].mxu0 %v4219
    %v4313 = vpop.f32.mrb[0].mxu0
    %v4314 = vadd.f32 %v4213, %v4313
    %v4315 = vpop.f32.mrb[0].mxu0
    %4316 = vmatprep.mubr.f32.mxu0 0.0
    %4317 = vmatmul.mubr.f32.gmra.mrb[0].mxu0 %v4222
    %v4318 = vpop.f32.mrb[0].mxu0
    %v4319 = vadd.f32 %v4213, %v4318
    %v4320 = vpop.f32.mrb[0].mxu0
    %4321 = vmatprep.mubr.f32.mxu0 0.0
    %4322 = vmatmul.mubr.f32.gmra.mrb[0].mxu0 %v4225
    %v4323 = vpop.f32.mrb[0].mxu0
    %v4324 = vadd.f32 %v4213, %v4323
    %v4325 = vpop.f32.mrb[0].mxu0
    %4326 = vmatprep.mubr.f32.mxu0 0.0
    %4327 = vmatmul.mubr.f32.gmra.mrb[0].mxu0 %v4228
    %v4328 = vpop.f32.mrb[0].mxu0
    %v4329 = vadd.f32 %v4213, %v4328
    %v4330 = vpop.f32.mrb[0].mxu0
    %4331 = vmatprep.mubr.f32.mxu0 0.0
    %4332 = vmatmul.mubr.f32.gmra.mrb[0].mxu0 %v4231
    %v4333 = vpop.f32.mrb[0].mxu0
    %v4334 = vadd.f32 %v4213, %v4333
    %v4335 = vpop.f32.mrb[0].mxu0
    %4336 = vmatprep.mubr.f32.mxu0 0.0
    %4337 = vmatmul.mubr.f32.gmra.mrb[0].mxu0 %v4234
    %v4338 = vpop.f32.mrb[0].mxu0
    %v4339 = vadd.f32 %v4213, %v4338
    %v4340 = vpop.f32.mrb[0].mxu0
    %4341 = vmatprep.mubr.f32.mxu0 0.0
    %4342 = vmatmul.mubr.f32.gmra.mrb[0].mxu0 %v4237
    %v4343 = vpop.f32.mrb[0].mxu0
    %v4344 = vadd.f32 %v4213, %v4343
    %v4345 = vpop.f32.mrb[0].mxu0
    %4346 = vmatprep.mubr.f32.mxu0 0.0
    %4347 = vmatmul.mubr.f32.gmra.mrb[0].mxu0 %v4240
    %v4348 = vpop.f32.mrb[0].mxu0
    %v4349 = vadd.f32 %v4213, %v4348
    %v4350 = vpop.f32.mrb[0].mxu0
    %4351 = vdwg.mxu0
    %s4352 = scalar_lea.vmem %s11, 32
    %v4353 = vld [vmem:[%s4352] sm:$0xff]
    %v4354 = vld [vmem:[%s4352 + $0x8] sm:$0xff]
    %v4355 = vld [vmem:[%s4352 + $0x10] sm:$0xff]
    %v4356 = vld [vmem:[%s4352 + $0x18] sm:$0xff]
    %4357 = vmatprep.subr.mxu0 0.0
    %4358 = vmatpush1.msra.mxu0 %v4353
    %4359 = vmatprep.subr.mxu0 0.0
    %4360 = vmatpush1.msra.mxu0 %v4354
    %4361 = vmatprep.subr.mxu0 0.0
    %4362 = vmatpush1.msra.mxu0 %v4355
    %4363 = vmatprep.subr.mxu0 0.0
    %4364 = vmatpush1.msra.mxu0 %v4356
    %4365 = vmatprep.subr.mxu0 0.0
    %4366 = vmatpush1.msra.mxu0 0.0
    %4367 = vmatprep.subr.mxu0 0.0
    %4368 = vmatpush1.msra.mxu0 0.0
    %4369 = vmatprep.subr.mxu0 0.0
    %4370 = vmatpush1.msra.mxu0 0.0
    %4371 = vmatprep.subr.mxu0 0.0
    %4372 = vmatpush1.msra.mxu0 0.0
    %4373 = vmatprep.subr.mxu0 0.0
    %4374 = vmatpush1.msra.mxu0 0.0
    %4375 = vmatprep.subr.mxu0 0.0
    %4376 = vmatpush1.msra.mxu0 0.0
    %4377 = vmatprep.subr.mxu0 0.0
    %4378 = vmatpush1.msra.mxu0 0.0
    %4379 = vmatprep.subr.mxu0 0.0
    %4380 = vmatpush1.msra.mxu0 0.0
    %4381 = vmatprep.subr.mxu0 0.0
    %4382 = vmatpush1.msra.mxu0 0.0
    %4383 = vmatprep.subr.mxu0 0.0
    %4384 = vmatpush1.msra.mxu0 0.0
    %4385 = vmatprep.subr.mxu0 0.0
    %4386 = vmatpush1.msra.mxu0 0.0
    %4387 = vmatprep.subr.mxu0 0.0
    %4388 = vmatpush1.msra.mxu0 0.0
    %4389 = vmatprep.subr.mxu0 0.0
    %4390 = vmatpush1.msra.mxu0 0.0
    %4391 = vmatprep.subr.mxu0 0.0
    %4392 = vmatpush1.msra.mxu0 0.0
    %4393 = vmatprep.subr.mxu0 0.0
    %4394 = vmatpush1.msra.mxu0 0.0
    %4395 = vmatprep.subr.mxu0 0.0
    %4396 = vmatpush1.msra.mxu0 0.0
    %4397 = vmatprep.subr.mxu0 0.0
    %4398 = vmatpush1.msra.mxu0 0.0
    %4399 = vmatprep.subr.mxu0 0.0
    %4400 = vmatpush1.msra.mxu0 0.0
    %4401 = vmatprep.subr.mxu0 0.0
    %4402 = vmatpush1.msra.mxu0 0.0
    %4403 = vmatprep.subr.mxu0 0.0
    %4404 = vmatpush1.msra.mxu0 0.0
    %4405 = vmatprep.subr.mxu0 0.0
    %4406 = vmatpush1.msra.mxu0 0.0
    %4407 = vmatprep.subr.mxu0 0.0
    %4408 = vmatpush1.msra.mxu0 0.0
    %4409 = vmatprep.subr.mxu0 0.0
    %4410 = vmatpush1.msra.mxu0 0.0
    %4411 = vmatprep.subr.mxu0 0.0
    %4412 = vmatpush1.msra.mxu0 0.0
    %4413 = vmatprep.subr.mxu0 0.0
    %4414 = vmatpush1.msra.mxu0 0.0
    %4415 = vmatprep.subr.mxu0 0.0
    %4416 = vmatpush1.msra.mxu0 0.0
    %4417 = vmatprep.subr.mxu0 0.0
    %4418 = vmatpush1.msra.mxu0 0.0
    %4419 = vmatprep.subr.mxu0 0.0
    %4420 = vmatpush1.msra.mxu0 0.0
    %4421 = vmatprep.mubr.f32.mxu0 0.0
    %4422 = vmatmul.mubr.f32.gmra.mrb[0].mxu0 %v4216
    %v4423 = vpop.f32.mrb[0].mxu0
    %v4424 = vadd.f32 0.0, %v4423
    %v4425 = vpop.f32.mrb[0].mxu0
    %4426 = vmatprep.mubr.f32.mxu0 0.0
    %4427 = vmatmul.mubr.f32.gmra.mrb[0].mxu0 %v4219
    %v4428 = vpop.f32.mrb[0].mxu0
    %v4429 = vadd.f32 0.0, %v4428
    %v4430 = vpop.f32.mrb[0].mxu0
    %4431 = vmatprep.mubr.f32.mxu0 0.0
    %4432 = vmatmul.mubr.f32.gmra.mrb[0].mxu0 %v4222
    %v4433 = vpop.f32.mrb[0].mxu0
    %v4434 = vadd.f32 0.0, %v4433
    %v4435 = vpop.f32.mrb[0].mxu0
    %4436 = vmatprep.mubr.f32.mxu0 0.0
    %4437 = vmatmul.mubr.f32.gmra.mrb[0].mxu0 %v4225
    %v4438 = vpop.f32.mrb[0].mxu0
    %v4439 = vadd.f32 0.0, %v4438
    %v4440 = vpop.f32.mrb[0].mxu0
    %4441 = vmatprep.mubr.f32.mxu0 0.0
    %4442 = vmatmul.mubr.f32.gmra.mrb[0].mxu0 %v4228
    %v4443 = vpop.f32.mrb[0].mxu0
    %v4444 = vadd.f32 0.0, %v4443
    %v4445 = vpop.f32.mrb[0].mxu0
    %4446 = vmatprep.mubr.f32.mxu0 0.0
    %4447 = vmatmul.mubr.f32.gmra.mrb[0].mxu0 %v4231
    %v4448 = vpop.f32.mrb[0].mxu0
    %v4449 = vadd.f32 0.0, %v4448
    %v4450 = vpop.f32.mrb[0].mxu0
    %4451 = vmatprep.mubr.f32.mxu0 0.0
    %4452 = vmatmul.mubr.f32.gmra.mrb[0].mxu0 %v4234
    %v4453 = vpop.f32.mrb[0].mxu0
    %v4454 = vadd.f32 0.0, %v4453
    %v4455 = vpop.f32.mrb[0].mxu0
    %4456 = vmatprep.mubr.f32.mxu0 0.0
    %4457 = vmatmul.mubr.f32.gmra.mrb[0].mxu0 %v4237
    %v4458 = vpop.f32.mrb[0].mxu0
    %v4459 = vadd.f32 0.0, %v4458
    %v4460 = vpop.f32.mrb[0].mxu0
    %4461 = vmatprep.mubr.f32.mxu0 0.0
    %4462 = vmatmul.mubr.f32.gmra.mrb[0].mxu0 %v4240
    %v4463 = vpop.f32.mrb[0].mxu0
    %v4464 = vadd.f32 0.0, %v4463
    %v4465 = vpop.f32.mrb[0].mxu0
    %4466 = vdwg.mxu0
    %s4467 = scalar_lea.vmem %s11, 64
    %v4468 = vld [vmem:[%s4467] sm:$0xff]
    %v4469 = vld [vmem:[%s4467 + $0x8] sm:$0xff]
    %v4470 = vld [vmem:[%s4467 + $0x10] sm:$0xff]
    %v4471 = vld [vmem:[%s4467 + $0x18] sm:$0xff]
    %v4472 = vadd.f32 %v4309, %v4464
    %v4474 = vsel %vm328, 0.0, 0
    %4476 = vmatprep.subr.mxu0 0.0
    %4477 = vmatpush1.msra.mxu0 %v4468
    %4478 = vmatprep.subr.mxu0 0.0
    %4479 = vmatpush1.msra.mxu0 %v4469
    %4480 = vmatprep.subr.mxu0 0.0
    %4481 = vmatpush1.msra.mxu0 %v4470
    %4482 = vmatprep.subr.mxu0 0.0
    %4483 = vmatpush1.msra.mxu0 %v4471
    %4484 = vmatprep.subr.mxu0 0.0
    %4485 = vmatpush1.msra.mxu0 0.0
    %4486 = vmatprep.subr.mxu0 0.0
    %4487 = vmatpush1.msra.mxu0 0.0
    %4488 = vmatprep.subr.mxu0 0.0
    %4489 = vmatpush1.msra.mxu0 0.0
    %4490 = vmatprep.subr.mxu0 0.0
    %4491 = vmatpush1.msra.mxu0 0.0
    %4492 = vmatprep.subr.mxu0 0.0
    %4493 = vmatpush1.msra.mxu0 0.0
    %4494 = vmatprep.subr.mxu0 0.0
    %4495 = vmatpush1.msra.mxu0 0.0
    %4496 = vmatprep.subr.mxu0 0.0
    %4497 = vmatpush1.msra.mxu0 0.0
    %4498 = vmatprep.subr.mxu0 0.0
    %4499 = vmatpush1.msra.mxu0 0.0
    %4500 = vmatprep.subr.mxu0 0.0
    %4501 = vmatpush1.msra.mxu0 0.0
    %4502 = vmatprep.subr.mxu0 0.0
    %4503 = vmatpush1.msra.mxu0 0.0
    %4504 = vmatprep.subr.mxu0 0.0
    %4505 = vmatpush1.msra.mxu0 0.0
    %4506 = vmatprep.subr.mxu0 0.0
    %4507 = vmatpush1.msra.mxu0 0.0
    %4508 = vmatprep.subr.mxu0 0.0
    %4509 = vmatpush1.msra.mxu0 0.0
    %4510 = vmatprep.subr.mxu0 0.0
    %4511 = vmatpush1.msra.mxu0 0.0
    %4512 = vmatprep.subr.mxu0 0.0
    %4513 = vmatpush1.msra.mxu0 0.0
    %4514 = vmatprep.subr.mxu0 0.0
    %4515 = vmatpush1.msra.mxu0 0.0
    %4516 = vmatprep.subr.mxu0 0.0
    %4517 = vmatpush1.msra.mxu0 0.0
    %4518 = vmatprep.subr.mxu0 0.0
    %4519 = vmatpush1.msra.mxu0 0.0
    %4520 = vmatprep.subr.mxu0 0.0
    %4521 = vmatpush1.msra.mxu0 0.0
    %4522 = vmatprep.subr.mxu0 0.0
    %4523 = vmatpush1.msra.mxu0 0.0
    %4524 = vmatprep.subr.mxu0 0.0
    %4525 = vmatpush1.msra.mxu0 0.0
    %4526 = vmatprep.subr.mxu0 0.0
    %4527 = vmatpush1.msra.mxu0 0.0
    %4528 = vmatprep.subr.mxu0 0.0
    %4529 = vmatpush1.msra.mxu0 0.0
    %4530 = vmatprep.subr.mxu0 0.0
    %4531 = vmatpush1.msra.mxu0 0.0
    %4532 = vmatprep.subr.mxu0 0.0
    %4533 = vmatpush1.msra.mxu0 0.0
    %4534 = vmatprep.subr.mxu0 0.0
    %4535 = vmatpush1.msra.mxu0 0.0
    %4536 = vmatprep.subr.mxu0 0.0
    %4537 = vmatpush1.msra.mxu0 0.0
    %4538 = vmatprep.subr.mxu0 0.0
    %4539 = vmatpush1.msra.mxu0 0.0
    %4540 = vmatprep.mubr.f32.mxu0 0.0
    %4541 = vmatmul.mubr.f32.gmra.mrb[0].mxu0 %v4474
    %v4542 = vpop.f32.mrb[0].mxu0
    %v4543 = vadd.f32 0.0, %v4542
    %v4544 = vpop.f32.mrb[0].mxu0
    %4545 = vdwg.mxu0
    %v4546 = vadd.f32 %v4472, %v4543
    %v4547 = vxor.u32 %v4546, 2147483648
    %v4548 = vmul.f32 %v4547, 1.442695
    %v4549 = vpow.pop %v4548
    %v4550 = vadd.f32 %v4549, 1.0
    %v4551 = vrcp.pop %v4550
    %v4552 = vmul.f32 1.0, %v4551
    %v4553 = vtanh.pop %v4546
    %v4554 = vmul.f32 %v4552, 0.0
    %4556 = vrot.lane.b32.xlu0 %v4553, 32
    %v4557 = vpop.permute.xlu0 %4556
    %v4559 = vmul.f32 %v4552, %v4557
    %4561 = vrot.lane.b32.xlu0 %v4559, 32
    %v4562 = vpop.permute.xlu0 %4561
    %v4564 = vadd.f32 %v4554, %v4562
    %v4565 = vtanh.pop %v4564
    %4567 = vrot.lane.b32.xlu0 %v4565, 32
    %v4568 = vpop.permute.xlu0 %4567
    %v4570 = vmul.f32 %v4552, %v4568
    %v4571 = vadd.f32 %v4314, %v4459
    %4573 = vrot.lane.b32.xlu0 %v4570, 64
    %v4574 = vpop.permute.xlu0 %4573
    %v4575 = vsel %vm328, %v4574, 0
    %4577 = vmatprep.subr.mxu0 0.0
    %4578 = vmatpush1.msra.mxu0 %v4468
    %4579 = vmatprep.subr.mxu0 0.0
    %4580 = vmatpush1.msra.mxu0 %v4469
    %4581 = vmatprep.subr.mxu0 0.0
    %4582 = vmatpush1.msra.mxu0 %v4470
    %4583 = vmatprep.subr.mxu0 0.0
    %4584 = vmatpush1.msra.mxu0 %v4471
    %4585 = vmatprep.subr.mxu0 0.0
    %4586 = vmatpush1.msra.mxu0 0.0
    %4587 = vmatprep.subr.mxu0 0.0
    %4588 = vmatpush1.msra.mxu0 0.0
    %4589 = vmatprep.subr.mxu0 0.0
    %4590 = vmatpush1.msra.mxu0 0.0
    %4591 = vmatprep.subr.mxu0 0.0
    %4592 = vmatpush1.msra.mxu0 0.0
    %4593 = vmatprep.subr.mxu0 0.0
    %4594 = vmatpush1.msra.mxu0 0.0
    %4595 = vmatprep.subr.mxu0 0.0
    %4596 = vmatpush1.msra.mxu0 0.0
    %4597 = vmatprep.subr.mxu0 0.0
    %4598 = vmatpush1.msra.mxu0 0.0
    %4599 = vmatprep.subr.mxu0 0.0
    %4600 = vmatpush1.msra.mxu0 0.0
    %4601 = vmatprep.subr.mxu0 0.0
    %4602 = vmatpush1.msra.mxu0 0.0
    %4603 = vmatprep.subr.mxu0 0.0
    %4604 = vmatpush1.msra.mxu0 0.0
    %4605 = vmatprep.subr.mxu0 0.0
    %4606 = vmatpush1.msra.mxu0 0.0
    %4607 = vmatprep.subr.mxu0 0.0
    %4608 = vmatpush1.msra.mxu0 0.0
    %4609 = vmatprep.subr.mxu0 0.0
    %4610 = vmatpush1.msra.mxu0 0.0
    %4611 = vmatprep.subr.mxu0 0.0
    %4612 = vmatpush1.msra.mxu0 0.0
    %4613 = vmatprep.subr.mxu0 0.0
    %4614 = vmatpush1.msra.mxu0 0.0
    %4615 = vmatprep.subr.mxu0 0.0
    %4616 = vmatpush1.msra.mxu0 0.0
    %4617 = vmatprep.subr.mxu0 0.0
    %4618 = vmatpush1.msra.mxu0 0.0
    %4619 = vmatprep.subr.mxu0 0.0
    %4620 = vmatpush1.msra.mxu0 0.0
    %4621 = vmatprep.subr.mxu0 0.0
    %4622 = vmatpush1.msra.mxu0 0.0
    %4623 = vmatprep.subr.mxu0 0.0
    %4624 = vmatpush1.msra.mxu0 0.0
    %4625 = vmatprep.subr.mxu0 0.0
    %4626 = vmatpush1.msra.mxu0 0.0
    %4627 = vmatprep.subr.mxu0 0.0
    %4628 = vmatpush1.msra.mxu0 0.0
    %4629 = vmatprep.subr.mxu0 0.0
    %4630 = vmatpush1.msra.mxu0 0.0
    %4631 = vmatprep.subr.mxu0 0.0
    %4632 = vmatpush1.msra.mxu0 0.0
    %4633 = vmatprep.subr.mxu0 0.0
    %4634 = vmatpush1.msra.mxu0 0.0
    %4635 = vmatprep.subr.mxu0 0.0
    %4636 = vmatpush1.msra.mxu0 0.0
    %4637 = vmatprep.subr.mxu0 0.0
    %4638 = vmatpush1.msra.mxu0 0.0
    %4639 = vmatprep.subr.mxu0 0.0
    %4640 = vmatpush1.msra.mxu0 0.0
    %4641 = vmatprep.mubr.f32.mxu0 0.0
    %4642 = vmatmul.mubr.f32.gmra.mrb[0].mxu0 %v4575
    %v4643 = vpop.f32.mrb[0].mxu0
    %v4644 = vadd.f32 0.0, %v4643
    %v4645 = vpop.f32.mrb[0].mxu0
    %4646 = vdwg.mxu0
    %v4647 = vadd.f32 %v4571, %v4644
    %v4648 = vxor.u32 %v4647, 2147483648
    %v4649 = vmul.f32 %v4648, 1.442695
    %v4650 = vpow.pop %v4649
    %v4651 = vadd.f32 %v4650, 1.0
    %v4652 = vrcp.pop %v4651
    %v4653 = vmul.f32 1.0, %v4652
    %v4654 = vtanh.pop %v4647
    %v4655 = vmul.f32 %v4653, %v4564
    %4657 = vrot.lane.b32.xlu0 %v4654, 32
    %v4658 = vpop.permute.xlu0 %4657
    %v4660 = vmul.f32 %v4653, %v4658
    %4662 = vrot.lane.b32.xlu0 %v4660, 32
    %v4663 = vpop.permute.xlu0 %4662
    %v4665 = vadd.f32 %v4655, %v4663
    %v4666 = vtanh.pop %v4665
    %4668 = vrot.lane.b32.xlu0 %v4666, 32
    %v4669 = vpop.permute.xlu0 %4668
    %v4671 = vmul.f32 %v4653, %v4669
    %v4672 = vadd.f32 %v4319, %v4454
    %4674 = vrot.lane.b32.xlu0 %v4671, 64
    %v4675 = vpop.permute.xlu0 %4674
    %v4676 = vsel %vm328, %v4675, 0
    %4678 = vmatprep.subr.mxu0 0.0
    %4679 = vmatpush1.msra.mxu0 %v4468
    %4680 = vmatprep.subr.mxu0 0.0
    %4681 = vmatpush1.msra.mxu0 %v4469
    %4682 = vmatprep.subr.mxu0 0.0
    %4683 = vmatpush1.msra.mxu0 %v4470
    %4684 = vmatprep.subr.mxu0 0.0
    %4685 = vmatpush1.msra.mxu0 %v4471
    %4686 = vmatprep.subr.mxu0 0.0
    %4687 = vmatpush1.msra.mxu0 0.0
    %4688 = vmatprep.subr.mxu0 0.0
    %4689 = vmatpush1.msra.mxu0 0.0
    %4690 = vmatprep.subr.mxu0 0.0
    %4691 = vmatpush1.msra.mxu0 0.0
    %4692 = vmatprep.subr.mxu0 0.0
    %4693 = vmatpush1.msra.mxu0 0.0
    %4694 = vmatprep.subr.mxu0 0.0
    %4695 = vmatpush1.msra.mxu0 0.0
    %4696 = vmatprep.subr.mxu0 0.0
    %4697 = vmatpush1.msra.mxu0 0.0
    %4698 = vmatprep.subr.mxu0 0.0
    %4699 = vmatpush1.msra.mxu0 0.0
    %4700 = vmatprep.subr.mxu0 0.0
    %4701 = vmatpush1.msra.mxu0 0.0
    %4702 = vmatprep.subr.mxu0 0.0
    %4703 = vmatpush1.msra.mxu0 0.0
    %4704 = vmatprep.subr.mxu0 0.0
    %4705 = vmatpush1.msra.mxu0 0.0
    %4706 = vmatprep.subr.mxu0 0.0
    %4707 = vmatpush1.msra.mxu0 0.0
    %4708 = vmatprep.subr.mxu0 0.0
    %4709 = vmatpush1.msra.mxu0 0.0
    %4710 = vmatprep.subr.mxu0 0.0
    %4711 = vmatpush1.msra.mxu0 0.0
    %4712 = vmatprep.subr.mxu0 0.0
    %4713 = vmatpush1.msra.mxu0 0.0
    %4714 = vmatprep.subr.mxu0 0.0
    %4715 = vmatpush1.msra.mxu0 0.0
    %4716 = vmatprep.subr.mxu0 0.0
    %4717 = vmatpush1.msra.mxu0 0.0
    %4718 = vmatprep.subr.mxu0 0.0
    %4719 = vmatpush1.msra.mxu0 0.0
    %4720 = vmatprep.subr.mxu0 0.0
    %4721 = vmatpush1.msra.mxu0 0.0
    %4722 = vmatprep.subr.mxu0 0.0
    %4723 = vmatpush1.msra.mxu0 0.0
    %4724 = vmatprep.subr.mxu0 0.0
    %4725 = vmatpush1.msra.mxu0 0.0
    %4726 = vmatprep.subr.mxu0 0.0
    %4727 = vmatpush1.msra.mxu0 0.0
    %4728 = vmatprep.subr.mxu0 0.0
    %4729 = vmatpush1.msra.mxu0 0.0
    %4730 = vmatprep.subr.mxu0 0.0
    %4731 = vmatpush1.msra.mxu0 0.0
    %4732 = vmatprep.subr.mxu0 0.0
    %4733 = vmatpush1.msra.mxu0 0.0
    %4734 = vmatprep.subr.mxu0 0.0
    %4735 = vmatpush1.msra.mxu0 0.0
    %4736 = vmatprep.subr.mxu0 0.0
    %4737 = vmatpush1.msra.mxu0 0.0
    %4738 = vmatprep.subr.mxu0 0.0
    %4739 = vmatpush1.msra.mxu0 0.0
    %4740 = vmatprep.subr.mxu0 0.0
    %4741 = vmatpush1.msra.mxu0 0.0
    %4742 = vmatprep.mubr.f32.mxu0 0.0
    %4743 = vmatmul.mubr.f32.gmra.mrb[0].mxu0 %v4676
    %v4744 = vpop.f32.mrb[0].mxu0
    %v4745 = vadd.f32 0.0, %v4744
    %v4746 = vpop.f32.mrb[0].mxu0
    %4747 = vdwg.mxu0
    %v4748 = vadd.f32 %v4672, %v4745
    %v4749 = vxor.u32 %v4748, 2147483648
    %v4750 = vmul.f32 %v4749, 1.442695
    %v4751 = vpow.pop %v4750
    %v4752 = vadd.f32 %v4751, 1.0
    %v4753 = vrcp.pop %v4752
    %v4754 = vmul.f32 1.0, %v4753
    %v4755 = vtanh.pop %v4748
    %v4756 = vmul.f32 %v4754, %v4665
    %4758 = vrot.lane.b32.xlu0 %v4755, 32
    %v4759 = vpop.permute.xlu0 %4758
    %v4761 = vmul.f32 %v4754, %v4759
    %4763 = vrot.lane.b32.xlu0 %v4761, 32
    %v4764 = vpop.permute.xlu0 %4763
    %v4766 = vadd.f32 %v4756, %v4764
    %v4767 = vtanh.pop %v4766
    %4769 = vrot.lane.b32.xlu0 %v4767, 32
    %v4770 = vpop.permute.xlu0 %4769
    %v4772 = vmul.f32 %v4754, %v4770
    %v4773 = vadd.f32 %v4324, %v4449
    %4775 = vrot.lane.b32.xlu0 %v4772, 64
    %v4776 = vpop.permute.xlu0 %4775
    %v4777 = vsel %vm328, %v4776, 0
    %4779 = vmatprep.subr.mxu0 0.0
    %4780 = vmatpush1.msra.mxu0 %v4468
    %4781 = vmatprep.subr.mxu0 0.0
    %4782 = vmatpush1.msra.mxu0 %v4469
    %4783 = vmatprep.subr.mxu0 0.0
    %4784 = vmatpush1.msra.mxu0 %v4470
    %4785 = vmatprep.subr.mxu0 0.0
    %4786 = vmatpush1.msra.mxu0 %v4471
    %4787 = vmatprep.subr.mxu0 0.0
    %4788 = vmatpush1.msra.mxu0 0.0
    %4789 = vmatprep.subr.mxu0 0.0
    %4790 = vmatpush1.msra.mxu0 0.0
    %4791 = vmatprep.subr.mxu0 0.0
    %4792 = vmatpush1.msra.mxu0 0.0
    %4793 = vmatprep.subr.mxu0 0.0
    %4794 = vmatpush1.msra.mxu0 0.0
    %4795 = vmatprep.subr.mxu0 0.0
    %4796 = vmatpush1.msra.mxu0 0.0
    %4797 = vmatprep.subr.mxu0 0.0
    %4798 = vmatpush1.msra.mxu0 0.0
    %4799 = vmatprep.subr.mxu0 0.0
    %4800 = vmatpush1.msra.mxu0 0.0
    %4801 = vmatprep.subr.mxu0 0.0
    %4802 = vmatpush1.msra.mxu0 0.0
    %4803 = vmatprep.subr.mxu0 0.0
    %4804 = vmatpush1.msra.mxu0 0.0
    %4805 = vmatprep.subr.mxu0 0.0
    %4806 = vmatpush1.msra.mxu0 0.0
    %4807 = vmatprep.subr.mxu0 0.0
    %4808 = vmatpush1.msra.mxu0 0.0
    %4809 = vmatprep.subr.mxu0 0.0
    %4810 = vmatpush1.msra.mxu0 0.0
    %4811 = vmatprep.subr.mxu0 0.0
    %4812 = vmatpush1.msra.mxu0 0.0
    %4813 = vmatprep.subr.mxu0 0.0
    %4814 = vmatpush1.msra.mxu0 0.0
    %4815 = vmatprep.subr.mxu0 0.0
    %4816 = vmatpush1.msra.mxu0 0.0
    %4817 = vmatprep.subr.mxu0 0.0
    %4818 = vmatpush1.msra.mxu0 0.0
    %4819 = vmatprep.subr.mxu0 0.0
    %4820 = vmatpush1.msra.mxu0 0.0
    %4821 = vmatprep.subr.mxu0 0.0
    %4822 = vmatpush1.msra.mxu0 0.0
    %4823 = vmatprep.subr.mxu0 0.0
    %4824 = vmatpush1.msra.mxu0 0.0
    %4825 = vmatprep.subr.mxu0 0.0
    %4826 = vmatpush1.msra.mxu0 0.0
    %4827 = vmatprep.subr.mxu0 0.0
    %4828 = vmatpush1.msra.mxu0 0.0
    %4829 = vmatprep.subr.mxu0 0.0
    %4830 = vmatpush1.msra.mxu0 0.0
    %4831 = vmatprep.subr.mxu0 0.0
    %4832 = vmatpush1.msra.mxu0 0.0
    %4833 = vmatprep.subr.mxu0 0.0
    %4834 = vmatpush1.msra.mxu0 0.0
    %4835 = vmatprep.subr.mxu0 0.0
    %4836 = vmatpush1.msra.mxu0 0.0
    %4837 = vmatprep.subr.mxu0 0.0
    %4838 = vmatpush1.msra.mxu0 0.0
    %4839 = vmatprep.subr.mxu0 0.0
    %4840 = vmatpush1.msra.mxu0 0.0
    %4841 = vmatprep.subr.mxu0 0.0
    %4842 = vmatpush1.msra.mxu0 0.0
    %4843 = vmatprep.mubr.f32.mxu0 0.0
    %4844 = vmatmul.mubr.f32.gmra.mrb[0].mxu0 %v4777
    %v4845 = vpop.f32.mrb[0].mxu0
    %v4846 = vadd.f32 0.0, %v4845
    %v4847 = vpop.f32.mrb[0].mxu0
    %4848 = vdwg.mxu0
    %v4849 = vadd.f32 %v4773, %v4846
    %v4850 = vxor.u32 %v4849, 2147483648
    %v4851 = vmul.f32 %v4850, 1.442695
    %v4852 = vpow.pop %v4851
    %v4853 = vadd.f32 %v4852, 1.0
    %v4854 = vrcp.pop %v4853
    %v4855 = vmul.f32 1.0, %v4854
    %v4856 = vtanh.pop %v4849
    %v4857 = vmul.f32 %v4855, %v4766
    %4859 = vrot.lane.b32.xlu0 %v4856, 32
    %v4860 = vpop.permute.xlu0 %4859
    %v4862 = vmul.f32 %v4855, %v4860
    %4864 = vrot.lane.b32.xlu0 %v4862, 32
    %v4865 = vpop.permute.xlu0 %4864
    %v4867 = vadd.f32 %v4857, %v4865
    %v4868 = vtanh.pop %v4867
    %4870 = vrot.lane.b32.xlu0 %v4868, 32
    %v4871 = vpop.permute.xlu0 %4870
    %v4873 = vmul.f32 %v4855, %v4871
    %v4874 = vadd.f32 %v4329, %v4444
    %4876 = vrot.lane.b32.xlu0 %v4873, 64
    %v4877 = vpop.permute.xlu0 %4876
    %v4878 = vsel %vm328, %v4877, 0
    %4880 = vmatprep.subr.mxu0 0.0
    %4881 = vmatpush1.msra.mxu0 %v4468
    %4882 = vmatprep.subr.mxu0 0.0
    %4883 = vmatpush1.msra.mxu0 %v4469
    %4884 = vmatprep.subr.mxu0 0.0
    %4885 = vmatpush1.msra.mxu0 %v4470
    %4886 = vmatprep.subr.mxu0 0.0
    %4887 = vmatpush1.msra.mxu0 %v4471
    %4888 = vmatprep.subr.mxu0 0.0
    %4889 = vmatpush1.msra.mxu0 0.0
    %4890 = vmatprep.subr.mxu0 0.0
    %4891 = vmatpush1.msra.mxu0 0.0
    %4892 = vmatprep.subr.mxu0 0.0
    %4893 = vmatpush1.msra.mxu0 0.0
    %4894 = vmatprep.subr.mxu0 0.0
    %4895 = vmatpush1.msra.mxu0 0.0
    %4896 = vmatprep.subr.mxu0 0.0
    %4897 = vmatpush1.msra.mxu0 0.0
    %4898 = vmatprep.subr.mxu0 0.0
    %4899 = vmatpush1.msra.mxu0 0.0
    %4900 = vmatprep.subr.mxu0 0.0
    %4901 = vmatpush1.msra.mxu0 0.0
    %4902 = vmatprep.subr.mxu0 0.0
    %4903 = vmatpush1.msra.mxu0 0.0
    %4904 = vmatprep.subr.mxu0 0.0
    %4905 = vmatpush1.msra.mxu0 0.0
    %4906 = vmatprep.subr.mxu0 0.0
    %4907 = vmatpush1.msra.mxu0 0.0
    %4908 = vmatprep.subr.mxu0 0.0
    %4909 = vmatpush1.msra.mxu0 0.0
    %4910 = vmatprep.subr.mxu0 0.0
    %4911 = vmatpush1.msra.mxu0 0.0
    %4912 = vmatprep.subr.mxu0 0.0
    %4913 = vmatpush1.msra.mxu0 0.0
    %4914 = vmatprep.subr.mxu0 0.0
    %4915 = vmatpush1.msra.mxu0 0.0
    %4916 = vmatprep.subr.mxu0 0.0
    %4917 = vmatpush1.msra.mxu0 0.0
    %4918 = vmatprep.subr.mxu0 0.0
    %4919 = vmatpush1.msra.mxu0 0.0
    %4920 = vmatprep.subr.mxu0 0.0
    %4921 = vmatpush1.msra.mxu0 0.0
    %4922 = vmatprep.subr.mxu0 0.0
    %4923 = vmatpush1.msra.mxu0 0.0
    %4924 = vmatprep.subr.mxu0 0.0
    %4925 = vmatpush1.msra.mxu0 0.0
    %4926 = vmatprep.subr.mxu0 0.0
    %4927 = vmatpush1.msra.mxu0 0.0
    %4928 = vmatprep.subr.mxu0 0.0
    %4929 = vmatpush1.msra.mxu0 0.0
    %4930 = vmatprep.subr.mxu0 0.0
    %4931 = vmatpush1.msra.mxu0 0.0
    %4932 = vmatprep.subr.mxu0 0.0
    %4933 = vmatpush1.msra.mxu0 0.0
    %4934 = vmatprep.subr.mxu0 0.0
    %4935 = vmatpush1.msra.mxu0 0.0
    %4936 = vmatprep.subr.mxu0 0.0
    %4937 = vmatpush1.msra.mxu0 0.0
    %4938 = vmatprep.subr.mxu0 0.0
    %4939 = vmatpush1.msra.mxu0 0.0
    %4940 = vmatprep.subr.mxu0 0.0
    %4941 = vmatpush1.msra.mxu0 0.0
    %4942 = vmatprep.subr.mxu0 0.0
    %4943 = vmatpush1.msra.mxu0 0.0
    %4944 = vmatprep.mubr.f32.mxu0 0.0
    %4945 = vmatmul.mubr.f32.gmra.mrb[0].mxu0 %v4878
    %v4946 = vpop.f32.mrb[0].mxu0
    %v4947 = vadd.f32 0.0, %v4946
    %v4948 = vpop.f32.mrb[0].mxu0
    %4949 = vdwg.mxu0
    %v4950 = vadd.f32 %v4874, %v4947
    %v4951 = vxor.u32 %v4950, 2147483648
    %v4952 = vmul.f32 %v4951, 1.442695
    %v4953 = vpow.pop %v4952
    %v4954 = vadd.f32 %v4953, 1.0
    %v4955 = vrcp.pop %v4954
    %v4956 = vmul.f32 1.0, %v4955
    %v4957 = vtanh.pop %v4950
    %v4958 = vmul.f32 %v4956, %v4867
    %4960 = vrot.lane.b32.xlu0 %v4957, 32
    %v4961 = vpop.permute.xlu0 %4960
    %v4963 = vmul.f32 %v4956, %v4961
    %4965 = vrot.lane.b32.xlu0 %v4963, 32
    %v4966 = vpop.permute.xlu0 %4965
    %v4968 = vadd.f32 %v4958, %v4966
    %v4969 = vtanh.pop %v4968
    %4971 = vrot.lane.b32.xlu0 %v4969, 32
    %v4972 = vpop.permute.xlu0 %4971
    %v4974 = vmul.f32 %v4956, %v4972
    %v4975 = vadd.f32 %v4334, %v4439
    %4977 = vrot.lane.b32.xlu0 %v4974, 64
    %v4978 = vpop.permute.xlu0 %4977
    %v4979 = vsel %vm328, %v4978, 0
    %4981 = vmatprep.subr.mxu0 0.0
    %4982 = vmatpush1.msra.mxu0 %v4468
    %4983 = vmatprep.subr.mxu0 0.0
    %4984 = vmatpush1.msra.mxu0 %v4469
    %4985 = vmatprep.subr.mxu0 0.0
    %4986 = vmatpush1.msra.mxu0 %v4470
    %4987 = vmatprep.subr.mxu0 0.0
    %4988 = vmatpush1.msra.mxu0 %v4471
    %4989 = vmatprep.subr.mxu0 0.0
    %4990 = vmatpush1.msra.mxu0 0.0
    %4991 = vmatprep.subr.mxu0 0.0
    %4992 = vmatpush1.msra.mxu0 0.0
    %4993 = vmatprep.subr.mxu0 0.0
    %4994 = vmatpush1.msra.mxu0 0.0
    %4995 = vmatprep.subr.mxu0 0.0
    %4996 = vmatpush1.msra.mxu0 0.0
    %4997 = vmatprep.subr.mxu0 0.0
    %4998 = vmatpush1.msra.mxu0 0.0
    %4999 = vmatprep.subr.mxu0 0.0
    %5000 = vmatpush1.msra.mxu0 0.0
    %5001 = vmatprep.subr.mxu0 0.0
    %5002 = vmatpush1.msra.mxu0 0.0
    %5003 = vmatprep.subr.mxu0 0.0
    %5004 = vmatpush1.msra.mxu0 0.0
    %5005 = vmatprep.subr.mxu0 0.0
    %5006 = vmatpush1.msra.mxu0 0.0
    %5007 = vmatprep.subr.mxu0 0.0
    %5008 = vmatpush1.msra.mxu0 0.0
    %5009 = vmatprep.subr.mxu0 0.0
    %5010 = vmatpush1.msra.mxu0 0.0
    %5011 = vmatprep.subr.mxu0 0.0
    %5012 = vmatpush1.msra.mxu0 0.0
    %5013 = vmatprep.subr.mxu0 0.0
    %5014 = vmatpush1.msra.mxu0 0.0
    %5015 = vmatprep.subr.mxu0 0.0
    %5016 = vmatpush1.msra.mxu0 0.0
    %5017 = vmatprep.subr.mxu0 0.0
    %5018 = vmatpush1.msra.mxu0 0.0
    %5019 = vmatprep.subr.mxu0 0.0
    %5020 = vmatpush1.msra.mxu0 0.0
    %5021 = vmatprep.subr.mxu0 0.0
    %5022 = vmatpush1.msra.mxu0 0.0
    %5023 = vmatprep.subr.mxu0 0.0
    %5024 = vmatpush1.msra.mxu0 0.0
    %5025 = vmatprep.subr.mxu0 0.0
    %5026 = vmatpush1.msra.mxu0 0.0
    %5027 = vmatprep.subr.mxu0 0.0
    %5028 = vmatpush1.msra.mxu0 0.0
    %5029 = vmatprep.subr.mxu0 0.0
    %5030 = vmatpush1.msra.mxu0 0.0
    %5031 = vmatprep.subr.mxu0 0.0
    %5032 = vmatpush1.msra.mxu0 0.0
    %5033 = vmatprep.subr.mxu0 0.0
    %5034 = vmatpush1.msra.mxu0 0.0
    %5035 = vmatprep.subr.mxu0 0.0
    %5036 = vmatpush1.msra.mxu0 0.0
    %5037 = vmatprep.subr.mxu0 0.0
    %5038 = vmatpush1.msra.mxu0 0.0
    %5039 = vmatprep.subr.mxu0 0.0
    %5040 = vmatpush1.msra.mxu0 0.0
    %5041 = vmatprep.subr.mxu0 0.0
    %5042 = vmatpush1.msra.mxu0 0.0
    %5043 = vmatprep.subr.mxu0 0.0
    %5044 = vmatpush1.msra.mxu0 0.0
    %5045 = vmatprep.mubr.f32.mxu0 0.0
    %5046 = vmatmul.mubr.f32.gmra.mrb[0].mxu0 %v4979
    %v5047 = vpop.f32.mrb[0].mxu0
    %v5048 = vadd.f32 0.0, %v5047
    %v5049 = vpop.f32.mrb[0].mxu0
    %5050 = vdwg.mxu0
    %v5051 = vadd.f32 %v4975, %v5048
    %v5052 = vxor.u32 %v5051, 2147483648
    %v5053 = vmul.f32 %v5052, 1.442695
    %v5054 = vpow.pop %v5053
    %v5055 = vadd.f32 %v5054, 1.0
    %v5056 = vrcp.pop %v5055
    %v5057 = vmul.f32 1.0, %v5056
    %v5058 = vtanh.pop %v5051
    %v5059 = vmul.f32 %v5057, %v4968
    %5061 = vrot.lane.b32.xlu0 %v5058, 32
    %v5062 = vpop.permute.xlu0 %5061
    %v5064 = vmul.f32 %v5057, %v5062
    %5066 = vrot.lane.b32.xlu0 %v5064, 32
    %v5067 = vpop.permute.xlu0 %5066
    %v5069 = vadd.f32 %v5059, %v5067
    %v5070 = vtanh.pop %v5069
    %5072 = vrot.lane.b32.xlu0 %v5070, 32
    %v5073 = vpop.permute.xlu0 %5072
    %v5075 = vmul.f32 %v5057, %v5073
    %v5076 = vadd.f32 %v4339, %v4434
    %5078 = vrot.lane.b32.xlu0 %v5075, 64
    %v5079 = vpop.permute.xlu0 %5078
    %v5080 = vsel %vm328, %v5079, 0
    %5082 = vmatprep.subr.mxu0 0.0
    %5083 = vmatpush1.msra.mxu0 %v4468
    %5084 = vmatprep.subr.mxu0 0.0
    %5085 = vmatpush1.msra.mxu0 %v4469
    %5086 = vmatprep.subr.mxu0 0.0
    %5087 = vmatpush1.msra.mxu0 %v4470
    %5088 = vmatprep.subr.mxu0 0.0
    %5089 = vmatpush1.msra.mxu0 %v4471
    %5090 = vmatprep.subr.mxu0 0.0
    %5091 = vmatpush1.msra.mxu0 0.0
    %5092 = vmatprep.subr.mxu0 0.0
    %5093 = vmatpush1.msra.mxu0 0.0
    %5094 = vmatprep.subr.mxu0 0.0
    %5095 = vmatpush1.msra.mxu0 0.0
    %5096 = vmatprep.subr.mxu0 0.0
    %5097 = vmatpush1.msra.mxu0 0.0
    %5098 = vmatprep.subr.mxu0 0.0
    %5099 = vmatpush1.msra.mxu0 0.0
    %5100 = vmatprep.subr.mxu0 0.0
    %5101 = vmatpush1.msra.mxu0 0.0
    %5102 = vmatprep.subr.mxu0 0.0
    %5103 = vmatpush1.msra.mxu0 0.0
    %5104 = vmatprep.subr.mxu0 0.0
    %5105 = vmatpush1.msra.mxu0 0.0
    %5106 = vmatprep.subr.mxu0 0.0
    %5107 = vmatpush1.msra.mxu0 0.0
    %5108 = vmatprep.subr.mxu0 0.0
    %5109 = vmatpush1.msra.mxu0 0.0
    %5110 = vmatprep.subr.mxu0 0.0
    %5111 = vmatpush1.msra.mxu0 0.0
    %5112 = vmatprep.subr.mxu0 0.0
    %5113 = vmatpush1.msra.mxu0 0.0
    %5114 = vmatprep.subr.mxu0 0.0
    %5115 = vmatpush1.msra.mxu0 0.0
    %5116 = vmatprep.subr.mxu0 0.0
    %5117 = vmatpush1.msra.mxu0 0.0
    %5118 = vmatprep.subr.mxu0 0.0
    %5119 = vmatpush1.msra.mxu0 0.0
    %5120 = vmatprep.subr.mxu0 0.0
    %5121 = vmatpush1.msra.mxu0 0.0
    %5122 = vmatprep.subr.mxu0 0.0
    %5123 = vmatpush1.msra.mxu0 0.0
    %5124 = vmatprep.subr.mxu0 0.0
    %5125 = vmatpush1.msra.mxu0 0.0
    %5126 = vmatprep.subr.mxu0 0.0
    %5127 = vmatpush1.msra.mxu0 0.0
    %5128 = vmatprep.subr.mxu0 0.0
    %5129 = vmatpush1.msra.mxu0 0.0
    %5130 = vmatprep.subr.mxu0 0.0
    %5131 = vmatpush1.msra.mxu0 0.0
    %5132 = vmatprep.subr.mxu0 0.0
    %5133 = vmatpush1.msra.mxu0 0.0
    %5134 = vmatprep.subr.mxu0 0.0
    %5135 = vmatpush1.msra.mxu0 0.0
    %5136 = vmatprep.subr.mxu0 0.0
    %5137 = vmatpush1.msra.mxu0 0.0
    %5138 = vmatprep.subr.mxu0 0.0
    %5139 = vmatpush1.msra.mxu0 0.0
    %5140 = vmatprep.subr.mxu0 0.0
    %5141 = vmatpush1.msra.mxu0 0.0
    %5142 = vmatprep.subr.mxu0 0.0
    %5143 = vmatpush1.msra.mxu0 0.0
    %5144 = vmatprep.subr.mxu0 0.0
    %5145 = vmatpush1.msra.mxu0 0.0
    %5146 = vmatprep.mubr.f32.mxu0 0.0
    %5147 = vmatmul.mubr.f32.gmra.mrb[0].mxu0 %v5080
    %v5148 = vpop.f32.mrb[0].mxu0
    %v5149 = vadd.f32 0.0, %v5148
    %v5150 = vpop.f32.mrb[0].mxu0
    %5151 = vdwg.mxu0
    %v5152 = vadd.f32 %v5076, %v5149
    %v5153 = vxor.u32 %v5152, 2147483648
    %v5154 = vmul.f32 %v5153, 1.442695
    %v5155 = vpow.pop %v5154
    %v5156 = vadd.f32 %v5155, 1.0
    %v5157 = vrcp.pop %v5156
    %v5158 = vmul.f32 1.0, %v5157
    %v5159 = vtanh.pop %v5152
    %v5160 = vmul.f32 %v5158, %v5069
    %5162 = vrot.lane.b32.xlu0 %v5159, 32
    %v5163 = vpop.permute.xlu0 %5162
    %v5165 = vmul.f32 %v5158, %v5163
    %5167 = vrot.lane.b32.xlu0 %v5165, 32
    %v5168 = vpop.permute.xlu0 %5167
    %v5170 = vadd.f32 %v5160, %v5168
    %v5171 = vtanh.pop %v5170
    %5173 = vrot.lane.b32.xlu0 %v5171, 32
    %v5174 = vpop.permute.xlu0 %5173
    %v5176 = vmul.f32 %v5158, %v5174
    %v5177 = vadd.f32 %v4344, %v4429
    %5179 = vrot.lane.b32.xlu0 %v5176, 64
    %v5180 = vpop.permute.xlu0 %5179
    %v5181 = vsel %vm328, %v5180, 0
    %5183 = vmatprep.subr.mxu0 0.0
    %5184 = vmatpush1.msra.mxu0 %v4468
    %5185 = vmatprep.subr.mxu0 0.0
    %5186 = vmatpush1.msra.mxu0 %v4469
    %5187 = vmatprep.subr.mxu0 0.0
    %5188 = vmatpush1.msra.mxu0 %v4470
    %5189 = vmatprep.subr.mxu0 0.0
    %5190 = vmatpush1.msra.mxu0 %v4471
    %5191 = vmatprep.subr.mxu0 0.0
    %5192 = vmatpush1.msra.mxu0 0.0
    %5193 = vmatprep.subr.mxu0 0.0
    %5194 = vmatpush1.msra.mxu0 0.0
    %5195 = vmatprep.subr.mxu0 0.0
    %5196 = vmatpush1.msra.mxu0 0.0
    %5197 = vmatprep.subr.mxu0 0.0
    %5198 = vmatpush1.msra.mxu0 0.0
    %5199 = vmatprep.subr.mxu0 0.0
    %5200 = vmatpush1.msra.mxu0 0.0
    %5201 = vmatprep.subr.mxu0 0.0
    %5202 = vmatpush1.msra.mxu0 0.0
    %5203 = vmatprep.subr.mxu0 0.0
    %5204 = vmatpush1.msra.mxu0 0.0
    %5205 = vmatprep.subr.mxu0 0.0
    %5206 = vmatpush1.msra.mxu0 0.0
    %5207 = vmatprep.subr.mxu0 0.0
    %5208 = vmatpush1.msra.mxu0 0.0
    %5209 = vmatprep.subr.mxu0 0.0
    %5210 = vmatpush1.msra.mxu0 0.0
    %5211 = vmatprep.subr.mxu0 0.0
    %5212 = vmatpush1.msra.mxu0 0.0
    %5213 = vmatprep.subr.mxu0 0.0
    %5214 = vmatpush1.msra.mxu0 0.0
    %5215 = vmatprep.subr.mxu0 0.0
    %5216 = vmatpush1.msra.mxu0 0.0
    %5217 = vmatprep.subr.mxu0 0.0
    %5218 = vmatpush1.msra.mxu0 0.0
    %5219 = vmatprep.subr.mxu0 0.0
    %5220 = vmatpush1.msra.mxu0 0.0
    %5221 = vmatprep.subr.mxu0 0.0
    %5222 = vmatpush1.msra.mxu0 0.0
    %5223 = vmatprep.subr.mxu0 0.0
    %5224 = vmatpush1.msra.mxu0 0.0
    %5225 = vmatprep.subr.mxu0 0.0
    %5226 = vmatpush1.msra.mxu0 0.0
    %5227 = vmatprep.subr.mxu0 0.0
    %5228 = vmatpush1.msra.mxu0 0.0
    %5229 = vmatprep.subr.mxu0 0.0
    %5230 = vmatpush1.msra.mxu0 0.0
    %5231 = vmatprep.subr.mxu0 0.0
    %5232 = vmatpush1.msra.mxu0 0.0
    %5233 = vmatprep.subr.mxu0 0.0
    %5234 = vmatpush1.msra.mxu0 0.0
    %5235 = vmatprep.subr.mxu0 0.0
    %5236 = vmatpush1.msra.mxu0 0.0
    %5237 = vmatprep.subr.mxu0 0.0
    %5238 = vmatpush1.msra.mxu0 0.0
    %5239 = vmatprep.subr.mxu0 0.0
    %5240 = vmatpush1.msra.mxu0 0.0
    %5241 = vmatprep.subr.mxu0 0.0
    %5242 = vmatpush1.msra.mxu0 0.0
    %5243 = vmatprep.subr.mxu0 0.0
    %5244 = vmatpush1.msra.mxu0 0.0
    %5245 = vmatprep.subr.mxu0 0.0
    %5246 = vmatpush1.msra.mxu0 0.0
    %5247 = vmatprep.mubr.f32.mxu0 0.0
    %5248 = vmatmul.mubr.f32.gmra.mrb[0].mxu0 %v5181
    %v5249 = vpop.f32.mrb[0].mxu0
    %v5250 = vadd.f32 0.0, %v5249
    %v5251 = vpop.f32.mrb[0].mxu0
    %5252 = vdwg.mxu0
    %v5253 = vadd.f32 %v5177, %v5250
    %v5254 = vxor.u32 %v5253, 2147483648
    %v5255 = vmul.f32 %v5254, 1.442695
    %v5256 = vpow.pop %v5255
    %v5257 = vadd.f32 %v5256, 1.0
    %v5258 = vrcp.pop %v5257
    %v5259 = vmul.f32 1.0, %v5258
    %v5260 = vtanh.pop %v5253
    %v5261 = vmul.f32 %v5259, %v5170
    %5263 = vrot.lane.b32.xlu0 %v5260, 32
    %v5264 = vpop.permute.xlu0 %5263
    %v5266 = vmul.f32 %v5259, %v5264
    %5268 = vrot.lane.b32.xlu0 %v5266, 32
    %v5269 = vpop.permute.xlu0 %5268
    %v5271 = vadd.f32 %v5261, %v5269
    %v5272 = vtanh.pop %v5271
    %5274 = vrot.lane.b32.xlu0 %v5272, 32
    %v5275 = vpop.permute.xlu0 %5274
    %v5277 = vmul.f32 %v5259, %v5275
    %v5278 = vadd.f32 %v4349, %v4424
    %5280 = vrot.lane.b32.xlu0 %v5277, 64
    %v5281 = vpop.permute.xlu0 %5280
    %v5282 = vsel %vm328, %v5281, 0
    %5284 = vmatprep.subr.mxu0 0.0
    %5285 = vmatpush1.msra.mxu0 %v4468
    %5286 = vmatprep.subr.mxu0 0.0
    %5287 = vmatpush1.msra.mxu0 %v4469
    %5288 = vmatprep.subr.mxu0 0.0
    %5289 = vmatpush1.msra.mxu0 %v4470
    %5290 = vmatprep.subr.mxu0 0.0
    %5291 = vmatpush1.msra.mxu0 %v4471
    %5292 = vmatprep.subr.mxu0 0.0
    %5293 = vmatpush1.msra.mxu0 0.0
    %5294 = vmatprep.subr.mxu0 0.0
    %5295 = vmatpush1.msra.mxu0 0.0
    %5296 = vmatprep.subr.mxu0 0.0
    %5297 = vmatpush1.msra.mxu0 0.0
    %5298 = vmatprep.subr.mxu0 0.0
    %5299 = vmatpush1.msra.mxu0 0.0
    %5300 = vmatprep.subr.mxu0 0.0
    %5301 = vmatpush1.msra.mxu0 0.0
    %5302 = vmatprep.subr.mxu0 0.0
    %5303 = vmatpush1.msra.mxu0 0.0
    %5304 = vmatprep.subr.mxu0 0.0
    %5305 = vmatpush1.msra.mxu0 0.0
    %5306 = vmatprep.subr.mxu0 0.0
    %5307 = vmatpush1.msra.mxu0 0.0
    %5308 = vmatprep.subr.mxu0 0.0
    %5309 = vmatpush1.msra.mxu0 0.0
    %5310 = vmatprep.subr.mxu0 0.0
    %5311 = vmatpush1.msra.mxu0 0.0
    %5312 = vmatprep.subr.mxu0 0.0
    %5313 = vmatpush1.msra.mxu0 0.0
    %5314 = vmatprep.subr.mxu0 0.0
    %5315 = vmatpush1.msra.mxu0 0.0
    %5316 = vmatprep.subr.mxu0 0.0
    %5317 = vmatpush1.msra.mxu0 0.0
    %5318 = vmatprep.subr.mxu0 0.0
    %5319 = vmatpush1.msra.mxu0 0.0
    %5320 = vmatprep.subr.mxu0 0.0
    %5321 = vmatpush1.msra.mxu0 0.0
    %5322 = vmatprep.subr.mxu0 0.0
    %5323 = vmatpush1.msra.mxu0 0.0
    %5324 = vmatprep.subr.mxu0 0.0
    %5325 = vmatpush1.msra.mxu0 0.0
    %5326 = vmatprep.subr.mxu0 0.0
    %5327 = vmatpush1.msra.mxu0 0.0
    %5328 = vmatprep.subr.mxu0 0.0
    %5329 = vmatpush1.msra.mxu0 0.0
    %5330 = vmatprep.subr.mxu0 0.0
    %5331 = vmatpush1.msra.mxu0 0.0
    %5332 = vmatprep.subr.mxu0 0.0
    %5333 = vmatpush1.msra.mxu0 0.0
    %5334 = vmatprep.subr.mxu0 0.0
    %5335 = vmatpush1.msra.mxu0 0.0
    %5336 = vmatprep.subr.mxu0 0.0
    %5337 = vmatpush1.msra.mxu0 0.0
    %5338 = vmatprep.subr.mxu0 0.0
    %5339 = vmatpush1.msra.mxu0 0.0
    %5340 = vmatprep.subr.mxu0 0.0
    %5341 = vmatpush1.msra.mxu0 0.0
    %5342 = vmatprep.subr.mxu0 0.0
    %5343 = vmatpush1.msra.mxu0 0.0
    %5344 = vmatprep.subr.mxu0 0.0
    %5345 = vmatpush1.msra.mxu0 0.0
    %5346 = vmatprep.subr.mxu0 0.0
    %5347 = vmatpush1.msra.mxu0 0.0
    %5348 = vmatprep.mubr.f32.mxu0 0.0
    %5349 = vmatmul.mubr.f32.gmra.mrb[0].mxu0 %v5282
    %v5350 = vpop.f32.mrb[0].mxu0
    %v5351 = vadd.f32 0.0, %v5350
    %v5352 = vpop.f32.mrb[0].mxu0
    %5353 = vdwg.mxu0
    %v5354 = vadd.f32 %v5278, %v5351
    %v5355 = vxor.u32 %v5354, 2147483648
    %v5356 = vmul.f32 %v5355, 1.442695
    %v5357 = vpow.pop %v5356
    %v5358 = vadd.f32 %v5357, 1.0
    %v5359 = vrcp.pop %v5358
    %v5360 = vmul.f32 1.0, %v5359
    %v5361 = vtanh.pop %v5354
    %v5362 = vmul.f32 %v5360, %v5271
    %5364 = vrot.lane.b32.xlu0 %v5361, 32
    %v5365 = vpop.permute.xlu0 %5364
    %v5367 = vmul.f32 %v5360, %v5365
    %5369 = vrot.lane.b32.xlu0 %v5367, 32
    %v5370 = vpop.permute.xlu0 %5369
    %v5372 = vadd.f32 %v5362, %v5370
    %v5373 = vtanh.pop %v5372
    %5375 = vrot.lane.b32.xlu0 %v5373, 32
    %v5376 = vpop.permute.xlu0 %5375
    %v5378 = vmul.f32 %v5360, %v5376
    %5380 = vrot.lane.b32.xlu0 %v5378, 64
    %v5381 = vpop.permute.xlu0 %5380
    %vm5391 = vcmask 130048
    %v5392 = vsel %vm5391, %v4574, %v5381
    %v5393 = vsel %vm5391, %v4675, %v5281
    %v5394 = vsel %vm5391, %v4776, %v5180
    %v5395 = vsel %vm5391, %v4877, %v5079
    %v5396 = vsel %vm5391, %v5079, %v4877
    %v5397 = vsel %vm5391, %v5180, %v4776
    %v5398 = vsel %vm5391, %v5281, %v4675
    %v5399 = vsel %vm5391, %v5381, %v4574
    %s5400 = scalar_lea.vmem %s11, 96
    %v5401 = vld [vmem:[%s5400] sm:$0xff]
    %v5402 = vld [vmem:[%s5400 + $0x8] sm:$0xff]
    %v5403 = vld [vmem:[%s5400 + $0x10] sm:$0xff]
    %v5404 = vld [vmem:[%s5400 + $0x18] sm:$0xff]
    %s5405 = scalar_lea.vmem %s12, 1
    %v5406 = vld [vmem:[%s5405] sm:$0x1]
    %v5408 = vlaneseq
    %v5409 = vshrl.u32 %v5408, 7
    %v5410 = vsub.s32 0, %v5409
    %v5411 = vrot.slane %v5406, %v5410
    %v5414 = vsel %vm328, %v5392, 0
    %v5417 = vsel %vm328, %v5393, 0
    %v5420 = vsel %vm328, %v5394, 0
    %v5423 = vsel %vm328, %v5395, 0
    %v5426 = vsel %vm328, %v4978, 0
    %v5429 = vsel %vm328, %v5396, 0
    %v5432 = vsel %vm328, %v5397, 0
    %v5435 = vsel %vm328, %v5398, 0
    %v5438 = vsel %vm328, %v5399, 0
    %5440 = vmatprep.subr.mxu0 0.0
    %5441 = vmatpush1.msra.mxu0 %v5401
    %5442 = vmatprep.subr.mxu0 0.0
    %5443 = vmatpush1.msra.mxu0 %v5402
    %5444 = vmatprep.subr.mxu0 0.0
    %5445 = vmatpush1.msra.mxu0 %v5403
    %5446 = vmatprep.subr.mxu0 0.0
    %5447 = vmatpush1.msra.mxu0 %v5404
    %5448 = vmatprep.subr.mxu0 0.0
    %5449 = vmatpush1.msra.mxu0 0.0
    %5450 = vmatprep.subr.mxu0 0.0
    %5451 = vmatpush1.msra.mxu0 0.0
    %5452 = vmatprep.subr.mxu0 0.0
    %5453 = vmatpush1.msra.mxu0 0.0
    %5454 = vmatprep.subr.mxu0 0.0
    %5455 = vmatpush1.msra.mxu0 0.0
    %5456 = vmatprep.subr.mxu0 0.0
    %5457 = vmatpush1.msra.mxu0 0.0
    %5458 = vmatprep.subr.mxu0 0.0
    %5459 = vmatpush1.msra.mxu0 0.0
    %5460 = vmatprep.subr.mxu0 0.0
    %5461 = vmatpush1.msra.mxu0 0.0
    %5462 = vmatprep.subr.mxu0 0.0
    %5463 = vmatpush1.msra.mxu0 0.0
    %5464 = vmatprep.subr.mxu0 0.0
    %5465 = vmatpush1.msra.mxu0 0.0
    %5466 = vmatprep.subr.mxu0 0.0
    %5467 = vmatpush1.msra.mxu0 0.0
    %5468 = vmatprep.subr.mxu0 0.0
    %5469 = vmatpush1.msra.mxu0 0.0
    %5470 = vmatprep.subr.mxu0 0.0
    %5471 = vmatpush1.msra.mxu0 0.0
    %5472 = vmatprep.subr.mxu0 0.0
    %5473 = vmatpush1.msra.mxu0 0.0
    %5474 = vmatprep.subr.mxu0 0.0
    %5475 = vmatpush1.msra.mxu0 0.0
    %5476 = vmatprep.subr.mxu0 0.0
    %5477 = vmatpush1.msra.mxu0 0.0
    %5478 = vmatprep.subr.mxu0 0.0
    %5479 = vmatpush1.msra.mxu0 0.0
    %5480 = vmatprep.subr.mxu0 0.0
    %5481 = vmatpush1.msra.mxu0 0.0
    %5482 = vmatprep.subr.mxu0 0.0
    %5483 = vmatpush1.msra.mxu0 0.0
    %5484 = vmatprep.subr.mxu0 0.0
    %5485 = vmatpush1.msra.mxu0 0.0
    %5486 = vmatprep.subr.mxu0 0.0
    %5487 = vmatpush1.msra.mxu0 0.0
    %5488 = vmatprep.subr.mxu0 0.0
    %5489 = vmatpush1.msra.mxu0 0.0
    %5490 = vmatprep.subr.mxu0 0.0
    %5491 = vmatpush1.msra.mxu0 0.0
    %5492 = vmatprep.subr.mxu0 0.0
    %5493 = vmatpush1.msra.mxu0 0.0
    %5494 = vmatprep.subr.mxu0 0.0
    %5495 = vmatpush1.msra.mxu0 0.0
    %5496 = vmatprep.subr.mxu0 0.0
    %5497 = vmatpush1.msra.mxu0 0.0
    %5498 = vmatprep.subr.mxu0 0.0
    %5499 = vmatpush1.msra.mxu0 0.0
    %5500 = vmatprep.subr.mxu0 0.0
    %5501 = vmatpush1.msra.mxu0 0.0
    %5502 = vmatprep.subr.mxu0 0.0
    %5503 = vmatpush1.msra.mxu0 0.0
    %5504 = vmatprep.mubr.f32.mxu0 0.0
    %5505 = vmatmul.mubr.f32.gmra.mrb[0].mxu0 %v5414
    %v5506 = vpop.f32.mrb[0].mxu0
    %v5507 = vadd.f32 %v5411, %v5506
    %v5508 = vpop.f32.mrb[0].mxu0
    %5509 = vmatprep.mubr.f32.mxu0 0.0
    %5510 = vmatmul.mubr.f32.gmra.mrb[0].mxu0 %v5417
    %v5511 = vpop.f32.mrb[0].mxu0
    %v5512 = vadd.f32 %v5411, %v5511
    %v5513 = vpop.f32.mrb[0].mxu0
    %5514 = vmatprep.mubr.f32.mxu0 0.0
    %5515 = vmatmul.mubr.f32.gmra.mrb[0].mxu0 %v5420
    %v5516 = vpop.f32.mrb[0].mxu0
    %v5517 = vadd.f32 %v5411, %v5516
    %v5518 = vpop.f32.mrb[0].mxu0
    %5519 = vmatprep.mubr.f32.mxu0 0.0
    %5520 = vmatmul.mubr.f32.gmra.mrb[0].mxu0 %v5423
    %v5521 = vpop.f32.mrb[0].mxu0
    %v5522 = vadd.f32 %v5411, %v5521
    %v5523 = vpop.f32.mrb[0].mxu0
    %5524 = vmatprep.mubr.f32.mxu0 0.0
    %5525 = vmatmul.mubr.f32.gmra.mrb[0].mxu0 %v5426
    %v5526 = vpop.f32.mrb[0].mxu0
    %v5527 = vadd.f32 %v5411, %v5526
    %v5528 = vpop.f32.mrb[0].mxu0
    %5529 = vmatprep.mubr.f32.mxu0 0.0
    %5530 = vmatmul.mubr.f32.gmra.mrb[0].mxu0 %v5429
    %v5531 = vpop.f32.mrb[0].mxu0
    %v5532 = vadd.f32 %v5411, %v5531
    %v5533 = vpop.f32.mrb[0].mxu0
    %5534 = vmatprep.mubr.f32.mxu0 0.0
    %5535 = vmatmul.mubr.f32.gmra.mrb[0].mxu0 %v5432
    %v5536 = vpop.f32.mrb[0].mxu0
    %v5537 = vadd.f32 %v5411, %v5536
    %v5538 = vpop.f32.mrb[0].mxu0
    %5539 = vmatprep.mubr.f32.mxu0 0.0
    %5540 = vmatmul.mubr.f32.gmra.mrb[0].mxu0 %v5435
    %v5541 = vpop.f32.mrb[0].mxu0
    %v5542 = vadd.f32 %v5411, %v5541
    %v5543 = vpop.f32.mrb[0].mxu0
    %5544 = vmatprep.mubr.f32.mxu0 0.0
    %5545 = vmatmul.mubr.f32.gmra.mrb[0].mxu0 %v5438
    %v5546 = vpop.f32.mrb[0].mxu0
    %v5547 = vadd.f32 %v5411, %v5546
    %v5548 = vpop.f32.mrb[0].mxu0
    %5549 = vdwg.mxu0
    %s5550 = scalar_lea.vmem %s11, 128
    %v5551 = vld [vmem:[%s5550] sm:$0xff]
    %v5552 = vld [vmem:[%s5550 + $0x8] sm:$0xff]
    %v5553 = vld [vmem:[%s5550 + $0x10] sm:$0xff]
    %v5554 = vld [vmem:[%s5550 + $0x18] sm:$0xff]
    %5555 = vmatprep.subr.mxu0 0.0
    %5556 = vmatpush1.msra.mxu0 %v5551
    %5557 = vmatprep.subr.mxu0 0.0
    %5558 = vmatpush1.msra.mxu0 %v5552
    %5559 = vmatprep.subr.mxu0 0.0
    %5560 = vmatpush1.msra.mxu0 %v5553
    %5561 = vmatprep.subr.mxu0 0.0
    %5562 = vmatpush1.msra.mxu0 %v5554
    %5563 = vmatprep.subr.mxu0 0.0
    %5564 = vmatpush1.msra.mxu0 0.0
    %5565 = vmatprep.subr.mxu0 0.0
    %5566 = vmatpush1.msra.mxu0 0.0
    %5567 = vmatprep.subr.mxu0 0.0
    %5568 = vmatpush1.msra.mxu0 0.0
    %5569 = vmatprep.subr.mxu0 0.0
    %5570 = vmatpush1.msra.mxu0 0.0
    %5571 = vmatprep.subr.mxu0 0.0
    %5572 = vmatpush1.msra.mxu0 0.0
    %5573 = vmatprep.subr.mxu0 0.0
    %5574 = vmatpush1.msra.mxu0 0.0
    %5575 = vmatprep.subr.mxu0 0.0
    %5576 = vmatpush1.msra.mxu0 0.0
    %5577 = vmatprep.subr.mxu0 0.0
    %5578 = vmatpush1.msra.mxu0 0.0
    %5579 = vmatprep.subr.mxu0 0.0
    %5580 = vmatpush1.msra.mxu0 0.0
    %5581 = vmatprep.subr.mxu0 0.0
    %5582 = vmatpush1.msra.mxu0 0.0
    %5583 = vmatprep.subr.mxu0 0.0
    %5584 = vmatpush1.msra.mxu0 0.0
    %5585 = vmatprep.subr.mxu0 0.0
    %5586 = vmatpush1.msra.mxu0 0.0
    %5587 = vmatprep.subr.mxu0 0.0
    %5588 = vmatpush1.msra.mxu0 0.0
    %5589 = vmatprep.subr.mxu0 0.0
    %5590 = vmatpush1.msra.mxu0 0.0
    %5591 = vmatprep.subr.mxu0 0.0
    %5592 = vmatpush1.msra.mxu0 0.0
    %5593 = vmatprep.subr.mxu0 0.0
    %5594 = vmatpush1.msra.mxu0 0.0
    %5595 = vmatprep.subr.mxu0 0.0
    %5596 = vmatpush1.msra.mxu0 0.0
    %5597 = vmatprep.subr.mxu0 0.0
    %5598 = vmatpush1.msra.mxu0 0.0
    %5599 = vmatprep.subr.mxu0 0.0
    %5600 = vmatpush1.msra.mxu0 0.0
    %5601 = vmatprep.subr.mxu0 0.0
    %5602 = vmatpush1.msra.mxu0 0.0
    %5603 = vmatprep.subr.mxu0 0.0
    %5604 = vmatpush1.msra.mxu0 0.0
    %5605 = vmatprep.subr.mxu0 0.0
    %5606 = vmatpush1.msra.mxu0 0.0
    %5607 = vmatprep.subr.mxu0 0.0
    %5608 = vmatpush1.msra.mxu0 0.0
    %5609 = vmatprep.subr.mxu0 0.0
    %5610 = vmatpush1.msra.mxu0 0.0
    %5611 = vmatprep.subr.mxu0 0.0
    %5612 = vmatpush1.msra.mxu0 0.0
    %5613 = vmatprep.subr.mxu0 0.0
    %5614 = vmatpush1.msra.mxu0 0.0
    %5615 = vmatprep.subr.mxu0 0.0
    %5616 = vmatpush1.msra.mxu0 0.0
    %5617 = vmatprep.subr.mxu0 0.0
    %5618 = vmatpush1.msra.mxu0 0.0
    %5619 = vmatprep.mubr.f32.mxu0 0.0
    %5620 = vmatmul.mubr.f32.gmra.mrb[0].mxu0 %v5414
    %v5621 = vpop.f32.mrb[0].mxu0
    %v5622 = vadd.f32 0.0, %v5621
    %v5623 = vpop.f32.mrb[0].mxu0
    %5624 = vmatprep.mubr.f32.mxu0 0.0
    %5625 = vmatmul.mubr.f32.gmra.mrb[0].mxu0 %v5417
    %v5626 = vpop.f32.mrb[0].mxu0
    %v5627 = vadd.f32 0.0, %v5626
    %v5628 = vpop.f32.mrb[0].mxu0
    %5629 = vmatprep.mubr.f32.mxu0 0.0
    %5630 = vmatmul.mubr.f32.gmra.mrb[0].mxu0 %v5420
    %v5631 = vpop.f32.mrb[0].mxu0
    %v5632 = vadd.f32 0.0, %v5631
    %v5633 = vpop.f32.mrb[0].mxu0
    %5634 = vmatprep.mubr.f32.mxu0 0.0
    %5635 = vmatmul.mubr.f32.gmra.mrb[0].mxu0 %v5423
    %v5636 = vpop.f32.mrb[0].mxu0
    %v5637 = vadd.f32 0.0, %v5636
    %v5638 = vpop.f32.mrb[0].mxu0
    %5639 = vmatprep.mubr.f32.mxu0 0.0
    %5640 = vmatmul.mubr.f32.gmra.mrb[0].mxu0 %v5426
    %v5641 = vpop.f32.mrb[0].mxu0
    %v5642 = vadd.f32 0.0, %v5641
    %v5643 = vpop.f32.mrb[0].mxu0
    %5644 = vmatprep.mubr.f32.mxu0 0.0
    %5645 = vmatmul.mubr.f32.gmra.mrb[0].mxu0 %v5429
    %v5646 = vpop.f32.mrb[0].mxu0
    %v5647 = vadd.f32 0.0, %v5646
    %v5648 = vpop.f32.mrb[0].mxu0
    %5649 = vmatprep.mubr.f32.mxu0 0.0
    %5650 = vmatmul.mubr.f32.gmra.mrb[0].mxu0 %v5432
    %v5651 = vpop.f32.mrb[0].mxu0
    %v5652 = vadd.f32 0.0, %v5651
    %v5653 = vpop.f32.mrb[0].mxu0
    %5654 = vmatprep.mubr.f32.mxu0 0.0
    %5655 = vmatmul.mubr.f32.gmra.mrb[0].mxu0 %v5435
    %v5656 = vpop.f32.mrb[0].mxu0
    %v5657 = vadd.f32 0.0, %v5656
    %v5658 = vpop.f32.mrb[0].mxu0
    %5659 = vmatprep.mubr.f32.mxu0 0.0
    %5660 = vmatmul.mubr.f32.gmra.mrb[0].mxu0 %v5438
    %v5661 = vpop.f32.mrb[0].mxu0
    %v5662 = vadd.f32 0.0, %v5661
    %v5663 = vpop.f32.mrb[0].mxu0
    %5664 = vdwg.mxu0
    %s5665 = scalar_lea.vmem %s11, 160
    %v5666 = vld [vmem:[%s5665] sm:$0xff]
    %v5667 = vld [vmem:[%s5665 + $0x8] sm:$0xff]
    %v5668 = vld [vmem:[%s5665 + $0x10] sm:$0xff]
    %v5669 = vld [vmem:[%s5665 + $0x18] sm:$0xff]
    %v5670 = vadd.f32 %v5507, %v5662
    %5671 = vmatprep.subr.mxu0 0.0
    %5672 = vmatpush1.msra.mxu0 %v5666
    %5673 = vmatprep.subr.mxu0 0.0
    %5674 = vmatpush1.msra.mxu0 %v5667
    %5675 = vmatprep.subr.mxu0 0.0
    %5676 = vmatpush1.msra.mxu0 %v5668
    %5677 = vmatprep.subr.mxu0 0.0
    %5678 = vmatpush1.msra.mxu0 %v5669
    %5679 = vmatprep.subr.mxu0 0.0
    %5680 = vmatpush1.msra.mxu0 0.0
    %5681 = vmatprep.subr.mxu0 0.0
    %5682 = vmatpush1.msra.mxu0 0.0
    %5683 = vmatprep.subr.mxu0 0.0
    %5684 = vmatpush1.msra.mxu0 0.0
    %5685 = vmatprep.subr.mxu0 0.0
    %5686 = vmatpush1.msra.mxu0 0.0
    %5687 = vmatprep.subr.mxu0 0.0
    %5688 = vmatpush1.msra.mxu0 0.0
    %5689 = vmatprep.subr.mxu0 0.0
    %5690 = vmatpush1.msra.mxu0 0.0
    %5691 = vmatprep.subr.mxu0 0.0
    %5692 = vmatpush1.msra.mxu0 0.0
    %5693 = vmatprep.subr.mxu0 0.0
    %5694 = vmatpush1.msra.mxu0 0.0
    %5695 = vmatprep.subr.mxu0 0.0
    %5696 = vmatpush1.msra.mxu0 0.0
    %5697 = vmatprep.subr.mxu0 0.0
    %5698 = vmatpush1.msra.mxu0 0.0
    %5699 = vmatprep.subr.mxu0 0.0
    %5700 = vmatpush1.msra.mxu0 0.0
    %5701 = vmatprep.subr.mxu0 0.0
    %5702 = vmatpush1.msra.mxu0 0.0
    %5703 = vmatprep.subr.mxu0 0.0
    %5704 = vmatpush1.msra.mxu0 0.0
    %5705 = vmatprep.subr.mxu0 0.0
    %5706 = vmatpush1.msra.mxu0 0.0
    %5707 = vmatprep.subr.mxu0 0.0
    %5708 = vmatpush1.msra.mxu0 0.0
    %5709 = vmatprep.subr.mxu0 0.0
    %5710 = vmatpush1.msra.mxu0 0.0
    %5711 = vmatprep.subr.mxu0 0.0
    %5712 = vmatpush1.msra.mxu0 0.0
    %5713 = vmatprep.subr.mxu0 0.0
    %5714 = vmatpush1.msra.mxu0 0.0
    %5715 = vmatprep.subr.mxu0 0.0
    %5716 = vmatpush1.msra.mxu0 0.0
    %5717 = vmatprep.subr.mxu0 0.0
    %5718 = vmatpush1.msra.mxu0 0.0
    %5719 = vmatprep.subr.mxu0 0.0
    %5720 = vmatpush1.msra.mxu0 0.0
    %5721 = vmatprep.subr.mxu0 0.0
    %5722 = vmatpush1.msra.mxu0 0.0
    %5723 = vmatprep.subr.mxu0 0.0
    %5724 = vmatpush1.msra.mxu0 0.0
    %5725 = vmatprep.subr.mxu0 0.0
    %5726 = vmatpush1.msra.mxu0 0.0
    %5727 = vmatprep.subr.mxu0 0.0
    %5728 = vmatpush1.msra.mxu0 0.0
    %5729 = vmatprep.subr.mxu0 0.0
    %5730 = vmatpush1.msra.mxu0 0.0
    %5731 = vmatprep.subr.mxu0 0.0
    %5732 = vmatpush1.msra.mxu0 0.0
    %5733 = vmatprep.subr.mxu0 0.0
    %5734 = vmatpush1.msra.mxu0 0.0
    %5735 = vmatprep.mubr.f32.mxu0 0.0
    %5736 = vmatmul.mubr.f32.gmra.mrb[0].mxu0 %v4474
    %v5737 = vpop.f32.mrb[0].mxu0
    %v5738 = vadd.f32 0.0, %v5737
    %v5739 = vpop.f32.mrb[0].mxu0
    %5740 = vdwg.mxu0
    %v5741 = vadd.f32 %v5670, %v5738
    %v5742 = vxor.u32 %v5741, 2147483648
    %v5743 = vmul.f32 %v5742, 1.442695
    %v5744 = vpow.pop %v5743
    %v5745 = vadd.f32 %v5744, 1.0
    %v5746 = vrcp.pop %v5745
    %v5747 = vmul.f32 1.0, %v5746
    %v5748 = vtanh.pop %v5741
    %v5749 = vmul.f32 %v5747, 0.0
    %5751 = vrot.lane.b32.xlu0 %v5748, 32
    %v5752 = vpop.permute.xlu0 %5751
    %v5754 = vmul.f32 %v5747, %v5752
    %5756 = vrot.lane.b32.xlu0 %v5754, 32
    %v5757 = vpop.permute.xlu0 %5756
    %v5759 = vadd.f32 %v5749, %v5757
    %v5760 = vtanh.pop %v5759
    %5762 = vrot.lane.b32.xlu0 %v5760, 32
    %v5763 = vpop.permute.xlu0 %5762
    %v5765 = vmul.f32 %v5747, %v5763
    %v5766 = vadd.f32 %v5512, %v5657
    %5768 = vrot.lane.b32.xlu0 %v5765, 64
    %v5769 = vpop.permute.xlu0 %5768
    %v5770 = vsel %vm328, %v5769, 0
    %5772 = vmatprep.subr.mxu0 0.0
    %5773 = vmatpush1.msra.mxu0 %v5666
    %5774 = vmatprep.subr.mxu0 0.0
    %5775 = vmatpush1.msra.mxu0 %v5667
    %5776 = vmatprep.subr.mxu0 0.0
    %5777 = vmatpush1.msra.mxu0 %v5668
    %5778 = vmatprep.subr.mxu0 0.0
    %5779 = vmatpush1.msra.mxu0 %v5669
    %5780 = vmatprep.subr.mxu0 0.0
    %5781 = vmatpush1.msra.mxu0 0.0
    %5782 = vmatprep.subr.mxu0 0.0
    %5783 = vmatpush1.msra.mxu0 0.0
    %5784 = vmatprep.subr.mxu0 0.0
    %5785 = vmatpush1.msra.mxu0 0.0
    %5786 = vmatprep.subr.mxu0 0.0
    %5787 = vmatpush1.msra.mxu0 0.0
    %5788 = vmatprep.subr.mxu0 0.0
    %5789 = vmatpush1.msra.mxu0 0.0
    %5790 = vmatprep.subr.mxu0 0.0
    %5791 = vmatpush1.msra.mxu0 0.0
    %5792 = vmatprep.subr.mxu0 0.0
    %5793 = vmatpush1.msra.mxu0 0.0
    %5794 = vmatprep.subr.mxu0 0.0
    %5795 = vmatpush1.msra.mxu0 0.0
    %5796 = vmatprep.subr.mxu0 0.0
    %5797 = vmatpush1.msra.mxu0 0.0
    %5798 = vmatprep.subr.mxu0 0.0
    %5799 = vmatpush1.msra.mxu0 0.0
    %5800 = vmatprep.subr.mxu0 0.0
    %5801 = vmatpush1.msra.mxu0 0.0
    %5802 = vmatprep.subr.mxu0 0.0
    %5803 = vmatpush1.msra.mxu0 0.0
    %5804 = vmatprep.subr.mxu0 0.0
    %5805 = vmatpush1.msra.mxu0 0.0
    %5806 = vmatprep.subr.mxu0 0.0
    %5807 = vmatpush1.msra.mxu0 0.0
    %5808 = vmatprep.subr.mxu0 0.0
    %5809 = vmatpush1.msra.mxu0 0.0
    %5810 = vmatprep.subr.mxu0 0.0
    %5811 = vmatpush1.msra.mxu0 0.0
    %5812 = vmatprep.subr.mxu0 0.0
    %5813 = vmatpush1.msra.mxu0 0.0
    %5814 = vmatprep.subr.mxu0 0.0
    %5815 = vmatpush1.msra.mxu0 0.0
    %5816 = vmatprep.subr.mxu0 0.0
    %5817 = vmatpush1.msra.mxu0 0.0
    %5818 = vmatprep.subr.mxu0 0.0
    %5819 = vmatpush1.msra.mxu0 0.0
    %5820 = vmatprep.subr.mxu0 0.0
    %5821 = vmatpush1.msra.mxu0 0.0
    %5822 = vmatprep.subr.mxu0 0.0
    %5823 = vmatpush1.msra.mxu0 0.0
    %5824 = vmatprep.subr.mxu0 0.0
    %5825 = vmatpush1.msra.mxu0 0.0
    %5826 = vmatprep.subr.mxu0 0.0
    %5827 = vmatpush1.msra.mxu0 0.0
    %5828 = vmatprep.subr.mxu0 0.0
    %5829 = vmatpush1.msra.mxu0 0.0
    %5830 = vmatprep.subr.mxu0 0.0
    %5831 = vmatpush1.msra.mxu0 0.0
    %5832 = vmatprep.subr.mxu0 0.0
    %5833 = vmatpush1.msra.mxu0 0.0
    %5834 = vmatprep.subr.mxu0 0.0
    %5835 = vmatpush1.msra.mxu0 0.0
    %5836 = vmatprep.mubr.f32.mxu0 0.0
    %5837 = vmatmul.mubr.f32.gmra.mrb[0].mxu0 %v5770
    %v5838 = vpop.f32.mrb[0].mxu0
    %v5839 = vadd.f32 0.0, %v5838
    %v5840 = vpop.f32.mrb[0].mxu0
    %5841 = vdwg.mxu0
    %v5842 = vadd.f32 %v5766, %v5839
    %v5843 = vxor.u32 %v5842, 2147483648
    %v5844 = vmul.f32 %v5843, 1.442695
    %v5845 = vpow.pop %v5844
    %v5846 = vadd.f32 %v5845, 1.0
    %v5847 = vrcp.pop %v5846
    %v5848 = vmul.f32 1.0, %v5847
    %v5849 = vtanh.pop %v5842
    %v5850 = vmul.f32 %v5848, %v5759
    %5852 = vrot.lane.b32.xlu0 %v5849, 32
    %v5853 = vpop.permute.xlu0 %5852
    %v5855 = vmul.f32 %v5848, %v5853
    %5857 = vrot.lane.b32.xlu0 %v5855, 32
    %v5858 = vpop.permute.xlu0 %5857
    %v5860 = vadd.f32 %v5850, %v5858
    %v5861 = vtanh.pop %v5860
    %5863 = vrot.lane.b32.xlu0 %v5861, 32
    %v5864 = vpop.permute.xlu0 %5863
    %v5866 = vmul.f32 %v5848, %v5864
    %v5867 = vadd.f32 %v5517, %v5652
    %5869 = vrot.lane.b32.xlu0 %v5866, 64
    %v5870 = vpop.permute.xlu0 %5869
    %v5871 = vsel %vm328, %v5870, 0
    %5873 = vmatprep.subr.mxu0 0.0
    %5874 = vmatpush1.msra.mxu0 %v5666
    %5875 = vmatprep.subr.mxu0 0.0
    %5876 = vmatpush1.msra.mxu0 %v5667
    %5877 = vmatprep.subr.mxu0 0.0
    %5878 = vmatpush1.msra.mxu0 %v5668
    %5879 = vmatprep.subr.mxu0 0.0
    %5880 = vmatpush1.msra.mxu0 %v5669
    %5881 = vmatprep.subr.mxu0 0.0
    %5882 = vmatpush1.msra.mxu0 0.0
    %5883 = vmatprep.subr.mxu0 0.0
    %5884 = vmatpush1.msra.mxu0 0.0
    %5885 = vmatprep.subr.mxu0 0.0
    %5886 = vmatpush1.msra.mxu0 0.0
    %5887 = vmatprep.subr.mxu0 0.0
    %5888 = vmatpush1.msra.mxu0 0.0
    %5889 = vmatprep.subr.mxu0 0.0
    %5890 = vmatpush1.msra.mxu0 0.0
    %5891 = vmatprep.subr.mxu0 0.0
    %5892 = vmatpush1.msra.mxu0 0.0
    %5893 = vmatprep.subr.mxu0 0.0
    %5894 = vmatpush1.msra.mxu0 0.0
    %5895 = vmatprep.subr.mxu0 0.0
    %5896 = vmatpush1.msra.mxu0 0.0
    %5897 = vmatprep.subr.mxu0 0.0
    %5898 = vmatpush1.msra.mxu0 0.0
    %5899 = vmatprep.subr.mxu0 0.0
    %5900 = vmatpush1.msra.mxu0 0.0
    %5901 = vmatprep.subr.mxu0 0.0
    %5902 = vmatpush1.msra.mxu0 0.0
    %5903 = vmatprep.subr.mxu0 0.0
    %5904 = vmatpush1.msra.mxu0 0.0
    %5905 = vmatprep.subr.mxu0 0.0
    %5906 = vmatpush1.msra.mxu0 0.0
    %5907 = vmatprep.subr.mxu0 0.0
    %5908 = vmatpush1.msra.mxu0 0.0
    %5909 = vmatprep.subr.mxu0 0.0
    %5910 = vmatpush1.msra.mxu0 0.0
    %5911 = vmatprep.subr.mxu0 0.0
    %5912 = vmatpush1.msra.mxu0 0.0
    %5913 = vmatprep.subr.mxu0 0.0
    %5914 = vmatpush1.msra.mxu0 0.0
    %5915 = vmatprep.subr.mxu0 0.0
    %5916 = vmatpush1.msra.mxu0 0.0
    %5917 = vmatprep.subr.mxu0 0.0
    %5918 = vmatpush1.msra.mxu0 0.0
    %5919 = vmatprep.subr.mxu0 0.0
    %5920 = vmatpush1.msra.mxu0 0.0
    %5921 = vmatprep.subr.mxu0 0.0
    %5922 = vmatpush1.msra.mxu0 0.0
    %5923 = vmatprep.subr.mxu0 0.0
    %5924 = vmatpush1.msra.mxu0 0.0
    %5925 = vmatprep.subr.mxu0 0.0
    %5926 = vmatpush1.msra.mxu0 0.0
    %5927 = vmatprep.subr.mxu0 0.0
    %5928 = vmatpush1.msra.mxu0 0.0
    %5929 = vmatprep.subr.mxu0 0.0
    %5930 = vmatpush1.msra.mxu0 0.0
    %5931 = vmatprep.subr.mxu0 0.0
    %5932 = vmatpush1.msra.mxu0 0.0
    %5933 = vmatprep.subr.mxu0 0.0
    %5934 = vmatpush1.msra.mxu0 0.0
    %5935 = vmatprep.subr.mxu0 0.0
    %5936 = vmatpush1.msra.mxu0 0.0
    %5937 = vmatprep.mubr.f32.mxu0 0.0
    %5938 = vmatmul.mubr.f32.gmra.mrb[0].mxu0 %v5871
    %v5939 = vpop.f32.mrb[0].mxu0
    %v5940 = vadd.f32 0.0, %v5939
    %v5941 = vpop.f32.mrb[0].mxu0
    %5942 = vdwg.mxu0
    %v5943 = vadd.f32 %v5867, %v5940
    %v5944 = vxor.u32 %v5943, 2147483648
    %v5945 = vmul.f32 %v5944, 1.442695
    %v5946 = vpow.pop %v5945
    %v5947 = vadd.f32 %v5946, 1.0
    %v5948 = vrcp.pop %v5947
    %v5949 = vmul.f32 1.0, %v5948
    %v5950 = vtanh.pop %v5943
    %v5951 = vmul.f32 %v5949, %v5860
    %5953 = vrot.lane.b32.xlu0 %v5950, 32
    %v5954 = vpop.permute.xlu0 %5953
    %v5956 = vmul.f32 %v5949, %v5954
    %5958 = vrot.lane.b32.xlu0 %v5956, 32
    %v5959 = vpop.permute.xlu0 %5958
    %v5961 = vadd.f32 %v5951, %v5959
    %v5962 = vtanh.pop %v5961
    %5964 = vrot.lane.b32.xlu0 %v5962, 32
    %v5965 = vpop.permute.xlu0 %5964
    %v5967 = vmul.f32 %v5949, %v5965
    %v5968 = vadd.f32 %v5522, %v5647
    %5970 = vrot.lane.b32.xlu0 %v5967, 64
    %v5971 = vpop.permute.xlu0 %5970
    %v5972 = vsel %vm328, %v5971, 0
    %5974 = vmatprep.subr.mxu0 0.0
    %5975 = vmatpush1.msra.mxu0 %v5666
    %5976 = vmatprep.subr.mxu0 0.0
    %5977 = vmatpush1.msra.mxu0 %v5667
    %5978 = vmatprep.subr.mxu0 0.0
    %5979 = vmatpush1.msra.mxu0 %v5668
    %5980 = vmatprep.subr.mxu0 0.0
    %5981 = vmatpush1.msra.mxu0 %v5669
    %5982 = vmatprep.subr.mxu0 0.0
    %5983 = vmatpush1.msra.mxu0 0.0
    %5984 = vmatprep.subr.mxu0 0.0
    %5985 = vmatpush1.msra.mxu0 0.0
    %5986 = vmatprep.subr.mxu0 0.0
    %5987 = vmatpush1.msra.mxu0 0.0
    %5988 = vmatprep.subr.mxu0 0.0
    %5989 = vmatpush1.msra.mxu0 0.0
    %5990 = vmatprep.subr.mxu0 0.0
    %5991 = vmatpush1.msra.mxu0 0.0
    %5992 = vmatprep.subr.mxu0 0.0
    %5993 = vmatpush1.msra.mxu0 0.0
    %5994 = vmatprep.subr.mxu0 0.0
    %5995 = vmatpush1.msra.mxu0 0.0
    %5996 = vmatprep.subr.mxu0 0.0
    %5997 = vmatpush1.msra.mxu0 0.0
    %5998 = vmatprep.subr.mxu0 0.0
    %5999 = vmatpush1.msra.mxu0 0.0
    %6000 = vmatprep.subr.mxu0 0.0
    %6001 = vmatpush1.msra.mxu0 0.0
    %6002 = vmatprep.subr.mxu0 0.0
    %6003 = vmatpush1.msra.mxu0 0.0
    %6004 = vmatprep.subr.mxu0 0.0
    %6005 = vmatpush1.msra.mxu0 0.0
    %6006 = vmatprep.subr.mxu0 0.0
    %6007 = vmatpush1.msra.mxu0 0.0
    %6008 = vmatprep.subr.mxu0 0.0
    %6009 = vmatpush1.msra.mxu0 0.0
    %6010 = vmatprep.subr.mxu0 0.0
    %6011 = vmatpush1.msra.mxu0 0.0
    %6012 = vmatprep.subr.mxu0 0.0
    %6013 = vmatpush1.msra.mxu0 0.0
    %6014 = vmatprep.subr.mxu0 0.0
    %6015 = vmatpush1.msra.mxu0 0.0
    %6016 = vmatprep.subr.mxu0 0.0
    %6017 = vmatpush1.msra.mxu0 0.0
    %6018 = vmatprep.subr.mxu0 0.0
    %6019 = vmatpush1.msra.mxu0 0.0
    %6020 = vmatprep.subr.mxu0 0.0
    %6021 = vmatpush1.msra.mxu0 0.0
    %6022 = vmatprep.subr.mxu0 0.0
    %6023 = vmatpush1.msra.mxu0 0.0
    %6024 = vmatprep.subr.mxu0 0.0
    %6025 = vmatpush1.msra.mxu0 0.0
    %6026 = vmatprep.subr.mxu0 0.0
    %6027 = vmatpush1.msra.mxu0 0.0
    %6028 = vmatprep.subr.mxu0 0.0
    %6029 = vmatpush1.msra.mxu0 0.0
    %6030 = vmatprep.subr.mxu0 0.0
    %6031 = vmatpush1.msra.mxu0 0.0
    %6032 = vmatprep.subr.mxu0 0.0
    %6033 = vmatpush1.msra.mxu0 0.0
    %6034 = vmatprep.subr.mxu0 0.0
    %6035 = vmatpush1.msra.mxu0 0.0
    %6036 = vmatprep.subr.mxu0 0.0
    %6037 = vmatpush1.msra.mxu0 0.0
    %6038 = vmatprep.mubr.f32.mxu0 0.0
    %6039 = vmatmul.mubr.f32.gmra.mrb[0].mxu0 %v5972
    %v6040 = vpop.f32.mrb[0].mxu0
    %v6041 = vadd.f32 0.0, %v6040
    %v6042 = vpop.f32.mrb[0].mxu0
    %6043 = vdwg.mxu0
    %v6044 = vadd.f32 %v5968, %v6041
    %v6045 = vxor.u32 %v6044, 2147483648
    %v6046 = vmul.f32 %v6045, 1.442695
    %v6047 = vpow.pop %v6046
    %v6048 = vadd.f32 %v6047, 1.0
    %v6049 = vrcp.pop %v6048
    %v6050 = vmul.f32 1.0, %v6049
    %v6051 = vtanh.pop %v6044
    %v6052 = vmul.f32 %v6050, %v5961
    %6054 = vrot.lane.b32.xlu0 %v6051, 32
    %v6055 = vpop.permute.xlu0 %6054
    %v6057 = vmul.f32 %v6050, %v6055
    %6059 = vrot.lane.b32.xlu0 %v6057, 32
    %v6060 = vpop.permute.xlu0 %6059
    %v6062 = vadd.f32 %v6052, %v6060
    %v6063 = vtanh.pop %v6062
    %6065 = vrot.lane.b32.xlu0 %v6063, 32
    %v6066 = vpop.permute.xlu0 %6065
    %v6068 = vmul.f32 %v6050, %v6066
    %v6069 = vadd.f32 %v5527, %v5642
    %6071 = vrot.lane.b32.xlu0 %v6068, 64
    %v6072 = vpop.permute.xlu0 %6071
    %v6073 = vsel %vm328, %v6072, 0
    %6075 = vmatprep.subr.mxu0 0.0
    %6076 = vmatpush1.msra.mxu0 %v5666
    %6077 = vmatprep.subr.mxu0 0.0
    %6078 = vmatpush1.msra.mxu0 %v5667
    %6079 = vmatprep.subr.mxu0 0.0
    %6080 = vmatpush1.msra.mxu0 %v5668
    %6081 = vmatprep.subr.mxu0 0.0
    %6082 = vmatpush1.msra.mxu0 %v5669
    %6083 = vmatprep.subr.mxu0 0.0
    %6084 = vmatpush1.msra.mxu0 0.0
    %6085 = vmatprep.subr.mxu0 0.0
    %6086 = vmatpush1.msra.mxu0 0.0
    %6087 = vmatprep.subr.mxu0 0.0
    %6088 = vmatpush1.msra.mxu0 0.0
    %6089 = vmatprep.subr.mxu0 0.0
    %6090 = vmatpush1.msra.mxu0 0.0
    %6091 = vmatprep.subr.mxu0 0.0
    %6092 = vmatpush1.msra.mxu0 0.0
    %6093 = vmatprep.subr.mxu0 0.0
    %6094 = vmatpush1.msra.mxu0 0.0
    %6095 = vmatprep.subr.mxu0 0.0
    %6096 = vmatpush1.msra.mxu0 0.0
    %6097 = vmatprep.subr.mxu0 0.0
    %6098 = vmatpush1.msra.mxu0 0.0
    %6099 = vmatprep.subr.mxu0 0.0
    %6100 = vmatpush1.msra.mxu0 0.0
    %6101 = vmatprep.subr.mxu0 0.0
    %6102 = vmatpush1.msra.mxu0 0.0
    %6103 = vmatprep.subr.mxu0 0.0
    %6104 = vmatpush1.msra.mxu0 0.0
    %6105 = vmatprep.subr.mxu0 0.0
    %6106 = vmatpush1.msra.mxu0 0.0
    %6107 = vmatprep.subr.mxu0 0.0
    %6108 = vmatpush1.msra.mxu0 0.0
    %6109 = vmatprep.subr.mxu0 0.0
    %6110 = vmatpush1.msra.mxu0 0.0
    %6111 = vmatprep.subr.mxu0 0.0
    %6112 = vmatpush1.msra.mxu0 0.0
    %6113 = vmatprep.subr.mxu0 0.0
    %6114 = vmatpush1.msra.mxu0 0.0
    %6115 = vmatprep.subr.mxu0 0.0
    %6116 = vmatpush1.msra.mxu0 0.0
    %6117 = vmatprep.subr.mxu0 0.0
    %6118 = vmatpush1.msra.mxu0 0.0
    %6119 = vmatprep.subr.mxu0 0.0
    %6120 = vmatpush1.msra.mxu0 0.0
    %6121 = vmatprep.subr.mxu0 0.0
    %6122 = vmatpush1.msra.mxu0 0.0
    %6123 = vmatprep.subr.mxu0 0.0
    %6124 = vmatpush1.msra.mxu0 0.0
    %6125 = vmatprep.subr.mxu0 0.0
    %6126 = vmatpush1.msra.mxu0 0.0
    %6127 = vmatprep.subr.mxu0 0.0
    %6128 = vmatpush1.msra.mxu0 0.0
    %6129 = vmatprep.subr.mxu0 0.0
    %6130 = vmatpush1.msra.mxu0 0.0
    %6131 = vmatprep.subr.mxu0 0.0
    %6132 = vmatpush1.msra.mxu0 0.0
    %6133 = vmatprep.subr.mxu0 0.0
    %6134 = vmatpush1.msra.mxu0 0.0
    %6135 = vmatprep.subr.mxu0 0.0
    %6136 = vmatpush1.msra.mxu0 0.0
    %6137 = vmatprep.subr.mxu0 0.0
    %6138 = vmatpush1.msra.mxu0 0.0
    %6139 = vmatprep.mubr.f32.mxu0 0.0
    %6140 = vmatmul.mubr.f32.gmra.mrb[0].mxu0 %v6073
    %v6141 = vpop.f32.mrb[0].mxu0
    %v6142 = vadd.f32 0.0, %v6141
    %v6143 = vpop.f32.mrb[0].mxu0
    %6144 = vdwg.mxu0
    %v6145 = vadd.f32 %v6069, %v6142
    %v6146 = vxor.u32 %v6145, 2147483648
    %v6147 = vmul.f32 %v6146, 1.442695
    %v6148 = vpow.pop %v6147
    %v6149 = vadd.f32 %v6148, 1.0
    %v6150 = vrcp.pop %v6149
    %v6151 = vmul.f32 1.0, %v6150
    %v6152 = vtanh.pop %v6145
    %v6153 = vmul.f32 %v6151, %v6062
    %6155 = vrot.lane.b32.xlu0 %v6152, 32
    %v6156 = vpop.permute.xlu0 %6155
    %v6158 = vmul.f32 %v6151, %v6156
    %6160 = vrot.lane.b32.xlu0 %v6158, 32
    %v6161 = vpop.permute.xlu0 %6160
    %v6163 = vadd.f32 %v6153, %v6161
    %v6164 = vtanh.pop %v6163
    %6166 = vrot.lane.b32.xlu0 %v6164, 32
    %v6167 = vpop.permute.xlu0 %6166
    %v6169 = vmul.f32 %v6151, %v6167
    %v6170 = vadd.f32 %v5532, %v5637
    %6172 = vrot.lane.b32.xlu0 %v6169, 64
    %v6173 = vpop.permute.xlu0 %6172
    %v6174 = vsel %vm328, %v6173, 0
    %6176 = vmatprep.subr.mxu0 0.0
    %6177 = vmatpush1.msra.mxu0 %v5666
    %6178 = vmatprep.subr.mxu0 0.0
    %6179 = vmatpush1.msra.mxu0 %v5667
    %6180 = vmatprep.subr.mxu0 0.0
    %6181 = vmatpush1.msra.mxu0 %v5668
    %6182 = vmatprep.subr.mxu0 0.0
    %6183 = vmatpush1.msra.mxu0 %v5669
    %6184 = vmatprep.subr.mxu0 0.0
    %6185 = vmatpush1.msra.mxu0 0.0
    %6186 = vmatprep.subr.mxu0 0.0
    %6187 = vmatpush1.msra.mxu0 0.0
    %6188 = vmatprep.subr.mxu0 0.0
    %6189 = vmatpush1.msra.mxu0 0.0
    %6190 = vmatprep.subr.mxu0 0.0
    %6191 = vmatpush1.msra.mxu0 0.0
    %6192 = vmatprep.subr.mxu0 0.0
    %6193 = vmatpush1.msra.mxu0 0.0
    %6194 = vmatprep.subr.mxu0 0.0
    %6195 = vmatpush1.msra.mxu0 0.0
    %6196 = vmatprep.subr.mxu0 0.0
    %6197 = vmatpush1.msra.mxu0 0.0
    %6198 = vmatprep.subr.mxu0 0.0
    %6199 = vmatpush1.msra.mxu0 0.0
    %6200 = vmatprep.subr.mxu0 0.0
    %6201 = vmatpush1.msra.mxu0 0.0
    %6202 = vmatprep.subr.mxu0 0.0
    %6203 = vmatpush1.msra.mxu0 0.0
    %6204 = vmatprep.subr.mxu0 0.0
    %6205 = vmatpush1.msra.mxu0 0.0
    %6206 = vmatprep.subr.mxu0 0.0
    %6207 = vmatpush1.msra.mxu0 0.0
    %6208 = vmatprep.subr.mxu0 0.0
    %6209 = vmatpush1.msra.mxu0 0.0
    %6210 = vmatprep.subr.mxu0 0.0
    %6211 = vmatpush1.msra.mxu0 0.0
    %6212 = vmatprep.subr.mxu0 0.0
    %6213 = vmatpush1.msra.mxu0 0.0
    %6214 = vmatprep.subr.mxu0 0.0
    %6215 = vmatpush1.msra.mxu0 0.0
    %6216 = vmatprep.subr.mxu0 0.0
    %6217 = vmatpush1.msra.mxu0 0.0
    %6218 = vmatprep.subr.mxu0 0.0
    %6219 = vmatpush1.msra.mxu0 0.0
    %6220 = vmatprep.subr.mxu0 0.0
    %6221 = vmatpush1.msra.mxu0 0.0
    %6222 = vmatprep.subr.mxu0 0.0
    %6223 = vmatpush1.msra.mxu0 0.0
    %6224 = vmatprep.subr.mxu0 0.0
    %6225 = vmatpush1.msra.mxu0 0.0
    %6226 = vmatprep.subr.mxu0 0.0
    %6227 = vmatpush1.msra.mxu0 0.0
    %6228 = vmatprep.subr.mxu0 0.0
    %6229 = vmatpush1.msra.mxu0 0.0
    %6230 = vmatprep.subr.mxu0 0.0
    %6231 = vmatpush1.msra.mxu0 0.0
    %6232 = vmatprep.subr.mxu0 0.0
    %6233 = vmatpush1.msra.mxu0 0.0
    %6234 = vmatprep.subr.mxu0 0.0
    %6235 = vmatpush1.msra.mxu0 0.0
    %6236 = vmatprep.subr.mxu0 0.0
    %6237 = vmatpush1.msra.mxu0 0.0
    %6238 = vmatprep.subr.mxu0 0.0
    %6239 = vmatpush1.msra.mxu0 0.0
    %6240 = vmatprep.mubr.f32.mxu0 0.0
    %6241 = vmatmul.mubr.f32.gmra.mrb[0].mxu0 %v6174
    %v6242 = vpop.f32.mrb[0].mxu0
    %v6243 = vadd.f32 0.0, %v6242
    %v6244 = vpop.f32.mrb[0].mxu0
    %6245 = vdwg.mxu0
    %v6246 = vadd.f32 %v6170, %v6243
    %v6247 = vxor.u32 %v6246, 2147483648
    %v6248 = vmul.f32 %v6247, 1.442695
    %v6249 = vpow.pop %v6248
    %v6250 = vadd.f32 %v6249, 1.0
    %v6251 = vrcp.pop %v6250
    %v6252 = vmul.f32 1.0, %v6251
    %v6253 = vtanh.pop %v6246
    %v6254 = vmul.f32 %v6252, %v6163
    %6256 = vrot.lane.b32.xlu0 %v6253, 32
    %v6257 = vpop.permute.xlu0 %6256
    %v6259 = vmul.f32 %v6252, %v6257
    %6261 = vrot.lane.b32.xlu0 %v6259, 32
    %v6262 = vpop.permute.xlu0 %6261
    %v6264 = vadd.f32 %v6254, %v6262
    %v6265 = vtanh.pop %v6264
    %6267 = vrot.lane.b32.xlu0 %v6265, 32
    %v6268 = vpop.permute.xlu0 %6267
    %v6270 = vmul.f32 %v6252, %v6268
    %v6271 = vadd.f32 %v5537, %v5632
    %6273 = vrot.lane.b32.xlu0 %v6270, 64
    %v6274 = vpop.permute.xlu0 %6273
    %v6275 = vsel %vm328, %v6274, 0
    %6277 = vmatprep.subr.mxu0 0.0
    %6278 = vmatpush1.msra.mxu0 %v5666
    %6279 = vmatprep.subr.mxu0 0.0
    %6280 = vmatpush1.msra.mxu0 %v5667
    %6281 = vmatprep.subr.mxu0 0.0
    %6282 = vmatpush1.msra.mxu0 %v5668
    %6283 = vmatprep.subr.mxu0 0.0
    %6284 = vmatpush1.msra.mxu0 %v5669
    %6285 = vmatprep.subr.mxu0 0.0
    %6286 = vmatpush1.msra.mxu0 0.0
    %6287 = vmatprep.subr.mxu0 0.0
    %6288 = vmatpush1.msra.mxu0 0.0
    %6289 = vmatprep.subr.mxu0 0.0
    %6290 = vmatpush1.msra.mxu0 0.0
    %6291 = vmatprep.subr.mxu0 0.0
    %6292 = vmatpush1.msra.mxu0 0.0
    %6293 = vmatprep.subr.mxu0 0.0
    %6294 = vmatpush1.msra.mxu0 0.0
    %6295 = vmatprep.subr.mxu0 0.0
    %6296 = vmatpush1.msra.mxu0 0.0
    %6297 = vmatprep.subr.mxu0 0.0
    %6298 = vmatpush1.msra.mxu0 0.0
    %6299 = vmatprep.subr.mxu0 0.0
    %6300 = vmatpush1.msra.mxu0 0.0
    %6301 = vmatprep.subr.mxu0 0.0
    %6302 = vmatpush1.msra.mxu0 0.0
    %6303 = vmatprep.subr.mxu0 0.0
    %6304 = vmatpush1.msra.mxu0 0.0
    %6305 = vmatprep.subr.mxu0 0.0
    %6306 = vmatpush1.msra.mxu0 0.0
    %6307 = vmatprep.subr.mxu0 0.0
    %6308 = vmatpush1.msra.mxu0 0.0
    %6309 = vmatprep.subr.mxu0 0.0
    %6310 = vmatpush1.msra.mxu0 0.0
    %6311 = vmatprep.subr.mxu0 0.0
    %6312 = vmatpush1.msra.mxu0 0.0
    %6313 = vmatprep.subr.mxu0 0.0
    %6314 = vmatpush1.msra.mxu0 0.0
    %6315 = vmatprep.subr.mxu0 0.0
    %6316 = vmatpush1.msra.mxu0 0.0
    %6317 = vmatprep.subr.mxu0 0.0
    %6318 = vmatpush1.msra.mxu0 0.0
    %6319 = vmatprep.subr.mxu0 0.0
    %6320 = vmatpush1.msra.mxu0 0.0
    %6321 = vmatprep.subr.mxu0 0.0
    %6322 = vmatpush1.msra.mxu0 0.0
    %6323 = vmatprep.subr.mxu0 0.0
    %6324 = vmatpush1.msra.mxu0 0.0
    %6325 = vmatprep.subr.mxu0 0.0
    %6326 = vmatpush1.msra.mxu0 0.0
    %6327 = vmatprep.subr.mxu0 0.0
    %6328 = vmatpush1.msra.mxu0 0.0
    %6329 = vmatprep.subr.mxu0 0.0
    %6330 = vmatpush1.msra.mxu0 0.0
    %6331 = vmatprep.subr.mxu0 0.0
    %6332 = vmatpush1.msra.mxu0 0.0
    %6333 = vmatprep.subr.mxu0 0.0
    %6334 = vmatpush1.msra.mxu0 0.0
    %6335 = vmatprep.subr.mxu0 0.0
    %6336 = vmatpush1.msra.mxu0 0.0
    %6337 = vmatprep.subr.mxu0 0.0
    %6338 = vmatpush1.msra.mxu0 0.0
    %6339 = vmatprep.subr.mxu0 0.0
    %6340 = vmatpush1.msra.mxu0 0.0
    %6341 = vmatprep.mubr.f32.mxu0 0.0
    %6342 = vmatmul.mubr.f32.gmra.mrb[0].mxu0 %v6275
    %v6343 = vpop.f32.mrb[0].mxu0
    %v6344 = vadd.f32 0.0, %v6343
    %v6345 = vpop.f32.mrb[0].mxu0
    %6346 = vdwg.mxu0
    %v6347 = vadd.f32 %v6271, %v6344
    %v6348 = vxor.u32 %v6347, 2147483648
    %v6349 = vmul.f32 %v6348, 1.442695
    %v6350 = vpow.pop %v6349
    %v6351 = vadd.f32 %v6350, 1.0
    %v6352 = vrcp.pop %v6351
    %v6353 = vmul.f32 1.0, %v6352
    %v6354 = vtanh.pop %v6347
    %v6355 = vmul.f32 %v6353, %v6264
    %6357 = vrot.lane.b32.xlu0 %v6354, 32
    %v6358 = vpop.permute.xlu0 %6357
    %v6360 = vmul.f32 %v6353, %v6358
    %6362 = vrot.lane.b32.xlu0 %v6360, 32
    %v6363 = vpop.permute.xlu0 %6362
    %v6365 = vadd.f32 %v6355, %v6363
    %v6366 = vtanh.pop %v6365
    %6368 = vrot.lane.b32.xlu0 %v6366, 32
    %v6369 = vpop.permute.xlu0 %6368
    %v6371 = vmul.f32 %v6353, %v6369
    %v6372 = vadd.f32 %v5542, %v5627
    %6374 = vrot.lane.b32.xlu0 %v6371, 64
    %v6375 = vpop.permute.xlu0 %6374
    %v6376 = vsel %vm328, %v6375, 0
    %6378 = vmatprep.subr.mxu0 0.0
    %6379 = vmatpush1.msra.mxu0 %v5666
    %6380 = vmatprep.subr.mxu0 0.0
    %6381 = vmatpush1.msra.mxu0 %v5667
    %6382 = vmatprep.subr.mxu0 0.0
    %6383 = vmatpush1.msra.mxu0 %v5668
    %6384 = vmatprep.subr.mxu0 0.0
    %6385 = vmatpush1.msra.mxu0 %v5669
    %6386 = vmatprep.subr.mxu0 0.0
    %6387 = vmatpush1.msra.mxu0 0.0
    %6388 = vmatprep.subr.mxu0 0.0
    %6389 = vmatpush1.msra.mxu0 0.0
    %6390 = vmatprep.subr.mxu0 0.0
    %6391 = vmatpush1.msra.mxu0 0.0
    %6392 = vmatprep.subr.mxu0 0.0
    %6393 = vmatpush1.msra.mxu0 0.0
    %6394 = vmatprep.subr.mxu0 0.0
    %6395 = vmatpush1.msra.mxu0 0.0
    %6396 = vmatprep.subr.mxu0 0.0
    %6397 = vmatpush1.msra.mxu0 0.0
    %6398 = vmatprep.subr.mxu0 0.0
    %6399 = vmatpush1.msra.mxu0 0.0
    %6400 = vmatprep.subr.mxu0 0.0
    %6401 = vmatpush1.msra.mxu0 0.0
    %6402 = vmatprep.subr.mxu0 0.0
    %6403 = vmatpush1.msra.mxu0 0.0
    %6404 = vmatprep.subr.mxu0 0.0
    %6405 = vmatpush1.msra.mxu0 0.0
    %6406 = vmatprep.subr.mxu0 0.0
    %6407 = vmatpush1.msra.mxu0 0.0
    %6408 = vmatprep.subr.mxu0 0.0
    %6409 = vmatpush1.msra.mxu0 0.0
    %6410 = vmatprep.subr.mxu0 0.0
    %6411 = vmatpush1.msra.mxu0 0.0
    %6412 = vmatprep.subr.mxu0 0.0
    %6413 = vmatpush1.msra.mxu0 0.0
    %6414 = vmatprep.subr.mxu0 0.0
    %6415 = vmatpush1.msra.mxu0 0.0
    %6416 = vmatprep.subr.mxu0 0.0
    %6417 = vmatpush1.msra.mxu0 0.0
    %6418 = vmatprep.subr.mxu0 0.0
    %6419 = vmatpush1.msra.mxu0 0.0
    %6420 = vmatprep.subr.mxu0 0.0
    %6421 = vmatpush1.msra.mxu0 0.0
    %6422 = vmatprep.subr.mxu0 0.0
    %6423 = vmatpush1.msra.mxu0 0.0
    %6424 = vmatprep.subr.mxu0 0.0
    %6425 = vmatpush1.msra.mxu0 0.0
    %6426 = vmatprep.subr.mxu0 0.0
    %6427 = vmatpush1.msra.mxu0 0.0
    %6428 = vmatprep.subr.mxu0 0.0
    %6429 = vmatpush1.msra.mxu0 0.0
    %6430 = vmatprep.subr.mxu0 0.0
    %6431 = vmatpush1.msra.mxu0 0.0
    %6432 = vmatprep.subr.mxu0 0.0
    %6433 = vmatpush1.msra.mxu0 0.0
    %6434 = vmatprep.subr.mxu0 0.0
    %6435 = vmatpush1.msra.mxu0 0.0
    %6436 = vmatprep.subr.mxu0 0.0
    %6437 = vmatpush1.msra.mxu0 0.0
    %6438 = vmatprep.subr.mxu0 0.0
    %6439 = vmatpush1.msra.mxu0 0.0
    %6440 = vmatprep.subr.mxu0 0.0
    %6441 = vmatpush1.msra.mxu0 0.0
    %6442 = vmatprep.mubr.f32.mxu0 0.0
    %6443 = vmatmul.mubr.f32.gmra.mrb[0].mxu0 %v6376
    %v6444 = vpop.f32.mrb[0].mxu0
    %v6445 = vadd.f32 0.0, %v6444
    %v6446 = vpop.f32.mrb[0].mxu0
    %6447 = vdwg.mxu0
    %v6448 = vadd.f32 %v6372, %v6445
    %v6449 = vxor.u32 %v6448, 2147483648
    %v6450 = vmul.f32 %v6449, 1.442695
    %v6451 = vpow.pop %v6450
    %v6452 = vadd.f32 %v6451, 1.0
    %v6453 = vrcp.pop %v6452
    %v6454 = vmul.f32 1.0, %v6453
    %v6455 = vtanh.pop %v6448
    %v6456 = vmul.f32 %v6454, %v6365
    %6458 = vrot.lane.b32.xlu0 %v6455, 32
    %v6459 = vpop.permute.xlu0 %6458
    %v6461 = vmul.f32 %v6454, %v6459
    %6463 = vrot.lane.b32.xlu0 %v6461, 32
    %v6464 = vpop.permute.xlu0 %6463
    %v6466 = vadd.f32 %v6456, %v6464
    %v6467 = vtanh.pop %v6466
    %6469 = vrot.lane.b32.xlu0 %v6467, 32
    %v6470 = vpop.permute.xlu0 %6469
    %v6472 = vmul.f32 %v6454, %v6470
    %v6473 = vadd.f32 %v5547, %v5622
    %6475 = vrot.lane.b32.xlu0 %v6472, 64
    %v6476 = vpop.permute.xlu0 %6475
    %v6477 = vsel %vm328, %v6476, 0
    %6479 = vmatprep.subr.mxu0 0.0
    %6480 = vmatpush1.msra.mxu0 %v5666
    %6481 = vmatprep.subr.mxu0 0.0
    %6482 = vmatpush1.msra.mxu0 %v5667
    %6483 = vmatprep.subr.mxu0 0.0
    %6484 = vmatpush1.msra.mxu0 %v5668
    %6485 = vmatprep.subr.mxu0 0.0
    %6486 = vmatpush1.msra.mxu0 %v5669
    %6487 = vmatprep.subr.mxu0 0.0
    %6488 = vmatpush1.msra.mxu0 0.0
    %6489 = vmatprep.subr.mxu0 0.0
    %6490 = vmatpush1.msra.mxu0 0.0
    %6491 = vmatprep.subr.mxu0 0.0
    %6492 = vmatpush1.msra.mxu0 0.0
    %6493 = vmatprep.subr.mxu0 0.0
    %6494 = vmatpush1.msra.mxu0 0.0
    %6495 = vmatprep.subr.mxu0 0.0
    %6496 = vmatpush1.msra.mxu0 0.0
    %6497 = vmatprep.subr.mxu0 0.0
    %6498 = vmatpush1.msra.mxu0 0.0
    %6499 = vmatprep.subr.mxu0 0.0
    %6500 = vmatpush1.msra.mxu0 0.0
    %6501 = vmatprep.subr.mxu0 0.0
    %6502 = vmatpush1.msra.mxu0 0.0
    %6503 = vmatprep.subr.mxu0 0.0
    %6504 = vmatpush1.msra.mxu0 0.0
    %6505 = vmatprep.subr.mxu0 0.0
    %6506 = vmatpush1.msra.mxu0 0.0
    %6507 = vmatprep.subr.mxu0 0.0
    %6508 = vmatpush1.msra.mxu0 0.0
    %6509 = vmatprep.subr.mxu0 0.0
    %6510 = vmatpush1.msra.mxu0 0.0
    %6511 = vmatprep.subr.mxu0 0.0
    %6512 = vmatpush1.msra.mxu0 0.0
    %6513 = vmatprep.subr.mxu0 0.0
    %6514 = vmatpush1.msra.mxu0 0.0
    %6515 = vmatprep.subr.mxu0 0.0
    %6516 = vmatpush1.msra.mxu0 0.0
    %6517 = vmatprep.subr.mxu0 0.0
    %6518 = vmatpush1.msra.mxu0 0.0
    %6519 = vmatprep.subr.mxu0 0.0
    %6520 = vmatpush1.msra.mxu0 0.0
    %6521 = vmatprep.subr.mxu0 0.0
    %6522 = vmatpush1.msra.mxu0 0.0
    %6523 = vmatprep.subr.mxu0 0.0
    %6524 = vmatpush1.msra.mxu0 0.0
    %6525 = vmatprep.subr.mxu0 0.0
    %6526 = vmatpush1.msra.mxu0 0.0
    %6527 = vmatprep.subr.mxu0 0.0
    %6528 = vmatpush1.msra.mxu0 0.0
    %6529 = vmatprep.subr.mxu0 0.0
    %6530 = vmatpush1.msra.mxu0 0.0
    %6531 = vmatprep.subr.mxu0 0.0
    %6532 = vmatpush1.msra.mxu0 0.0
    %6533 = vmatprep.subr.mxu0 0.0
    %6534 = vmatpush1.msra.mxu0 0.0
    %6535 = vmatprep.subr.mxu0 0.0
    %6536 = vmatpush1.msra.mxu0 0.0
    %6537 = vmatprep.subr.mxu0 0.0
    %6538 = vmatpush1.msra.mxu0 0.0
    %6539 = vmatprep.subr.mxu0 0.0
    %6540 = vmatpush1.msra.mxu0 0.0
    %6541 = vmatprep.subr.mxu0 0.0
    %6542 = vmatpush1.msra.mxu0 0.0
    %6543 = vmatprep.mubr.f32.mxu0 0.0
    %6544 = vmatmul.mubr.f32.gmra.mrb[0].mxu0 %v6477
    %v6545 = vpop.f32.mrb[0].mxu0
    %v6546 = vadd.f32 0.0, %v6545
    %v6547 = vpop.f32.mrb[0].mxu0
    %6548 = vdwg.mxu0
    %v6549 = vadd.f32 %v6473, %v6546
    %v6550 = vxor.u32 %v6549, 2147483648
    %v6551 = vmul.f32 %v6550, 1.442695
    %v6552 = vpow.pop %v6551
    %v6553 = vadd.f32 %v6552, 1.0
    %v6554 = vrcp.pop %v6553
    %v6555 = vmul.f32 1.0, %v6554
    %v6556 = vtanh.pop %v6549
    %v6557 = vmul.f32 %v6555, %v6466
    %6559 = vrot.lane.b32.xlu0 %v6556, 32
    %v6560 = vpop.permute.xlu0 %6559
    %v6562 = vmul.f32 %v6555, %v6560
    %6564 = vrot.lane.b32.xlu0 %v6562, 32
    %v6565 = vpop.permute.xlu0 %6564
    %v6567 = vadd.f32 %v6557, %v6565
    %v6568 = vtanh.pop %v6567
    %6570 = vrot.lane.b32.xlu0 %v6568, 32
    %v6571 = vpop.permute.xlu0 %6570
    %v6573 = vmul.f32 %v6555, %v6571
    %6576 = vrot.lane.b32.xlu0 %v6573, 64
    %v6577 = vpop.permute.xlu0 %6576
    %v6579 = vsel %vm5391, %v5769, %v6577
    %s6580 = sld [smem:[#allocation2]]
    %s6581 = sld [smem:[#allocation2 + $0x1]]
    %s6582 = sld [smem:[#allocation2 + $0x2]]
    %v6583 = vld [vmem:[%s13] sm:$0xff]
    %v6584 = vld [vmem:[%s13 + $0x8] sm:$0xff]
    %v6585 = vld [vmem:[%s13 + $0x10] sm:$0xff]
    %v6586 = vld [vmem:[%s13 + $0x18] sm:$0xff]
    %v6587 = vld [vmem:[%s15] sm:$0x1]
    %v6589 = vlaneseq
    %v6590 = vshrl.u32 %v6589, 7
    %v6591 = vsub.s32 0, %v6590
    %v6592 = vrot.slane %v6587, %v6591
    %v6595 = vsel %vm328, %v6579, 0
    %6597 = vmatprep.subr.mxu0 0.0
    %6598 = vmatpush1.msra.mxu0 %v6583
    %6599 = vmatprep.subr.mxu0 0.0
    %6600 = vmatpush1.msra.mxu0 %v6584
    %6601 = vmatprep.subr.mxu0 0.0
    %6602 = vmatpush1.msra.mxu0 %v6585
    %6603 = vmatprep.subr.mxu0 0.0
    %6604 = vmatpush1.msra.mxu0 %v6586
    %6605 = vmatprep.subr.mxu0 0.0
    %6606 = vmatpush1.msra.mxu0 0.0
    %6607 = vmatprep.subr.mxu0 0.0
    %6608 = vmatpush1.msra.mxu0 0.0
    %6609 = vmatprep.subr.mxu0 0.0
    %6610 = vmatpush1.msra.mxu0 0.0
    %6611 = vmatprep.subr.mxu0 0.0
    %6612 = vmatpush1.msra.mxu0 0.0
    %6613 = vmatprep.subr.mxu0 0.0
    %6614 = vmatpush1.msra.mxu0 0.0
    %6615 = vmatprep.subr.mxu0 0.0
    %6616 = vmatpush1.msra.mxu0 0.0
    %6617 = vmatprep.subr.mxu0 0.0
    %6618 = vmatpush1.msra.mxu0 0.0
    %6619 = vmatprep.subr.mxu0 0.0
    %6620 = vmatpush1.msra.mxu0 0.0
    %6621 = vmatprep.subr.mxu0 0.0
    %6622 = vmatpush1.msra.mxu0 0.0
    %6623 = vmatprep.subr.mxu0 0.0
    %6624 = vmatpush1.msra.mxu0 0.0
    %6625 = vmatprep.subr.mxu0 0.0
    %6626 = vmatpush1.msra.mxu0 0.0
    %6627 = vmatprep.subr.mxu0 0.0
    %6628 = vmatpush1.msra.mxu0 0.0
    %6629 = vmatprep.subr.mxu0 0.0
    %6630 = vmatpush1.msra.mxu0 0.0
    %6631 = vmatprep.subr.mxu0 0.0
    %6632 = vmatpush1.msra.mxu0 0.0
    %6633 = vmatprep.subr.mxu0 0.0
    %6634 = vmatpush1.msra.mxu0 0.0
    %6635 = vmatprep.subr.mxu0 0.0
    %6636 = vmatpush1.msra.mxu0 0.0
    %6637 = vmatprep.subr.mxu0 0.0
    %6638 = vmatpush1.msra.mxu0 0.0
    %6639 = vmatprep.subr.mxu0 0.0
    %6640 = vmatpush1.msra.mxu0 0.0
    %6641 = vmatprep.subr.mxu0 0.0
    %6642 = vmatpush1.msra.mxu0 0.0
    %6643 = vmatprep.subr.mxu0 0.0
    %6644 = vmatpush1.msra.mxu0 0.0
    %6645 = vmatprep.subr.mxu0 0.0
    %6646 = vmatpush1.msra.mxu0 0.0
    %6647 = vmatprep.subr.mxu0 0.0
    %6648 = vmatpush1.msra.mxu0 0.0
    %6649 = vmatprep.subr.mxu0 0.0
    %6650 = vmatpush1.msra.mxu0 0.0
    %6651 = vmatprep.subr.mxu0 0.0
    %6652 = vmatpush1.msra.mxu0 0.0
    %6653 = vmatprep.subr.mxu0 0.0
    %6654 = vmatpush1.msra.mxu0 0.0
    %6655 = vmatprep.subr.mxu0 0.0
    %6656 = vmatpush1.msra.mxu0 0.0
    %6657 = vmatprep.subr.mxu0 0.0
    %6658 = vmatpush1.msra.mxu0 0.0
    %6659 = vmatprep.subr.mxu0 0.0
    %6660 = vmatpush1.msra.mxu0 0.0
    %6661 = vmatprep.mubr.f32.mxu0 0.0
    %6662 = vmatmul.mubr.f32.gmra.mrb[0].mxu0 %v6595
    %v6663 = vpop.f32.mrb[0].mxu0
    %v6664 = vadd.f32 %v6592, %v6663
    %v6665 = vpop.f32.mrb[0].mxu0
    %6666 = vdwg.mxu0
    %v6667 = vmul.f32 %v6664, %v6664
    %v6668 = vmul.f32 %v6664, %v6667
    %v6669 = vmul.f32 %v6668, 0.044715
    %v6670 = vadd.f32 %v6664, %v6669
    %v6671 = vmul.f32 %v6670, 0.7978846
    %v6672 = vtanh.pop %v6671
    %v6673 = vadd.f32 %v6672, 1.0
    %v6674 = vmul.f32 %v6673, 0.5
    %v6675 = vmul.f32 %v6664, %v6674
    %v6676 = vld [vmem:[%s14] sm:$0xff]
    %v6677 = vld [vmem:[%s14 + $0x8] sm:$0xff]
    %v6678 = vld [vmem:[%s14 + $0x10] sm:$0xff]
    %v6679 = vld [vmem:[%s14 + $0x18] sm:$0xff]
    %v6680 = vld [vmem:[%s14 + $0x20] sm:$0xff]
    %v6681 = vld [vmem:[%s14 + $0x28] sm:$0xff]
    %v6682 = vld [vmem:[%s14 + $0x30] sm:$0xff]
    %v6683 = vld [vmem:[%s14 + $0x38] sm:$0xff]
    %6685 = vrot.lane.b32.xlu0 %v6675, 96
    %v6686 = vpop.permute.xlu0 %6685
    %6687 = vrot.lane.b32.xlu0 %v6592, 32
    %v6688 = vpop.permute.xlu0 %6687
    %vm6690 = vcmask 523264
    %v6691 = vsel %vm6690, %v6686, 0
    %6693 = vmatprep.subr.mxu0 0.0
    %6694 = vmatpush1.msra.mxu0 %v6676
    %6695 = vmatprep.subr.mxu0 0.0
    %6696 = vmatpush1.msra.mxu0 %v6677
    %6697 = vmatprep.subr.mxu0 0.0
    %6698 = vmatpush1.msra.mxu0 %v6678
    %6699 = vmatprep.subr.mxu0 0.0
    %6700 = vmatpush1.msra.mxu0 %v6679
    %6701 = vmatprep.subr.mxu0 0.0
    %6702 = vmatpush1.msra.mxu0 %v6680
    %6703 = vmatprep.subr.mxu0 0.0
    %6704 = vmatpush1.msra.mxu0 %v6681
    %6705 = vmatprep.subr.mxu0 0.0
    %6706 = vmatpush1.msra.mxu0 %v6682
    %6707 = vmatprep.subr.mxu0 0.0
    %6708 = vmatpush1.msra.mxu0 %v6683
    %6709 = vmatprep.subr.mxu0 0.0
    %6710 = vmatpush1.msra.mxu0 0.0
    %6711 = vmatprep.subr.mxu0 0.0
    %6712 = vmatpush1.msra.mxu0 0.0
    %6713 = vmatprep.subr.mxu0 0.0
    %6714 = vmatpush1.msra.mxu0 0.0
    %6715 = vmatprep.subr.mxu0 0.0
    %6716 = vmatpush1.msra.mxu0 0.0
    %6717 = vmatprep.subr.mxu0 0.0
    %6718 = vmatpush1.msra.mxu0 0.0
    %6719 = vmatprep.subr.mxu0 0.0
    %6720 = vmatpush1.msra.mxu0 0.0
    %6721 = vmatprep.subr.mxu0 0.0
    %6722 = vmatpush1.msra.mxu0 0.0
    %6723 = vmatprep.subr.mxu0 0.0
    %6724 = vmatpush1.msra.mxu0 0.0
    %6725 = vmatprep.subr.mxu0 0.0
    %6726 = vmatpush1.msra.mxu0 0.0
    %6727 = vmatprep.subr.mxu0 0.0
    %6728 = vmatpush1.msra.mxu0 0.0
    %6729 = vmatprep.subr.mxu0 0.0
    %6730 = vmatpush1.msra.mxu0 0.0
    %6731 = vmatprep.subr.mxu0 0.0
    %6732 = vmatpush1.msra.mxu0 0.0
    %6733 = vmatprep.subr.mxu0 0.0
    %6734 = vmatpush1.msra.mxu0 0.0
    %6735 = vmatprep.subr.mxu0 0.0
    %6736 = vmatpush1.msra.mxu0 0.0
    %6737 = vmatprep.subr.mxu0 0.0
    %6738 = vmatpush1.msra.mxu0 0.0
    %6739 = vmatprep.subr.mxu0 0.0
    %6740 = vmatpush1.msra.mxu0 0.0
    %6741 = vmatprep.subr.mxu0 0.0
    %6742 = vmatpush1.msra.mxu0 0.0
    %6743 = vmatprep.subr.mxu0 0.0
    %6744 = vmatpush1.msra.mxu0 0.0
    %6745 = vmatprep.subr.mxu0 0.0
    %6746 = vmatpush1.msra.mxu0 0.0
    %6747 = vmatprep.subr.mxu0 0.0
    %6748 = vmatpush1.msra.mxu0 0.0
    %6749 = vmatprep.subr.mxu0 0.0
    %6750 = vmatpush1.msra.mxu0 0.0
    %6751 = vmatprep.subr.mxu0 0.0
    %6752 = vmatpush1.msra.mxu0 0.0
    %6753 = vmatprep.subr.mxu0 0.0
    %6754 = vmatpush1.msra.mxu0 0.0
    %6755 = vmatprep.subr.mxu0 0.0
    %6756 = vmatpush1.msra.mxu0 0.0
    %6757 = vmatprep.mubr.f32.mxu0 0.0
    %6758 = vmatmul.mubr.f32.gmra.mrb[0].mxu0 %v6691
    %v6759 = vpop.f32.mrb[0].mxu0
    %v6760 = vadd.f32 %v6688, %v6759
    %v6761 = vpop.f32.mrb[0].mxu0
    %6762 = vdwg.mxu0
    %v6763 = vstv %s6580
    %v6764 = vmul.f32 %v6763, %v6579
    %v6765 = vstv %s6581
    %v6766 = vmul.f32 %v6765, %v6664
    %v6767 = vadd.f32 %v6764, %v6766
    %v6768 = vstv %s6582
    %v6769 = vmul.f32 %v6768, %v6760
    %v6770 = vadd.f32 %v6767, %v6769
    %s6771 = sld [smem:[#allocation2 + $0x80]]
    %s6772 = sld [smem:[#allocation2 + $0x81]]
    %s6773 = sld [smem:[#allocation2 + $0x82]]
    %s6774 = scalar_lea.vmem %s13, 32
    %v6775 = vld [vmem:[%s6774] sm:$0xff]
    %v6776 = vld [vmem:[%s6774 + $0x8] sm:$0xff]
    %v6777 = vld [vmem:[%s6774 + $0x10] sm:$0xff]
    %v6778 = vld [vmem:[%s6774 + $0x18] sm:$0xff]
    %s6779 = scalar_lea.vmem %s15, 1
    %v6780 = vld [vmem:[%s6779] sm:$0x1]
    %v6782 = vlaneseq
    %v6783 = vshrl.u32 %v6782, 7
    %v6784 = vsub.s32 0, %v6783
    %v6785 = vrot.slane %v6780, %v6784
    %v6788 = vsel %vm328, %v6770, 0
    %6790 = vmatprep.subr.mxu0 0.0
    %6791 = vmatpush1.msra.mxu0 %v6775
    %6792 = vmatprep.subr.mxu0 0.0
    %6793 = vmatpush1.msra.mxu0 %v6776
    %6794 = vmatprep.subr.mxu0 0.0
    %6795 = vmatpush1.msra.mxu0 %v6777
    %6796 = vmatprep.subr.mxu0 0.0
    %6797 = vmatpush1.msra.mxu0 %v6778
    %6798 = vmatprep.subr.mxu0 0.0
    %6799 = vmatpush1.msra.mxu0 0.0
    %6800 = vmatprep.subr.mxu0 0.0
    %6801 = vmatpush1.msra.mxu0 0.0
    %6802 = vmatprep.subr.mxu0 0.0
    %6803 = vmatpush1.msra.mxu0 0.0
    %6804 = vmatprep.subr.mxu0 0.0
    %6805 = vmatpush1.msra.mxu0 0.0
    %6806 = vmatprep.subr.mxu0 0.0
    %6807 = vmatpush1.msra.mxu0 0.0
    %6808 = vmatprep.subr.mxu0 0.0
    %6809 = vmatpush1.msra.mxu0 0.0
    %6810 = vmatprep.subr.mxu0 0.0
    %6811 = vmatpush1.msra.mxu0 0.0
    %6812 = vmatprep.subr.mxu0 0.0
    %6813 = vmatpush1.msra.mxu0 0.0
    %6814 = vmatprep.subr.mxu0 0.0
    %6815 = vmatpush1.msra.mxu0 0.0
    %6816 = vmatprep.subr.mxu0 0.0
    %6817 = vmatpush1.msra.mxu0 0.0
    %6818 = vmatprep.subr.mxu0 0.0
    %6819 = vmatpush1.msra.mxu0 0.0
    %6820 = vmatprep.subr.mxu0 0.0
    %6821 = vmatpush1.msra.mxu0 0.0
    %6822 = vmatprep.subr.mxu0 0.0
    %6823 = vmatpush1.msra.mxu0 0.0
    %6824 = vmatprep.subr.mxu0 0.0
    %6825 = vmatpush1.msra.mxu0 0.0
    %6826 = vmatprep.subr.mxu0 0.0
    %6827 = vmatpush1.msra.mxu0 0.0
    %6828 = vmatprep.subr.mxu0 0.0
    %6829 = vmatpush1.msra.mxu0 0.0
    %6830 = vmatprep.subr.mxu0 0.0
    %6831 = vmatpush1.msra.mxu0 0.0
    %6832 = vmatprep.subr.mxu0 0.0
    %6833 = vmatpush1.msra.mxu0 0.0
    %6834 = vmatprep.subr.mxu0 0.0
    %6835 = vmatpush1.msra.mxu0 0.0
    %6836 = vmatprep.subr.mxu0 0.0
    %6837 = vmatpush1.msra.mxu0 0.0
    %6838 = vmatprep.subr.mxu0 0.0
    %6839 = vmatpush1.msra.mxu0 0.0
    %6840 = vmatprep.subr.mxu0 0.0
    %6841 = vmatpush1.msra.mxu0 0.0
    %6842 = vmatprep.subr.mxu0 0.0
    %6843 = vmatpush1.msra.mxu0 0.0
    %6844 = vmatprep.subr.mxu0 0.0
    %6845 = vmatpush1.msra.mxu0 0.0
    %6846 = vmatprep.subr.mxu0 0.0
    %6847 = vmatpush1.msra.mxu0 0.0
    %6848 = vmatprep.subr.mxu0 0.0
    %6849 = vmatpush1.msra.mxu0 0.0
    %6850 = vmatprep.subr.mxu0 0.0
    %6851 = vmatpush1.msra.mxu0 0.0
    %6852 = vmatprep.subr.mxu0 0.0
    %6853 = vmatpush1.msra.mxu0 0.0
    %6854 = vmatprep.mubr.f32.mxu0 0.0
    %6855 = vmatmul.mubr.f32.gmra.mrb[0].mxu0 %v6788
    %v6856 = vpop.f32.mrb[0].mxu0
    %v6857 = vadd.f32 %v6785, %v6856
    %v6858 = vpop.f32.mrb[0].mxu0
    %6859 = vdwg.mxu0
    %v6860 = vmul.f32 %v6857, %v6857
    %v6861 = vmul.f32 %v6857, %v6860
    %v6862 = vmul.f32 %v6861, 0.044715
    %v6863 = vadd.f32 %v6857, %v6862
    %v6864 = vmul.f32 %v6863, 0.7978846
    %v6865 = vtanh.pop %v6864
    %v6866 = vadd.f32 %v6865, 1.0
    %v6867 = vmul.f32 %v6866, 0.5
    %v6868 = vmul.f32 %v6857, %v6867
    %s6869 = scalar_lea.vmem %s14, 64
    %v6870 = vld [vmem:[%s6869] sm:$0xff]
    %v6871 = vld [vmem:[%s6869 + $0x8] sm:$0xff]
    %v6872 = vld [vmem:[%s6869 + $0x10] sm:$0xff]
    %v6873 = vld [vmem:[%s6869 + $0x18] sm:$0xff]
    %v6874 = vld [vmem:[%s6869 + $0x20] sm:$0xff]
    %v6875 = vld [vmem:[%s6869 + $0x28] sm:$0xff]
    %v6876 = vld [vmem:[%s6869 + $0x30] sm:$0xff]
    %v6877 = vld [vmem:[%s6869 + $0x38] sm:$0xff]
    %6879 = vrot.lane.b32.xlu0 %v6868, 96
    %v6880 = vpop.permute.xlu0 %6879
    %6881 = vrot.lane.b32.xlu0 %v6785, 32
    %v6882 = vpop.permute.xlu0 %6881
    %v6884 = vsel %vm6690, %v6880, 0
    %6886 = vmatprep.subr.mxu0 0.0
    %6887 = vmatpush1.msra.mxu0 %v6870
    %6888 = vmatprep.subr.mxu0 0.0
    %6889 = vmatpush1.msra.mxu0 %v6871
    %6890 = vmatprep.subr.mxu0 0.0
    %6891 = vmatpush1.msra.mxu0 %v6872
    %6892 = vmatprep.subr.mxu0 0.0
    %6893 = vmatpush1.msra.mxu0 %v6873
    %6894 = vmatprep.subr.mxu0 0.0
    %6895 = vmatpush1.msra.mxu0 %v6874
    %6896 = vmatprep.subr.mxu0 0.0
    %6897 = vmatpush1.msra.mxu0 %v6875
    %6898 = vmatprep.subr.mxu0 0.0
    %6899 = vmatpush1.msra.mxu0 %v6876
    %6900 = vmatprep.subr.mxu0 0.0
    %6901 = vmatpush1.msra.mxu0 %v6877
    %6902 = vmatprep.subr.mxu0 0.0
    %6903 = vmatpush1.msra.mxu0 0.0
    %6904 = vmatprep.subr.mxu0 0.0
    %6905 = vmatpush1.msra.mxu0 0.0
    %6906 = vmatprep.subr.mxu0 0.0
    %6907 = vmatpush1.msra.mxu0 0.0
    %6908 = vmatprep.subr.mxu0 0.0
    %6909 = vmatpush1.msra.mxu0 0.0
    %6910 = vmatprep.subr.mxu0 0.0
    %6911 = vmatpush1.msra.mxu0 0.0
    %6912 = vmatprep.subr.mxu0 0.0
    %6913 = vmatpush1.msra.mxu0 0.0
    %6914 = vmatprep.subr.mxu0 0.0
    %6915 = vmatpush1.msra.mxu0 0.0
    %6916 = vmatprep.subr.mxu0 0.0
    %6917 = vmatpush1.msra.mxu0 0.0
    %6918 = vmatprep.subr.mxu0 0.0
    %6919 = vmatpush1.msra.mxu0 0.0
    %6920 = vmatprep.subr.mxu0 0.0
    %6921 = vmatpush1.msra.mxu0 0.0
    %6922 = vmatprep.subr.mxu0 0.0
    %6923 = vmatpush1.msra.mxu0 0.0
    %6924 = vmatprep.subr.mxu0 0.0
    %6925 = vmatpush1.msra.mxu0 0.0
    %6926 = vmatprep.subr.mxu0 0.0
    %6927 = vmatpush1.msra.mxu0 0.0
    %6928 = vmatprep.subr.mxu0 0.0
    %6929 = vmatpush1.msra.mxu0 0.0
    %6930 = vmatprep.subr.mxu0 0.0
    %6931 = vmatpush1.msra.mxu0 0.0
    %6932 = vmatprep.subr.mxu0 0.0
    %6933 = vmatpush1.msra.mxu0 0.0
    %6934 = vmatprep.subr.mxu0 0.0
    %6935 = vmatpush1.msra.mxu0 0.0
    %6936 = vmatprep.subr.mxu0 0.0
    %6937 = vmatpush1.msra.mxu0 0.0
    %6938 = vmatprep.subr.mxu0 0.0
    %6939 = vmatpush1.msra.mxu0 0.0
    %6940 = vmatprep.subr.mxu0 0.0
    %6941 = vmatpush1.msra.mxu0 0.0
    %6942 = vmatprep.subr.mxu0 0.0
    %6943 = vmatpush1.msra.mxu0 0.0
    %6944 = vmatprep.subr.mxu0 0.0
    %6945 = vmatpush1.msra.mxu0 0.0
    %6946 = vmatprep.subr.mxu0 0.0
    %6947 = vmatpush1.msra.mxu0 0.0
    %6948 = vmatprep.subr.mxu0 0.0
    %6949 = vmatpush1.msra.mxu0 0.0
    %6950 = vmatprep.mubr.f32.mxu0 0.0
    %6951 = vmatmul.mubr.f32.gmra.mrb[0].mxu0 %v6884
    %v6952 = vpop.f32.mrb[0].mxu0
    %v6953 = vadd.f32 %v6882, %v6952
    %v6954 = vpop.f32.mrb[0].mxu0
    %6955 = vdwg.mxu0
    %v6956 = vstv %s6771
    %v6957 = vmul.f32 %v6956, %v6770
    %v6958 = vstv %s6772
    %v6959 = vmul.f32 %v6958, %v6857
    %v6960 = vadd.f32 %v6957, %v6959
    %v6961 = vstv %s6773
    %v6962 = vmul.f32 %v6961, %v6953
    %v6963 = vadd.f32 %v6960, %v6962
    %6964 = vst.msk [vmem:[#allocation5] sm:$0xff] %vm328, %v6963
    // Predicated region
    $region74: #{tpu_custom_call.1} parent=1 // pred_check
      _
    $region75: #{tpu_custom_call.1} parent=1 // pred_check_branch
      %6966 = sbr.rel (0) target = $region77
    $region76: #{tpu_custom_call.1} parent=1 // pred_region
      %s6968 = ssub.s32 128, 128
      %6969 = vsyncadd [#allocation3], %s6968
      %s6971 = sshll.u32 [#allocation5], 4
      %s6972 = int_to_ptr.vmem [resolvable:$true] %s6971
      %6974 = dma.vmem_to_hbm [thread:$0]  %s6972, 128, %s17, [#allocation3]
    $region77: #{tpu_custom_call.1} parent=1 // pred_fallthru
      _
    // Predicated region
    $region78: #{tpu_custom_call.1} parent=1 // pred_check
      _
    $region79: #{tpu_custom_call.1} parent=1 // pred_check_branch
      %6976 = sbr.rel (0) target = $region81
    $region80: #{tpu_custom_call.1} parent=1 // pred_region
      %6977 = dma.done [#allocation3], 128
    $region81: #{tpu_custom_call.1} parent=1 // pred_fallthru
      _
    %6978 = vsyncpa [#allocation3], 1
    %6979 = vsyncpa [#allocation4], 1

</llo_original>
